<compile_context>
chip_gen: v7x
topology: tpu7x:2x2x1
jax: 0.10.0
libtpu: 0.0.40
codegen_flags: <defaults>
</compile_context>

<pallas_src>
import functools

import jax
import jax.numpy as jnp
from jax.experimental import pallas as pl
from jax.experimental.pallas import tpu as pltpu

_INV_SQRT2 = 0.7071067811865476
_LN_EPS = 1e-5


def _gelu_exact(x):
    # torch nn.GELU() default = exact erf formulation
    return 0.5 * x * (1.0 + jax.lax.erf(x * _INV_SQRT2))


def _mlp_ln_kernel(x_ref, w1_ref, b1_ref, w2_ref, b2_ref, w3_ref, b3_ref,
                   gamma_ref, beta_ref, out_ref):
    """One row-tile of: Linear -> GELU -> Linear -> GELU -> Linear -> LayerNorm."""
    x = x_ref[...]

    h = jnp.dot(x, w1_ref[...], preferred_element_type=jnp.float32) + b1_ref[...]
    h = _gelu_exact(h)
    h = jnp.dot(h, w2_ref[...], preferred_element_type=jnp.float32) + b2_ref[...]
    h = _gelu_exact(h)
    y = jnp.dot(h, w3_ref[...], preferred_element_type=jnp.float32) + b3_ref[...]

    # LayerNorm over last dim (biased variance, eps=1e-5), then affine.
    mean = jnp.mean(y, axis=-1, keepdims=True)
    var = jnp.mean(jnp.square(y - mean), axis=-1, keepdims=True)
    inv = jax.lax.rsqrt(var + _LN_EPS)
    out_ref[...] = ((y - mean) * inv) * gamma_ref[...] + beta_ref[...]


def _round_up(a, b):
    return ((a + b - 1) // b) * b


def mlp_layernorm(x, params, *, tile_rows=512):
    """build_mlp(in, hidden, out, drop_out=False, lay_norm=True) via a Pallas kernel.

    x: [N, in_size] float32 (N need not be divisible by tile_rows).
    params: w1 [in,h], b1 [1,h], w2 [h,h], b2 [1,h], w3 [h,out], b3 [1,out],
            gamma [1,out], beta [1,out].
    """
    n, in_size = x.shape
    hidden = params["w1"].shape[1]
    out_size = params["w3"].shape[1]

    # Clamp the row tile for tiny inputs; keep it a multiple of 8 (sublane quantum).
    tile_rows = min(tile_rows, _round_up(max(n, 1), 8))
    n_pad = _round_up(n, tile_rows)
    if n_pad != n:
        # Zero rows flow through the MLP to a constant row; LN eps keeps it finite.
        x = jnp.pad(x, ((0, n_pad - n), (0, 0)))

    full = lambda shape: pl.BlockSpec(shape, lambda i: (0, 0))  # resident params

    out = pl.pallas_call(
        _mlp_ln_kernel,
        out_shape=jax.ShapeDtypeStruct((n_pad, out_size), jnp.float32),
        grid_spec=pltpu.PrefetchScalarGridSpec(
            num_scalar_prefetch=0,
            grid=(n_pad // tile_rows,),
            in_specs=[
                pl.BlockSpec((tile_rows, in_size), lambda i: (i, 0)),   # x row tile
                full((in_size, hidden)),    # w1
                full((1, hidden)),          # b1
                full((hidden, hidden)),     # w2
                full((1, hidden)),          # b2
                full((hidden, out_size)),   # w3
                full((1, out_size)),        # b3
                full((1, out_size)),        # gamma
                full((1, out_size)),        # beta
            ],
            out_specs=pl.BlockSpec((tile_rows, out_size), lambda i: (i, 0)),
        ),
        compiler_params=pltpu.CompilerParams(
            dimension_semantics=("parallel",)),
    )(x, params["w1"], params["b1"], params["w2"], params["b2"],
      params["w3"], params["b3"], params["gamma"], params["beta"])

    return out[:n] if n_pad != n else out


def init_mlp_params(key, in_size, hidden_size, out_size):
    """Deterministic synthetic params for build_mlp(drop_out=False, lay_norm=True)."""
    ks = jax.random.split(key, 6)
    scale = lambda fan_in: 1.0 / jnp.sqrt(jnp.float32(fan_in))
    return {
        "w1": jax.random.uniform(ks[0], (in_size, hidden_size), jnp.float32,
                                 -scale(in_size), scale(in_size)),
        "b1": jax.random.uniform(ks[1], (1, hidden_size), jnp.float32,
                                 -scale(in_size), scale(in_size)),
        "w2": jax.random.uniform(ks[2], (hidden_size, hidden_size), jnp.float32,
                                 -scale(hidden_size), scale(hidden_size)),
        "b2": jax.random.uniform(ks[3], (1, hidden_size), jnp.float32,
                                 -scale(hidden_size), scale(hidden_size)),
        "w3": jax.random.uniform(ks[4], (hidden_size, out_size), jnp.float32,
                                 -scale(hidden_size), scale(hidden_size)),
        "b3": jax.random.uniform(ks[5], (1, out_size), jnp.float32,
                                 -scale(hidden_size), scale(hidden_size)),
        "gamma": jnp.ones((1, out_size), jnp.float32),
        "beta": jnp.zeros((1, out_size), jnp.float32),
    }


def gn_block_forward(x, edge_attr, edge_index, eb_params, nb_params, *, tile_rows=512):
    """GnBlock.forward: returns (x_out, edge_attr_out).

    edge_index / face / batch / num_graphs of the torch_geometric Data object are
    pure passthrough metadata, not compute, so they are not returned here.
    """
    # TODO(synk): EdgeBlock/NodeBlock source is not included in the spec; the
    # gather/scatter message passing below is reconstructed from the stated input
    # dims (eb: 3*H sender/receiver/edge concat; nb: H + H//2 via two-way split
    # edge aggregation).  The build_mlp+LayerNorm compute (the Pallas kernel) is exact.
    senders = edge_index[0]
    receivers = edge_index[1]
    num_nodes = x.shape[0]
    hidden = x.shape[1]
    half = hidden // 2

    # ---- EdgeBlock: concat sender/receiver node attrs with edge attrs, MLP+LN ----
    edge_in = jnp.concatenate([x[senders], x[receivers], edge_attr], axis=1)
    edge_new = mlp_layernorm(edge_in, eb_params, tile_rows=tile_rows)

    # ---- NodeBlock: two-way edge aggregation onto nodes, concat with x, MLP+LN ----
    agg = (jax.ops.segment_sum(edge_new[:, :half], senders, num_segments=num_nodes)
           + jax.ops.segment_sum(edge_new[:, half:], receivers, num_segments=num_nodes))
    node_in = jnp.concatenate([x, agg], axis=1)
    x_new = mlp_layernorm(node_in, nb_params, tile_rows=tile_rows)

    # ---- residual connections ----
    return x + x_new, edge_attr + edge_new


# ----------------------------- pure-JAX reference -----------------------------

def _reference_mlp_ln(x, p):
    h = _gelu_exact(jnp.dot(x, p["w1"]) + p["b1"])
    h = _gelu_exact(jnp.dot(h, p["w2"]) + p["b2"])
    y = jnp.dot(h, p["w3"]) + p["b3"]
    mean = jnp.mean(y, axis=-1, keepdims=True)
    var = jnp.mean(jnp.square(y - mean), axis=-1, keepdims=True)
    return (y - mean) * jax.lax.rsqrt(var + _LN_EPS) * p["gamma"] + p["beta"]


def _reference_gn_block(x, edge_attr, edge_index, eb_params, nb_params):
    s, r = edge_index[0], edge_index[1]
    n, hidden = x.shape
    half = hidden // 2
    edge_in = jnp.concatenate([x[s], x[r], edge_attr], axis=1)
    edge_new = _reference_mlp_ln(edge_in, eb_params)
    agg = (jax.ops.segment_sum(edge_new[:, :half], s, num_segments=n)
           + jax.ops.segment_sum(edge_new[:, half:], r, num_segments=n))
    node_in = jnp.concatenate([x, agg], axis=1)
    x_new = _reference_mlp_ln(node_in, nb_params)
    return x + x_new, edge_attr + edge_new


if __name__ == "__main__":
    key = jax.random.PRNGKey(0)
    k_x, k_e, k_s, k_r, k_eb, k_nb = jax.random.split(key, 6)

    hidden_size = 128                       # GnBlock default -> lane-dense 128-wide features
    num_nodes = 1000                        # non-multiple of tile_rows: exercises padding path
    num_edges = 1500
    eb_input_dim = 3 * hidden_size          # 384
    nb_input_dim = hidden_size + hidden_size // 2   # 192

    x = jax.random.normal(k_x, (num_nodes, hidden_size), jnp.float32)
    edge_attr = jax.random.normal(k_e, (num_edges, hidden_size), jnp.float32)
    senders = jax.random.randint(k_s, (num_edges,), 0, num_nodes, dtype=jnp.int32)
    receivers = jax.random.randint(k_r, (num_edges,), 0, num_nodes, dtype=jnp.int32)
    edge_index = jnp.stack([senders, receivers])

    eb_params = init_mlp_params(k_eb, eb_input_dim, hidden_size, hidden_size)
    nb_params = init_mlp_params(k_nb, nb_input_dim, hidden_size, hidden_size)

    fwd = jax.jit(functools.partial(gn_block_forward, tile_rows=512))
    x_out, edge_out = fwd(x, edge_attr, edge_index, eb_params, nb_params)
    jax.block_until_ready((x_out, edge_out))

    # Correctness check against a plain-JAX reference.
    ref_x, ref_e = _reference_gn_block(x, edge_attr, edge_index, eb_params, nb_params)
    assert x_out.shape == (num_nodes, hidden_size)
    assert edge_out.shape == (num_edges, hidden_size)
    assert jnp.allclose(x_out, ref_x, atol=2e-3, rtol=2e-3)
    assert jnp.allclose(edge_out, ref_e, atol=2e-3, rtol=2e-3)

    print("KERNEL_OK")
</pallas_src>

<mosaic_0001>
module attributes {stable_mosaic.version = 11 : i64} {
  func.func @_mlp_ln_kernel(%arg0: i32, %arg1: memref<512x384xf32, #tpu.memory_space<vmem>>, %arg2: memref<384x128xf32, #tpu.memory_space<vmem>>, %arg3: memref<1x128xf32, #tpu.memory_space<vmem>>, %arg4: memref<128x128xf32, #tpu.memory_space<vmem>>, %arg5: memref<1x128xf32, #tpu.memory_space<vmem>>, %arg6: memref<128x128xf32, #tpu.memory_space<vmem>>, %arg7: memref<1x128xf32, #tpu.memory_space<vmem>>, %arg8: memref<1x128xf32, #tpu.memory_space<vmem>>, %arg9: memref<1x128xf32, #tpu.memory_space<vmem>>, %arg10: memref<512x128xf32, #tpu.memory_space<vmem>>) attributes {dimension_semantics = [#tpu.dimension_semantics<parallel>], iteration_bounds = array<i64: 3>, scalar_prefetch = 0 : i64, scratch_operands = 0 : i64, tpu.core_type = #tpu.core_type<tc>, window_params = [{transform_indices = @transform_0, window_bounds = array<i64: 512, 384>}, {pipeline_mode = #tpu.pipeline_mode<synchronous>, transform_indices = @transform_1, window_bounds = array<i64: 384, 128>}, {pipeline_mode = #tpu.pipeline_mode<synchronous>, transform_indices = @transform_2, window_bounds = array<i64: 1, 128>}, {pipeline_mode = #tpu.pipeline_mode<synchronous>, transform_indices = @transform_3, window_bounds = array<i64: 128, 128>}, {pipeline_mode = #tpu.pipeline_mode<synchronous>, transform_indices = @transform_4, window_bounds = array<i64: 1, 128>}, {pipeline_mode = #tpu.pipeline_mode<synchronous>, transform_indices = @transform_5, window_bounds = array<i64: 128, 128>}, {pipeline_mode = #tpu.pipeline_mode<synchronous>, transform_indices = @transform_6, window_bounds = array<i64: 1, 128>}, {pipeline_mode = #tpu.pipeline_mode<synchronous>, transform_indices = @transform_7, window_bounds = array<i64: 1, 128>}, {pipeline_mode = #tpu.pipeline_mode<synchronous>, transform_indices = @transform_8, window_bounds = array<i64: 1, 128>}, {transform_indices = @transform_9, window_bounds = array<i64: 512, 128>}]} {
    %c0 = arith.constant 0 : index
    %c0_0 = arith.constant 0 : index
    %0 = vector.load %arg1[%c0, %c0_0] : memref<512x384xf32, #tpu.memory_space<vmem>>, vector<512x384xf32>
    %c0_1 = arith.constant 0 : index
    %c0_2 = arith.constant 0 : index
    %1 = vector.load %arg2[%c0_1, %c0_2] : memref<384x128xf32, #tpu.memory_space<vmem>>, vector<384x128xf32>
    %cst = arith.constant dense<0.000000e+00> : vector<512x128xf32>
    %2 = tpu.matmul %0, %1, %cst {dimension_numbers = #tpu.dot_dimension_numbers<[1], [0], [0], [1], [0, 0, 1, 1], [], []>} : vector<512x384xf32>, vector<384x128xf32>, vector<512x128xf32> -> vector<512x128xf32>
    %c0_3 = arith.constant 0 : index
    %c0_4 = arith.constant 0 : index
    %3 = vector.load %arg3[%c0_3, %c0_4] : memref<1x128xf32, #tpu.memory_space<vmem>>, vector<1x128xf32>
    %4 = vector.broadcast %3 : vector<1x128xf32> to vector<512x128xf32>
    %5 = arith.addf %2, %4 : vector<512x128xf32>
    %cst_5 = arith.constant 5.000000e-01 : f32
    %6 = vector.broadcast %cst_5 : f32 to vector<512x128xf32>
    %7 = arith.mulf %6, %5 : vector<512x128xf32>
    %cst_6 = arith.constant 0.707106769 : f32
    %8 = vector.broadcast %cst_6 : f32 to vector<512x128xf32>
    %9 = arith.mulf %5, %8 : vector<512x128xf32>
    %10 = math.erf %9 : vector<512x128xf32>
    %cst_7 = arith.constant 1.000000e+00 : f32
    %11 = vector.broadcast %cst_7 : f32 to vector<512x128xf32>
    %12 = arith.addf %11, %10 : vector<512x128xf32>
    %13 = arith.mulf %7, %12 : vector<512x128xf32>
    %c0_8 = arith.constant 0 : index
    %c0_9 = arith.constant 0 : index
    %14 = vector.load %arg4[%c0_8, %c0_9] : memref<128x128xf32, #tpu.memory_space<vmem>>, vector<128x128xf32>
    %cst_10 = arith.constant dense<0.000000e+00> : vector<512x128xf32>
    %15 = tpu.matmul %13, %14, %cst_10 {dimension_numbers = #tpu.dot_dimension_numbers<[1], [0], [0], [1], [0, 0, 1, 1], [], []>} : vector<512x128xf32>, vector<128x128xf32>, vector<512x128xf32> -> vector<512x128xf32>
    %c0_11 = arith.constant 0 : index
    %c0_12 = arith.constant 0 : index
    %16 = vector.load %arg5[%c0_11, %c0_12] : memref<1x128xf32, #tpu.memory_space<vmem>>, vector<1x128xf32>
    %17 = vector.broadcast %16 : vector<1x128xf32> to vector<512x128xf32>
    %18 = arith.addf %15, %17 : vector<512x128xf32>
    %cst_13 = arith.constant 5.000000e-01 : f32
    %19 = vector.broadcast %cst_13 : f32 to vector<512x128xf32>
    %20 = arith.mulf %19, %18 : vector<512x128xf32>
    %cst_14 = arith.constant 0.707106769 : f32
    %21 = vector.broadcast %cst_14 : f32 to vector<512x128xf32>
    %22 = arith.mulf %18, %21 : vector<512x128xf32>
    %23 = math.erf %22 : vector<512x128xf32>
    %cst_15 = arith.constant 1.000000e+00 : f32
    %24 = vector.broadcast %cst_15 : f32 to vector<512x128xf32>
    %25 = arith.addf %24, %23 : vector<512x128xf32>
    %26 = arith.mulf %20, %25 : vector<512x128xf32>
    %c0_16 = arith.constant 0 : index
    %c0_17 = arith.constant 0 : index
    %27 = vector.load %arg6[%c0_16, %c0_17] : memref<128x128xf32, #tpu.memory_space<vmem>>, vector<128x128xf32>
    %cst_18 = arith.constant dense<0.000000e+00> : vector<512x128xf32>
    %28 = tpu.matmul %26, %27, %cst_18 {dimension_numbers = #tpu.dot_dimension_numbers<[1], [0], [0], [1], [0, 0, 1, 1], [], []>} : vector<512x128xf32>, vector<128x128xf32>, vector<512x128xf32> -> vector<512x128xf32>
    %c0_19 = arith.constant 0 : index
    %c0_20 = arith.constant 0 : index
    %29 = vector.load %arg7[%c0_19, %c0_20] : memref<1x128xf32, #tpu.memory_space<vmem>>, vector<1x128xf32>
    %30 = vector.broadcast %29 : vector<1x128xf32> to vector<512x128xf32>
    %31 = arith.addf %28, %30 : vector<512x128xf32>
    %cst_21 = arith.constant dense<0.000000e+00> : vector<512xf32>
    %32 = vector.multi_reduction <add>, %31, %cst_21 [1] : vector<512x128xf32> to vector<512xf32>
    %33 = vector.shape_cast %32 : vector<512xf32> to vector<512x1xf32>
    %cst_22 = arith.constant 1.280000e+02 : f32
    %34 = vector.broadcast %cst_22 : f32 to vector<512x1xf32>
    %35 = arith.divf %33, %34 : vector<512x1xf32>
    %36 = vector.broadcast %35 : vector<512x1xf32> to vector<512x128xf32>
    %37 = arith.subf %31, %36 : vector<512x128xf32>
    %38 = arith.mulf %37, %37 : vector<512x128xf32>
    %cst_23 = arith.constant dense<0.000000e+00> : vector<512xf32>
    %39 = vector.multi_reduction <add>, %38, %cst_23 [1] : vector<512x128xf32> to vector<512xf32>
    %40 = vector.shape_cast %39 : vector<512xf32> to vector<512x1xf32>
    %cst_24 = arith.constant 1.280000e+02 : f32
    %41 = vector.broadcast %cst_24 : f32 to vector<512x1xf32>
    %42 = arith.divf %40, %41 : vector<512x1xf32>
    %cst_25 = arith.constant 9.99999974E-6 : f32
    %43 = vector.broadcast %cst_25 : f32 to vector<512x1xf32>
    %44 = arith.addf %42, %43 : vector<512x1xf32>
    %45 = math.rsqrt %44 : vector<512x1xf32>
    %46 = vector.broadcast %35 : vector<512x1xf32> to vector<512x128xf32>
    %47 = arith.subf %31, %46 : vector<512x128xf32>
    %48 = vector.broadcast %45 : vector<512x1xf32> to vector<512x128xf32>
    %49 = arith.mulf %47, %48 : vector<512x128xf32>
    %c0_26 = arith.constant 0 : index
    %c0_27 = arith.constant 0 : index
    %50 = vector.load %arg8[%c0_26, %c0_27] : memref<1x128xf32, #tpu.memory_space<vmem>>, vector<1x128xf32>
    %51 = vector.broadcast %50 : vector<1x128xf32> to vector<512x128xf32>
    %52 = arith.mulf %49, %51 : vector<512x128xf32>
    %c0_28 = arith.constant 0 : index
    %c0_29 = arith.constant 0 : index
    %53 = vector.load %arg9[%c0_28, %c0_29] : memref<1x128xf32, #tpu.memory_space<vmem>>, vector<1x128xf32>
    %54 = vector.broadcast %53 : vector<1x128xf32> to vector<512x128xf32>
    %55 = arith.addf %52, %54 : vector<512x128xf32>
    %c0_30 = arith.constant 0 : index
    %c0_31 = arith.constant 0 : index
    %56 = vector.load %arg10[%c0_30, %c0_31] : memref<512x128xf32, #tpu.memory_space<vmem>>, vector<512x128xf32>
    tpu.vector_store %arg10[%c0_30, %c0_31], %55 {strides = array<i32>} : memref<512x128xf32, #tpu.memory_space<vmem>>, vector<512x128xf32>,
    return
  }
  func.func @transform_0(%arg0: i32) -> (i32, i32) {
    %c0_i32 = arith.constant 0 : i32
    %c0_i32_0 = arith.constant 0 : i32
    return %arg0, %c0_i32 : i32, i32
  }
  func.func @transform_1(%arg0: i32) -> (i32, i32) {
    %c0_i32 = arith.constant 0 : i32
    %c0_i32_0 = arith.constant 0 : i32
    %c0_i32_1 = arith.constant 0 : i32
    return %c0_i32, %c0_i32_0 : i32, i32
  }
  func.func @transform_2(%arg0: i32) -> (i32, i32) {
    %c0_i32 = arith.constant 0 : i32
    %c0_i32_0 = arith.constant 0 : i32
    %c0_i32_1 = arith.constant 0 : i32
    return %c0_i32, %c0_i32_0 : i32, i32
  }
  func.func @transform_3(%arg0: i32) -> (i32, i32) {
    %c0_i32 = arith.constant 0 : i32
    %c0_i32_0 = arith.constant 0 : i32
    %c0_i32_1 = arith.constant 0 : i32
    return %c0_i32, %c0_i32_0 : i32, i32
  }
  func.func @transform_4(%arg0: i32) -> (i32, i32) {
    %c0_i32 = arith.constant 0 : i32
    %c0_i32_0 = arith.constant 0 : i32
    %c0_i32_1 = arith.constant 0 : i32
    return %c0_i32, %c0_i32_0 : i32, i32
  }
  func.func @transform_5(%arg0: i32) -> (i32, i32) {
    %c0_i32 = arith.constant 0 : i32
    %c0_i32_0 = arith.constant 0 : i32
    %c0_i32_1 = arith.constant 0 : i32
    return %c0_i32, %c0_i32_0 : i32, i32
  }
  func.func @transform_6(%arg0: i32) -> (i32, i32) {
    %c0_i32 = arith.constant 0 : i32
    %c0_i32_0 = arith.constant 0 : i32
    %c0_i32_1 = arith.constant 0 : i32
    return %c0_i32, %c0_i32_0 : i32, i32
  }
  func.func @transform_7(%arg0: i32) -> (i32, i32) {
    %c0_i32 = arith.constant 0 : i32
    %c0_i32_0 = arith.constant 0 : i32
    %c0_i32_1 = arith.constant 0 : i32
    return %c0_i32, %c0_i32_0 : i32, i32
  }
  func.func @transform_8(%arg0: i32) -> (i32, i32) {
    %c0_i32 = arith.constant 0 : i32
    %c0_i32_0 = arith.constant 0 : i32
    %c0_i32_1 = arith.constant 0 : i32
    return %c0_i32, %c0_i32_0 : i32, i32
  }
  func.func @transform_9(%arg0: i32) -> (i32, i32) {
    %c0_i32 = arith.constant 0 : i32
    %c0_i32_0 = arith.constant 0 : i32
    return %arg0, %c0_i32 : i32, i32
  }
}

module attributes {stable_mosaic.version = 11 : i64} {
  func.func @_mlp_ln_kernel(%arg0: i32, %arg1: memref<512x192xf32, #tpu.memory_space<vmem>>, %arg2: memref<192x128xf32, #tpu.memory_space<vmem>>, %arg3: memref<1x128xf32, #tpu.memory_space<vmem>>, %arg4: memref<128x128xf32, #tpu.memory_space<vmem>>, %arg5: memref<1x128xf32, #tpu.memory_space<vmem>>, %arg6: memref<128x128xf32, #tpu.memory_space<vmem>>, %arg7: memref<1x128xf32, #tpu.memory_space<vmem>>, %arg8: memref<1x128xf32, #tpu.memory_space<vmem>>, %arg9: memref<1x128xf32, #tpu.memory_space<vmem>>, %arg10: memref<512x128xf32, #tpu.memory_space<vmem>>) attributes {dimension_semantics = [#tpu.dimension_semantics<parallel>], iteration_bounds = array<i64: 2>, scalar_prefetch = 0 : i64, scratch_operands = 0 : i64, tpu.core_type = #tpu.core_type<tc>, window_params = [{transform_indices = @transform_0, window_bounds = array<i64: 512, 192>}, {pipeline_mode = #tpu.pipeline_mode<synchronous>, transform_indices = @transform_1, window_bounds = array<i64: 192, 128>}, {pipeline_mode = #tpu.pipeline_mode<synchronous>, transform_indices = @transform_2, window_bounds = array<i64: 1, 128>}, {pipeline_mode = #tpu.pipeline_mode<synchronous>, transform_indices = @transform_3, window_bounds = array<i64: 128, 128>}, {pipeline_mode = #tpu.pipeline_mode<synchronous>, transform_indices = @transform_4, window_bounds = array<i64: 1, 128>}, {pipeline_mode = #tpu.pipeline_mode<synchronous>, transform_indices = @transform_5, window_bounds = array<i64: 128, 128>}, {pipeline_mode = #tpu.pipeline_mode<synchronous>, transform_indices = @transform_6, window_bounds = array<i64: 1, 128>}, {pipeline_mode = #tpu.pipeline_mode<synchronous>, transform_indices = @transform_7, window_bounds = array<i64: 1, 128>}, {pipeline_mode = #tpu.pipeline_mode<synchronous>, transform_indices = @transform_8, window_bounds = array<i64: 1, 128>}, {transform_indices = @transform_9, window_bounds = array<i64: 512, 128>}]} {
    %c0 = arith.constant 0 : index
    %c0_0 = arith.constant 0 : index
    %0 = vector.load %arg1[%c0, %c0_0] : memref<512x192xf32, #tpu.memory_space<vmem>>, vector<512x192xf32>
    %c0_1 = arith.constant 0 : index
    %c0_2 = arith.constant 0 : index
    %1 = vector.load %arg2[%c0_1, %c0_2] : memref<192x128xf32, #tpu.memory_space<vmem>>, vector<192x128xf32>
    %cst = arith.constant dense<0.000000e+00> : vector<512x128xf32>
    %2 = tpu.matmul %0, %1, %cst {dimension_numbers = #tpu.dot_dimension_numbers<[1], [0], [0], [1], [0, 0, 1, 1], [], []>} : vector<512x192xf32>, vector<192x128xf32>, vector<512x128xf32> -> vector<512x128xf32>
    %c0_3 = arith.constant 0 : index
    %c0_4 = arith.constant 0 : index
    %3 = vector.load %arg3[%c0_3, %c0_4] : memref<1x128xf32, #tpu.memory_space<vmem>>, vector<1x128xf32>
    %4 = vector.broadcast %3 : vector<1x128xf32> to vector<512x128xf32>
    %5 = arith.addf %2, %4 : vector<512x128xf32>
    %cst_5 = arith.constant 5.000000e-01 : f32
    %6 = vector.broadcast %cst_5 : f32 to vector<512x128xf32>
    %7 = arith.mulf %6, %5 : vector<512x128xf32>
    %cst_6 = arith.constant 0.707106769 : f32
    %8 = vector.broadcast %cst_6 : f32 to vector<512x128xf32>
    %9 = arith.mulf %5, %8 : vector<512x128xf32>
    %10 = math.erf %9 : vector<512x128xf32>
    %cst_7 = arith.constant 1.000000e+00 : f32
    %11 = vector.broadcast %cst_7 : f32 to vector<512x128xf32>
    %12 = arith.addf %11, %10 : vector<512x128xf32>
    %13 = arith.mulf %7, %12 : vector<512x128xf32>
    %c0_8 = arith.constant 0 : index
    %c0_9 = arith.constant 0 : index
    %14 = vector.load %arg4[%c0_8, %c0_9] : memref<128x128xf32, #tpu.memory_space<vmem>>, vector<128x128xf32>
    %cst_10 = arith.constant dense<0.000000e+00> : vector<512x128xf32>
    %15 = tpu.matmul %13, %14, %cst_10 {dimension_numbers = #tpu.dot_dimension_numbers<[1], [0], [0], [1], [0, 0, 1, 1], [], []>} : vector<512x128xf32>, vector<128x128xf32>, vector<512x128xf32> -> vector<512x128xf32>
    %c0_11 = arith.constant 0 : index
    %c0_12 = arith.constant 0 : index
    %16 = vector.load %arg5[%c0_11, %c0_12] : memref<1x128xf32, #tpu.memory_space<vmem>>, vector<1x128xf32>
    %17 = vector.broadcast %16 : vector<1x128xf32> to vector<512x128xf32>
    %18 = arith.addf %15, %17 : vector<512x128xf32>
    %cst_13 = arith.constant 5.000000e-01 : f32
    %19 = vector.broadcast %cst_13 : f32 to vector<512x128xf32>
    %20 = arith.mulf %19, %18 : vector<512x128xf32>
    %cst_14 = arith.constant 0.707106769 : f32
    %21 = vector.broadcast %cst_14 : f32 to vector<512x128xf32>
    %22 = arith.mulf %18, %21 : vector<512x128xf32>
    %23 = math.erf %22 : vector<512x128xf32>
    %cst_15 = arith.constant 1.000000e+00 : f32
    %24 = vector.broadcast %cst_15 : f32 to vector<512x128xf32>
    %25 = arith.addf %24, %23 : vector<512x128xf32>
    %26 = arith.mulf %20, %25 : vector<512x128xf32>
    %c0_16 = arith.constant 0 : index
    %c0_17 = arith.constant 0 : index
    %27 = vector.load %arg6[%c0_16, %c0_17] : memref<128x128xf32, #tpu.memory_space<vmem>>, vector<128x128xf32>
    %cst_18 = arith.constant dense<0.000000e+00> : vector<512x128xf32>
    %28 = tpu.matmul %26, %27, %cst_18 {dimension_numbers = #tpu.dot_dimension_numbers<[1], [0], [0], [1], [0, 0, 1, 1], [], []>} : vector<512x128xf32>, vector<128x128xf32>, vector<512x128xf32> -> vector<512x128xf32>
    %c0_19 = arith.constant 0 : index
    %c0_20 = arith.constant 0 : index
    %29 = vector.load %arg7[%c0_19, %c0_20] : memref<1x128xf32, #tpu.memory_space<vmem>>, vector<1x128xf32>
    %30 = vector.broadcast %29 : vector<1x128xf32> to vector<512x128xf32>
    %31 = arith.addf %28, %30 : vector<512x128xf32>
    %cst_21 = arith.constant dense<0.000000e+00> : vector<512xf32>
    %32 = vector.multi_reduction <add>, %31, %cst_21 [1] : vector<512x128xf32> to vector<512xf32>
    %33 = vector.shape_cast %32 : vector<512xf32> to vector<512x1xf32>
    %cst_22 = arith.constant 1.280000e+02 : f32
    %34 = vector.broadcast %cst_22 : f32 to vector<512x1xf32>
    %35 = arith.divf %33, %34 : vector<512x1xf32>
    %36 = vector.broadcast %35 : vector<512x1xf32> to vector<512x128xf32>
    %37 = arith.subf %31, %36 : vector<512x128xf32>
    %38 = arith.mulf %37, %37 : vector<512x128xf32>
    %cst_23 = arith.constant dense<0.000000e+00> : vector<512xf32>
    %39 = vector.multi_reduction <add>, %38, %cst_23 [1] : vector<512x128xf32> to vector<512xf32>
    %40 = vector.shape_cast %39 : vector<512xf32> to vector<512x1xf32>
    %cst_24 = arith.constant 1.280000e+02 : f32
    %41 = vector.broadcast %cst_24 : f32 to vector<512x1xf32>
    %42 = arith.divf %40, %41 : vector<512x1xf32>
    %cst_25 = arith.constant 9.99999974E-6 : f32
    %43 = vector.broadcast %cst_25 : f32 to vector<512x1xf32>
    %44 = arith.addf %42, %43 : vector<512x1xf32>
    %45 = math.rsqrt %44 : vector<512x1xf32>
    %46 = vector.broadcast %35 : vector<512x1xf32> to vector<512x128xf32>
    %47 = arith.subf %31, %46 : vector<512x128xf32>
    %48 = vector.broadcast %45 : vector<512x1xf32> to vector<512x128xf32>
    %49 = arith.mulf %47, %48 : vector<512x128xf32>
    %c0_26 = arith.constant 0 : index
    %c0_27 = arith.constant 0 : index
    %50 = vector.load %arg8[%c0_26, %c0_27] : memref<1x128xf32, #tpu.memory_space<vmem>>, vector<1x128xf32>
    %51 = vector.broadcast %50 : vector<1x128xf32> to vector<512x128xf32>
    %52 = arith.mulf %49, %51 : vector<512x128xf32>
    %c0_28 = arith.constant 0 : index
    %c0_29 = arith.constant 0 : index
    %53 = vector.load %arg9[%c0_28, %c0_29] : memref<1x128xf32, #tpu.memory_space<vmem>>, vector<1x128xf32>
    %54 = vector.broadcast %53 : vector<1x128xf32> to vector<512x128xf32>
    %55 = arith.addf %52, %54 : vector<512x128xf32>
    %c0_30 = arith.constant 0 : index
    %c0_31 = arith.constant 0 : index
    %56 = vector.load %arg10[%c0_30, %c0_31] : memref<512x128xf32, #tpu.memory_space<vmem>>, vector<512x128xf32>
    tpu.vector_store %arg10[%c0_30, %c0_31], %55 {strides = array<i32>} : memref<512x128xf32, #tpu.memory_space<vmem>>, vector<512x128xf32>,
    return
  }
  func.func @transform_0(%arg0: i32) -> (i32, i32) {
    %c0_i32 = arith.constant 0 : i32
    %c0_i32_0 = arith.constant 0 : i32
    return %arg0, %c0_i32 : i32, i32
  }
  func.func @transform_1(%arg0: i32) -> (i32, i32) {
    %c0_i32 = arith.constant 0 : i32
    %c0_i32_0 = arith.constant 0 : i32
    %c0_i32_1 = arith.constant 0 : i32
    return %c0_i32, %c0_i32_0 : i32, i32
  }
  func.func @transform_2(%arg0: i32) -> (i32, i32) {
    %c0_i32 = arith.constant 0 : i32
    %c0_i32_0 = arith.constant 0 : i32
    %c0_i32_1 = arith.constant 0 : i32
    return %c0_i32, %c0_i32_0 : i32, i32
  }
  func.func @transform_3(%arg0: i32) -> (i32, i32) {
    %c0_i32 = arith.constant 0 : i32
    %c0_i32_0 = arith.constant 0 : i32
    %c0_i32_1 = arith.constant 0 : i32
    return %c0_i32, %c0_i32_0 : i32, i32
  }
  func.func @transform_4(%arg0: i32) -> (i32, i32) {
    %c0_i32 = arith.constant 0 : i32
    %c0_i32_0 = arith.constant 0 : i32
    %c0_i32_1 = arith.constant 0 : i32
    return %c0_i32, %c0_i32_0 : i32, i32
  }
  func.func @transform_5(%arg0: i32) -> (i32, i32) {
    %c0_i32 = arith.constant 0 : i32
    %c0_i32_0 = arith.constant 0 : i32
    %c0_i32_1 = arith.constant 0 : i32
    return %c0_i32, %c0_i32_0 : i32, i32
  }
  func.func @transform_6(%arg0: i32) -> (i32, i32) {
    %c0_i32 = arith.constant 0 : i32
    %c0_i32_0 = arith.constant 0 : i32
    %c0_i32_1 = arith.constant 0 : i32
    return %c0_i32, %c0_i32_0 : i32, i32
  }
  func.func @transform_7(%arg0: i32) -> (i32, i32) {
    %c0_i32 = arith.constant 0 : i32
    %c0_i32_0 = arith.constant 0 : i32
    %c0_i32_1 = arith.constant 0 : i32
    return %c0_i32, %c0_i32_0 : i32, i32
  }
  func.func @transform_8(%arg0: i32) -> (i32, i32) {
    %c0_i32 = arith.constant 0 : i32
    %c0_i32_0 = arith.constant 0 : i32
    %c0_i32_1 = arith.constant 0 : i32
    return %c0_i32, %c0_i32_0 : i32, i32
  }
  func.func @transform_9(%arg0: i32) -> (i32, i32) {
    %c0_i32 = arith.constant 0 : i32
    %c0_i32_0 = arith.constant 0 : i32
    return %arg0, %c0_i32 : i32, i32
  }
}

</mosaic_0001>

<llo_original>
// kernel: gn_block_forward.2
$region0: #{gn_block_forward.2}
  #allocation0 [shape = 'u32[]', space=smem, size = 0x4, offset = 0x4, fixed_abs, tag = 'smem constant byte address 0x4 - core index']
  #allocation1 [shape = 'u32[144,128]{1,0:T(1,128)}', space=vmem, size = 0x12000, scoped, tag = 'internal scratch']
  %s0 = inlined_call_operand.vmem [shape: f32[1536,384], index: 0, kind: input, shape index: {}]
  %s1 = inlined_call_operand.vmem [shape: f32[384,128], index: 1, kind: input, shape index: {}]
  %s2 = inlined_call_operand.vmem [shape: f32[1,128], index: 2, kind: input, shape index: {}]
  %s3 = inlined_call_operand.vmem [shape: f32[128,128], index: 3, kind: input, shape index: {}]
  %s4 = inlined_call_operand.vmem [shape: f32[1,128], index: 4, kind: input, shape index: {}]
  %s5 = inlined_call_operand.vmem [shape: f32[128,128], index: 5, kind: input, shape index: {}]
  %s6 = inlined_call_operand.vmem [shape: f32[1,128], index: 6, kind: input, shape index: {}]
  %s7 = inlined_call_operand.vmem [shape: f32[1,128], index: 7, kind: input, shape index: {}]
  %s8 = inlined_call_operand.vmem [shape: f32[1,128], index: 8, kind: input, shape index: {}]
  %s9 = inlined_call_operand.vmem [shape: f32[1536,128], index: 9, kind: output, shape index: {}]
  %s10 = sld [smem:[#allocation0]]
  $region69: #{gn_block_forward.2} parent=0
    _
  %s12 = ssub.s32 1, %s10
  %s13 = scalar_select 0, %s12, %s10
  loop: start=0, step=1, limit=5
  $region2: #{gn_block_forward.2} parent=0 // loop_pre_header
    _
  $region3: #{gn_block_forward.2} parent=0 // loop_header
    %s15 = sphi 0, %s19
    %p16 = scmp.ge.s32.totalorder %s15, 5
    %s25 = sphi 0, %s27
    %s28 = sphi 0, %s25
    %s29 = sphi 0, %s28
    %s45 = sphi 0, %s29
    %s49 = sphi 0, %s49
    %s51 = sphi 0, %s49
    %s52 = sphi 0, %s51
    %s66 = sphi 0, %s52
    %s70 = sphi 0, %s70
    %s72 = sphi 0, %s70
    %s73 = sphi 0, %s72
    %s87 = sphi 0, %s73
    %s91 = sphi 0, %s91
    %s93 = sphi 0, %s91
    %s94 = sphi 0, %s93
    %s108 = sphi 0, %s94
    %s112 = sphi 0, %s112
    %s114 = sphi 0, %s112
    %s115 = sphi 0, %s114
    %s129 = sphi 0, %s115
    %s133 = sphi 0, %s133
    %s135 = sphi 0, %s133
    %s136 = sphi 0, %s135
    %s150 = sphi 0, %s136
    %s154 = sphi 0, %s154
    %s156 = sphi 0, %s154
    %s157 = sphi 0, %s156
    %s171 = sphi 0, %s157
    %s175 = sphi 0, %s175
    %s177 = sphi 0, %s175
    %s178 = sphi 0, %s177
    %s192 = sphi 0, %s178
    %s196 = sphi 0, %s196
    %s198 = sphi 0, %s196
    %s199 = sphi 0, %s198
    %s213 = sphi 0, %s199
    %s219 = sphi 0, %s221
    %s222 = sphi 0, %s219
    %s223 = sphi 0, %s222
    %s239 = sphi 0, %s223
  $region4: #{gn_block_forward.2} parent=0 // loop_header_branch
    %18 = sbr.rel (%p16) target = $region8
  $region5: #{gn_block_forward.2} parent=0 // loop_body
    %s20 = ssub.s32 %s15, 1
    %s21 = ssub.s32 %s15, 2
    %s22 = sadd.s32 %s15, 1
    %s23 = ssub.s32 %s15, %s22
    %p24 = scmp.eq.s32.totalorder %s23, 0
    %s26 = sadd.s32 %s25, 1
    %s27 = scalar_select %p24, %s25, %s26
    %p30 = pneg %p24
    %p31 = scmp.eq.s32.totalorder %s15, 2
    %p32 = por %p30, %p31
    %p33 = scmp.ne.s32.totalorder %s25, %s28
    %p34 = scmp.eq.s32.totalorder %s15, 0
    %p35 = por %p33, %p34
    %p36 = scmp.ne.s32.totalorder %s25, %s28
    %p37 = scmp.eq.s32.totalorder %s20, 2
    %p38 = por %p36, %p37
    %p39 = scmp.ne.s32.totalorder %s28, %s29
    %p40 = scmp.eq.s32.totalorder %s20, 0
    %p41 = por %p39, %p40
    %p42 = scmp.ne.s32.totalorder %s28, %s29
    %p43 = scmp.eq.s32.totalorder %s21, 2
    %p44 = por %p42, %p43
    %p46 = scmp.ne.s32.totalorder %s29, %s45
    %p47 = scmp.eq.s32.totalorder %s21, 0
    %p48 = por %p46, %p47
    %s50 = sadd.s32 %s49, 1
    %p53 = scmp.eq.s32.totalorder %s15, 2
    %p54 = scmp.ne.s32.totalorder %s49, %s51
    %p55 = scmp.eq.s32.totalorder %s15, 0
    %p56 = por %p54, %p55
    %p57 = scmp.ne.s32.totalorder %s49, %s51
    %p58 = scmp.eq.s32.totalorder %s20, 2
    %p59 = por %p57, %p58
    %p60 = scmp.ne.s32.totalorder %s51, %s52
    %p61 = scmp.eq.s32.totalorder %s20, 0
    %p62 = por %p60, %p61
    %p63 = scmp.ne.s32.totalorder %s51, %s52
    %p64 = scmp.eq.s32.totalorder %s21, 2
    %p65 = por %p63, %p64
    %p67 = scmp.ne.s32.totalorder %s52, %s66
    %p68 = scmp.eq.s32.totalorder %s21, 0
    %p69 = por %p67, %p68
    %s71 = sadd.s32 %s70, 1
    %p74 = scmp.eq.s32.totalorder %s15, 2
    %p75 = scmp.ne.s32.totalorder %s70, %s72
    %p76 = scmp.eq.s32.totalorder %s15, 0
    %p77 = por %p75, %p76
    %p78 = scmp.ne.s32.totalorder %s70, %s72
    %p79 = scmp.eq.s32.totalorder %s20, 2
    %p80 = por %p78, %p79
    %p81 = scmp.ne.s32.totalorder %s72, %s73
    %p82 = scmp.eq.s32.totalorder %s20, 0
    %p83 = por %p81, %p82
    %p84 = scmp.ne.s32.totalorder %s72, %s73
    %p85 = scmp.eq.s32.totalorder %s21, 2
    %p86 = por %p84, %p85
    %p88 = scmp.ne.s32.totalorder %s73, %s87
    %p89 = scmp.eq.s32.totalorder %s21, 0
    %p90 = por %p88, %p89
    %s92 = sadd.s32 %s91, 1
    %p95 = scmp.eq.s32.totalorder %s15, 2
    %p96 = scmp.ne.s32.totalorder %s91, %s93
    %p97 = scmp.eq.s32.totalorder %s15, 0
    %p98 = por %p96, %p97
    %p99 = scmp.ne.s32.totalorder %s91, %s93
    %p100 = scmp.eq.s32.totalorder %s20, 2
    %p101 = por %p99, %p100
    %p102 = scmp.ne.s32.totalorder %s93, %s94
    %p103 = scmp.eq.s32.totalorder %s20, 0
    %p104 = por %p102, %p103
    %p105 = scmp.ne.s32.totalorder %s93, %s94
    %p106 = scmp.eq.s32.totalorder %s21, 2
    %p107 = por %p105, %p106
    %p109 = scmp.ne.s32.totalorder %s94, %s108
    %p110 = scmp.eq.s32.totalorder %s21, 0
    %p111 = por %p109, %p110
    %s113 = sadd.s32 %s112, 1
    %p116 = scmp.eq.s32.totalorder %s15, 2
    %p117 = scmp.ne.s32.totalorder %s112, %s114
    %p118 = scmp.eq.s32.totalorder %s15, 0
    %p119 = por %p117, %p118
    %p120 = scmp.ne.s32.totalorder %s112, %s114
    %p121 = scmp.eq.s32.totalorder %s20, 2
    %p122 = por %p120, %p121
    %p123 = scmp.ne.s32.totalorder %s114, %s115
    %p124 = scmp.eq.s32.totalorder %s20, 0
    %p125 = por %p123, %p124
    %p126 = scmp.ne.s32.totalorder %s114, %s115
    %p127 = scmp.eq.s32.totalorder %s21, 2
    %p128 = por %p126, %p127
    %p130 = scmp.ne.s32.totalorder %s115, %s129
    %p131 = scmp.eq.s32.totalorder %s21, 0
    %p132 = por %p130, %p131
    %s134 = sadd.s32 %s133, 1
    %p137 = scmp.eq.s32.totalorder %s15, 2
    %p138 = scmp.ne.s32.totalorder %s133, %s135
    %p139 = scmp.eq.s32.totalorder %s15, 0
    %p140 = por %p138, %p139
    %p141 = scmp.ne.s32.totalorder %s133, %s135
    %p142 = scmp.eq.s32.totalorder %s20, 2
    %p143 = por %p141, %p142
    %p144 = scmp.ne.s32.totalorder %s135, %s136
    %p145 = scmp.eq.s32.totalorder %s20, 0
    %p146 = por %p144, %p145
    %p147 = scmp.ne.s32.totalorder %s135, %s136
    %p148 = scmp.eq.s32.totalorder %s21, 2
    %p149 = por %p147, %p148
    %p151 = scmp.ne.s32.totalorder %s136, %s150
    %p152 = scmp.eq.s32.totalorder %s21, 0
    %p153 = por %p151, %p152
    %s155 = sadd.s32 %s154, 1
    %p158 = scmp.eq.s32.totalorder %s15, 2
    %p159 = scmp.ne.s32.totalorder %s154, %s156
    %p160 = scmp.eq.s32.totalorder %s15, 0
    %p161 = por %p159, %p160
    %p162 = scmp.ne.s32.totalorder %s154, %s156
    %p163 = scmp.eq.s32.totalorder %s20, 2
    %p164 = por %p162, %p163
    %p165 = scmp.ne.s32.totalorder %s156, %s157
    %p166 = scmp.eq.s32.totalorder %s20, 0
    %p167 = por %p165, %p166
    %p168 = scmp.ne.s32.totalorder %s156, %s157
    %p169 = scmp.eq.s32.totalorder %s21, 2
    %p170 = por %p168, %p169
    %p172 = scmp.ne.s32.totalorder %s157, %s171
    %p173 = scmp.eq.s32.totalorder %s21, 0
    %p174 = por %p172, %p173
    %s176 = sadd.s32 %s175, 1
    %p179 = scmp.eq.s32.totalorder %s15, 2
    %p180 = scmp.ne.s32.totalorder %s175, %s177
    %p181 = scmp.eq.s32.totalorder %s15, 0
    %p182 = por %p180, %p181
    %p183 = scmp.ne.s32.totalorder %s175, %s177
    %p184 = scmp.eq.s32.totalorder %s20, 2
    %p185 = por %p183, %p184
    %p186 = scmp.ne.s32.totalorder %s177, %s178
    %p187 = scmp.eq.s32.totalorder %s20, 0
    %p188 = por %p186, %p187
    %p189 = scmp.ne.s32.totalorder %s177, %s178
    %p190 = scmp.eq.s32.totalorder %s21, 2
    %p191 = por %p189, %p190
    %p193 = scmp.ne.s32.totalorder %s178, %s192
    %p194 = scmp.eq.s32.totalorder %s21, 0
    %p195 = por %p193, %p194
    %s197 = sadd.s32 %s196, 1
    %p200 = scmp.eq.s32.totalorder %s15, 2
    %p201 = scmp.ne.s32.totalorder %s196, %s198
    %p202 = scmp.eq.s32.totalorder %s15, 0
    %p203 = por %p201, %p202
    %p204 = scmp.ne.s32.totalorder %s196, %s198
    %p205 = scmp.eq.s32.totalorder %s20, 2
    %p206 = por %p204, %p205
    %p207 = scmp.ne.s32.totalorder %s198, %s199
    %p208 = scmp.eq.s32.totalorder %s20, 0
    %p209 = por %p207, %p208
    %p210 = scmp.ne.s32.totalorder %s198, %s199
    %p211 = scmp.eq.s32.totalorder %s21, 2
    %p212 = por %p210, %p211
    %p214 = scmp.ne.s32.totalorder %s199, %s213
    %p215 = scmp.eq.s32.totalorder %s21, 0
    %p216 = por %p214, %p215
    %s217 = ssub.s32 %s15, %s22
    %p218 = scmp.eq.s32.totalorder %s217, 0
    %s220 = sadd.s32 %s219, 1
    %s221 = scalar_select %p218, %s219, %s220
    %p224 = pneg %p218
    %p225 = scmp.eq.s32.totalorder %s15, 2
    %p226 = por %p224, %p225
    %p227 = scmp.ne.s32.totalorder %s219, %s222
    %p228 = scmp.eq.s32.totalorder %s15, 0
    %p229 = por %p227, %p228
    %p230 = scmp.ne.s32.totalorder %s219, %s222
    %p231 = scmp.eq.s32.totalorder %s20, 2
    %p232 = por %p230, %p231
    %p233 = scmp.ne.s32.totalorder %s222, %s223
    %p234 = scmp.eq.s32.totalorder %s20, 0
    %p235 = por %p233, %p234
    %p236 = scmp.ne.s32.totalorder %s222, %s223
    %p237 = scmp.eq.s32.totalorder %s21, 2
    %p238 = por %p236, %p237
    %p240 = scmp.ne.s32.totalorder %s223, %s239
    %p241 = scmp.eq.s32.totalorder %s21, 0
    %p242 = por %p240, %p241
    %p243 = scmp.le.s32.totalorder 1, %s15
    %p244 = scmp.lt.s32.totalorder %s15, 4
    %p245 = pnand %p243, %p244
    %p246 = pneg %p245
    // Predicated region
    $region9: #{gn_block_forward.2} parent=5 // pred_check
      _
    $region10: #{gn_block_forward.2} parent=5 // pred_check_branch
      %248 = sbr.rel (%p245) target = $region12
    $region11: #{gn_block_forward.2} parent=5 // pred_region
      %s249 = ssub.s32 %s15, 1
      // Predicated region
      $region13: #{gn_block_forward.2} parent=11 // pred_check
        %p250 = pneg %p62
      $region14: #{gn_block_forward.2} parent=11 // pred_check_branch
        %252 = sbr.rel (%p250) target = $region16
      $region15: #{gn_block_forward.2} parent=11 // pred_region
        _
      $region16: #{gn_block_forward.2} parent=11 // pred_fallthru
        _
      // Predicated region
      $region17: #{gn_block_forward.2} parent=11 // pred_check
        %p253 = pneg %p83
      $region18: #{gn_block_forward.2} parent=11 // pred_check_branch
        %255 = sbr.rel (%p253) target = $region20
      $region19: #{gn_block_forward.2} parent=11 // pred_region
        _
      $region20: #{gn_block_forward.2} parent=11 // pred_fallthru
        _
      // Predicated region
      $region21: #{gn_block_forward.2} parent=11 // pred_check
        %p256 = pneg %p104
      $region22: #{gn_block_forward.2} parent=11 // pred_check_branch
        %258 = sbr.rel (%p256) target = $region24
      $region23: #{gn_block_forward.2} parent=11 // pred_region
        _
      $region24: #{gn_block_forward.2} parent=11 // pred_fallthru
        _
      // Predicated region
      $region25: #{gn_block_forward.2} parent=11 // pred_check
        %p259 = pneg %p125
      $region26: #{gn_block_forward.2} parent=11 // pred_check_branch
        %261 = sbr.rel (%p259) target = $region28
      $region27: #{gn_block_forward.2} parent=11 // pred_region
        _
      $region28: #{gn_block_forward.2} parent=11 // pred_fallthru
        _
      // Predicated region
      $region29: #{gn_block_forward.2} parent=11 // pred_check
        %p262 = pneg %p146
      $region30: #{gn_block_forward.2} parent=11 // pred_check_branch
        %264 = sbr.rel (%p262) target = $region32
      $region31: #{gn_block_forward.2} parent=11 // pred_region
        _
      $region32: #{gn_block_forward.2} parent=11 // pred_fallthru
        _
      // Predicated region
      $region33: #{gn_block_forward.2} parent=11 // pred_check
        %p265 = pneg %p167
      $region34: #{gn_block_forward.2} parent=11 // pred_check_branch
        %267 = sbr.rel (%p265) target = $region36
      $region35: #{gn_block_forward.2} parent=11 // pred_region
        _
      $region36: #{gn_block_forward.2} parent=11 // pred_fallthru
        _
      // Predicated region
      $region37: #{gn_block_forward.2} parent=11 // pred_check
        %p268 = pneg %p188
      $region38: #{gn_block_forward.2} parent=11 // pred_check_branch
        %270 = sbr.rel (%p268) target = $region40
      $region39: #{gn_block_forward.2} parent=11 // pred_region
        _
      $region40: #{gn_block_forward.2} parent=11 // pred_fallthru
        _
      // Predicated region
      $region41: #{gn_block_forward.2} parent=11 // pred_check
        %p271 = pneg %p209
      $region42: #{gn_block_forward.2} parent=11 // pred_check_branch
        %273 = sbr.rel (%p271) target = $region44
      $region43: #{gn_block_forward.2} parent=11 // pred_region
        _
      $region44: #{gn_block_forward.2} parent=11 // pred_fallthru
        _
    $region12: #{gn_block_forward.2} parent=5 // pred_fallthru
      _
    %p274 = scmp.lt.s32.totalorder %s15, 3
    // Predicated region
    $region45: #{gn_block_forward.2} parent=5 // pred_check
      %p275 = pneg %p274
    $region46: #{gn_block_forward.2} parent=5 // pred_check_branch
      %277 = sbr.rel (%p275) target = $region48
    $region47: #{gn_block_forward.2} parent=5 // pred_region
      // Predicated region
      $region49: #{gn_block_forward.2} parent=47 // pred_check
        %p278 = pneg %p35
      $region50: #{gn_block_forward.2} parent=47 // pred_check_branch
        %280 = sbr.rel (%p278) target = $region52
      $region51: #{gn_block_forward.2} parent=47 // pred_region
        %s281 = smul.u32 64, %s15
        %p282 = scmp.lt.s32.totalorder %s281, 191
        %s283 = scalar_select %p282, %s281, 191
        %s284 = smul.addr %s283, 3
        %s285 = smul.addr %s284, 8
        %s286 = scalar_lea.vmem %s0, %s285
        %s287 = smul.u32 64, %s15
      $region52: #{gn_block_forward.2} parent=47 // pred_fallthru
        _
    $region48: #{gn_block_forward.2} parent=5 // pred_fallthru
      _
    %p288 = scmp.le.s32.totalorder 1, %s15
    %p289 = scmp.lt.s32.totalorder %s15, 4
    %p290 = pnand %p288, %p289
    %p291 = pneg %p290
    // Predicated region
    $region53: #{gn_block_forward.2} parent=5 // pred_check
      _
    $region54: #{gn_block_forward.2} parent=5 // pred_check_branch
      %293 = sbr.rel (%p290) target = $region56
    $region55: #{gn_block_forward.2} parent=5 // pred_region
      %s294 = ssub.s32 %s15, 1
      %s295 = smul.u32 64, %s20
      %p296 = scmp.lt.s32.totalorder %s295, 191
      %s297 = scalar_select %p296, %s295, 191
      %s298 = smul.addr %s297, 3
      %s299 = smul.addr %s298, 8
      %s300 = scalar_lea.vmem %s0, %s299
      %p301 = pneg %p41
      %p302 = pneg %p38
      %p303 = pneg %p62
      %p304 = pneg %p59
      %p305 = pneg %p83
      %p306 = pneg %p80
      %p307 = pneg %p104
      %p308 = pneg %p101
      %p309 = pneg %p125
      %p310 = pneg %p122
      %p311 = pneg %p146
      %p312 = pneg %p143
      %p313 = pneg %p167
      %p314 = pneg %p164
      %p315 = pneg %p188
      %p316 = pneg %p185
      %p317 = pneg %p209
      %p318 = pneg %p206
      %p319 = pneg %p235
      %p320 = pneg %p232
      %s321 = smul.u32 64, %s20
      %p322 = scmp.lt.s32.totalorder %s321, 191
      %s323 = scalar_select %p322, %s321, 191
      %s324 = smul.addr %s323, 8
      %s325 = scalar_lea.vmem %s9, %s324
      %s326 = smul.u32 64, %s20
      %p327 = scmp.lt.s32.totalorder %s326, 191
      %s328 = scalar_select %p327, %s326, 191
      %s329 = smul.addr %s328, 3
      %s330 = smul.addr %s329, 8
      %s331 = scalar_lea.vmem %s0, %s330
      %s332 = smul.u32 64, %s20
      %s333 = smul.u32 64, %s20
      %p334 = scmp.lt.s32.totalorder %s333, 191
      %s335 = scalar_select %p334, %s333, 191
      %s336 = smul.addr %s335, 8
      %s337 = scalar_lea.vmem %s9, %s336
      %s338 = smul.u32 64, %s20
      %v339 = vld [vmem:[%s331] sm:$0xff]
      %v340 = vld [vmem:[%s331 + $0x8] sm:$0xff]
      %v341 = vld [vmem:[%s331 + $0x10] sm:$0xff]
      %v342 = vld [vmem:[%s331 + $0x18] sm:$0xff]
      %v343 = vld [vmem:[%s331 + $0x20] sm:$0xff]
      %v344 = vld [vmem:[%s331 + $0x28] sm:$0xff]
      %v345 = vld [vmem:[%s331 + $0x30] sm:$0xff]
      %v346 = vld [vmem:[%s331 + $0x38] sm:$0xff]
      %v347 = vld [vmem:[%s331 + $0x40] sm:$0xff]
      %v348 = vld [vmem:[%s331 + $0x48] sm:$0xff]
      %v349 = vld [vmem:[%s331 + $0x50] sm:$0xff]
      %v350 = vld [vmem:[%s331 + $0x58] sm:$0xff]
      %v351 = vld [vmem:[%s331 + $0x60] sm:$0xff]
      %v352 = vld [vmem:[%s331 + $0x68] sm:$0xff]
      %v353 = vld [vmem:[%s331 + $0x70] sm:$0xff]
      %v354 = vld [vmem:[%s331 + $0x78] sm:$0xff]
      %v355 = vld [vmem:[%s331 + $0x80] sm:$0xff]
      %v356 = vld [vmem:[%s331 + $0x88] sm:$0xff]
      %v357 = vld [vmem:[%s331 + $0x90] sm:$0xff]
      %v358 = vld [vmem:[%s331 + $0x98] sm:$0xff]
      %v359 = vld [vmem:[%s331 + $0xa0] sm:$0xff]
      %v360 = vld [vmem:[%s331 + $0xa8] sm:$0xff]
      %v361 = vld [vmem:[%s331 + $0xb0] sm:$0xff]
      %v362 = vld [vmem:[%s331 + $0xb8] sm:$0xff]
      %v363 = vld [vmem:[%s331 + $0xc0] sm:$0xff]
      %v364 = vld [vmem:[%s331 + $0xc8] sm:$0xff]
      %v365 = vld [vmem:[%s331 + $0xd0] sm:$0xff]
      %v366 = vld [vmem:[%s331 + $0xd8] sm:$0xff]
      %v367 = vld [vmem:[%s331 + $0xe0] sm:$0xff]
      %v368 = vld [vmem:[%s331 + $0xe8] sm:$0xff]
      %v369 = vld [vmem:[%s331 + $0xf0] sm:$0xff]
      %v370 = vld [vmem:[%s331 + $0xf8] sm:$0xff]
      %v371 = vld [vmem:[%s331 + $0x100] sm:$0xff]
      %v372 = vld [vmem:[%s331 + $0x108] sm:$0xff]
      %v373 = vld [vmem:[%s331 + $0x110] sm:$0xff]
      %v374 = vld [vmem:[%s331 + $0x118] sm:$0xff]
      %v375 = vld [vmem:[%s331 + $0x120] sm:$0xff]
      %v376 = vld [vmem:[%s331 + $0x128] sm:$0xff]
      %v377 = vld [vmem:[%s331 + $0x130] sm:$0xff]
      %v378 = vld [vmem:[%s331 + $0x138] sm:$0xff]
      %v379 = vld [vmem:[%s331 + $0x140] sm:$0xff]
      %v380 = vld [vmem:[%s331 + $0x148] sm:$0xff]
      %v381 = vld [vmem:[%s331 + $0x150] sm:$0xff]
      %v382 = vld [vmem:[%s331 + $0x158] sm:$0xff]
      %v383 = vld [vmem:[%s331 + $0x160] sm:$0xff]
      %v384 = vld [vmem:[%s331 + $0x168] sm:$0xff]
      %v385 = vld [vmem:[%s331 + $0x170] sm:$0xff]
      %v386 = vld [vmem:[%s331 + $0x178] sm:$0xff]
      %v387 = vld [vmem:[%s331 + $0x180] sm:$0xff]
      %v388 = vld [vmem:[%s331 + $0x188] sm:$0xff]
      %v389 = vld [vmem:[%s331 + $0x190] sm:$0xff]
      %v390 = vld [vmem:[%s331 + $0x198] sm:$0xff]
      %v391 = vld [vmem:[%s331 + $0x1a0] sm:$0xff]
      %v392 = vld [vmem:[%s331 + $0x1a8] sm:$0xff]
      %v393 = vld [vmem:[%s331 + $0x1b0] sm:$0xff]
      %v394 = vld [vmem:[%s331 + $0x1b8] sm:$0xff]
      %v395 = vld [vmem:[%s331 + $0x1c0] sm:$0xff]
      %v396 = vld [vmem:[%s331 + $0x1c8] sm:$0xff]
      %v397 = vld [vmem:[%s331 + $0x1d0] sm:$0xff]
      %v398 = vld [vmem:[%s331 + $0x1d8] sm:$0xff]
      %v399 = vld [vmem:[%s331 + $0x1e0] sm:$0xff]
      %v400 = vld [vmem:[%s331 + $0x1e8] sm:$0xff]
      %v401 = vld [vmem:[%s331 + $0x1f0] sm:$0xff]
      %v402 = vld [vmem:[%s331 + $0x1f8] sm:$0xff]
      %v403 = vld [vmem:[%s331 + $0x200] sm:$0xff]
      %v404 = vld [vmem:[%s331 + $0x208] sm:$0xff]
      %v405 = vld [vmem:[%s331 + $0x210] sm:$0xff]
      %v406 = vld [vmem:[%s331 + $0x218] sm:$0xff]
      %v407 = vld [vmem:[%s331 + $0x220] sm:$0xff]
      %v408 = vld [vmem:[%s331 + $0x228] sm:$0xff]
      %v409 = vld [vmem:[%s331 + $0x230] sm:$0xff]
      %v410 = vld [vmem:[%s331 + $0x238] sm:$0xff]
      %v411 = vld [vmem:[%s331 + $0x240] sm:$0xff]
      %v412 = vld [vmem:[%s331 + $0x248] sm:$0xff]
      %v413 = vld [vmem:[%s331 + $0x250] sm:$0xff]
      %v414 = vld [vmem:[%s331 + $0x258] sm:$0xff]
      %v415 = vld [vmem:[%s331 + $0x260] sm:$0xff]
      %v416 = vld [vmem:[%s331 + $0x268] sm:$0xff]
      %v417 = vld [vmem:[%s331 + $0x270] sm:$0xff]
      %v418 = vld [vmem:[%s331 + $0x278] sm:$0xff]
      %v419 = vld [vmem:[%s331 + $0x280] sm:$0xff]
      %v420 = vld [vmem:[%s331 + $0x288] sm:$0xff]
      %v421 = vld [vmem:[%s331 + $0x290] sm:$0xff]
      %v422 = vld [vmem:[%s331 + $0x298] sm:$0xff]
      %v423 = vld [vmem:[%s331 + $0x2a0] sm:$0xff]
      %v424 = vld [vmem:[%s331 + $0x2a8] sm:$0xff]
      %v425 = vld [vmem:[%s331 + $0x2b0] sm:$0xff]
      %v426 = vld [vmem:[%s331 + $0x2b8] sm:$0xff]
      %v427 = vld [vmem:[%s331 + $0x2c0] sm:$0xff]
      %v428 = vld [vmem:[%s331 + $0x2c8] sm:$0xff]
      %v429 = vld [vmem:[%s331 + $0x2d0] sm:$0xff]
      %v430 = vld [vmem:[%s331 + $0x2d8] sm:$0xff]
      %v431 = vld [vmem:[%s331 + $0x2e0] sm:$0xff]
      %v432 = vld [vmem:[%s331 + $0x2e8] sm:$0xff]
      %v433 = vld [vmem:[%s331 + $0x2f0] sm:$0xff]
      %v434 = vld [vmem:[%s331 + $0x2f8] sm:$0xff]
      %v435 = vld [vmem:[%s331 + $0x300] sm:$0xff]
      %v436 = vld [vmem:[%s331 + $0x308] sm:$0xff]
      %v437 = vld [vmem:[%s331 + $0x310] sm:$0xff]
      %v438 = vld [vmem:[%s331 + $0x318] sm:$0xff]
      %v439 = vld [vmem:[%s331 + $0x320] sm:$0xff]
      %v440 = vld [vmem:[%s331 + $0x328] sm:$0xff]
      %v441 = vld [vmem:[%s331 + $0x330] sm:$0xff]
      %v442 = vld [vmem:[%s331 + $0x338] sm:$0xff]
      %v443 = vld [vmem:[%s331 + $0x340] sm:$0xff]
      %v444 = vld [vmem:[%s331 + $0x348] sm:$0xff]
      %v445 = vld [vmem:[%s331 + $0x350] sm:$0xff]
      %v446 = vld [vmem:[%s331 + $0x358] sm:$0xff]
      %v447 = vld [vmem:[%s331 + $0x360] sm:$0xff]
      %v448 = vld [vmem:[%s331 + $0x368] sm:$0xff]
      %v449 = vld [vmem:[%s331 + $0x370] sm:$0xff]
      %v450 = vld [vmem:[%s331 + $0x378] sm:$0xff]
      %v451 = vld [vmem:[%s331 + $0x380] sm:$0xff]
      %v452 = vld [vmem:[%s331 + $0x388] sm:$0xff]
      %v453 = vld [vmem:[%s331 + $0x390] sm:$0xff]
      %v454 = vld [vmem:[%s331 + $0x398] sm:$0xff]
      %v455 = vld [vmem:[%s331 + $0x3a0] sm:$0xff]
      %v456 = vld [vmem:[%s331 + $0x3a8] sm:$0xff]
      %v457 = vld [vmem:[%s331 + $0x3b0] sm:$0xff]
      %v458 = vld [vmem:[%s331 + $0x3b8] sm:$0xff]
      %v459 = vld [vmem:[%s331 + $0x3c0] sm:$0xff]
      %v460 = vld [vmem:[%s331 + $0x3c8] sm:$0xff]
      %v461 = vld [vmem:[%s331 + $0x3d0] sm:$0xff]
      %v462 = vld [vmem:[%s331 + $0x3d8] sm:$0xff]
      %v463 = vld [vmem:[%s331 + $0x3e0] sm:$0xff]
      %v464 = vld [vmem:[%s331 + $0x3e8] sm:$0xff]
      %v465 = vld [vmem:[%s331 + $0x3f0] sm:$0xff]
      %v466 = vld [vmem:[%s331 + $0x3f8] sm:$0xff]
      %v467 = vld [vmem:[%s331 + $0x400] sm:$0xff]
      %v468 = vld [vmem:[%s331 + $0x408] sm:$0xff]
      %v469 = vld [vmem:[%s331 + $0x410] sm:$0xff]
      %v470 = vld [vmem:[%s331 + $0x418] sm:$0xff]
      %v471 = vld [vmem:[%s331 + $0x420] sm:$0xff]
      %v472 = vld [vmem:[%s331 + $0x428] sm:$0xff]
      %v473 = vld [vmem:[%s331 + $0x430] sm:$0xff]
      %v474 = vld [vmem:[%s331 + $0x438] sm:$0xff]
      %v475 = vld [vmem:[%s331 + $0x440] sm:$0xff]
      %v476 = vld [vmem:[%s331 + $0x448] sm:$0xff]
      %v477 = vld [vmem:[%s331 + $0x450] sm:$0xff]
      %v478 = vld [vmem:[%s331 + $0x458] sm:$0xff]
      %v479 = vld [vmem:[%s331 + $0x460] sm:$0xff]
      %v480 = vld [vmem:[%s331 + $0x468] sm:$0xff]
      %v481 = vld [vmem:[%s331 + $0x470] sm:$0xff]
      %v482 = vld [vmem:[%s331 + $0x478] sm:$0xff]
      %v483 = vld [vmem:[%s331 + $0x480] sm:$0xff]
      %v484 = vld [vmem:[%s331 + $0x488] sm:$0xff]
      %v485 = vld [vmem:[%s331 + $0x490] sm:$0xff]
      %v486 = vld [vmem:[%s331 + $0x498] sm:$0xff]
      %v487 = vld [vmem:[%s331 + $0x4a0] sm:$0xff]
      %v488 = vld [vmem:[%s331 + $0x4a8] sm:$0xff]
      %v489 = vld [vmem:[%s331 + $0x4b0] sm:$0xff]
      %v490 = vld [vmem:[%s331 + $0x4b8] sm:$0xff]
      %v491 = vld [vmem:[%s331 + $0x4c0] sm:$0xff]
      %v492 = vld [vmem:[%s331 + $0x4c8] sm:$0xff]
      %v493 = vld [vmem:[%s331 + $0x4d0] sm:$0xff]
      %v494 = vld [vmem:[%s331 + $0x4d8] sm:$0xff]
      %v495 = vld [vmem:[%s331 + $0x4e0] sm:$0xff]
      %v496 = vld [vmem:[%s331 + $0x4e8] sm:$0xff]
      %v497 = vld [vmem:[%s331 + $0x4f0] sm:$0xff]
      %v498 = vld [vmem:[%s331 + $0x4f8] sm:$0xff]
      %v499 = vld [vmem:[%s331 + $0x500] sm:$0xff]
      %v500 = vld [vmem:[%s331 + $0x508] sm:$0xff]
      %v501 = vld [vmem:[%s331 + $0x510] sm:$0xff]
      %v502 = vld [vmem:[%s331 + $0x518] sm:$0xff]
      %v503 = vld [vmem:[%s331 + $0x520] sm:$0xff]
      %v504 = vld [vmem:[%s331 + $0x528] sm:$0xff]
      %v505 = vld [vmem:[%s331 + $0x530] sm:$0xff]
      %v506 = vld [vmem:[%s331 + $0x538] sm:$0xff]
      %v507 = vld [vmem:[%s331 + $0x540] sm:$0xff]
      %v508 = vld [vmem:[%s331 + $0x548] sm:$0xff]
      %v509 = vld [vmem:[%s331 + $0x550] sm:$0xff]
      %v510 = vld [vmem:[%s331 + $0x558] sm:$0xff]
      %v511 = vld [vmem:[%s331 + $0x560] sm:$0xff]
      %v512 = vld [vmem:[%s331 + $0x568] sm:$0xff]
      %v513 = vld [vmem:[%s331 + $0x570] sm:$0xff]
      %v514 = vld [vmem:[%s331 + $0x578] sm:$0xff]
      %v515 = vld [vmem:[%s331 + $0x580] sm:$0xff]
      %v516 = vld [vmem:[%s331 + $0x588] sm:$0xff]
      %v517 = vld [vmem:[%s331 + $0x590] sm:$0xff]
      %v518 = vld [vmem:[%s331 + $0x598] sm:$0xff]
      %v519 = vld [vmem:[%s331 + $0x5a0] sm:$0xff]
      %v520 = vld [vmem:[%s331 + $0x5a8] sm:$0xff]
      %v521 = vld [vmem:[%s331 + $0x5b0] sm:$0xff]
      %v522 = vld [vmem:[%s331 + $0x5b8] sm:$0xff]
      %v523 = vld [vmem:[%s331 + $0x5c0] sm:$0xff]
      %v524 = vld [vmem:[%s331 + $0x5c8] sm:$0xff]
      %v525 = vld [vmem:[%s331 + $0x5d0] sm:$0xff]
      %v526 = vld [vmem:[%s331 + $0x5d8] sm:$0xff]
      %v527 = vld [vmem:[%s331 + $0x5e0] sm:$0xff]
      %v528 = vld [vmem:[%s331 + $0x5e8] sm:$0xff]
      %v529 = vld [vmem:[%s331 + $0x5f0] sm:$0xff]
      %v530 = vld [vmem:[%s331 + $0x5f8] sm:$0xff]
      %v531 = vld [vmem:[%s1] sm:$0xff]
      %v532 = vld [vmem:[%s1 + $0x8] sm:$0xff]
      %v533 = vld [vmem:[%s1 + $0x10] sm:$0xff]
      %v534 = vld [vmem:[%s1 + $0x18] sm:$0xff]
      %v535 = vld [vmem:[%s1 + $0x20] sm:$0xff]
      %v536 = vld [vmem:[%s1 + $0x28] sm:$0xff]
      %v537 = vld [vmem:[%s1 + $0x30] sm:$0xff]
      %v538 = vld [vmem:[%s1 + $0x38] sm:$0xff]
      %v539 = vld [vmem:[%s1 + $0x40] sm:$0xff]
      %v540 = vld [vmem:[%s1 + $0x48] sm:$0xff]
      %v541 = vld [vmem:[%s1 + $0x50] sm:$0xff]
      %v542 = vld [vmem:[%s1 + $0x58] sm:$0xff]
      %v543 = vld [vmem:[%s1 + $0x60] sm:$0xff]
      %v544 = vld [vmem:[%s1 + $0x68] sm:$0xff]
      %v545 = vld [vmem:[%s1 + $0x70] sm:$0xff]
      %v546 = vld [vmem:[%s1 + $0x78] sm:$0xff]
      %v547 = vld [vmem:[%s1 + $0x80] sm:$0xff]
      %v548 = vld [vmem:[%s1 + $0x88] sm:$0xff]
      %v549 = vld [vmem:[%s1 + $0x90] sm:$0xff]
      %v550 = vld [vmem:[%s1 + $0x98] sm:$0xff]
      %v551 = vld [vmem:[%s1 + $0xa0] sm:$0xff]
      %v552 = vld [vmem:[%s1 + $0xa8] sm:$0xff]
      %v553 = vld [vmem:[%s1 + $0xb0] sm:$0xff]
      %v554 = vld [vmem:[%s1 + $0xb8] sm:$0xff]
      %v555 = vld [vmem:[%s1 + $0xc0] sm:$0xff]
      %v556 = vld [vmem:[%s1 + $0xc8] sm:$0xff]
      %v557 = vld [vmem:[%s1 + $0xd0] sm:$0xff]
      %v558 = vld [vmem:[%s1 + $0xd8] sm:$0xff]
      %v559 = vld [vmem:[%s1 + $0xe0] sm:$0xff]
      %v560 = vld [vmem:[%s1 + $0xe8] sm:$0xff]
      %v561 = vld [vmem:[%s1 + $0xf0] sm:$0xff]
      %v562 = vld [vmem:[%s1 + $0xf8] sm:$0xff]
      %v563 = vld [vmem:[%s1 + $0x100] sm:$0xff]
      %v564 = vld [vmem:[%s1 + $0x108] sm:$0xff]
      %v565 = vld [vmem:[%s1 + $0x110] sm:$0xff]
      %v566 = vld [vmem:[%s1 + $0x118] sm:$0xff]
      %v567 = vld [vmem:[%s1 + $0x120] sm:$0xff]
      %v568 = vld [vmem:[%s1 + $0x128] sm:$0xff]
      %v569 = vld [vmem:[%s1 + $0x130] sm:$0xff]
      %v570 = vld [vmem:[%s1 + $0x138] sm:$0xff]
      %v571 = vld [vmem:[%s1 + $0x140] sm:$0xff]
      %v572 = vld [vmem:[%s1 + $0x148] sm:$0xff]
      %v573 = vld [vmem:[%s1 + $0x150] sm:$0xff]
      %v574 = vld [vmem:[%s1 + $0x158] sm:$0xff]
      %v575 = vld [vmem:[%s1 + $0x160] sm:$0xff]
      %v576 = vld [vmem:[%s1 + $0x168] sm:$0xff]
      %v577 = vld [vmem:[%s1 + $0x170] sm:$0xff]
      %v578 = vld [vmem:[%s1 + $0x178] sm:$0xff]
      %v579 = vld [vmem:[%s2] sm:$0x1]
      %v581 = vlaneseq
      %v582 = vshrl.u32 %v581, 7
      %v583 = vsub.s32 0, %v582
      %v584 = vrot.slane %v579, %v583
      %586 = vmatprep.subr.mxu0 0.0
      %587 = vmatpush1.msra.mxu0 %v531
      %588 = vmatprep.subr.mxu0 0.0
      %589 = vmatpush1.msra.mxu0 %v532
      %590 = vmatprep.subr.mxu0 0.0
      %591 = vmatpush1.msra.mxu0 %v533
      %592 = vmatprep.subr.mxu0 0.0
      %593 = vmatpush1.msra.mxu0 %v534
      %594 = vmatprep.subr.mxu0 0.0
      %595 = vmatpush1.msra.mxu0 %v535
      %596 = vmatprep.subr.mxu0 0.0
      %597 = vmatpush1.msra.mxu0 %v536
      %598 = vmatprep.subr.mxu0 0.0
      %599 = vmatpush1.msra.mxu0 %v537
      %600 = vmatprep.subr.mxu0 0.0
      %601 = vmatpush1.msra.mxu0 %v538
      %602 = vmatprep.subr.mxu0 0.0
      %603 = vmatpush1.msra.mxu0 %v539
      %604 = vmatprep.subr.mxu0 0.0
      %605 = vmatpush1.msra.mxu0 %v540
      %606 = vmatprep.subr.mxu0 0.0
      %607 = vmatpush1.msra.mxu0 %v541
      %608 = vmatprep.subr.mxu0 0.0
      %609 = vmatpush1.msra.mxu0 %v542
      %610 = vmatprep.subr.mxu0 0.0
      %611 = vmatpush1.msra.mxu0 %v543
      %612 = vmatprep.subr.mxu0 0.0
      %613 = vmatpush1.msra.mxu0 %v544
      %614 = vmatprep.subr.mxu0 0.0
      %615 = vmatpush1.msra.mxu0 %v545
      %616 = vmatprep.subr.mxu0 0.0
      %617 = vmatpush1.msra.mxu0 %v546
      %618 = vmatprep.subr.mxu0 0.0
      %619 = vmatpush1.msra.mxu0 %v547
      %620 = vmatprep.subr.mxu0 0.0
      %621 = vmatpush1.msra.mxu0 %v548
      %622 = vmatprep.subr.mxu0 0.0
      %623 = vmatpush1.msra.mxu0 %v549
      %624 = vmatprep.subr.mxu0 0.0
      %625 = vmatpush1.msra.mxu0 %v550
      %626 = vmatprep.subr.mxu0 0.0
      %627 = vmatpush1.msra.mxu0 %v551
      %628 = vmatprep.subr.mxu0 0.0
      %629 = vmatpush1.msra.mxu0 %v552
      %630 = vmatprep.subr.mxu0 0.0
      %631 = vmatpush1.msra.mxu0 %v553
      %632 = vmatprep.subr.mxu0 0.0
      %633 = vmatpush1.msra.mxu0 %v554
      %634 = vmatprep.subr.mxu0 0.0
      %635 = vmatpush1.msra.mxu0 %v555
      %636 = vmatprep.subr.mxu0 0.0
      %637 = vmatpush1.msra.mxu0 %v556
      %638 = vmatprep.subr.mxu0 0.0
      %639 = vmatpush1.msra.mxu0 %v557
      %640 = vmatprep.subr.mxu0 0.0
      %641 = vmatpush1.msra.mxu0 %v558
      %642 = vmatprep.subr.mxu0 0.0
      %643 = vmatpush1.msra.mxu0 %v559
      %644 = vmatprep.subr.mxu0 0.0
      %645 = vmatpush1.msra.mxu0 %v560
      %646 = vmatprep.subr.mxu0 0.0
      %647 = vmatpush1.msra.mxu0 %v561
      %648 = vmatprep.subr.mxu0 0.0
      %649 = vmatpush1.msra.mxu0 %v562
      %650 = vmatprep.mubr.f32.mxu0 %v340
      %651 = vmatmul.mubr.f32.gmra.mrb[0].mxu0 %v339
      %v652 = vpop.f32.mrb[0].mxu0
      %v653 = vadd.f32 %v584, %v652
      %v654 = vpop.f32.mrb[0].mxu0
      %655 = vmatprep.mubr.f32.mxu0 %v343
      %656 = vmatmul.mubr.f32.gmra.mrb[0].mxu0 %v342
      %v657 = vpop.f32.mrb[0].mxu0
      %v658 = vadd.f32 %v584, %v657
      %v659 = vpop.f32.mrb[0].mxu0
      %660 = vmatprep.mubr.f32.mxu0 %v346
      %661 = vmatmul.mubr.f32.gmra.mrb[0].mxu0 %v345
      %v662 = vpop.f32.mrb[0].mxu0
      %v663 = vadd.f32 %v584, %v662
      %v664 = vpop.f32.mrb[0].mxu0
      %665 = vmatprep.mubr.f32.mxu0 %v349
      %666 = vmatmul.mubr.f32.gmra.mrb[0].mxu0 %v348
      %v667 = vpop.f32.mrb[0].mxu0
      %v668 = vadd.f32 %v584, %v667
      %v669 = vpop.f32.mrb[0].mxu0
      %670 = vmatprep.mubr.f32.mxu0 %v352
      %671 = vmatmul.mubr.f32.gmra.mrb[0].mxu0 %v351
      %v672 = vpop.f32.mrb[0].mxu0
      %v673 = vadd.f32 %v584, %v672
      %v674 = vpop.f32.mrb[0].mxu0
      %675 = vmatprep.mubr.f32.mxu0 %v355
      %676 = vmatmul.mubr.f32.gmra.mrb[0].mxu0 %v354
      %v677 = vpop.f32.mrb[0].mxu0
      %v678 = vadd.f32 %v584, %v677
      %v679 = vpop.f32.mrb[0].mxu0
      %680 = vmatprep.mubr.f32.mxu0 %v358
      %681 = vmatmul.mubr.f32.gmra.mrb[0].mxu0 %v357
      %v682 = vpop.f32.mrb[0].mxu0
      %v683 = vadd.f32 %v584, %v682
      %v684 = vpop.f32.mrb[0].mxu0
      %685 = vmatprep.mubr.f32.mxu0 %v361
      %686 = vmatmul.mubr.f32.gmra.mrb[0].mxu0 %v360
      %v687 = vpop.f32.mrb[0].mxu0
      %v688 = vadd.f32 %v584, %v687
      %v689 = vpop.f32.mrb[0].mxu0
      %690 = vmatprep.mubr.f32.mxu0 %v364
      %691 = vmatmul.mubr.f32.gmra.mrb[0].mxu0 %v363
      %v692 = vpop.f32.mrb[0].mxu0
      %v693 = vadd.f32 %v584, %v692
      %v694 = vpop.f32.mrb[0].mxu0
      %695 = vmatprep.mubr.f32.mxu0 %v367
      %696 = vmatmul.mubr.f32.gmra.mrb[0].mxu0 %v366
      %v697 = vpop.f32.mrb[0].mxu0
      %v698 = vadd.f32 %v584, %v697
      %v699 = vpop.f32.mrb[0].mxu0
      %700 = vmatprep.mubr.f32.mxu0 %v370
      %701 = vmatmul.mubr.f32.gmra.mrb[0].mxu0 %v369
      %v702 = vpop.f32.mrb[0].mxu0
      %v703 = vadd.f32 %v584, %v702
      %v704 = vpop.f32.mrb[0].mxu0
      %705 = vmatprep.mubr.f32.mxu0 %v373
      %706 = vmatmul.mubr.f32.gmra.mrb[0].mxu0 %v372
      %v707 = vpop.f32.mrb[0].mxu0
      %v708 = vadd.f32 %v584, %v707
      %v709 = vpop.f32.mrb[0].mxu0
      %710 = vmatprep.mubr.f32.mxu0 %v376
      %711 = vmatmul.mubr.f32.gmra.mrb[0].mxu0 %v375
      %v712 = vpop.f32.mrb[0].mxu0
      %v713 = vadd.f32 %v584, %v712
      %v714 = vpop.f32.mrb[0].mxu0
      %715 = vmatprep.mubr.f32.mxu0 %v379
      %716 = vmatmul.mubr.f32.gmra.mrb[0].mxu0 %v378
      %v717 = vpop.f32.mrb[0].mxu0
      %v718 = vadd.f32 %v584, %v717
      %v719 = vpop.f32.mrb[0].mxu0
      %720 = vmatprep.mubr.f32.mxu0 %v382
      %721 = vmatmul.mubr.f32.gmra.mrb[0].mxu0 %v381
      %v722 = vpop.f32.mrb[0].mxu0
      %v723 = vadd.f32 %v584, %v722
      %v724 = vpop.f32.mrb[0].mxu0
      %725 = vmatprep.mubr.f32.mxu0 %v385
      %726 = vmatmul.mubr.f32.gmra.mrb[0].mxu0 %v384
      %v727 = vpop.f32.mrb[0].mxu0
      %v728 = vadd.f32 %v584, %v727
      %v729 = vpop.f32.mrb[0].mxu0
      %730 = vmatprep.mubr.f32.mxu0 %v388
      %731 = vmatmul.mubr.f32.gmra.mrb[0].mxu0 %v387
      %v732 = vpop.f32.mrb[0].mxu0
      %v733 = vadd.f32 %v584, %v732
      %v734 = vpop.f32.mrb[0].mxu0
      %735 = vmatprep.mubr.f32.mxu0 %v391
      %736 = vmatmul.mubr.f32.gmra.mrb[0].mxu0 %v390
      %v737 = vpop.f32.mrb[0].mxu0
      %v738 = vadd.f32 %v584, %v737
      %v739 = vpop.f32.mrb[0].mxu0
      %740 = vmatprep.mubr.f32.mxu0 %v394
      %741 = vmatmul.mubr.f32.gmra.mrb[0].mxu0 %v393
      %v742 = vpop.f32.mrb[0].mxu0
      %v743 = vadd.f32 %v584, %v742
      %v744 = vpop.f32.mrb[0].mxu0
      %745 = vmatprep.mubr.f32.mxu0 %v397
      %746 = vmatmul.mubr.f32.gmra.mrb[0].mxu0 %v396
      %v747 = vpop.f32.mrb[0].mxu0
      %v748 = vadd.f32 %v584, %v747
      %v749 = vpop.f32.mrb[0].mxu0
      %750 = vmatprep.mubr.f32.mxu0 %v400
      %751 = vmatmul.mubr.f32.gmra.mrb[0].mxu0 %v399
      %v752 = vpop.f32.mrb[0].mxu0
      %v753 = vadd.f32 %v584, %v752
      %v754 = vpop.f32.mrb[0].mxu0
      %755 = vmatprep.mubr.f32.mxu0 %v403
      %756 = vmatmul.mubr.f32.gmra.mrb[0].mxu0 %v402
      %v757 = vpop.f32.mrb[0].mxu0
      %v758 = vadd.f32 %v584, %v757
      %v759 = vpop.f32.mrb[0].mxu0
      %760 = vmatprep.mubr.f32.mxu0 %v406
      %761 = vmatmul.mubr.f32.gmra.mrb[0].mxu0 %v405
      %v762 = vpop.f32.mrb[0].mxu0
      %v763 = vadd.f32 %v584, %v762
      %v764 = vpop.f32.mrb[0].mxu0
      %765 = vmatprep.mubr.f32.mxu0 %v409
      %766 = vmatmul.mubr.f32.gmra.mrb[0].mxu0 %v408
      %v767 = vpop.f32.mrb[0].mxu0
      %v768 = vadd.f32 %v584, %v767
      %v769 = vpop.f32.mrb[0].mxu0
      %770 = vmatprep.mubr.f32.mxu0 %v412
      %771 = vmatmul.mubr.f32.gmra.mrb[0].mxu0 %v411
      %v772 = vpop.f32.mrb[0].mxu0
      %v773 = vadd.f32 %v584, %v772
      %v774 = vpop.f32.mrb[0].mxu0
      %775 = vmatprep.mubr.f32.mxu0 %v415
      %776 = vmatmul.mubr.f32.gmra.mrb[0].mxu0 %v414
      %v777 = vpop.f32.mrb[0].mxu0
      %v778 = vadd.f32 %v584, %v777
      %v779 = vpop.f32.mrb[0].mxu0
      %780 = vmatprep.mubr.f32.mxu0 %v418
      %781 = vmatmul.mubr.f32.gmra.mrb[0].mxu0 %v417
      %v782 = vpop.f32.mrb[0].mxu0
      %v783 = vadd.f32 %v584, %v782
      %v784 = vpop.f32.mrb[0].mxu0
      %785 = vmatprep.mubr.f32.mxu0 %v421
      %786 = vmatmul.mubr.f32.gmra.mrb[0].mxu0 %v420
      %v787 = vpop.f32.mrb[0].mxu0
      %v788 = vadd.f32 %v584, %v787
      %v789 = vpop.f32.mrb[0].mxu0
      %790 = vmatprep.mubr.f32.mxu0 %v424
      %791 = vmatmul.mubr.f32.gmra.mrb[0].mxu0 %v423
      %v792 = vpop.f32.mrb[0].mxu0
      %v793 = vadd.f32 %v584, %v792
      %v794 = vpop.f32.mrb[0].mxu0
      %795 = vmatprep.mubr.f32.mxu0 %v427
      %796 = vmatmul.mubr.f32.gmra.mrb[0].mxu0 %v426
      %v797 = vpop.f32.mrb[0].mxu0
      %v798 = vadd.f32 %v584, %v797
      %v799 = vpop.f32.mrb[0].mxu0
      %800 = vmatprep.mubr.f32.mxu0 %v430
      %801 = vmatmul.mubr.f32.gmra.mrb[0].mxu0 %v429
      %v802 = vpop.f32.mrb[0].mxu0
      %v803 = vadd.f32 %v584, %v802
      %v804 = vpop.f32.mrb[0].mxu0
      %805 = vmatprep.mubr.f32.mxu0 %v433
      %806 = vmatmul.mubr.f32.gmra.mrb[0].mxu0 %v432
      %v807 = vpop.f32.mrb[0].mxu0
      %v808 = vadd.f32 %v584, %v807
      %v809 = vpop.f32.mrb[0].mxu0
      %810 = vmatprep.mubr.f32.mxu0 %v436
      %811 = vmatmul.mubr.f32.gmra.mrb[0].mxu0 %v435
      %v812 = vpop.f32.mrb[0].mxu0
      %v813 = vadd.f32 %v584, %v812
      %v814 = vpop.f32.mrb[0].mxu0
      %815 = vmatprep.mubr.f32.mxu0 %v439
      %816 = vmatmul.mubr.f32.gmra.mrb[0].mxu0 %v438
      %v817 = vpop.f32.mrb[0].mxu0
      %v818 = vadd.f32 %v584, %v817
      %v819 = vpop.f32.mrb[0].mxu0
      %820 = vmatprep.mubr.f32.mxu0 %v442
      %821 = vmatmul.mubr.f32.gmra.mrb[0].mxu0 %v441
      %v822 = vpop.f32.mrb[0].mxu0
      %v823 = vadd.f32 %v584, %v822
      %v824 = vpop.f32.mrb[0].mxu0
      %825 = vmatprep.mubr.f32.mxu0 %v445
      %826 = vmatmul.mubr.f32.gmra.mrb[0].mxu0 %v444
      %v827 = vpop.f32.mrb[0].mxu0
      %v828 = vadd.f32 %v584, %v827
      %v829 = vpop.f32.mrb[0].mxu0
      %830 = vmatprep.mubr.f32.mxu0 %v448
      %831 = vmatmul.mubr.f32.gmra.mrb[0].mxu0 %v447
      %v832 = vpop.f32.mrb[0].mxu0
      %v833 = vadd.f32 %v584, %v832
      %v834 = vpop.f32.mrb[0].mxu0
      %835 = vmatprep.mubr.f32.mxu0 %v451
      %836 = vmatmul.mubr.f32.gmra.mrb[0].mxu0 %v450
      %v837 = vpop.f32.mrb[0].mxu0
      %v838 = vadd.f32 %v584, %v837
      %v839 = vpop.f32.mrb[0].mxu0
      %840 = vmatprep.mubr.f32.mxu0 %v454
      %841 = vmatmul.mubr.f32.gmra.mrb[0].mxu0 %v453
      %v842 = vpop.f32.mrb[0].mxu0
      %v843 = vadd.f32 %v584, %v842
      %v844 = vpop.f32.mrb[0].mxu0
      %845 = vmatprep.mubr.f32.mxu0 %v457
      %846 = vmatmul.mubr.f32.gmra.mrb[0].mxu0 %v456
      %v847 = vpop.f32.mrb[0].mxu0
      %v848 = vadd.f32 %v584, %v847
      %v849 = vpop.f32.mrb[0].mxu0
      %850 = vmatprep.mubr.f32.mxu0 %v460
      %851 = vmatmul.mubr.f32.gmra.mrb[0].mxu0 %v459
      %v852 = vpop.f32.mrb[0].mxu0
      %v853 = vadd.f32 %v584, %v852
      %v854 = vpop.f32.mrb[0].mxu0
      %855 = vmatprep.mubr.f32.mxu0 %v463
      %856 = vmatmul.mubr.f32.gmra.mrb[0].mxu0 %v462
      %v857 = vpop.f32.mrb[0].mxu0
      %v858 = vadd.f32 %v584, %v857
      %v859 = vpop.f32.mrb[0].mxu0
      %860 = vmatprep.mubr.f32.mxu0 %v466
      %861 = vmatmul.mubr.f32.gmra.mrb[0].mxu0 %v465
      %v862 = vpop.f32.mrb[0].mxu0
      %v863 = vadd.f32 %v584, %v862
      %v864 = vpop.f32.mrb[0].mxu0
      %865 = vmatprep.mubr.f32.mxu0 %v469
      %866 = vmatmul.mubr.f32.gmra.mrb[0].mxu0 %v468
      %v867 = vpop.f32.mrb[0].mxu0
      %v868 = vadd.f32 %v584, %v867
      %v869 = vpop.f32.mrb[0].mxu0
      %870 = vmatprep.mubr.f32.mxu0 %v472
      %871 = vmatmul.mubr.f32.gmra.mrb[0].mxu0 %v471
      %v872 = vpop.f32.mrb[0].mxu0
      %v873 = vadd.f32 %v584, %v872
      %v874 = vpop.f32.mrb[0].mxu0
      %875 = vmatprep.mubr.f32.mxu0 %v475
      %876 = vmatmul.mubr.f32.gmra.mrb[0].mxu0 %v474
      %v877 = vpop.f32.mrb[0].mxu0
      %v878 = vadd.f32 %v584, %v877
      %v879 = vpop.f32.mrb[0].mxu0
      %880 = vmatprep.mubr.f32.mxu0 %v478
      %881 = vmatmul.mubr.f32.gmra.mrb[0].mxu0 %v477
      %v882 = vpop.f32.mrb[0].mxu0
      %v883 = vadd.f32 %v584, %v882
      %v884 = vpop.f32.mrb[0].mxu0
      %885 = vmatprep.mubr.f32.mxu0 %v481
      %886 = vmatmul.mubr.f32.gmra.mrb[0].mxu0 %v480
      %v887 = vpop.f32.mrb[0].mxu0
      %v888 = vadd.f32 %v584, %v887
      %v889 = vpop.f32.mrb[0].mxu0
      %890 = vmatprep.mubr.f32.mxu0 %v484
      %891 = vmatmul.mubr.f32.gmra.mrb[0].mxu0 %v483
      %v892 = vpop.f32.mrb[0].mxu0
      %v893 = vadd.f32 %v584, %v892
      %v894 = vpop.f32.mrb[0].mxu0
      %895 = vmatprep.mubr.f32.mxu0 %v487
      %896 = vmatmul.mubr.f32.gmra.mrb[0].mxu0 %v486
      %v897 = vpop.f32.mrb[0].mxu0
      %v898 = vadd.f32 %v584, %v897
      %v899 = vpop.f32.mrb[0].mxu0
      %900 = vmatprep.mubr.f32.mxu0 %v490
      %901 = vmatmul.mubr.f32.gmra.mrb[0].mxu0 %v489
      %v902 = vpop.f32.mrb[0].mxu0
      %v903 = vadd.f32 %v584, %v902
      %v904 = vpop.f32.mrb[0].mxu0
      %905 = vmatprep.mubr.f32.mxu0 %v493
      %906 = vmatmul.mubr.f32.gmra.mrb[0].mxu0 %v492
      %v907 = vpop.f32.mrb[0].mxu0
      %v908 = vadd.f32 %v584, %v907
      %v909 = vpop.f32.mrb[0].mxu0
      %910 = vmatprep.mubr.f32.mxu0 %v496
      %911 = vmatmul.mubr.f32.gmra.mrb[0].mxu0 %v495
      %v912 = vpop.f32.mrb[0].mxu0
      %v913 = vadd.f32 %v584, %v912
      %v914 = vpop.f32.mrb[0].mxu0
      %915 = vmatprep.mubr.f32.mxu0 %v499
      %916 = vmatmul.mubr.f32.gmra.mrb[0].mxu0 %v498
      %v917 = vpop.f32.mrb[0].mxu0
      %v918 = vadd.f32 %v584, %v917
      %v919 = vpop.f32.mrb[0].mxu0
      %920 = vmatprep.mubr.f32.mxu0 %v502
      %921 = vmatmul.mubr.f32.gmra.mrb[0].mxu0 %v501
      %v922 = vpop.f32.mrb[0].mxu0
      %v923 = vadd.f32 %v584, %v922
      %v924 = vpop.f32.mrb[0].mxu0
      %925 = vmatprep.mubr.f32.mxu0 %v505
      %926 = vmatmul.mubr.f32.gmra.mrb[0].mxu0 %v504
      %v927 = vpop.f32.mrb[0].mxu0
      %v928 = vadd.f32 %v584, %v927
      %v929 = vpop.f32.mrb[0].mxu0
      %930 = vmatprep.mubr.f32.mxu0 %v508
      %931 = vmatmul.mubr.f32.gmra.mrb[0].mxu0 %v507
      %v932 = vpop.f32.mrb[0].mxu0
      %v933 = vadd.f32 %v584, %v932
      %v934 = vpop.f32.mrb[0].mxu0
      %935 = vmatprep.mubr.f32.mxu0 %v511
      %936 = vmatmul.mubr.f32.gmra.mrb[0].mxu0 %v510
      %v937 = vpop.f32.mrb[0].mxu0
      %v938 = vadd.f32 %v584, %v937
      %v939 = vpop.f32.mrb[0].mxu0
      %940 = vmatprep.mubr.f32.mxu0 %v514
      %941 = vmatmul.mubr.f32.gmra.mrb[0].mxu0 %v513
      %v942 = vpop.f32.mrb[0].mxu0
      %v943 = vadd.f32 %v584, %v942
      %v944 = vpop.f32.mrb[0].mxu0
      %945 = vmatprep.mubr.f32.mxu0 %v517
      %946 = vmatmul.mubr.f32.gmra.mrb[0].mxu0 %v516
      %v947 = vpop.f32.mrb[0].mxu0
      %v948 = vadd.f32 %v584, %v947
      %v949 = vpop.f32.mrb[0].mxu0
      %950 = vmatprep.mubr.f32.mxu0 %v520
      %951 = vmatmul.mubr.f32.gmra.mrb[0].mxu0 %v519
      %v952 = vpop.f32.mrb[0].mxu0
      %v953 = vadd.f32 %v584, %v952
      %v954 = vpop.f32.mrb[0].mxu0
      %955 = vmatprep.mubr.f32.mxu0 %v523
      %956 = vmatmul.mubr.f32.gmra.mrb[0].mxu0 %v522
      %v957 = vpop.f32.mrb[0].mxu0
      %v958 = vadd.f32 %v584, %v957
      %v959 = vpop.f32.mrb[0].mxu0
      %960 = vmatprep.mubr.f32.mxu0 %v526
      %961 = vmatmul.mubr.f32.gmra.mrb[0].mxu0 %v525
      %v962 = vpop.f32.mrb[0].mxu0
      %v963 = vadd.f32 %v584, %v962
      %v964 = vpop.f32.mrb[0].mxu0
      %965 = vmatprep.mubr.f32.mxu0 %v529
      %966 = vmatmul.mubr.f32.gmra.mrb[0].mxu0 %v528
      %v967 = vpop.f32.mrb[0].mxu0
      %v968 = vadd.f32 %v584, %v967
      %v969 = vpop.f32.mrb[0].mxu0
      %970 = vdwg.mxu0
      %971 = vmatprep.subr.mxu0 0.0
      %972 = vmatpush1.msra.mxu0 %v563
      %973 = vmatprep.subr.mxu0 0.0
      %974 = vmatpush1.msra.mxu0 %v564
      %975 = vmatprep.subr.mxu0 0.0
      %976 = vmatpush1.msra.mxu0 %v565
      %977 = vmatprep.subr.mxu0 0.0
      %978 = vmatpush1.msra.mxu0 %v566
      %979 = vmatprep.subr.mxu0 0.0
      %980 = vmatpush1.msra.mxu0 %v567
      %981 = vmatprep.subr.mxu0 0.0
      %982 = vmatpush1.msra.mxu0 %v568
      %983 = vmatprep.subr.mxu0 0.0
      %984 = vmatpush1.msra.mxu0 %v569
      %985 = vmatprep.subr.mxu0 0.0
      %986 = vmatpush1.msra.mxu0 %v570
      %987 = vmatprep.subr.mxu0 0.0
      %988 = vmatpush1.msra.mxu0 %v571
      %989 = vmatprep.subr.mxu0 0.0
      %990 = vmatpush1.msra.mxu0 %v572
      %991 = vmatprep.subr.mxu0 0.0
      %992 = vmatpush1.msra.mxu0 %v573
      %993 = vmatprep.subr.mxu0 0.0
      %994 = vmatpush1.msra.mxu0 %v574
      %995 = vmatprep.subr.mxu0 0.0
      %996 = vmatpush1.msra.mxu0 %v575
      %997 = vmatprep.subr.mxu0 0.0
      %998 = vmatpush1.msra.mxu0 %v576
      %999 = vmatprep.subr.mxu0 0.0
      %1000 = vmatpush1.msra.mxu0 %v577
      %1001 = vmatprep.subr.mxu0 0.0
      %1002 = vmatpush1.msra.mxu0 %v578
      %1003 = vmatprep.subr.mxu0 0.0
      %1004 = vmatpush1.msra.mxu0 0.0
      %1005 = vmatprep.subr.mxu0 0.0
      %1006 = vmatpush1.msra.mxu0 0.0
      %1007 = vmatprep.subr.mxu0 0.0
      %1008 = vmatpush1.msra.mxu0 0.0
      %1009 = vmatprep.subr.mxu0 0.0
      %1010 = vmatpush1.msra.mxu0 0.0
      %1011 = vmatprep.subr.mxu0 0.0
      %1012 = vmatpush1.msra.mxu0 0.0
      %1013 = vmatprep.subr.mxu0 0.0
      %1014 = vmatpush1.msra.mxu0 0.0
      %1015 = vmatprep.subr.mxu0 0.0
      %1016 = vmatpush1.msra.mxu0 0.0
      %1017 = vmatprep.subr.mxu0 0.0
      %1018 = vmatpush1.msra.mxu0 0.0
      %1019 = vmatprep.subr.mxu0 0.0
      %1020 = vmatpush1.msra.mxu0 0.0
      %1021 = vmatprep.subr.mxu0 0.0
      %1022 = vmatpush1.msra.mxu0 0.0
      %1023 = vmatprep.subr.mxu0 0.0
      %1024 = vmatpush1.msra.mxu0 0.0
      %1025 = vmatprep.subr.mxu0 0.0
      %1026 = vmatpush1.msra.mxu0 0.0
      %1027 = vmatprep.subr.mxu0 0.0
      %1028 = vmatpush1.msra.mxu0 0.0
      %1029 = vmatprep.subr.mxu0 0.0
      %1030 = vmatpush1.msra.mxu0 0.0
      %1031 = vmatprep.subr.mxu0 0.0
      %1032 = vmatpush1.msra.mxu0 0.0
      %1033 = vmatprep.subr.mxu0 0.0
      %1034 = vmatpush1.msra.mxu0 0.0
      %1035 = vmatprep.mubr.f32.mxu0 0.0
      %1036 = vmatmul.mubr.f32.gmra.mrb[0].mxu0 %v341
      %v1037 = vpop.f32.mrb[0].mxu0
      %v1038 = vadd.f32 %v653, %v1037
      %v1039 = vpop.f32.mrb[0].mxu0
      %1040 = vmatprep.mubr.f32.mxu0 0.0
      %1041 = vmatmul.mubr.f32.gmra.mrb[0].mxu0 %v344
      %v1042 = vpop.f32.mrb[0].mxu0
      %v1043 = vadd.f32 %v658, %v1042
      %v1044 = vpop.f32.mrb[0].mxu0
      %1045 = vmatprep.mubr.f32.mxu0 0.0
      %1046 = vmatmul.mubr.f32.gmra.mrb[0].mxu0 %v347
      %v1047 = vpop.f32.mrb[0].mxu0
      %v1048 = vadd.f32 %v663, %v1047
      %v1049 = vpop.f32.mrb[0].mxu0
      %1050 = vmatprep.mubr.f32.mxu0 0.0
      %1051 = vmatmul.mubr.f32.gmra.mrb[0].mxu0 %v350
      %v1052 = vpop.f32.mrb[0].mxu0
      %v1053 = vadd.f32 %v668, %v1052
      %v1054 = vpop.f32.mrb[0].mxu0
      %1055 = vmatprep.mubr.f32.mxu0 0.0
      %1056 = vmatmul.mubr.f32.gmra.mrb[0].mxu0 %v353
      %v1057 = vpop.f32.mrb[0].mxu0
      %v1058 = vadd.f32 %v673, %v1057
      %v1059 = vpop.f32.mrb[0].mxu0
      %1060 = vmatprep.mubr.f32.mxu0 0.0
      %1061 = vmatmul.mubr.f32.gmra.mrb[0].mxu0 %v356
      %v1062 = vpop.f32.mrb[0].mxu0
      %v1063 = vadd.f32 %v678, %v1062
      %v1064 = vpop.f32.mrb[0].mxu0
      %1065 = vmatprep.mubr.f32.mxu0 0.0
      %1066 = vmatmul.mubr.f32.gmra.mrb[0].mxu0 %v359
      %v1067 = vpop.f32.mrb[0].mxu0
      %v1068 = vadd.f32 %v683, %v1067
      %v1069 = vpop.f32.mrb[0].mxu0
      %1070 = vmatprep.mubr.f32.mxu0 0.0
      %1071 = vmatmul.mubr.f32.gmra.mrb[0].mxu0 %v362
      %v1072 = vpop.f32.mrb[0].mxu0
      %v1073 = vadd.f32 %v688, %v1072
      %v1074 = vpop.f32.mrb[0].mxu0
      %1075 = vmatprep.mubr.f32.mxu0 0.0
      %1076 = vmatmul.mubr.f32.gmra.mrb[0].mxu0 %v365
      %v1077 = vpop.f32.mrb[0].mxu0
      %v1078 = vadd.f32 %v693, %v1077
      %v1079 = vpop.f32.mrb[0].mxu0
      %1080 = vmatprep.mubr.f32.mxu0 0.0
      %1081 = vmatmul.mubr.f32.gmra.mrb[0].mxu0 %v368
      %v1082 = vpop.f32.mrb[0].mxu0
      %v1083 = vadd.f32 %v698, %v1082
      %v1084 = vpop.f32.mrb[0].mxu0
      %1085 = vmatprep.mubr.f32.mxu0 0.0
      %1086 = vmatmul.mubr.f32.gmra.mrb[0].mxu0 %v371
      %v1087 = vpop.f32.mrb[0].mxu0
      %v1088 = vadd.f32 %v703, %v1087
      %v1089 = vpop.f32.mrb[0].mxu0
      %1090 = vmatprep.mubr.f32.mxu0 0.0
      %1091 = vmatmul.mubr.f32.gmra.mrb[0].mxu0 %v374
      %v1092 = vpop.f32.mrb[0].mxu0
      %v1093 = vadd.f32 %v708, %v1092
      %v1094 = vpop.f32.mrb[0].mxu0
      %1095 = vmatprep.mubr.f32.mxu0 0.0
      %1096 = vmatmul.mubr.f32.gmra.mrb[0].mxu0 %v377
      %v1097 = vpop.f32.mrb[0].mxu0
      %v1098 = vadd.f32 %v713, %v1097
      %v1099 = vpop.f32.mrb[0].mxu0
      %1100 = vmatprep.mubr.f32.mxu0 0.0
      %1101 = vmatmul.mubr.f32.gmra.mrb[0].mxu0 %v380
      %v1102 = vpop.f32.mrb[0].mxu0
      %v1103 = vadd.f32 %v718, %v1102
      %v1104 = vpop.f32.mrb[0].mxu0
      %1105 = vmatprep.mubr.f32.mxu0 0.0
      %1106 = vmatmul.mubr.f32.gmra.mrb[0].mxu0 %v383
      %v1107 = vpop.f32.mrb[0].mxu0
      %v1108 = vadd.f32 %v723, %v1107
      %v1109 = vpop.f32.mrb[0].mxu0
      %1110 = vmatprep.mubr.f32.mxu0 0.0
      %1111 = vmatmul.mubr.f32.gmra.mrb[0].mxu0 %v386
      %v1112 = vpop.f32.mrb[0].mxu0
      %v1113 = vadd.f32 %v728, %v1112
      %v1114 = vpop.f32.mrb[0].mxu0
      %1115 = vmatprep.mubr.f32.mxu0 0.0
      %1116 = vmatmul.mubr.f32.gmra.mrb[0].mxu0 %v389
      %v1117 = vpop.f32.mrb[0].mxu0
      %v1118 = vadd.f32 %v733, %v1117
      %v1119 = vpop.f32.mrb[0].mxu0
      %1120 = vmatprep.mubr.f32.mxu0 0.0
      %1121 = vmatmul.mubr.f32.gmra.mrb[0].mxu0 %v392
      %v1122 = vpop.f32.mrb[0].mxu0
      %v1123 = vadd.f32 %v738, %v1122
      %v1124 = vpop.f32.mrb[0].mxu0
      %1125 = vmatprep.mubr.f32.mxu0 0.0
      %1126 = vmatmul.mubr.f32.gmra.mrb[0].mxu0 %v395
      %v1127 = vpop.f32.mrb[0].mxu0
      %v1128 = vadd.f32 %v743, %v1127
      %v1129 = vpop.f32.mrb[0].mxu0
      %1130 = vmatprep.mubr.f32.mxu0 0.0
      %1131 = vmatmul.mubr.f32.gmra.mrb[0].mxu0 %v398
      %v1132 = vpop.f32.mrb[0].mxu0
      %v1133 = vadd.f32 %v748, %v1132
      %v1134 = vpop.f32.mrb[0].mxu0
      %1135 = vmatprep.mubr.f32.mxu0 0.0
      %1136 = vmatmul.mubr.f32.gmra.mrb[0].mxu0 %v401
      %v1137 = vpop.f32.mrb[0].mxu0
      %v1138 = vadd.f32 %v753, %v1137
      %v1139 = vpop.f32.mrb[0].mxu0
      %1140 = vmatprep.mubr.f32.mxu0 0.0
      %1141 = vmatmul.mubr.f32.gmra.mrb[0].mxu0 %v404
      %v1142 = vpop.f32.mrb[0].mxu0
      %v1143 = vadd.f32 %v758, %v1142
      %v1144 = vpop.f32.mrb[0].mxu0
      %1145 = vmatprep.mubr.f32.mxu0 0.0
      %1146 = vmatmul.mubr.f32.gmra.mrb[0].mxu0 %v407
      %v1147 = vpop.f32.mrb[0].mxu0
      %v1148 = vadd.f32 %v763, %v1147
      %v1149 = vpop.f32.mrb[0].mxu0
      %1150 = vmatprep.mubr.f32.mxu0 0.0
      %1151 = vmatmul.mubr.f32.gmra.mrb[0].mxu0 %v410
      %v1152 = vpop.f32.mrb[0].mxu0
      %v1153 = vadd.f32 %v768, %v1152
      %v1154 = vpop.f32.mrb[0].mxu0
      %1155 = vmatprep.mubr.f32.mxu0 0.0
      %1156 = vmatmul.mubr.f32.gmra.mrb[0].mxu0 %v413
      %v1157 = vpop.f32.mrb[0].mxu0
      %v1158 = vadd.f32 %v773, %v1157
      %v1159 = vpop.f32.mrb[0].mxu0
      %1160 = vmatprep.mubr.f32.mxu0 0.0
      %1161 = vmatmul.mubr.f32.gmra.mrb[0].mxu0 %v416
      %v1162 = vpop.f32.mrb[0].mxu0
      %v1163 = vadd.f32 %v778, %v1162
      %v1164 = vpop.f32.mrb[0].mxu0
      %1165 = vmatprep.mubr.f32.mxu0 0.0
      %1166 = vmatmul.mubr.f32.gmra.mrb[0].mxu0 %v419
      %v1167 = vpop.f32.mrb[0].mxu0
      %v1168 = vadd.f32 %v783, %v1167
      %v1169 = vpop.f32.mrb[0].mxu0
      %1170 = vmatprep.mubr.f32.mxu0 0.0
      %1171 = vmatmul.mubr.f32.gmra.mrb[0].mxu0 %v422
      %v1172 = vpop.f32.mrb[0].mxu0
      %v1173 = vadd.f32 %v788, %v1172
      %v1174 = vpop.f32.mrb[0].mxu0
      %1175 = vmatprep.mubr.f32.mxu0 0.0
      %1176 = vmatmul.mubr.f32.gmra.mrb[0].mxu0 %v425
      %v1177 = vpop.f32.mrb[0].mxu0
      %v1178 = vadd.f32 %v793, %v1177
      %v1179 = vpop.f32.mrb[0].mxu0
      %1180 = vmatprep.mubr.f32.mxu0 0.0
      %1181 = vmatmul.mubr.f32.gmra.mrb[0].mxu0 %v428
      %v1182 = vpop.f32.mrb[0].mxu0
      %v1183 = vadd.f32 %v798, %v1182
      %v1184 = vpop.f32.mrb[0].mxu0
      %1185 = vmatprep.mubr.f32.mxu0 0.0
      %1186 = vmatmul.mubr.f32.gmra.mrb[0].mxu0 %v431
      %v1187 = vpop.f32.mrb[0].mxu0
      %v1188 = vadd.f32 %v803, %v1187
      %v1189 = vpop.f32.mrb[0].mxu0
      %1190 = vmatprep.mubr.f32.mxu0 0.0
      %1191 = vmatmul.mubr.f32.gmra.mrb[0].mxu0 %v434
      %v1192 = vpop.f32.mrb[0].mxu0
      %v1193 = vadd.f32 %v808, %v1192
      %v1194 = vpop.f32.mrb[0].mxu0
      %1195 = vmatprep.mubr.f32.mxu0 0.0
      %1196 = vmatmul.mubr.f32.gmra.mrb[0].mxu0 %v437
      %v1197 = vpop.f32.mrb[0].mxu0
      %v1198 = vadd.f32 %v813, %v1197
      %v1199 = vpop.f32.mrb[0].mxu0
      %1200 = vmatprep.mubr.f32.mxu0 0.0
      %1201 = vmatmul.mubr.f32.gmra.mrb[0].mxu0 %v440
      %v1202 = vpop.f32.mrb[0].mxu0
      %v1203 = vadd.f32 %v818, %v1202
      %v1204 = vpop.f32.mrb[0].mxu0
      %1205 = vmatprep.mubr.f32.mxu0 0.0
      %1206 = vmatmul.mubr.f32.gmra.mrb[0].mxu0 %v443
      %v1207 = vpop.f32.mrb[0].mxu0
      %v1208 = vadd.f32 %v823, %v1207
      %v1209 = vpop.f32.mrb[0].mxu0
      %1210 = vmatprep.mubr.f32.mxu0 0.0
      %1211 = vmatmul.mubr.f32.gmra.mrb[0].mxu0 %v446
      %v1212 = vpop.f32.mrb[0].mxu0
      %v1213 = vadd.f32 %v828, %v1212
      %v1214 = vpop.f32.mrb[0].mxu0
      %1215 = vmatprep.mubr.f32.mxu0 0.0
      %1216 = vmatmul.mubr.f32.gmra.mrb[0].mxu0 %v449
      %v1217 = vpop.f32.mrb[0].mxu0
      %v1218 = vadd.f32 %v833, %v1217
      %v1219 = vpop.f32.mrb[0].mxu0
      %1220 = vmatprep.mubr.f32.mxu0 0.0
      %1221 = vmatmul.mubr.f32.gmra.mrb[0].mxu0 %v452
      %v1222 = vpop.f32.mrb[0].mxu0
      %v1223 = vadd.f32 %v838, %v1222
      %v1224 = vpop.f32.mrb[0].mxu0
      %1225 = vmatprep.mubr.f32.mxu0 0.0
      %1226 = vmatmul.mubr.f32.gmra.mrb[0].mxu0 %v455
      %v1227 = vpop.f32.mrb[0].mxu0
      %v1228 = vadd.f32 %v843, %v1227
      %v1229 = vpop.f32.mrb[0].mxu0
      %1230 = vmatprep.mubr.f32.mxu0 0.0
      %1231 = vmatmul.mubr.f32.gmra.mrb[0].mxu0 %v458
      %v1232 = vpop.f32.mrb[0].mxu0
      %v1233 = vadd.f32 %v848, %v1232
      %v1234 = vpop.f32.mrb[0].mxu0
      %1235 = vmatprep.mubr.f32.mxu0 0.0
      %1236 = vmatmul.mubr.f32.gmra.mrb[0].mxu0 %v461
      %v1237 = vpop.f32.mrb[0].mxu0
      %v1238 = vadd.f32 %v853, %v1237
      %v1239 = vpop.f32.mrb[0].mxu0
      %1240 = vmatprep.mubr.f32.mxu0 0.0
      %1241 = vmatmul.mubr.f32.gmra.mrb[0].mxu0 %v464
      %v1242 = vpop.f32.mrb[0].mxu0
      %v1243 = vadd.f32 %v858, %v1242
      %v1244 = vpop.f32.mrb[0].mxu0
      %1245 = vmatprep.mubr.f32.mxu0 0.0
      %1246 = vmatmul.mubr.f32.gmra.mrb[0].mxu0 %v467
      %v1247 = vpop.f32.mrb[0].mxu0
      %v1248 = vadd.f32 %v863, %v1247
      %v1249 = vpop.f32.mrb[0].mxu0
      %1250 = vmatprep.mubr.f32.mxu0 0.0
      %1251 = vmatmul.mubr.f32.gmra.mrb[0].mxu0 %v470
      %v1252 = vpop.f32.mrb[0].mxu0
      %v1253 = vadd.f32 %v868, %v1252
      %v1254 = vpop.f32.mrb[0].mxu0
      %1255 = vmatprep.mubr.f32.mxu0 0.0
      %1256 = vmatmul.mubr.f32.gmra.mrb[0].mxu0 %v473
      %v1257 = vpop.f32.mrb[0].mxu0
      %v1258 = vadd.f32 %v873, %v1257
      %v1259 = vpop.f32.mrb[0].mxu0
      %1260 = vmatprep.mubr.f32.mxu0 0.0
      %1261 = vmatmul.mubr.f32.gmra.mrb[0].mxu0 %v476
      %v1262 = vpop.f32.mrb[0].mxu0
      %v1263 = vadd.f32 %v878, %v1262
      %v1264 = vpop.f32.mrb[0].mxu0
      %1265 = vmatprep.mubr.f32.mxu0 0.0
      %1266 = vmatmul.mubr.f32.gmra.mrb[0].mxu0 %v479
      %v1267 = vpop.f32.mrb[0].mxu0
      %v1268 = vadd.f32 %v883, %v1267
      %v1269 = vpop.f32.mrb[0].mxu0
      %1270 = vmatprep.mubr.f32.mxu0 0.0
      %1271 = vmatmul.mubr.f32.gmra.mrb[0].mxu0 %v482
      %v1272 = vpop.f32.mrb[0].mxu0
      %v1273 = vadd.f32 %v888, %v1272
      %v1274 = vpop.f32.mrb[0].mxu0
      %1275 = vmatprep.mubr.f32.mxu0 0.0
      %1276 = vmatmul.mubr.f32.gmra.mrb[0].mxu0 %v485
      %v1277 = vpop.f32.mrb[0].mxu0
      %v1278 = vadd.f32 %v893, %v1277
      %v1279 = vpop.f32.mrb[0].mxu0
      %1280 = vmatprep.mubr.f32.mxu0 0.0
      %1281 = vmatmul.mubr.f32.gmra.mrb[0].mxu0 %v488
      %v1282 = vpop.f32.mrb[0].mxu0
      %v1283 = vadd.f32 %v898, %v1282
      %v1284 = vpop.f32.mrb[0].mxu0
      %1285 = vmatprep.mubr.f32.mxu0 0.0
      %1286 = vmatmul.mubr.f32.gmra.mrb[0].mxu0 %v491
      %v1287 = vpop.f32.mrb[0].mxu0
      %v1288 = vadd.f32 %v903, %v1287
      %v1289 = vpop.f32.mrb[0].mxu0
      %1290 = vmatprep.mubr.f32.mxu0 0.0
      %1291 = vmatmul.mubr.f32.gmra.mrb[0].mxu0 %v494
      %v1292 = vpop.f32.mrb[0].mxu0
      %v1293 = vadd.f32 %v908, %v1292
      %v1294 = vpop.f32.mrb[0].mxu0
      %1295 = vmatprep.mubr.f32.mxu0 0.0
      %1296 = vmatmul.mubr.f32.gmra.mrb[0].mxu0 %v497
      %v1297 = vpop.f32.mrb[0].mxu0
      %v1298 = vadd.f32 %v913, %v1297
      %v1299 = vpop.f32.mrb[0].mxu0
      %1300 = vmatprep.mubr.f32.mxu0 0.0
      %1301 = vmatmul.mubr.f32.gmra.mrb[0].mxu0 %v500
      %v1302 = vpop.f32.mrb[0].mxu0
      %v1303 = vadd.f32 %v918, %v1302
      %v1304 = vpop.f32.mrb[0].mxu0
      %1305 = vmatprep.mubr.f32.mxu0 0.0
      %1306 = vmatmul.mubr.f32.gmra.mrb[0].mxu0 %v503
      %v1307 = vpop.f32.mrb[0].mxu0
      %v1308 = vadd.f32 %v923, %v1307
      %v1309 = vpop.f32.mrb[0].mxu0
      %1310 = vmatprep.mubr.f32.mxu0 0.0
      %1311 = vmatmul.mubr.f32.gmra.mrb[0].mxu0 %v506
      %v1312 = vpop.f32.mrb[0].mxu0
      %v1313 = vadd.f32 %v928, %v1312
      %v1314 = vpop.f32.mrb[0].mxu0
      %1315 = vmatprep.mubr.f32.mxu0 0.0
      %1316 = vmatmul.mubr.f32.gmra.mrb[0].mxu0 %v509
      %v1317 = vpop.f32.mrb[0].mxu0
      %v1318 = vadd.f32 %v933, %v1317
      %v1319 = vpop.f32.mrb[0].mxu0
      %1320 = vmatprep.mubr.f32.mxu0 0.0
      %1321 = vmatmul.mubr.f32.gmra.mrb[0].mxu0 %v512
      %v1322 = vpop.f32.mrb[0].mxu0
      %v1323 = vadd.f32 %v938, %v1322
      %v1324 = vpop.f32.mrb[0].mxu0
      %1325 = vmatprep.mubr.f32.mxu0 0.0
      %1326 = vmatmul.mubr.f32.gmra.mrb[0].mxu0 %v515
      %v1327 = vpop.f32.mrb[0].mxu0
      %v1328 = vadd.f32 %v943, %v1327
      %v1329 = vpop.f32.mrb[0].mxu0
      %1330 = vmatprep.mubr.f32.mxu0 0.0
      %1331 = vmatmul.mubr.f32.gmra.mrb[0].mxu0 %v518
      %v1332 = vpop.f32.mrb[0].mxu0
      %v1333 = vadd.f32 %v948, %v1332
      %v1334 = vpop.f32.mrb[0].mxu0
      %1335 = vmatprep.mubr.f32.mxu0 0.0
      %1336 = vmatmul.mubr.f32.gmra.mrb[0].mxu0 %v521
      %v1337 = vpop.f32.mrb[0].mxu0
      %v1338 = vadd.f32 %v953, %v1337
      %v1339 = vpop.f32.mrb[0].mxu0
      %1340 = vmatprep.mubr.f32.mxu0 0.0
      %1341 = vmatmul.mubr.f32.gmra.mrb[0].mxu0 %v524
      %v1342 = vpop.f32.mrb[0].mxu0
      %v1343 = vadd.f32 %v958, %v1342
      %v1344 = vpop.f32.mrb[0].mxu0
      %1345 = vmatprep.mubr.f32.mxu0 0.0
      %1346 = vmatmul.mubr.f32.gmra.mrb[0].mxu0 %v527
      %v1347 = vpop.f32.mrb[0].mxu0
      %v1348 = vadd.f32 %v963, %v1347
      %v1349 = vpop.f32.mrb[0].mxu0
      %1350 = vmatprep.mubr.f32.mxu0 0.0
      %1351 = vmatmul.mubr.f32.gmra.mrb[0].mxu0 %v530
      %v1352 = vpop.f32.mrb[0].mxu0
      %v1353 = vadd.f32 %v968, %v1352
      %v1354 = vpop.f32.mrb[0].mxu0
      %1355 = vdwg.mxu0
      %v1356 = vmul.f32 %v1038, 0.5
      %v1357 = vmul.f32 %v1043, 0.5
      %v1358 = vmul.f32 %v1048, 0.5
      %v1359 = vmul.f32 %v1053, 0.5
      %v1360 = vmul.f32 %v1058, 0.5
      %v1361 = vmul.f32 %v1063, 0.5
      %v1362 = vmul.f32 %v1068, 0.5
      %v1363 = vmul.f32 %v1073, 0.5
      %v1364 = vmul.f32 %v1078, 0.5
      %v1365 = vmul.f32 %v1083, 0.5
      %v1366 = vmul.f32 %v1088, 0.5
      %v1367 = vmul.f32 %v1093, 0.5
      %v1368 = vmul.f32 %v1098, 0.5
      %v1369 = vmul.f32 %v1103, 0.5
      %v1370 = vmul.f32 %v1108, 0.5
      %v1371 = vmul.f32 %v1113, 0.5
      %v1372 = vmul.f32 %v1118, 0.5
      %v1373 = vmul.f32 %v1123, 0.5
      %v1374 = vmul.f32 %v1128, 0.5
      %v1375 = vmul.f32 %v1133, 0.5
      %v1376 = vmul.f32 %v1138, 0.5
      %v1377 = vmul.f32 %v1143, 0.5
      %v1378 = vmul.f32 %v1148, 0.5
      %v1379 = vmul.f32 %v1153, 0.5
      %v1380 = vmul.f32 %v1158, 0.5
      %v1381 = vmul.f32 %v1163, 0.5
      %v1382 = vmul.f32 %v1168, 0.5
      %v1383 = vmul.f32 %v1173, 0.5
      %v1384 = vmul.f32 %v1178, 0.5
      %v1385 = vmul.f32 %v1183, 0.5
      %v1386 = vmul.f32 %v1188, 0.5
      %v1387 = vmul.f32 %v1193, 0.5
      %v1388 = vmul.f32 %v1198, 0.5
      %v1389 = vmul.f32 %v1203, 0.5
      %v1390 = vmul.f32 %v1208, 0.5
      %v1391 = vmul.f32 %v1213, 0.5
      %v1392 = vmul.f32 %v1218, 0.5
      %v1393 = vmul.f32 %v1223, 0.5
      %v1394 = vmul.f32 %v1228, 0.5
      %v1395 = vmul.f32 %v1233, 0.5
      %v1396 = vmul.f32 %v1238, 0.5
      %v1397 = vmul.f32 %v1243, 0.5
      %v1398 = vmul.f32 %v1248, 0.5
      %v1399 = vmul.f32 %v1253, 0.5
      %v1400 = vmul.f32 %v1258, 0.5
      %v1401 = vmul.f32 %v1263, 0.5
      %v1402 = vmul.f32 %v1268, 0.5
      %v1403 = vmul.f32 %v1273, 0.5
      %v1404 = vmul.f32 %v1278, 0.5
      %v1405 = vmul.f32 %v1283, 0.5
      %v1406 = vmul.f32 %v1288, 0.5
      %v1407 = vmul.f32 %v1293, 0.5
      %v1408 = vmul.f32 %v1298, 0.5
      %v1409 = vmul.f32 %v1303, 0.5
      %v1410 = vmul.f32 %v1308, 0.5
      %v1411 = vmul.f32 %v1313, 0.5
      %v1412 = vmul.f32 %v1318, 0.5
      %v1413 = vmul.f32 %v1323, 0.5
      %v1414 = vmul.f32 %v1328, 0.5
      %v1415 = vmul.f32 %v1333, 0.5
      %v1416 = vmul.f32 %v1338, 0.5
      %v1417 = vmul.f32 %v1343, 0.5
      %v1418 = vmul.f32 %v1348, 0.5
      %v1419 = vmul.f32 %v1353, 0.5
      %v1420 = vmul.f32 %v1038, 0.70710677
      %v1421 = vmul.f32 %v1043, 0.70710677
      %v1422 = vmul.f32 %v1048, 0.70710677
      %v1423 = vmul.f32 %v1053, 0.70710677
      %v1424 = vmul.f32 %v1058, 0.70710677
      %v1425 = vmul.f32 %v1063, 0.70710677
      %v1426 = vmul.f32 %v1068, 0.70710677
      %v1427 = vmul.f32 %v1073, 0.70710677
      %v1428 = vmul.f32 %v1078, 0.70710677
      %v1429 = vmul.f32 %v1083, 0.70710677
      %v1430 = vmul.f32 %v1088, 0.70710677
      %v1431 = vmul.f32 %v1093, 0.70710677
      %v1432 = vmul.f32 %v1098, 0.70710677
      %v1433 = vmul.f32 %v1103, 0.70710677
      %v1434 = vmul.f32 %v1108, 0.70710677
      %v1435 = vmul.f32 %v1113, 0.70710677
      %v1436 = vmul.f32 %v1118, 0.70710677
      %v1437 = vmul.f32 %v1123, 0.70710677
      %v1438 = vmul.f32 %v1128, 0.70710677
      %v1439 = vmul.f32 %v1133, 0.70710677
      %v1440 = vmul.f32 %v1138, 0.70710677
      %v1441 = vmul.f32 %v1143, 0.70710677
      %v1442 = vmul.f32 %v1148, 0.70710677
      %v1443 = vmul.f32 %v1153, 0.70710677
      %v1444 = vmul.f32 %v1158, 0.70710677
      %v1445 = vmul.f32 %v1163, 0.70710677
      %v1446 = vmul.f32 %v1168, 0.70710677
      %v1447 = vmul.f32 %v1173, 0.70710677
      %v1448 = vmul.f32 %v1178, 0.70710677
      %v1449 = vmul.f32 %v1183, 0.70710677
      %v1450 = vmul.f32 %v1188, 0.70710677
      %v1451 = vmul.f32 %v1193, 0.70710677
      %v1452 = vmul.f32 %v1198, 0.70710677
      %v1453 = vmul.f32 %v1203, 0.70710677
      %v1454 = vmul.f32 %v1208, 0.70710677
      %v1455 = vmul.f32 %v1213, 0.70710677
      %v1456 = vmul.f32 %v1218, 0.70710677
      %v1457 = vmul.f32 %v1223, 0.70710677
      %v1458 = vmul.f32 %v1228, 0.70710677
      %v1459 = vmul.f32 %v1233, 0.70710677
      %v1460 = vmul.f32 %v1238, 0.70710677
      %v1461 = vmul.f32 %v1243, 0.70710677
      %v1462 = vmul.f32 %v1248, 0.70710677
      %v1463 = vmul.f32 %v1253, 0.70710677
      %v1464 = vmul.f32 %v1258, 0.70710677
      %v1465 = vmul.f32 %v1263, 0.70710677
      %v1466 = vmul.f32 %v1268, 0.70710677
      %v1467 = vmul.f32 %v1273, 0.70710677
      %v1468 = vmul.f32 %v1278, 0.70710677
      %v1469 = vmul.f32 %v1283, 0.70710677
      %v1470 = vmul.f32 %v1288, 0.70710677
      %v1471 = vmul.f32 %v1293, 0.70710677
      %v1472 = vmul.f32 %v1298, 0.70710677
      %v1473 = vmul.f32 %v1303, 0.70710677
      %v1474 = vmul.f32 %v1308, 0.70710677
      %v1475 = vmul.f32 %v1313, 0.70710677
      %v1476 = vmul.f32 %v1318, 0.70710677
      %v1477 = vmul.f32 %v1323, 0.70710677
      %v1478 = vmul.f32 %v1328, 0.70710677
      %v1479 = vmul.f32 %v1333, 0.70710677
      %v1480 = vmul.f32 %v1338, 0.70710677
      %v1481 = vmul.f32 %v1343, 0.70710677
      %v1482 = vmul.f32 %v1348, 0.70710677
      %v1483 = vmul.f32 %v1353, 0.70710677
      %v1484 = verf.f32.pop %v1420
      %v1485 = verf.f32.pop %v1421
      %v1486 = verf.f32.pop %v1422
      %v1487 = verf.f32.pop %v1423
      %v1488 = verf.f32.pop %v1424
      %v1489 = verf.f32.pop %v1425
      %v1490 = verf.f32.pop %v1426
      %v1491 = verf.f32.pop %v1427
      %v1492 = verf.f32.pop %v1428
      %v1493 = verf.f32.pop %v1429
      %v1494 = verf.f32.pop %v1430
      %v1495 = verf.f32.pop %v1431
      %v1496 = verf.f32.pop %v1432
      %v1497 = verf.f32.pop %v1433
      %v1498 = verf.f32.pop %v1434
      %v1499 = verf.f32.pop %v1435
      %v1500 = verf.f32.pop %v1436
      %v1501 = verf.f32.pop %v1437
      %v1502 = verf.f32.pop %v1438
      %v1503 = verf.f32.pop %v1439
      %v1504 = verf.f32.pop %v1440
      %v1505 = verf.f32.pop %v1441
      %v1506 = verf.f32.pop %v1442
      %v1507 = verf.f32.pop %v1443
      %v1508 = verf.f32.pop %v1444
      %v1509 = verf.f32.pop %v1445
      %v1510 = verf.f32.pop %v1446
      %v1511 = verf.f32.pop %v1447
      %v1512 = verf.f32.pop %v1448
      %v1513 = verf.f32.pop %v1449
      %v1514 = verf.f32.pop %v1450
      %v1515 = verf.f32.pop %v1451
      %v1516 = verf.f32.pop %v1452
      %v1517 = verf.f32.pop %v1453
      %v1518 = verf.f32.pop %v1454
      %v1519 = verf.f32.pop %v1455
      %v1520 = verf.f32.pop %v1456
      %v1521 = verf.f32.pop %v1457
      %v1522 = verf.f32.pop %v1458
      %v1523 = verf.f32.pop %v1459
      %v1524 = verf.f32.pop %v1460
      %v1525 = verf.f32.pop %v1461
      %v1526 = verf.f32.pop %v1462
      %v1527 = verf.f32.pop %v1463
      %v1528 = verf.f32.pop %v1464
      %v1529 = verf.f32.pop %v1465
      %v1530 = verf.f32.pop %v1466
      %v1531 = verf.f32.pop %v1467
      %v1532 = verf.f32.pop %v1468
      %v1533 = verf.f32.pop %v1469
      %v1534 = verf.f32.pop %v1470
      %v1535 = verf.f32.pop %v1471
      %v1536 = verf.f32.pop %v1472
      %v1537 = verf.f32.pop %v1473
      %v1538 = verf.f32.pop %v1474
      %v1539 = verf.f32.pop %v1475
      %v1540 = verf.f32.pop %v1476
      %v1541 = verf.f32.pop %v1477
      %v1542 = verf.f32.pop %v1478
      %v1543 = verf.f32.pop %v1479
      %v1544 = verf.f32.pop %v1480
      %v1545 = verf.f32.pop %v1481
      %v1546 = verf.f32.pop %v1482
      %v1547 = verf.f32.pop %v1483
      %v1548 = vadd.f32 %v1484, 1.0
      %v1549 = vadd.f32 %v1485, 1.0
      %v1550 = vadd.f32 %v1486, 1.0
      %v1551 = vadd.f32 %v1487, 1.0
      %v1552 = vadd.f32 %v1488, 1.0
      %v1553 = vadd.f32 %v1489, 1.0
      %v1554 = vadd.f32 %v1490, 1.0
      %v1555 = vadd.f32 %v1491, 1.0
      %v1556 = vadd.f32 %v1492, 1.0
      %v1557 = vadd.f32 %v1493, 1.0
      %v1558 = vadd.f32 %v1494, 1.0
      %v1559 = vadd.f32 %v1495, 1.0
      %v1560 = vadd.f32 %v1496, 1.0
      %v1561 = vadd.f32 %v1497, 1.0
      %v1562 = vadd.f32 %v1498, 1.0
      %v1563 = vadd.f32 %v1499, 1.0
      %v1564 = vadd.f32 %v1500, 1.0
      %v1565 = vadd.f32 %v1501, 1.0
      %v1566 = vadd.f32 %v1502, 1.0
      %v1567 = vadd.f32 %v1503, 1.0
      %v1568 = vadd.f32 %v1504, 1.0
      %v1569 = vadd.f32 %v1505, 1.0
      %v1570 = vadd.f32 %v1506, 1.0
      %v1571 = vadd.f32 %v1507, 1.0
      %v1572 = vadd.f32 %v1508, 1.0
      %v1573 = vadd.f32 %v1509, 1.0
      %v1574 = vadd.f32 %v1510, 1.0
      %v1575 = vadd.f32 %v1511, 1.0
      %v1576 = vadd.f32 %v1512, 1.0
      %v1577 = vadd.f32 %v1513, 1.0
      %v1578 = vadd.f32 %v1514, 1.0
      %v1579 = vadd.f32 %v1515, 1.0
      %v1580 = vadd.f32 %v1516, 1.0
      %v1581 = vadd.f32 %v1517, 1.0
      %v1582 = vadd.f32 %v1518, 1.0
      %v1583 = vadd.f32 %v1519, 1.0
      %v1584 = vadd.f32 %v1520, 1.0
      %v1585 = vadd.f32 %v1521, 1.0
      %v1586 = vadd.f32 %v1522, 1.0
      %v1587 = vadd.f32 %v1523, 1.0
      %v1588 = vadd.f32 %v1524, 1.0
      %v1589 = vadd.f32 %v1525, 1.0
      %v1590 = vadd.f32 %v1526, 1.0
      %v1591 = vadd.f32 %v1527, 1.0
      %v1592 = vadd.f32 %v1528, 1.0
      %v1593 = vadd.f32 %v1529, 1.0
      %v1594 = vadd.f32 %v1530, 1.0
      %v1595 = vadd.f32 %v1531, 1.0
      %v1596 = vadd.f32 %v1532, 1.0
      %v1597 = vadd.f32 %v1533, 1.0
      %v1598 = vadd.f32 %v1534, 1.0
      %v1599 = vadd.f32 %v1535, 1.0
      %v1600 = vadd.f32 %v1536, 1.0
      %v1601 = vadd.f32 %v1537, 1.0
      %v1602 = vadd.f32 %v1538, 1.0
      %v1603 = vadd.f32 %v1539, 1.0
      %v1604 = vadd.f32 %v1540, 1.0
      %v1605 = vadd.f32 %v1541, 1.0
      %v1606 = vadd.f32 %v1542, 1.0
      %v1607 = vadd.f32 %v1543, 1.0
      %v1608 = vadd.f32 %v1544, 1.0
      %v1609 = vadd.f32 %v1545, 1.0
      %v1610 = vadd.f32 %v1546, 1.0
      %v1611 = vadd.f32 %v1547, 1.0
      %v1612 = vmul.f32 %v1356, %v1548
      %v1613 = vmul.f32 %v1357, %v1549
      %v1614 = vmul.f32 %v1358, %v1550
      %v1615 = vmul.f32 %v1359, %v1551
      %v1616 = vmul.f32 %v1360, %v1552
      %v1617 = vmul.f32 %v1361, %v1553
      %v1618 = vmul.f32 %v1362, %v1554
      %v1619 = vmul.f32 %v1363, %v1555
      %v1620 = vmul.f32 %v1364, %v1556
      %v1621 = vmul.f32 %v1365, %v1557
      %v1622 = vmul.f32 %v1366, %v1558
      %v1623 = vmul.f32 %v1367, %v1559
      %v1624 = vmul.f32 %v1368, %v1560
      %v1625 = vmul.f32 %v1369, %v1561
      %v1626 = vmul.f32 %v1370, %v1562
      %v1627 = vmul.f32 %v1371, %v1563
      %v1628 = vmul.f32 %v1372, %v1564
      %v1629 = vmul.f32 %v1373, %v1565
      %v1630 = vmul.f32 %v1374, %v1566
      %v1631 = vmul.f32 %v1375, %v1567
      %v1632 = vmul.f32 %v1376, %v1568
      %v1633 = vmul.f32 %v1377, %v1569
      %v1634 = vmul.f32 %v1378, %v1570
      %v1635 = vmul.f32 %v1379, %v1571
      %v1636 = vmul.f32 %v1380, %v1572
      %v1637 = vmul.f32 %v1381, %v1573
      %v1638 = vmul.f32 %v1382, %v1574
      %v1639 = vmul.f32 %v1383, %v1575
      %v1640 = vmul.f32 %v1384, %v1576
      %v1641 = vmul.f32 %v1385, %v1577
      %v1642 = vmul.f32 %v1386, %v1578
      %v1643 = vmul.f32 %v1387, %v1579
      %v1644 = vmul.f32 %v1388, %v1580
      %v1645 = vmul.f32 %v1389, %v1581
      %v1646 = vmul.f32 %v1390, %v1582
      %v1647 = vmul.f32 %v1391, %v1583
      %v1648 = vmul.f32 %v1392, %v1584
      %v1649 = vmul.f32 %v1393, %v1585
      %v1650 = vmul.f32 %v1394, %v1586
      %v1651 = vmul.f32 %v1395, %v1587
      %v1652 = vmul.f32 %v1396, %v1588
      %v1653 = vmul.f32 %v1397, %v1589
      %v1654 = vmul.f32 %v1398, %v1590
      %v1655 = vmul.f32 %v1399, %v1591
      %v1656 = vmul.f32 %v1400, %v1592
      %v1657 = vmul.f32 %v1401, %v1593
      %v1658 = vmul.f32 %v1402, %v1594
      %v1659 = vmul.f32 %v1403, %v1595
      %v1660 = vmul.f32 %v1404, %v1596
      %v1661 = vmul.f32 %v1405, %v1597
      %v1662 = vmul.f32 %v1406, %v1598
      %v1663 = vmul.f32 %v1407, %v1599
      %v1664 = vmul.f32 %v1408, %v1600
      %v1665 = vmul.f32 %v1409, %v1601
      %v1666 = vmul.f32 %v1410, %v1602
      %v1667 = vmul.f32 %v1411, %v1603
      %v1668 = vmul.f32 %v1412, %v1604
      %v1669 = vmul.f32 %v1413, %v1605
      %v1670 = vmul.f32 %v1414, %v1606
      %v1671 = vmul.f32 %v1415, %v1607
      %v1672 = vmul.f32 %v1416, %v1608
      %v1673 = vmul.f32 %v1417, %v1609
      %v1674 = vmul.f32 %v1418, %v1610
      %v1675 = vmul.f32 %v1419, %v1611
      %v1676 = vld [vmem:[%s3] sm:$0xff]
      %v1677 = vld [vmem:[%s3 + $0x8] sm:$0xff]
      %v1678 = vld [vmem:[%s3 + $0x10] sm:$0xff]
      %v1679 = vld [vmem:[%s3 + $0x18] sm:$0xff]
      %v1680 = vld [vmem:[%s3 + $0x20] sm:$0xff]
      %v1681 = vld [vmem:[%s3 + $0x28] sm:$0xff]
      %v1682 = vld [vmem:[%s3 + $0x30] sm:$0xff]
      %v1683 = vld [vmem:[%s3 + $0x38] sm:$0xff]
      %v1684 = vld [vmem:[%s3 + $0x40] sm:$0xff]
      %v1685 = vld [vmem:[%s3 + $0x48] sm:$0xff]
      %v1686 = vld [vmem:[%s3 + $0x50] sm:$0xff]
      %v1687 = vld [vmem:[%s3 + $0x58] sm:$0xff]
      %v1688 = vld [vmem:[%s3 + $0x60] sm:$0xff]
      %v1689 = vld [vmem:[%s3 + $0x68] sm:$0xff]
      %v1690 = vld [vmem:[%s3 + $0x70] sm:$0xff]
      %v1691 = vld [vmem:[%s3 + $0x78] sm:$0xff]
      %v1692 = vld [vmem:[%s4] sm:$0x1]
      %v1694 = vlaneseq
      %v1695 = vshrl.u32 %v1694, 7
      %v1696 = vsub.s32 0, %v1695
      %v1697 = vrot.slane %v1692, %v1696
      %1699 = vmatprep.subr.mxu0 0.0
      %1700 = vmatpush1.msra.mxu0 %v1676
      %1701 = vmatprep.subr.mxu0 0.0
      %1702 = vmatpush1.msra.mxu0 %v1677
      %1703 = vmatprep.subr.mxu0 0.0
      %1704 = vmatpush1.msra.mxu0 %v1678
      %1705 = vmatprep.subr.mxu0 0.0
      %1706 = vmatpush1.msra.mxu0 %v1679
      %1707 = vmatprep.subr.mxu0 0.0
      %1708 = vmatpush1.msra.mxu0 %v1680
      %1709 = vmatprep.subr.mxu0 0.0
      %1710 = vmatpush1.msra.mxu0 %v1681
      %1711 = vmatprep.subr.mxu0 0.0
      %1712 = vmatpush1.msra.mxu0 %v1682
      %1713 = vmatprep.subr.mxu0 0.0
      %1714 = vmatpush1.msra.mxu0 %v1683
      %1715 = vmatprep.subr.mxu0 0.0
      %1716 = vmatpush1.msra.mxu0 %v1684
      %1717 = vmatprep.subr.mxu0 0.0
      %1718 = vmatpush1.msra.mxu0 %v1685
      %1719 = vmatprep.subr.mxu0 0.0
      %1720 = vmatpush1.msra.mxu0 %v1686
      %1721 = vmatprep.subr.mxu0 0.0
      %1722 = vmatpush1.msra.mxu0 %v1687
      %1723 = vmatprep.subr.mxu0 0.0
      %1724 = vmatpush1.msra.mxu0 %v1688
      %1725 = vmatprep.subr.mxu0 0.0
      %1726 = vmatpush1.msra.mxu0 %v1689
      %1727 = vmatprep.subr.mxu0 0.0
      %1728 = vmatpush1.msra.mxu0 %v1690
      %1729 = vmatprep.subr.mxu0 0.0
      %1730 = vmatpush1.msra.mxu0 %v1691
      %1731 = vmatprep.subr.mxu0 0.0
      %1732 = vmatpush1.msra.mxu0 0.0
      %1733 = vmatprep.subr.mxu0 0.0
      %1734 = vmatpush1.msra.mxu0 0.0
      %1735 = vmatprep.subr.mxu0 0.0
      %1736 = vmatpush1.msra.mxu0 0.0
      %1737 = vmatprep.subr.mxu0 0.0
      %1738 = vmatpush1.msra.mxu0 0.0
      %1739 = vmatprep.subr.mxu0 0.0
      %1740 = vmatpush1.msra.mxu0 0.0
      %1741 = vmatprep.subr.mxu0 0.0
      %1742 = vmatpush1.msra.mxu0 0.0
      %1743 = vmatprep.subr.mxu0 0.0
      %1744 = vmatpush1.msra.mxu0 0.0
      %1745 = vmatprep.subr.mxu0 0.0
      %1746 = vmatpush1.msra.mxu0 0.0
      %1747 = vmatprep.subr.mxu0 0.0
      %1748 = vmatpush1.msra.mxu0 0.0
      %1749 = vmatprep.subr.mxu0 0.0
      %1750 = vmatpush1.msra.mxu0 0.0
      %1751 = vmatprep.subr.mxu0 0.0
      %1752 = vmatpush1.msra.mxu0 0.0
      %1753 = vmatprep.subr.mxu0 0.0
      %1754 = vmatpush1.msra.mxu0 0.0
      %1755 = vmatprep.subr.mxu0 0.0
      %1756 = vmatpush1.msra.mxu0 0.0
      %1757 = vmatprep.subr.mxu0 0.0
      %1758 = vmatpush1.msra.mxu0 0.0
      %1759 = vmatprep.subr.mxu0 0.0
      %1760 = vmatpush1.msra.mxu0 0.0
      %1761 = vmatprep.subr.mxu0 0.0
      %1762 = vmatpush1.msra.mxu0 0.0
      %1763 = vmatprep.mubr.f32.mxu0 0.0
      %1764 = vmatmul.mubr.f32.gmra.mrb[0].mxu0 %v1612
      %v1765 = vpop.f32.mrb[0].mxu0
      %v1766 = vadd.f32 %v1697, %v1765
      %v1767 = vpop.f32.mrb[0].mxu0
      %1768 = vmatprep.mubr.f32.mxu0 0.0
      %1769 = vmatmul.mubr.f32.gmra.mrb[0].mxu0 %v1613
      %v1770 = vpop.f32.mrb[0].mxu0
      %v1771 = vadd.f32 %v1697, %v1770
      %v1772 = vpop.f32.mrb[0].mxu0
      %1773 = vmatprep.mubr.f32.mxu0 0.0
      %1774 = vmatmul.mubr.f32.gmra.mrb[0].mxu0 %v1614
      %v1775 = vpop.f32.mrb[0].mxu0
      %v1776 = vadd.f32 %v1697, %v1775
      %v1777 = vpop.f32.mrb[0].mxu0
      %1778 = vmatprep.mubr.f32.mxu0 0.0
      %1779 = vmatmul.mubr.f32.gmra.mrb[0].mxu0 %v1615
      %v1780 = vpop.f32.mrb[0].mxu0
      %v1781 = vadd.f32 %v1697, %v1780
      %v1782 = vpop.f32.mrb[0].mxu0
      %1783 = vmatprep.mubr.f32.mxu0 0.0
      %1784 = vmatmul.mubr.f32.gmra.mrb[0].mxu0 %v1616
      %v1785 = vpop.f32.mrb[0].mxu0
      %v1786 = vadd.f32 %v1697, %v1785
      %v1787 = vpop.f32.mrb[0].mxu0
      %1788 = vmatprep.mubr.f32.mxu0 0.0
      %1789 = vmatmul.mubr.f32.gmra.mrb[0].mxu0 %v1617
      %v1790 = vpop.f32.mrb[0].mxu0
      %v1791 = vadd.f32 %v1697, %v1790
      %v1792 = vpop.f32.mrb[0].mxu0
      %1793 = vmatprep.mubr.f32.mxu0 0.0
      %1794 = vmatmul.mubr.f32.gmra.mrb[0].mxu0 %v1618
      %v1795 = vpop.f32.mrb[0].mxu0
      %v1796 = vadd.f32 %v1697, %v1795
      %v1797 = vpop.f32.mrb[0].mxu0
      %1798 = vmatprep.mubr.f32.mxu0 0.0
      %1799 = vmatmul.mubr.f32.gmra.mrb[0].mxu0 %v1619
      %v1800 = vpop.f32.mrb[0].mxu0
      %v1801 = vadd.f32 %v1697, %v1800
      %v1802 = vpop.f32.mrb[0].mxu0
      %1803 = vmatprep.mubr.f32.mxu0 0.0
      %1804 = vmatmul.mubr.f32.gmra.mrb[0].mxu0 %v1620
      %v1805 = vpop.f32.mrb[0].mxu0
      %v1806 = vadd.f32 %v1697, %v1805
      %v1807 = vpop.f32.mrb[0].mxu0
      %1808 = vmatprep.mubr.f32.mxu0 0.0
      %1809 = vmatmul.mubr.f32.gmra.mrb[0].mxu0 %v1621
      %v1810 = vpop.f32.mrb[0].mxu0
      %v1811 = vadd.f32 %v1697, %v1810
      %v1812 = vpop.f32.mrb[0].mxu0
      %1813 = vmatprep.mubr.f32.mxu0 0.0
      %1814 = vmatmul.mubr.f32.gmra.mrb[0].mxu0 %v1622
      %v1815 = vpop.f32.mrb[0].mxu0
      %v1816 = vadd.f32 %v1697, %v1815
      %v1817 = vpop.f32.mrb[0].mxu0
      %1818 = vmatprep.mubr.f32.mxu0 0.0
      %1819 = vmatmul.mubr.f32.gmra.mrb[0].mxu0 %v1623
      %v1820 = vpop.f32.mrb[0].mxu0
      %v1821 = vadd.f32 %v1697, %v1820
      %v1822 = vpop.f32.mrb[0].mxu0
      %1823 = vmatprep.mubr.f32.mxu0 0.0
      %1824 = vmatmul.mubr.f32.gmra.mrb[0].mxu0 %v1624
      %v1825 = vpop.f32.mrb[0].mxu0
      %v1826 = vadd.f32 %v1697, %v1825
      %v1827 = vpop.f32.mrb[0].mxu0
      %1828 = vmatprep.mubr.f32.mxu0 0.0
      %1829 = vmatmul.mubr.f32.gmra.mrb[0].mxu0 %v1625
      %v1830 = vpop.f32.mrb[0].mxu0
      %v1831 = vadd.f32 %v1697, %v1830
      %v1832 = vpop.f32.mrb[0].mxu0
      %1833 = vmatprep.mubr.f32.mxu0 0.0
      %1834 = vmatmul.mubr.f32.gmra.mrb[0].mxu0 %v1626
      %v1835 = vpop.f32.mrb[0].mxu0
      %v1836 = vadd.f32 %v1697, %v1835
      %v1837 = vpop.f32.mrb[0].mxu0
      %1838 = vmatprep.mubr.f32.mxu0 0.0
      %1839 = vmatmul.mubr.f32.gmra.mrb[0].mxu0 %v1627
      %v1840 = vpop.f32.mrb[0].mxu0
      %v1841 = vadd.f32 %v1697, %v1840
      %v1842 = vpop.f32.mrb[0].mxu0
      %1843 = vmatprep.mubr.f32.mxu0 0.0
      %1844 = vmatmul.mubr.f32.gmra.mrb[0].mxu0 %v1628
      %v1845 = vpop.f32.mrb[0].mxu0
      %v1846 = vadd.f32 %v1697, %v1845
      %v1847 = vpop.f32.mrb[0].mxu0
      %1848 = vmatprep.mubr.f32.mxu0 0.0
      %1849 = vmatmul.mubr.f32.gmra.mrb[0].mxu0 %v1629
      %v1850 = vpop.f32.mrb[0].mxu0
      %v1851 = vadd.f32 %v1697, %v1850
      %v1852 = vpop.f32.mrb[0].mxu0
      %1853 = vmatprep.mubr.f32.mxu0 0.0
      %1854 = vmatmul.mubr.f32.gmra.mrb[0].mxu0 %v1630
      %v1855 = vpop.f32.mrb[0].mxu0
      %v1856 = vadd.f32 %v1697, %v1855
      %v1857 = vpop.f32.mrb[0].mxu0
      %1858 = vmatprep.mubr.f32.mxu0 0.0
      %1859 = vmatmul.mubr.f32.gmra.mrb[0].mxu0 %v1631
      %v1860 = vpop.f32.mrb[0].mxu0
      %v1861 = vadd.f32 %v1697, %v1860
      %v1862 = vpop.f32.mrb[0].mxu0
      %1863 = vmatprep.mubr.f32.mxu0 0.0
      %1864 = vmatmul.mubr.f32.gmra.mrb[0].mxu0 %v1632
      %v1865 = vpop.f32.mrb[0].mxu0
      %v1866 = vadd.f32 %v1697, %v1865
      %v1867 = vpop.f32.mrb[0].mxu0
      %1868 = vmatprep.mubr.f32.mxu0 0.0
      %1869 = vmatmul.mubr.f32.gmra.mrb[0].mxu0 %v1633
      %v1870 = vpop.f32.mrb[0].mxu0
      %v1871 = vadd.f32 %v1697, %v1870
      %v1872 = vpop.f32.mrb[0].mxu0
      %1873 = vmatprep.mubr.f32.mxu0 0.0
      %1874 = vmatmul.mubr.f32.gmra.mrb[0].mxu0 %v1634
      %v1875 = vpop.f32.mrb[0].mxu0
      %v1876 = vadd.f32 %v1697, %v1875
      %v1877 = vpop.f32.mrb[0].mxu0
      %1878 = vmatprep.mubr.f32.mxu0 0.0
      %1879 = vmatmul.mubr.f32.gmra.mrb[0].mxu0 %v1635
      %v1880 = vpop.f32.mrb[0].mxu0
      %v1881 = vadd.f32 %v1697, %v1880
      %v1882 = vpop.f32.mrb[0].mxu0
      %1883 = vmatprep.mubr.f32.mxu0 0.0
      %1884 = vmatmul.mubr.f32.gmra.mrb[0].mxu0 %v1636
      %v1885 = vpop.f32.mrb[0].mxu0
      %v1886 = vadd.f32 %v1697, %v1885
      %v1887 = vpop.f32.mrb[0].mxu0
      %1888 = vmatprep.mubr.f32.mxu0 0.0
      %1889 = vmatmul.mubr.f32.gmra.mrb[0].mxu0 %v1637
      %v1890 = vpop.f32.mrb[0].mxu0
      %v1891 = vadd.f32 %v1697, %v1890
      %v1892 = vpop.f32.mrb[0].mxu0
      %1893 = vmatprep.mubr.f32.mxu0 0.0
      %1894 = vmatmul.mubr.f32.gmra.mrb[0].mxu0 %v1638
      %v1895 = vpop.f32.mrb[0].mxu0
      %v1896 = vadd.f32 %v1697, %v1895
      %v1897 = vpop.f32.mrb[0].mxu0
      %1898 = vmatprep.mubr.f32.mxu0 0.0
      %1899 = vmatmul.mubr.f32.gmra.mrb[0].mxu0 %v1639
      %v1900 = vpop.f32.mrb[0].mxu0
      %v1901 = vadd.f32 %v1697, %v1900
      %v1902 = vpop.f32.mrb[0].mxu0
      %1903 = vmatprep.mubr.f32.mxu0 0.0
      %1904 = vmatmul.mubr.f32.gmra.mrb[0].mxu0 %v1640
      %v1905 = vpop.f32.mrb[0].mxu0
      %v1906 = vadd.f32 %v1697, %v1905
      %v1907 = vpop.f32.mrb[0].mxu0
      %1908 = vmatprep.mubr.f32.mxu0 0.0
      %1909 = vmatmul.mubr.f32.gmra.mrb[0].mxu0 %v1641
      %v1910 = vpop.f32.mrb[0].mxu0
      %v1911 = vadd.f32 %v1697, %v1910
      %v1912 = vpop.f32.mrb[0].mxu0
      %1913 = vmatprep.mubr.f32.mxu0 0.0
      %1914 = vmatmul.mubr.f32.gmra.mrb[0].mxu0 %v1642
      %v1915 = vpop.f32.mrb[0].mxu0
      %v1916 = vadd.f32 %v1697, %v1915
      %v1917 = vpop.f32.mrb[0].mxu0
      %1918 = vmatprep.mubr.f32.mxu0 0.0
      %1919 = vmatmul.mubr.f32.gmra.mrb[0].mxu0 %v1643
      %v1920 = vpop.f32.mrb[0].mxu0
      %v1921 = vadd.f32 %v1697, %v1920
      %v1922 = vpop.f32.mrb[0].mxu0
      %1923 = vmatprep.mubr.f32.mxu0 0.0
      %1924 = vmatmul.mubr.f32.gmra.mrb[0].mxu0 %v1644
      %v1925 = vpop.f32.mrb[0].mxu0
      %v1926 = vadd.f32 %v1697, %v1925
      %v1927 = vpop.f32.mrb[0].mxu0
      %1928 = vmatprep.mubr.f32.mxu0 0.0
      %1929 = vmatmul.mubr.f32.gmra.mrb[0].mxu0 %v1645
      %v1930 = vpop.f32.mrb[0].mxu0
      %v1931 = vadd.f32 %v1697, %v1930
      %v1932 = vpop.f32.mrb[0].mxu0
      %1933 = vmatprep.mubr.f32.mxu0 0.0
      %1934 = vmatmul.mubr.f32.gmra.mrb[0].mxu0 %v1646
      %v1935 = vpop.f32.mrb[0].mxu0
      %v1936 = vadd.f32 %v1697, %v1935
      %v1937 = vpop.f32.mrb[0].mxu0
      %1938 = vmatprep.mubr.f32.mxu0 0.0
      %1939 = vmatmul.mubr.f32.gmra.mrb[0].mxu0 %v1647
      %v1940 = vpop.f32.mrb[0].mxu0
      %v1941 = vadd.f32 %v1697, %v1940
      %v1942 = vpop.f32.mrb[0].mxu0
      %1943 = vmatprep.mubr.f32.mxu0 0.0
      %1944 = vmatmul.mubr.f32.gmra.mrb[0].mxu0 %v1648
      %v1945 = vpop.f32.mrb[0].mxu0
      %v1946 = vadd.f32 %v1697, %v1945
      %v1947 = vpop.f32.mrb[0].mxu0
      %1948 = vmatprep.mubr.f32.mxu0 0.0
      %1949 = vmatmul.mubr.f32.gmra.mrb[0].mxu0 %v1649
      %v1950 = vpop.f32.mrb[0].mxu0
      %v1951 = vadd.f32 %v1697, %v1950
      %v1952 = vpop.f32.mrb[0].mxu0
      %1953 = vmatprep.mubr.f32.mxu0 0.0
      %1954 = vmatmul.mubr.f32.gmra.mrb[0].mxu0 %v1650
      %v1955 = vpop.f32.mrb[0].mxu0
      %v1956 = vadd.f32 %v1697, %v1955
      %v1957 = vpop.f32.mrb[0].mxu0
      %1958 = vmatprep.mubr.f32.mxu0 0.0
      %1959 = vmatmul.mubr.f32.gmra.mrb[0].mxu0 %v1651
      %v1960 = vpop.f32.mrb[0].mxu0
      %v1961 = vadd.f32 %v1697, %v1960
      %v1962 = vpop.f32.mrb[0].mxu0
      %1963 = vmatprep.mubr.f32.mxu0 0.0
      %1964 = vmatmul.mubr.f32.gmra.mrb[0].mxu0 %v1652
      %v1965 = vpop.f32.mrb[0].mxu0
      %v1966 = vadd.f32 %v1697, %v1965
      %v1967 = vpop.f32.mrb[0].mxu0
      %1968 = vmatprep.mubr.f32.mxu0 0.0
      %1969 = vmatmul.mubr.f32.gmra.mrb[0].mxu0 %v1653
      %v1970 = vpop.f32.mrb[0].mxu0
      %v1971 = vadd.f32 %v1697, %v1970
      %v1972 = vpop.f32.mrb[0].mxu0
      %1973 = vmatprep.mubr.f32.mxu0 0.0
      %1974 = vmatmul.mubr.f32.gmra.mrb[0].mxu0 %v1654
      %v1975 = vpop.f32.mrb[0].mxu0
      %v1976 = vadd.f32 %v1697, %v1975
      %v1977 = vpop.f32.mrb[0].mxu0
      %1978 = vmatprep.mubr.f32.mxu0 0.0
      %1979 = vmatmul.mubr.f32.gmra.mrb[0].mxu0 %v1655
      %v1980 = vpop.f32.mrb[0].mxu0
      %v1981 = vadd.f32 %v1697, %v1980
      %v1982 = vpop.f32.mrb[0].mxu0
      %1983 = vmatprep.mubr.f32.mxu0 0.0
      %1984 = vmatmul.mubr.f32.gmra.mrb[0].mxu0 %v1656
      %v1985 = vpop.f32.mrb[0].mxu0
      %v1986 = vadd.f32 %v1697, %v1985
      %v1987 = vpop.f32.mrb[0].mxu0
      %1988 = vmatprep.mubr.f32.mxu0 0.0
      %1989 = vmatmul.mubr.f32.gmra.mrb[0].mxu0 %v1657
      %v1990 = vpop.f32.mrb[0].mxu0
      %v1991 = vadd.f32 %v1697, %v1990
      %v1992 = vpop.f32.mrb[0].mxu0
      %1993 = vmatprep.mubr.f32.mxu0 0.0
      %1994 = vmatmul.mubr.f32.gmra.mrb[0].mxu0 %v1658
      %v1995 = vpop.f32.mrb[0].mxu0
      %v1996 = vadd.f32 %v1697, %v1995
      %v1997 = vpop.f32.mrb[0].mxu0
      %1998 = vmatprep.mubr.f32.mxu0 0.0
      %1999 = vmatmul.mubr.f32.gmra.mrb[0].mxu0 %v1659
      %v2000 = vpop.f32.mrb[0].mxu0
      %v2001 = vadd.f32 %v1697, %v2000
      %v2002 = vpop.f32.mrb[0].mxu0
      %2003 = vmatprep.mubr.f32.mxu0 0.0
      %2004 = vmatmul.mubr.f32.gmra.mrb[0].mxu0 %v1660
      %v2005 = vpop.f32.mrb[0].mxu0
      %v2006 = vadd.f32 %v1697, %v2005
      %v2007 = vpop.f32.mrb[0].mxu0
      %2008 = vmatprep.mubr.f32.mxu0 0.0
      %2009 = vmatmul.mubr.f32.gmra.mrb[0].mxu0 %v1661
      %v2010 = vpop.f32.mrb[0].mxu0
      %v2011 = vadd.f32 %v1697, %v2010
      %v2012 = vpop.f32.mrb[0].mxu0
      %2013 = vmatprep.mubr.f32.mxu0 0.0
      %2014 = vmatmul.mubr.f32.gmra.mrb[0].mxu0 %v1662
      %v2015 = vpop.f32.mrb[0].mxu0
      %v2016 = vadd.f32 %v1697, %v2015
      %v2017 = vpop.f32.mrb[0].mxu0
      %2018 = vmatprep.mubr.f32.mxu0 0.0
      %2019 = vmatmul.mubr.f32.gmra.mrb[0].mxu0 %v1663
      %v2020 = vpop.f32.mrb[0].mxu0
      %v2021 = vadd.f32 %v1697, %v2020
      %v2022 = vpop.f32.mrb[0].mxu0
      %2023 = vmatprep.mubr.f32.mxu0 0.0
      %2024 = vmatmul.mubr.f32.gmra.mrb[0].mxu0 %v1664
      %v2025 = vpop.f32.mrb[0].mxu0
      %v2026 = vadd.f32 %v1697, %v2025
      %v2027 = vpop.f32.mrb[0].mxu0
      %2028 = vmatprep.mubr.f32.mxu0 0.0
      %2029 = vmatmul.mubr.f32.gmra.mrb[0].mxu0 %v1665
      %v2030 = vpop.f32.mrb[0].mxu0
      %v2031 = vadd.f32 %v1697, %v2030
      %v2032 = vpop.f32.mrb[0].mxu0
      %2033 = vmatprep.mubr.f32.mxu0 0.0
      %2034 = vmatmul.mubr.f32.gmra.mrb[0].mxu0 %v1666
      %v2035 = vpop.f32.mrb[0].mxu0
      %v2036 = vadd.f32 %v1697, %v2035
      %v2037 = vpop.f32.mrb[0].mxu0
      %2038 = vmatprep.mubr.f32.mxu0 0.0
      %2039 = vmatmul.mubr.f32.gmra.mrb[0].mxu0 %v1667
      %v2040 = vpop.f32.mrb[0].mxu0
      %v2041 = vadd.f32 %v1697, %v2040
      %v2042 = vpop.f32.mrb[0].mxu0
      %2043 = vmatprep.mubr.f32.mxu0 0.0
      %2044 = vmatmul.mubr.f32.gmra.mrb[0].mxu0 %v1668
      %v2045 = vpop.f32.mrb[0].mxu0
      %v2046 = vadd.f32 %v1697, %v2045
      %v2047 = vpop.f32.mrb[0].mxu0
      %2048 = vmatprep.mubr.f32.mxu0 0.0
      %2049 = vmatmul.mubr.f32.gmra.mrb[0].mxu0 %v1669
      %v2050 = vpop.f32.mrb[0].mxu0
      %v2051 = vadd.f32 %v1697, %v2050
      %v2052 = vpop.f32.mrb[0].mxu0
      %2053 = vmatprep.mubr.f32.mxu0 0.0
      %2054 = vmatmul.mubr.f32.gmra.mrb[0].mxu0 %v1670
      %v2055 = vpop.f32.mrb[0].mxu0
      %v2056 = vadd.f32 %v1697, %v2055
      %v2057 = vpop.f32.mrb[0].mxu0
      %2058 = vmatprep.mubr.f32.mxu0 0.0
      %2059 = vmatmul.mubr.f32.gmra.mrb[0].mxu0 %v1671
      %v2060 = vpop.f32.mrb[0].mxu0
      %v2061 = vadd.f32 %v1697, %v2060
      %v2062 = vpop.f32.mrb[0].mxu0
      %2063 = vmatprep.mubr.f32.mxu0 0.0
      %2064 = vmatmul.mubr.f32.gmra.mrb[0].mxu0 %v1672
      %v2065 = vpop.f32.mrb[0].mxu0
      %v2066 = vadd.f32 %v1697, %v2065
      %v2067 = vpop.f32.mrb[0].mxu0
      %2068 = vmatprep.mubr.f32.mxu0 0.0
      %2069 = vmatmul.mubr.f32.gmra.mrb[0].mxu0 %v1673
      %v2070 = vpop.f32.mrb[0].mxu0
      %v2071 = vadd.f32 %v1697, %v2070
      %v2072 = vpop.f32.mrb[0].mxu0
      %2073 = vmatprep.mubr.f32.mxu0 0.0
      %2074 = vmatmul.mubr.f32.gmra.mrb[0].mxu0 %v1674
      %v2075 = vpop.f32.mrb[0].mxu0
      %v2076 = vadd.f32 %v1697, %v2075
      %v2077 = vpop.f32.mrb[0].mxu0
      %2078 = vmatprep.mubr.f32.mxu0 0.0
      %2079 = vmatmul.mubr.f32.gmra.mrb[0].mxu0 %v1675
      %v2080 = vpop.f32.mrb[0].mxu0
      %v2081 = vadd.f32 %v1697, %v2080
      %v2082 = vpop.f32.mrb[0].mxu0
      %2083 = vdwg.mxu0
      %v2084 = vmul.f32 %v1766, 0.5
      %v2085 = vmul.f32 %v1771, 0.5
      %v2086 = vmul.f32 %v1776, 0.5
      %v2087 = vmul.f32 %v1781, 0.5
      %v2088 = vmul.f32 %v1786, 0.5
      %v2089 = vmul.f32 %v1791, 0.5
      %v2090 = vmul.f32 %v1796, 0.5
      %v2091 = vmul.f32 %v1801, 0.5
      %v2092 = vmul.f32 %v1806, 0.5
      %v2093 = vmul.f32 %v1811, 0.5
      %v2094 = vmul.f32 %v1816, 0.5
      %v2095 = vmul.f32 %v1821, 0.5
      %v2096 = vmul.f32 %v1826, 0.5
      %v2097 = vmul.f32 %v1831, 0.5
      %v2098 = vmul.f32 %v1836, 0.5
      %v2099 = vmul.f32 %v1841, 0.5
      %v2100 = vmul.f32 %v1846, 0.5
      %v2101 = vmul.f32 %v1851, 0.5
      %v2102 = vmul.f32 %v1856, 0.5
      %v2103 = vmul.f32 %v1861, 0.5
      %v2104 = vmul.f32 %v1866, 0.5
      %v2105 = vmul.f32 %v1871, 0.5
      %v2106 = vmul.f32 %v1876, 0.5
      %v2107 = vmul.f32 %v1881, 0.5
      %v2108 = vmul.f32 %v1886, 0.5
      %v2109 = vmul.f32 %v1891, 0.5
      %v2110 = vmul.f32 %v1896, 0.5
      %v2111 = vmul.f32 %v1901, 0.5
      %v2112 = vmul.f32 %v1906, 0.5
      %v2113 = vmul.f32 %v1911, 0.5
      %v2114 = vmul.f32 %v1916, 0.5
      %v2115 = vmul.f32 %v1921, 0.5
      %v2116 = vmul.f32 %v1926, 0.5
      %v2117 = vmul.f32 %v1931, 0.5
      %v2118 = vmul.f32 %v1936, 0.5
      %v2119 = vmul.f32 %v1941, 0.5
      %v2120 = vmul.f32 %v1946, 0.5
      %v2121 = vmul.f32 %v1951, 0.5
      %v2122 = vmul.f32 %v1956, 0.5
      %v2123 = vmul.f32 %v1961, 0.5
      %v2124 = vmul.f32 %v1966, 0.5
      %v2125 = vmul.f32 %v1971, 0.5
      %v2126 = vmul.f32 %v1976, 0.5
      %v2127 = vmul.f32 %v1981, 0.5
      %v2128 = vmul.f32 %v1986, 0.5
      %v2129 = vmul.f32 %v1991, 0.5
      %v2130 = vmul.f32 %v1996, 0.5
      %v2131 = vmul.f32 %v2001, 0.5
      %v2132 = vmul.f32 %v2006, 0.5
      %v2133 = vmul.f32 %v2011, 0.5
      %v2134 = vmul.f32 %v2016, 0.5
      %v2135 = vmul.f32 %v2021, 0.5
      %v2136 = vmul.f32 %v2026, 0.5
      %v2137 = vmul.f32 %v2031, 0.5
      %v2138 = vmul.f32 %v2036, 0.5
      %v2139 = vmul.f32 %v2041, 0.5
      %v2140 = vmul.f32 %v2046, 0.5
      %v2141 = vmul.f32 %v2051, 0.5
      %v2142 = vmul.f32 %v2056, 0.5
      %v2143 = vmul.f32 %v2061, 0.5
      %v2144 = vmul.f32 %v2066, 0.5
      %v2145 = vmul.f32 %v2071, 0.5
      %v2146 = vmul.f32 %v2076, 0.5
      %v2147 = vmul.f32 %v2081, 0.5
      %v2148 = vmul.f32 %v1766, 0.70710677
      %v2149 = vmul.f32 %v1771, 0.70710677
      %v2150 = vmul.f32 %v1776, 0.70710677
      %v2151 = vmul.f32 %v1781, 0.70710677
      %v2152 = vmul.f32 %v1786, 0.70710677
      %v2153 = vmul.f32 %v1791, 0.70710677
      %v2154 = vmul.f32 %v1796, 0.70710677
      %v2155 = vmul.f32 %v1801, 0.70710677
      %v2156 = vmul.f32 %v1806, 0.70710677
      %v2157 = vmul.f32 %v1811, 0.70710677
      %v2158 = vmul.f32 %v1816, 0.70710677
      %v2159 = vmul.f32 %v1821, 0.70710677
      %v2160 = vmul.f32 %v1826, 0.70710677
      %v2161 = vmul.f32 %v1831, 0.70710677
      %v2162 = vmul.f32 %v1836, 0.70710677
      %v2163 = vmul.f32 %v1841, 0.70710677
      %v2164 = vmul.f32 %v1846, 0.70710677
      %v2165 = vmul.f32 %v1851, 0.70710677
      %v2166 = vmul.f32 %v1856, 0.70710677
      %v2167 = vmul.f32 %v1861, 0.70710677
      %v2168 = vmul.f32 %v1866, 0.70710677
      %v2169 = vmul.f32 %v1871, 0.70710677
      %v2170 = vmul.f32 %v1876, 0.70710677
      %v2171 = vmul.f32 %v1881, 0.70710677
      %v2172 = vmul.f32 %v1886, 0.70710677
      %v2173 = vmul.f32 %v1891, 0.70710677
      %v2174 = vmul.f32 %v1896, 0.70710677
      %v2175 = vmul.f32 %v1901, 0.70710677
      %v2176 = vmul.f32 %v1906, 0.70710677
      %v2177 = vmul.f32 %v1911, 0.70710677
      %v2178 = vmul.f32 %v1916, 0.70710677
      %v2179 = vmul.f32 %v1921, 0.70710677
      %v2180 = vmul.f32 %v1926, 0.70710677
      %v2181 = vmul.f32 %v1931, 0.70710677
      %v2182 = vmul.f32 %v1936, 0.70710677
      %v2183 = vmul.f32 %v1941, 0.70710677
      %v2184 = vmul.f32 %v1946, 0.70710677
      %v2185 = vmul.f32 %v1951, 0.70710677
      %v2186 = vmul.f32 %v1956, 0.70710677
      %v2187 = vmul.f32 %v1961, 0.70710677
      %v2188 = vmul.f32 %v1966, 0.70710677
      %v2189 = vmul.f32 %v1971, 0.70710677
      %v2190 = vmul.f32 %v1976, 0.70710677
      %v2191 = vmul.f32 %v1981, 0.70710677
      %v2192 = vmul.f32 %v1986, 0.70710677
      %v2193 = vmul.f32 %v1991, 0.70710677
      %v2194 = vmul.f32 %v1996, 0.70710677
      %v2195 = vmul.f32 %v2001, 0.70710677
      %v2196 = vmul.f32 %v2006, 0.70710677
      %v2197 = vmul.f32 %v2011, 0.70710677
      %v2198 = vmul.f32 %v2016, 0.70710677
      %v2199 = vmul.f32 %v2021, 0.70710677
      %v2200 = vmul.f32 %v2026, 0.70710677
      %v2201 = vmul.f32 %v2031, 0.70710677
      %v2202 = vmul.f32 %v2036, 0.70710677
      %v2203 = vmul.f32 %v2041, 0.70710677
      %v2204 = vmul.f32 %v2046, 0.70710677
      %v2205 = vmul.f32 %v2051, 0.70710677
      %v2206 = vmul.f32 %v2056, 0.70710677
      %v2207 = vmul.f32 %v2061, 0.70710677
      %v2208 = vmul.f32 %v2066, 0.70710677
      %v2209 = vmul.f32 %v2071, 0.70710677
      %v2210 = vmul.f32 %v2076, 0.70710677
      %v2211 = vmul.f32 %v2081, 0.70710677
      %v2212 = verf.f32.pop %v2148
      %v2213 = verf.f32.pop %v2149
      %v2214 = verf.f32.pop %v2150
      %v2215 = verf.f32.pop %v2151
      %v2216 = verf.f32.pop %v2152
      %v2217 = verf.f32.pop %v2153
      %v2218 = verf.f32.pop %v2154
      %v2219 = verf.f32.pop %v2155
      %v2220 = verf.f32.pop %v2156
      %v2221 = verf.f32.pop %v2157
      %v2222 = verf.f32.pop %v2158
      %v2223 = verf.f32.pop %v2159
      %v2224 = verf.f32.pop %v2160
      %v2225 = verf.f32.pop %v2161
      %v2226 = verf.f32.pop %v2162
      %v2227 = verf.f32.pop %v2163
      %v2228 = verf.f32.pop %v2164
      %v2229 = verf.f32.pop %v2165
      %v2230 = verf.f32.pop %v2166
      %v2231 = verf.f32.pop %v2167
      %v2232 = verf.f32.pop %v2168
      %v2233 = verf.f32.pop %v2169
      %v2234 = verf.f32.pop %v2170
      %v2235 = verf.f32.pop %v2171
      %v2236 = verf.f32.pop %v2172
      %v2237 = verf.f32.pop %v2173
      %v2238 = verf.f32.pop %v2174
      %v2239 = verf.f32.pop %v2175
      %v2240 = verf.f32.pop %v2176
      %v2241 = verf.f32.pop %v2177
      %v2242 = verf.f32.pop %v2178
      %v2243 = verf.f32.pop %v2179
      %v2244 = verf.f32.pop %v2180
      %v2245 = verf.f32.pop %v2181
      %v2246 = verf.f32.pop %v2182
      %v2247 = verf.f32.pop %v2183
      %v2248 = verf.f32.pop %v2184
      %v2249 = verf.f32.pop %v2185
      %v2250 = verf.f32.pop %v2186
      %v2251 = verf.f32.pop %v2187
      %v2252 = verf.f32.pop %v2188
      %v2253 = verf.f32.pop %v2189
      %v2254 = verf.f32.pop %v2190
      %v2255 = verf.f32.pop %v2191
      %v2256 = verf.f32.pop %v2192
      %v2257 = verf.f32.pop %v2193
      %v2258 = verf.f32.pop %v2194
      %v2259 = verf.f32.pop %v2195
      %v2260 = verf.f32.pop %v2196
      %v2261 = verf.f32.pop %v2197
      %v2262 = verf.f32.pop %v2198
      %v2263 = verf.f32.pop %v2199
      %v2264 = verf.f32.pop %v2200
      %v2265 = verf.f32.pop %v2201
      %v2266 = verf.f32.pop %v2202
      %v2267 = verf.f32.pop %v2203
      %v2268 = verf.f32.pop %v2204
      %v2269 = verf.f32.pop %v2205
      %v2270 = verf.f32.pop %v2206
      %v2271 = verf.f32.pop %v2207
      %v2272 = verf.f32.pop %v2208
      %v2273 = verf.f32.pop %v2209
      %v2274 = verf.f32.pop %v2210
      %v2275 = verf.f32.pop %v2211
      %v2276 = vadd.f32 %v2212, 1.0
      %v2277 = vadd.f32 %v2213, 1.0
      %v2278 = vadd.f32 %v2214, 1.0
      %v2279 = vadd.f32 %v2215, 1.0
      %v2280 = vadd.f32 %v2216, 1.0
      %v2281 = vadd.f32 %v2217, 1.0
      %v2282 = vadd.f32 %v2218, 1.0
      %v2283 = vadd.f32 %v2219, 1.0
      %v2284 = vadd.f32 %v2220, 1.0
      %v2285 = vadd.f32 %v2221, 1.0
      %v2286 = vadd.f32 %v2222, 1.0
      %v2287 = vadd.f32 %v2223, 1.0
      %v2288 = vadd.f32 %v2224, 1.0
      %v2289 = vadd.f32 %v2225, 1.0
      %v2290 = vadd.f32 %v2226, 1.0
      %v2291 = vadd.f32 %v2227, 1.0
      %v2292 = vadd.f32 %v2228, 1.0
      %v2293 = vadd.f32 %v2229, 1.0
      %v2294 = vadd.f32 %v2230, 1.0
      %v2295 = vadd.f32 %v2231, 1.0
      %v2296 = vadd.f32 %v2232, 1.0
      %v2297 = vadd.f32 %v2233, 1.0
      %v2298 = vadd.f32 %v2234, 1.0
      %v2299 = vadd.f32 %v2235, 1.0
      %v2300 = vadd.f32 %v2236, 1.0
      %v2301 = vadd.f32 %v2237, 1.0
      %v2302 = vadd.f32 %v2238, 1.0
      %v2303 = vadd.f32 %v2239, 1.0
      %v2304 = vadd.f32 %v2240, 1.0
      %v2305 = vadd.f32 %v2241, 1.0
      %v2306 = vadd.f32 %v2242, 1.0
      %v2307 = vadd.f32 %v2243, 1.0
      %v2308 = vadd.f32 %v2244, 1.0
      %v2309 = vadd.f32 %v2245, 1.0
      %v2310 = vadd.f32 %v2246, 1.0
      %v2311 = vadd.f32 %v2247, 1.0
      %v2312 = vadd.f32 %v2248, 1.0
      %v2313 = vadd.f32 %v2249, 1.0
      %v2314 = vadd.f32 %v2250, 1.0
      %v2315 = vadd.f32 %v2251, 1.0
      %v2316 = vadd.f32 %v2252, 1.0
      %v2317 = vadd.f32 %v2253, 1.0
      %v2318 = vadd.f32 %v2254, 1.0
      %v2319 = vadd.f32 %v2255, 1.0
      %v2320 = vadd.f32 %v2256, 1.0
      %v2321 = vadd.f32 %v2257, 1.0
      %v2322 = vadd.f32 %v2258, 1.0
      %v2323 = vadd.f32 %v2259, 1.0
      %v2324 = vadd.f32 %v2260, 1.0
      %v2325 = vadd.f32 %v2261, 1.0
      %v2326 = vadd.f32 %v2262, 1.0
      %v2327 = vadd.f32 %v2263, 1.0
      %v2328 = vadd.f32 %v2264, 1.0
      %v2329 = vadd.f32 %v2265, 1.0
      %v2330 = vadd.f32 %v2266, 1.0
      %v2331 = vadd.f32 %v2267, 1.0
      %v2332 = vadd.f32 %v2268, 1.0
      %v2333 = vadd.f32 %v2269, 1.0
      %v2334 = vadd.f32 %v2270, 1.0
      %v2335 = vadd.f32 %v2271, 1.0
      %v2336 = vadd.f32 %v2272, 1.0
      %v2337 = vadd.f32 %v2273, 1.0
      %v2338 = vadd.f32 %v2274, 1.0
      %v2339 = vadd.f32 %v2275, 1.0
      %v2340 = vmul.f32 %v2084, %v2276
      %v2341 = vmul.f32 %v2085, %v2277
      %v2342 = vmul.f32 %v2086, %v2278
      %v2343 = vmul.f32 %v2087, %v2279
      %v2344 = vmul.f32 %v2088, %v2280
      %v2345 = vmul.f32 %v2089, %v2281
      %v2346 = vmul.f32 %v2090, %v2282
      %v2347 = vmul.f32 %v2091, %v2283
      %v2348 = vmul.f32 %v2092, %v2284
      %v2349 = vmul.f32 %v2093, %v2285
      %v2350 = vmul.f32 %v2094, %v2286
      %v2351 = vmul.f32 %v2095, %v2287
      %v2352 = vmul.f32 %v2096, %v2288
      %v2353 = vmul.f32 %v2097, %v2289
      %v2354 = vmul.f32 %v2098, %v2290
      %v2355 = vmul.f32 %v2099, %v2291
      %v2356 = vmul.f32 %v2100, %v2292
      %v2357 = vmul.f32 %v2101, %v2293
      %v2358 = vmul.f32 %v2102, %v2294
      %v2359 = vmul.f32 %v2103, %v2295
      %v2360 = vmul.f32 %v2104, %v2296
      %v2361 = vmul.f32 %v2105, %v2297
      %v2362 = vmul.f32 %v2106, %v2298
      %v2363 = vmul.f32 %v2107, %v2299
      %v2364 = vmul.f32 %v2108, %v2300
      %v2365 = vmul.f32 %v2109, %v2301
      %v2366 = vmul.f32 %v2110, %v2302
      %v2367 = vmul.f32 %v2111, %v2303
      %v2368 = vmul.f32 %v2112, %v2304
      %v2369 = vmul.f32 %v2113, %v2305
      %v2370 = vmul.f32 %v2114, %v2306
      %v2371 = vmul.f32 %v2115, %v2307
      %v2372 = vmul.f32 %v2116, %v2308
      %v2373 = vmul.f32 %v2117, %v2309
      %v2374 = vmul.f32 %v2118, %v2310
      %v2375 = vmul.f32 %v2119, %v2311
      %v2376 = vmul.f32 %v2120, %v2312
      %v2377 = vmul.f32 %v2121, %v2313
      %v2378 = vmul.f32 %v2122, %v2314
      %v2379 = vmul.f32 %v2123, %v2315
      %v2380 = vmul.f32 %v2124, %v2316
      %v2381 = vmul.f32 %v2125, %v2317
      %v2382 = vmul.f32 %v2126, %v2318
      %v2383 = vmul.f32 %v2127, %v2319
      %v2384 = vmul.f32 %v2128, %v2320
      %v2385 = vmul.f32 %v2129, %v2321
      %v2386 = vmul.f32 %v2130, %v2322
      %v2387 = vmul.f32 %v2131, %v2323
      %v2388 = vmul.f32 %v2132, %v2324
      %v2389 = vmul.f32 %v2133, %v2325
      %v2390 = vmul.f32 %v2134, %v2326
      %v2391 = vmul.f32 %v2135, %v2327
      %v2392 = vmul.f32 %v2136, %v2328
      %v2393 = vmul.f32 %v2137, %v2329
      %v2394 = vmul.f32 %v2138, %v2330
      %v2395 = vmul.f32 %v2139, %v2331
      %v2396 = vmul.f32 %v2140, %v2332
      %v2397 = vmul.f32 %v2141, %v2333
      %v2398 = vmul.f32 %v2142, %v2334
      %v2399 = vmul.f32 %v2143, %v2335
      %v2400 = vmul.f32 %v2144, %v2336
      %v2401 = vmul.f32 %v2145, %v2337
      %v2402 = vmul.f32 %v2146, %v2338
      %v2403 = vmul.f32 %v2147, %v2339
      %v2404 = vld [vmem:[%s5] sm:$0xff]
      %v2405 = vld [vmem:[%s5 + $0x8] sm:$0xff]
      %v2406 = vld [vmem:[%s5 + $0x10] sm:$0xff]
      %v2407 = vld [vmem:[%s5 + $0x18] sm:$0xff]
      %v2408 = vld [vmem:[%s5 + $0x20] sm:$0xff]
      %v2409 = vld [vmem:[%s5 + $0x28] sm:$0xff]
      %v2410 = vld [vmem:[%s5 + $0x30] sm:$0xff]
      %v2411 = vld [vmem:[%s5 + $0x38] sm:$0xff]
      %v2412 = vld [vmem:[%s5 + $0x40] sm:$0xff]
      %v2413 = vld [vmem:[%s5 + $0x48] sm:$0xff]
      %v2414 = vld [vmem:[%s5 + $0x50] sm:$0xff]
      %v2415 = vld [vmem:[%s5 + $0x58] sm:$0xff]
      %v2416 = vld [vmem:[%s5 + $0x60] sm:$0xff]
      %v2417 = vld [vmem:[%s5 + $0x68] sm:$0xff]
      %v2418 = vld [vmem:[%s5 + $0x70] sm:$0xff]
      %v2419 = vld [vmem:[%s5 + $0x78] sm:$0xff]
      %v2420 = vld [vmem:[%s6] sm:$0x1]
      %v2422 = vlaneseq
      %v2423 = vshrl.u32 %v2422, 7
      %v2424 = vsub.s32 0, %v2423
      %v2425 = vrot.slane %v2420, %v2424
      %2427 = vmatprep.subr.mxu0 0.0
      %2428 = vmatpush1.msra.mxu0 %v2404
      %2429 = vmatprep.subr.mxu0 0.0
      %2430 = vmatpush1.msra.mxu0 %v2405
      %2431 = vmatprep.subr.mxu0 0.0
      %2432 = vmatpush1.msra.mxu0 %v2406
      %2433 = vmatprep.subr.mxu0 0.0
      %2434 = vmatpush1.msra.mxu0 %v2407
      %2435 = vmatprep.subr.mxu0 0.0
      %2436 = vmatpush1.msra.mxu0 %v2408
      %2437 = vmatprep.subr.mxu0 0.0
      %2438 = vmatpush1.msra.mxu0 %v2409
      %2439 = vmatprep.subr.mxu0 0.0
      %2440 = vmatpush1.msra.mxu0 %v2410
      %2441 = vmatprep.subr.mxu0 0.0
      %2442 = vmatpush1.msra.mxu0 %v2411
      %2443 = vmatprep.subr.mxu0 0.0
      %2444 = vmatpush1.msra.mxu0 %v2412
      %2445 = vmatprep.subr.mxu0 0.0
      %2446 = vmatpush1.msra.mxu0 %v2413
      %2447 = vmatprep.subr.mxu0 0.0
      %2448 = vmatpush1.msra.mxu0 %v2414
      %2449 = vmatprep.subr.mxu0 0.0
      %2450 = vmatpush1.msra.mxu0 %v2415
      %2451 = vmatprep.subr.mxu0 0.0
      %2452 = vmatpush1.msra.mxu0 %v2416
      %2453 = vmatprep.subr.mxu0 0.0
      %2454 = vmatpush1.msra.mxu0 %v2417
      %2455 = vmatprep.subr.mxu0 0.0
      %2456 = vmatpush1.msra.mxu0 %v2418
      %2457 = vmatprep.subr.mxu0 0.0
      %2458 = vmatpush1.msra.mxu0 %v2419
      %2459 = vmatprep.subr.mxu0 0.0
      %2460 = vmatpush1.msra.mxu0 0.0
      %2461 = vmatprep.subr.mxu0 0.0
      %2462 = vmatpush1.msra.mxu0 0.0
      %2463 = vmatprep.subr.mxu0 0.0
      %2464 = vmatpush1.msra.mxu0 0.0
      %2465 = vmatprep.subr.mxu0 0.0
      %2466 = vmatpush1.msra.mxu0 0.0
      %2467 = vmatprep.subr.mxu0 0.0
      %2468 = vmatpush1.msra.mxu0 0.0
      %2469 = vmatprep.subr.mxu0 0.0
      %2470 = vmatpush1.msra.mxu0 0.0
      %2471 = vmatprep.subr.mxu0 0.0
      %2472 = vmatpush1.msra.mxu0 0.0
      %2473 = vmatprep.subr.mxu0 0.0
      %2474 = vmatpush1.msra.mxu0 0.0
      %2475 = vmatprep.subr.mxu0 0.0
      %2476 = vmatpush1.msra.mxu0 0.0
      %2477 = vmatprep.subr.mxu0 0.0
      %2478 = vmatpush1.msra.mxu0 0.0
      %2479 = vmatprep.subr.mxu0 0.0
      %2480 = vmatpush1.msra.mxu0 0.0
      %2481 = vmatprep.subr.mxu0 0.0
      %2482 = vmatpush1.msra.mxu0 0.0
      %2483 = vmatprep.subr.mxu0 0.0
      %2484 = vmatpush1.msra.mxu0 0.0
      %2485 = vmatprep.subr.mxu0 0.0
      %2486 = vmatpush1.msra.mxu0 0.0
      %2487 = vmatprep.subr.mxu0 0.0
      %2488 = vmatpush1.msra.mxu0 0.0
      %2489 = vmatprep.subr.mxu0 0.0
      %2490 = vmatpush1.msra.mxu0 0.0
      %2491 = vmatprep.mubr.f32.mxu0 0.0
      %2492 = vmatmul.mubr.f32.gmra.mrb[0].mxu0 %v2340
      %v2493 = vpop.f32.mrb[0].mxu0
      %v2494 = vadd.f32 %v2425, %v2493
      %v2495 = vpop.f32.mrb[0].mxu0
      %2496 = vmatprep.mubr.f32.mxu0 0.0
      %2497 = vmatmul.mubr.f32.gmra.mrb[0].mxu0 %v2341
      %v2498 = vpop.f32.mrb[0].mxu0
      %v2499 = vadd.f32 %v2425, %v2498
      %v2500 = vpop.f32.mrb[0].mxu0
      %2501 = vmatprep.mubr.f32.mxu0 0.0
      %2502 = vmatmul.mubr.f32.gmra.mrb[0].mxu0 %v2342
      %v2503 = vpop.f32.mrb[0].mxu0
      %v2504 = vadd.f32 %v2425, %v2503
      %v2505 = vpop.f32.mrb[0].mxu0
      %2506 = vmatprep.mubr.f32.mxu0 0.0
      %2507 = vmatmul.mubr.f32.gmra.mrb[0].mxu0 %v2343
      %v2508 = vpop.f32.mrb[0].mxu0
      %v2509 = vadd.f32 %v2425, %v2508
      %v2510 = vpop.f32.mrb[0].mxu0
      %2511 = vmatprep.mubr.f32.mxu0 0.0
      %2512 = vmatmul.mubr.f32.gmra.mrb[0].mxu0 %v2344
      %v2513 = vpop.f32.mrb[0].mxu0
      %v2514 = vadd.f32 %v2425, %v2513
      %v2515 = vpop.f32.mrb[0].mxu0
      %2516 = vmatprep.mubr.f32.mxu0 0.0
      %2517 = vmatmul.mubr.f32.gmra.mrb[0].mxu0 %v2345
      %v2518 = vpop.f32.mrb[0].mxu0
      %v2519 = vadd.f32 %v2425, %v2518
      %v2520 = vpop.f32.mrb[0].mxu0
      %2521 = vmatprep.mubr.f32.mxu0 0.0
      %2522 = vmatmul.mubr.f32.gmra.mrb[0].mxu0 %v2346
      %v2523 = vpop.f32.mrb[0].mxu0
      %v2524 = vadd.f32 %v2425, %v2523
      %v2525 = vpop.f32.mrb[0].mxu0
      %2526 = vmatprep.mubr.f32.mxu0 0.0
      %2527 = vmatmul.mubr.f32.gmra.mrb[0].mxu0 %v2347
      %v2528 = vpop.f32.mrb[0].mxu0
      %v2529 = vadd.f32 %v2425, %v2528
      %v2530 = vpop.f32.mrb[0].mxu0
      %2531 = vmatprep.mubr.f32.mxu0 0.0
      %2532 = vmatmul.mubr.f32.gmra.mrb[0].mxu0 %v2348
      %v2533 = vpop.f32.mrb[0].mxu0
      %v2534 = vadd.f32 %v2425, %v2533
      %v2535 = vpop.f32.mrb[0].mxu0
      %2536 = vmatprep.mubr.f32.mxu0 0.0
      %2537 = vmatmul.mubr.f32.gmra.mrb[0].mxu0 %v2349
      %v2538 = vpop.f32.mrb[0].mxu0
      %v2539 = vadd.f32 %v2425, %v2538
      %v2540 = vpop.f32.mrb[0].mxu0
      %2541 = vmatprep.mubr.f32.mxu0 0.0
      %2542 = vmatmul.mubr.f32.gmra.mrb[0].mxu0 %v2350
      %v2543 = vpop.f32.mrb[0].mxu0
      %v2544 = vadd.f32 %v2425, %v2543
      %v2545 = vpop.f32.mrb[0].mxu0
      %2546 = vmatprep.mubr.f32.mxu0 0.0
      %2547 = vmatmul.mubr.f32.gmra.mrb[0].mxu0 %v2351
      %v2548 = vpop.f32.mrb[0].mxu0
      %v2549 = vadd.f32 %v2425, %v2548
      %v2550 = vpop.f32.mrb[0].mxu0
      %2551 = vmatprep.mubr.f32.mxu0 0.0
      %2552 = vmatmul.mubr.f32.gmra.mrb[0].mxu0 %v2352
      %v2553 = vpop.f32.mrb[0].mxu0
      %v2554 = vadd.f32 %v2425, %v2553
      %v2555 = vpop.f32.mrb[0].mxu0
      %2556 = vmatprep.mubr.f32.mxu0 0.0
      %2557 = vmatmul.mubr.f32.gmra.mrb[0].mxu0 %v2353
      %v2558 = vpop.f32.mrb[0].mxu0
      %v2559 = vadd.f32 %v2425, %v2558
      %v2560 = vpop.f32.mrb[0].mxu0
      %2561 = vmatprep.mubr.f32.mxu0 0.0
      %2562 = vmatmul.mubr.f32.gmra.mrb[0].mxu0 %v2354
      %v2563 = vpop.f32.mrb[0].mxu0
      %v2564 = vadd.f32 %v2425, %v2563
      %v2565 = vpop.f32.mrb[0].mxu0
      %2566 = vmatprep.mubr.f32.mxu0 0.0
      %2567 = vmatmul.mubr.f32.gmra.mrb[0].mxu0 %v2355
      %v2568 = vpop.f32.mrb[0].mxu0
      %v2569 = vadd.f32 %v2425, %v2568
      %v2570 = vpop.f32.mrb[0].mxu0
      %2571 = vmatprep.mubr.f32.mxu0 0.0
      %2572 = vmatmul.mubr.f32.gmra.mrb[0].mxu0 %v2356
      %v2573 = vpop.f32.mrb[0].mxu0
      %v2574 = vadd.f32 %v2425, %v2573
      %v2575 = vpop.f32.mrb[0].mxu0
      %2576 = vmatprep.mubr.f32.mxu0 0.0
      %2577 = vmatmul.mubr.f32.gmra.mrb[0].mxu0 %v2357
      %v2578 = vpop.f32.mrb[0].mxu0
      %v2579 = vadd.f32 %v2425, %v2578
      %v2580 = vpop.f32.mrb[0].mxu0
      %2581 = vmatprep.mubr.f32.mxu0 0.0
      %2582 = vmatmul.mubr.f32.gmra.mrb[0].mxu0 %v2358
      %v2583 = vpop.f32.mrb[0].mxu0
      %v2584 = vadd.f32 %v2425, %v2583
      %v2585 = vpop.f32.mrb[0].mxu0
      %2586 = vmatprep.mubr.f32.mxu0 0.0
      %2587 = vmatmul.mubr.f32.gmra.mrb[0].mxu0 %v2359
      %v2588 = vpop.f32.mrb[0].mxu0
      %v2589 = vadd.f32 %v2425, %v2588
      %v2590 = vpop.f32.mrb[0].mxu0
      %2591 = vmatprep.mubr.f32.mxu0 0.0
      %2592 = vmatmul.mubr.f32.gmra.mrb[0].mxu0 %v2360
      %v2593 = vpop.f32.mrb[0].mxu0
      %v2594 = vadd.f32 %v2425, %v2593
      %v2595 = vpop.f32.mrb[0].mxu0
      %2596 = vmatprep.mubr.f32.mxu0 0.0
      %2597 = vmatmul.mubr.f32.gmra.mrb[0].mxu0 %v2361
      %v2598 = vpop.f32.mrb[0].mxu0
      %v2599 = vadd.f32 %v2425, %v2598
      %v2600 = vpop.f32.mrb[0].mxu0
      %2601 = vmatprep.mubr.f32.mxu0 0.0
      %2602 = vmatmul.mubr.f32.gmra.mrb[0].mxu0 %v2362
      %v2603 = vpop.f32.mrb[0].mxu0
      %v2604 = vadd.f32 %v2425, %v2603
      %v2605 = vpop.f32.mrb[0].mxu0
      %2606 = vmatprep.mubr.f32.mxu0 0.0
      %2607 = vmatmul.mubr.f32.gmra.mrb[0].mxu0 %v2363
      %v2608 = vpop.f32.mrb[0].mxu0
      %v2609 = vadd.f32 %v2425, %v2608
      %v2610 = vpop.f32.mrb[0].mxu0
      %2611 = vmatprep.mubr.f32.mxu0 0.0
      %2612 = vmatmul.mubr.f32.gmra.mrb[0].mxu0 %v2364
      %v2613 = vpop.f32.mrb[0].mxu0
      %v2614 = vadd.f32 %v2425, %v2613
      %v2615 = vpop.f32.mrb[0].mxu0
      %2616 = vmatprep.mubr.f32.mxu0 0.0
      %2617 = vmatmul.mubr.f32.gmra.mrb[0].mxu0 %v2365
      %v2618 = vpop.f32.mrb[0].mxu0
      %v2619 = vadd.f32 %v2425, %v2618
      %v2620 = vpop.f32.mrb[0].mxu0
      %2621 = vmatprep.mubr.f32.mxu0 0.0
      %2622 = vmatmul.mubr.f32.gmra.mrb[0].mxu0 %v2366
      %v2623 = vpop.f32.mrb[0].mxu0
      %v2624 = vadd.f32 %v2425, %v2623
      %v2625 = vpop.f32.mrb[0].mxu0
      %2626 = vmatprep.mubr.f32.mxu0 0.0
      %2627 = vmatmul.mubr.f32.gmra.mrb[0].mxu0 %v2367
      %v2628 = vpop.f32.mrb[0].mxu0
      %v2629 = vadd.f32 %v2425, %v2628
      %v2630 = vpop.f32.mrb[0].mxu0
      %2631 = vmatprep.mubr.f32.mxu0 0.0
      %2632 = vmatmul.mubr.f32.gmra.mrb[0].mxu0 %v2368
      %v2633 = vpop.f32.mrb[0].mxu0
      %v2634 = vadd.f32 %v2425, %v2633
      %v2635 = vpop.f32.mrb[0].mxu0
      %2636 = vmatprep.mubr.f32.mxu0 0.0
      %2637 = vmatmul.mubr.f32.gmra.mrb[0].mxu0 %v2369
      %v2638 = vpop.f32.mrb[0].mxu0
      %v2639 = vadd.f32 %v2425, %v2638
      %v2640 = vpop.f32.mrb[0].mxu0
      %2641 = vmatprep.mubr.f32.mxu0 0.0
      %2642 = vmatmul.mubr.f32.gmra.mrb[0].mxu0 %v2370
      %v2643 = vpop.f32.mrb[0].mxu0
      %v2644 = vadd.f32 %v2425, %v2643
      %v2645 = vpop.f32.mrb[0].mxu0
      %2646 = vmatprep.mubr.f32.mxu0 0.0
      %2647 = vmatmul.mubr.f32.gmra.mrb[0].mxu0 %v2371
      %v2648 = vpop.f32.mrb[0].mxu0
      %v2649 = vadd.f32 %v2425, %v2648
      %v2650 = vpop.f32.mrb[0].mxu0
      %2651 = vmatprep.mubr.f32.mxu0 0.0
      %2652 = vmatmul.mubr.f32.gmra.mrb[0].mxu0 %v2372
      %v2653 = vpop.f32.mrb[0].mxu0
      %v2654 = vadd.f32 %v2425, %v2653
      %v2655 = vpop.f32.mrb[0].mxu0
      %2656 = vmatprep.mubr.f32.mxu0 0.0
      %2657 = vmatmul.mubr.f32.gmra.mrb[0].mxu0 %v2373
      %v2658 = vpop.f32.mrb[0].mxu0
      %v2659 = vadd.f32 %v2425, %v2658
      %v2660 = vpop.f32.mrb[0].mxu0
      %2661 = vmatprep.mubr.f32.mxu0 0.0
      %2662 = vmatmul.mubr.f32.gmra.mrb[0].mxu0 %v2374
      %v2663 = vpop.f32.mrb[0].mxu0
      %v2664 = vadd.f32 %v2425, %v2663
      %v2665 = vpop.f32.mrb[0].mxu0
      %2666 = vmatprep.mubr.f32.mxu0 0.0
      %2667 = vmatmul.mubr.f32.gmra.mrb[0].mxu0 %v2375
      %v2668 = vpop.f32.mrb[0].mxu0
      %v2669 = vadd.f32 %v2425, %v2668
      %v2670 = vpop.f32.mrb[0].mxu0
      %2671 = vmatprep.mubr.f32.mxu0 0.0
      %2672 = vmatmul.mubr.f32.gmra.mrb[0].mxu0 %v2376
      %v2673 = vpop.f32.mrb[0].mxu0
      %v2674 = vadd.f32 %v2425, %v2673
      %v2675 = vpop.f32.mrb[0].mxu0
      %2676 = vmatprep.mubr.f32.mxu0 0.0
      %2677 = vmatmul.mubr.f32.gmra.mrb[0].mxu0 %v2377
      %v2678 = vpop.f32.mrb[0].mxu0
      %v2679 = vadd.f32 %v2425, %v2678
      %v2680 = vpop.f32.mrb[0].mxu0
      %2681 = vmatprep.mubr.f32.mxu0 0.0
      %2682 = vmatmul.mubr.f32.gmra.mrb[0].mxu0 %v2378
      %v2683 = vpop.f32.mrb[0].mxu0
      %v2684 = vadd.f32 %v2425, %v2683
      %v2685 = vpop.f32.mrb[0].mxu0
      %2686 = vmatprep.mubr.f32.mxu0 0.0
      %2687 = vmatmul.mubr.f32.gmra.mrb[0].mxu0 %v2379
      %v2688 = vpop.f32.mrb[0].mxu0
      %v2689 = vadd.f32 %v2425, %v2688
      %v2690 = vpop.f32.mrb[0].mxu0
      %2691 = vmatprep.mubr.f32.mxu0 0.0
      %2692 = vmatmul.mubr.f32.gmra.mrb[0].mxu0 %v2380
      %v2693 = vpop.f32.mrb[0].mxu0
      %v2694 = vadd.f32 %v2425, %v2693
      %v2695 = vpop.f32.mrb[0].mxu0
      %2696 = vmatprep.mubr.f32.mxu0 0.0
      %2697 = vmatmul.mubr.f32.gmra.mrb[0].mxu0 %v2381
      %v2698 = vpop.f32.mrb[0].mxu0
      %v2699 = vadd.f32 %v2425, %v2698
      %v2700 = vpop.f32.mrb[0].mxu0
      %2701 = vmatprep.mubr.f32.mxu0 0.0
      %2702 = vmatmul.mubr.f32.gmra.mrb[0].mxu0 %v2382
      %v2703 = vpop.f32.mrb[0].mxu0
      %v2704 = vadd.f32 %v2425, %v2703
      %v2705 = vpop.f32.mrb[0].mxu0
      %2706 = vmatprep.mubr.f32.mxu0 0.0
      %2707 = vmatmul.mubr.f32.gmra.mrb[0].mxu0 %v2383
      %v2708 = vpop.f32.mrb[0].mxu0
      %v2709 = vadd.f32 %v2425, %v2708
      %v2710 = vpop.f32.mrb[0].mxu0
      %2711 = vmatprep.mubr.f32.mxu0 0.0
      %2712 = vmatmul.mubr.f32.gmra.mrb[0].mxu0 %v2384
      %v2713 = vpop.f32.mrb[0].mxu0
      %v2714 = vadd.f32 %v2425, %v2713
      %v2715 = vpop.f32.mrb[0].mxu0
      %2716 = vmatprep.mubr.f32.mxu0 0.0
      %2717 = vmatmul.mubr.f32.gmra.mrb[0].mxu0 %v2385
      %v2718 = vpop.f32.mrb[0].mxu0
      %v2719 = vadd.f32 %v2425, %v2718
      %v2720 = vpop.f32.mrb[0].mxu0
      %2721 = vmatprep.mubr.f32.mxu0 0.0
      %2722 = vmatmul.mubr.f32.gmra.mrb[0].mxu0 %v2386
      %v2723 = vpop.f32.mrb[0].mxu0
      %v2724 = vadd.f32 %v2425, %v2723
      %v2725 = vpop.f32.mrb[0].mxu0
      %2726 = vmatprep.mubr.f32.mxu0 0.0
      %2727 = vmatmul.mubr.f32.gmra.mrb[0].mxu0 %v2387
      %v2728 = vpop.f32.mrb[0].mxu0
      %v2729 = vadd.f32 %v2425, %v2728
      %v2730 = vpop.f32.mrb[0].mxu0
      %2731 = vmatprep.mubr.f32.mxu0 0.0
      %2732 = vmatmul.mubr.f32.gmra.mrb[0].mxu0 %v2388
      %v2733 = vpop.f32.mrb[0].mxu0
      %v2734 = vadd.f32 %v2425, %v2733
      %v2735 = vpop.f32.mrb[0].mxu0
      %2736 = vmatprep.mubr.f32.mxu0 0.0
      %2737 = vmatmul.mubr.f32.gmra.mrb[0].mxu0 %v2389
      %v2738 = vpop.f32.mrb[0].mxu0
      %v2739 = vadd.f32 %v2425, %v2738
      %v2740 = vpop.f32.mrb[0].mxu0
      %2741 = vmatprep.mubr.f32.mxu0 0.0
      %2742 = vmatmul.mubr.f32.gmra.mrb[0].mxu0 %v2390
      %v2743 = vpop.f32.mrb[0].mxu0
      %v2744 = vadd.f32 %v2425, %v2743
      %v2745 = vpop.f32.mrb[0].mxu0
      %2746 = vmatprep.mubr.f32.mxu0 0.0
      %2747 = vmatmul.mubr.f32.gmra.mrb[0].mxu0 %v2391
      %v2748 = vpop.f32.mrb[0].mxu0
      %v2749 = vadd.f32 %v2425, %v2748
      %v2750 = vpop.f32.mrb[0].mxu0
      %2751 = vmatprep.mubr.f32.mxu0 0.0
      %2752 = vmatmul.mubr.f32.gmra.mrb[0].mxu0 %v2392
      %v2753 = vpop.f32.mrb[0].mxu0
      %v2754 = vadd.f32 %v2425, %v2753
      %v2755 = vpop.f32.mrb[0].mxu0
      %2756 = vmatprep.mubr.f32.mxu0 0.0
      %2757 = vmatmul.mubr.f32.gmra.mrb[0].mxu0 %v2393
      %v2758 = vpop.f32.mrb[0].mxu0
      %v2759 = vadd.f32 %v2425, %v2758
      %v2760 = vpop.f32.mrb[0].mxu0
      %2761 = vmatprep.mubr.f32.mxu0 0.0
      %2762 = vmatmul.mubr.f32.gmra.mrb[0].mxu0 %v2394
      %v2763 = vpop.f32.mrb[0].mxu0
      %v2764 = vadd.f32 %v2425, %v2763
      %v2765 = vpop.f32.mrb[0].mxu0
      %2766 = vmatprep.mubr.f32.mxu0 0.0
      %2767 = vmatmul.mubr.f32.gmra.mrb[0].mxu0 %v2395
      %v2768 = vpop.f32.mrb[0].mxu0
      %v2769 = vadd.f32 %v2425, %v2768
      %v2770 = vpop.f32.mrb[0].mxu0
      %2771 = vmatprep.mubr.f32.mxu0 0.0
      %2772 = vmatmul.mubr.f32.gmra.mrb[0].mxu0 %v2396
      %v2773 = vpop.f32.mrb[0].mxu0
      %v2774 = vadd.f32 %v2425, %v2773
      %v2775 = vpop.f32.mrb[0].mxu0
      %2776 = vmatprep.mubr.f32.mxu0 0.0
      %2777 = vmatmul.mubr.f32.gmra.mrb[0].mxu0 %v2397
      %v2778 = vpop.f32.mrb[0].mxu0
      %v2779 = vadd.f32 %v2425, %v2778
      %v2780 = vpop.f32.mrb[0].mxu0
      %2781 = vmatprep.mubr.f32.mxu0 0.0
      %2782 = vmatmul.mubr.f32.gmra.mrb[0].mxu0 %v2398
      %v2783 = vpop.f32.mrb[0].mxu0
      %v2784 = vadd.f32 %v2425, %v2783
      %v2785 = vpop.f32.mrb[0].mxu0
      %2786 = vmatprep.mubr.f32.mxu0 0.0
      %2787 = vmatmul.mubr.f32.gmra.mrb[0].mxu0 %v2399
      %v2788 = vpop.f32.mrb[0].mxu0
      %v2789 = vadd.f32 %v2425, %v2788
      %v2790 = vpop.f32.mrb[0].mxu0
      %2791 = vmatprep.mubr.f32.mxu0 0.0
      %2792 = vmatmul.mubr.f32.gmra.mrb[0].mxu0 %v2400
      %v2793 = vpop.f32.mrb[0].mxu0
      %v2794 = vadd.f32 %v2425, %v2793
      %v2795 = vpop.f32.mrb[0].mxu0
      %2796 = vmatprep.mubr.f32.mxu0 0.0
      %2797 = vmatmul.mubr.f32.gmra.mrb[0].mxu0 %v2401
      %v2798 = vpop.f32.mrb[0].mxu0
      %v2799 = vadd.f32 %v2425, %v2798
      %v2800 = vpop.f32.mrb[0].mxu0
      %2801 = vmatprep.mubr.f32.mxu0 0.0
      %2802 = vmatmul.mubr.f32.gmra.mrb[0].mxu0 %v2402
      %v2803 = vpop.f32.mrb[0].mxu0
      %v2804 = vadd.f32 %v2425, %v2803
      %v2805 = vpop.f32.mrb[0].mxu0
      %2806 = vmatprep.mubr.f32.mxu0 0.0
      %2807 = vmatmul.mubr.f32.gmra.mrb[0].mxu0 %v2403
      %v2808 = vpop.f32.mrb[0].mxu0
      %v2809 = vadd.f32 %v2425, %v2808
      %v2810 = vpop.f32.mrb[0].mxu0
      %2811 = vdwg.mxu0
      %2812 = vadd.xlane.f32.xlu0 %v2494
      %v2813 = vpop.xlane.xlu0 %2812
      %2814 = vadd.xlane.f32.xlu0 %v2499
      %v2815 = vpop.xlane.xlu0 %2814
      %2816 = vadd.xlane.f32.xlu0 %v2504
      %v2817 = vpop.xlane.xlu0 %2816
      %2818 = vadd.xlane.f32.xlu0 %v2509
      %v2819 = vpop.xlane.xlu0 %2818
      %2820 = vadd.xlane.f32.xlu0 %v2514
      %v2821 = vpop.xlane.xlu0 %2820
      %2822 = vadd.xlane.f32.xlu0 %v2519
      %v2823 = vpop.xlane.xlu0 %2822
      %2824 = vadd.xlane.f32.xlu0 %v2524
      %v2825 = vpop.xlane.xlu0 %2824
      %2826 = vadd.xlane.f32.xlu0 %v2529
      %v2827 = vpop.xlane.xlu0 %2826
      %2828 = vadd.xlane.f32.xlu0 %v2534
      %v2829 = vpop.xlane.xlu0 %2828
      %2830 = vadd.xlane.f32.xlu0 %v2539
      %v2831 = vpop.xlane.xlu0 %2830
      %2832 = vadd.xlane.f32.xlu0 %v2544
      %v2833 = vpop.xlane.xlu0 %2832
      %2834 = vadd.xlane.f32.xlu0 %v2549
      %v2835 = vpop.xlane.xlu0 %2834
      %2836 = vadd.xlane.f32.xlu0 %v2554
      %v2837 = vpop.xlane.xlu0 %2836
      %2838 = vadd.xlane.f32.xlu0 %v2559
      %v2839 = vpop.xlane.xlu0 %2838
      %2840 = vadd.xlane.f32.xlu0 %v2564
      %v2841 = vpop.xlane.xlu0 %2840
      %2842 = vadd.xlane.f32.xlu0 %v2569
      %v2843 = vpop.xlane.xlu0 %2842
      %2844 = vadd.xlane.f32.xlu0 %v2574
      %v2845 = vpop.xlane.xlu0 %2844
      %2846 = vadd.xlane.f32.xlu0 %v2579
      %v2847 = vpop.xlane.xlu0 %2846
      %2848 = vadd.xlane.f32.xlu0 %v2584
      %v2849 = vpop.xlane.xlu0 %2848
      %2850 = vadd.xlane.f32.xlu0 %v2589
      %v2851 = vpop.xlane.xlu0 %2850
      %2852 = vadd.xlane.f32.xlu0 %v2594
      %v2853 = vpop.xlane.xlu0 %2852
      %2854 = vadd.xlane.f32.xlu0 %v2599
      %v2855 = vpop.xlane.xlu0 %2854
      %2856 = vadd.xlane.f32.xlu0 %v2604
      %v2857 = vpop.xlane.xlu0 %2856
      %2858 = vadd.xlane.f32.xlu0 %v2609
      %v2859 = vpop.xlane.xlu0 %2858
      %2860 = vadd.xlane.f32.xlu0 %v2614
      %v2861 = vpop.xlane.xlu0 %2860
      %2862 = vadd.xlane.f32.xlu0 %v2619
      %v2863 = vpop.xlane.xlu0 %2862
      %2864 = vadd.xlane.f32.xlu0 %v2624
      %v2865 = vpop.xlane.xlu0 %2864
      %2866 = vadd.xlane.f32.xlu0 %v2629
      %v2867 = vpop.xlane.xlu0 %2866
      %2868 = vadd.xlane.f32.xlu0 %v2634
      %v2869 = vpop.xlane.xlu0 %2868
      %2870 = vadd.xlane.f32.xlu0 %v2639
      %v2871 = vpop.xlane.xlu0 %2870
      %2872 = vadd.xlane.f32.xlu0 %v2644
      %v2873 = vpop.xlane.xlu0 %2872
      %2874 = vadd.xlane.f32.xlu0 %v2649
      %v2875 = vpop.xlane.xlu0 %2874
      %2876 = vadd.xlane.f32.xlu0 %v2654
      %v2877 = vpop.xlane.xlu0 %2876
      %2878 = vadd.xlane.f32.xlu0 %v2659
      %v2879 = vpop.xlane.xlu0 %2878
      %2880 = vadd.xlane.f32.xlu0 %v2664
      %v2881 = vpop.xlane.xlu0 %2880
      %2882 = vadd.xlane.f32.xlu0 %v2669
      %v2883 = vpop.xlane.xlu0 %2882
      %2884 = vadd.xlane.f32.xlu0 %v2674
      %v2885 = vpop.xlane.xlu0 %2884
      %2886 = vadd.xlane.f32.xlu0 %v2679
      %v2887 = vpop.xlane.xlu0 %2886
      %2888 = vadd.xlane.f32.xlu0 %v2684
      %v2889 = vpop.xlane.xlu0 %2888
      %2890 = vadd.xlane.f32.xlu0 %v2689
      %v2891 = vpop.xlane.xlu0 %2890
      %2892 = vadd.xlane.f32.xlu0 %v2694
      %v2893 = vpop.xlane.xlu0 %2892
      %2894 = vadd.xlane.f32.xlu0 %v2699
      %v2895 = vpop.xlane.xlu0 %2894
      %2896 = vadd.xlane.f32.xlu0 %v2704
      %v2897 = vpop.xlane.xlu0 %2896
      %2898 = vadd.xlane.f32.xlu0 %v2709
      %v2899 = vpop.xlane.xlu0 %2898
      %2900 = vadd.xlane.f32.xlu0 %v2714
      %v2901 = vpop.xlane.xlu0 %2900
      %2902 = vadd.xlane.f32.xlu0 %v2719
      %v2903 = vpop.xlane.xlu0 %2902
      %2904 = vadd.xlane.f32.xlu0 %v2724
      %v2905 = vpop.xlane.xlu0 %2904
      %2906 = vadd.xlane.f32.xlu0 %v2729
      %v2907 = vpop.xlane.xlu0 %2906
      %2908 = vadd.xlane.f32.xlu0 %v2734
      %v2909 = vpop.xlane.xlu0 %2908
      %2910 = vadd.xlane.f32.xlu0 %v2739
      %v2911 = vpop.xlane.xlu0 %2910
      %2912 = vadd.xlane.f32.xlu0 %v2744
      %v2913 = vpop.xlane.xlu0 %2912
      %2914 = vadd.xlane.f32.xlu0 %v2749
      %v2915 = vpop.xlane.xlu0 %2914
      %2916 = vadd.xlane.f32.xlu0 %v2754
      %v2917 = vpop.xlane.xlu0 %2916
      %2918 = vadd.xlane.f32.xlu0 %v2759
      %v2919 = vpop.xlane.xlu0 %2918
      %2920 = vadd.xlane.f32.xlu0 %v2764
      %v2921 = vpop.xlane.xlu0 %2920
      %2922 = vadd.xlane.f32.xlu0 %v2769
      %v2923 = vpop.xlane.xlu0 %2922
      %2924 = vadd.xlane.f32.xlu0 %v2774
      %v2925 = vpop.xlane.xlu0 %2924
      %2926 = vadd.xlane.f32.xlu0 %v2779
      %v2927 = vpop.xlane.xlu0 %2926
      %2928 = vadd.xlane.f32.xlu0 %v2784
      %v2929 = vpop.xlane.xlu0 %2928
      %2930 = vadd.xlane.f32.xlu0 %v2789
      %v2931 = vpop.xlane.xlu0 %2930
      %2932 = vadd.xlane.f32.xlu0 %v2794
      %v2933 = vpop.xlane.xlu0 %2932
      %2934 = vadd.xlane.f32.xlu0 %v2799
      %v2935 = vpop.xlane.xlu0 %2934
      %2936 = vadd.xlane.f32.xlu0 %v2804
      %v2937 = vpop.xlane.xlu0 %2936
      %2938 = vadd.xlane.f32.xlu0 %v2809
      %v2939 = vpop.xlane.xlu0 %2938
      %v2940 = vrcp.pop 128.0
      %v2941 = vmul.f32 %v2813, %v2940
      %v2942 = vmul.f32 %v2815, %v2940
      %v2943 = vmul.f32 %v2817, %v2940
      %v2944 = vmul.f32 %v2819, %v2940
      %v2945 = vmul.f32 %v2821, %v2940
      %v2946 = vmul.f32 %v2823, %v2940
      %v2947 = vmul.f32 %v2825, %v2940
      %v2948 = vmul.f32 %v2827, %v2940
      %v2949 = vmul.f32 %v2829, %v2940
      %v2950 = vmul.f32 %v2831, %v2940
      %v2951 = vmul.f32 %v2833, %v2940
      %v2952 = vmul.f32 %v2835, %v2940
      %v2953 = vmul.f32 %v2837, %v2940
      %v2954 = vmul.f32 %v2839, %v2940
      %v2955 = vmul.f32 %v2841, %v2940
      %v2956 = vmul.f32 %v2843, %v2940
      %v2957 = vmul.f32 %v2845, %v2940
      %v2958 = vmul.f32 %v2847, %v2940
      %v2959 = vmul.f32 %v2849, %v2940
      %v2960 = vmul.f32 %v2851, %v2940
      %v2961 = vmul.f32 %v2853, %v2940
      %v2962 = vmul.f32 %v2855, %v2940
      %v2963 = vmul.f32 %v2857, %v2940
      %v2964 = vmul.f32 %v2859, %v2940
      %v2965 = vmul.f32 %v2861, %v2940
      %v2966 = vmul.f32 %v2863, %v2940
      %v2967 = vmul.f32 %v2865, %v2940
      %v2968 = vmul.f32 %v2867, %v2940
      %v2969 = vmul.f32 %v2869, %v2940
      %v2970 = vmul.f32 %v2871, %v2940
      %v2971 = vmul.f32 %v2873, %v2940
      %v2972 = vmul.f32 %v2875, %v2940
      %v2973 = vmul.f32 %v2877, %v2940
      %v2974 = vmul.f32 %v2879, %v2940
      %v2975 = vmul.f32 %v2881, %v2940
      %v2976 = vmul.f32 %v2883, %v2940
      %v2977 = vmul.f32 %v2885, %v2940
      %v2978 = vmul.f32 %v2887, %v2940
      %v2979 = vmul.f32 %v2889, %v2940
      %v2980 = vmul.f32 %v2891, %v2940
      %v2981 = vmul.f32 %v2893, %v2940
      %v2982 = vmul.f32 %v2895, %v2940
      %v2983 = vmul.f32 %v2897, %v2940
      %v2984 = vmul.f32 %v2899, %v2940
      %v2985 = vmul.f32 %v2901, %v2940
      %v2986 = vmul.f32 %v2903, %v2940
      %v2987 = vmul.f32 %v2905, %v2940
      %v2988 = vmul.f32 %v2907, %v2940
      %v2989 = vmul.f32 %v2909, %v2940
      %v2990 = vmul.f32 %v2911, %v2940
      %v2991 = vmul.f32 %v2913, %v2940
      %v2992 = vmul.f32 %v2915, %v2940
      %v2993 = vmul.f32 %v2917, %v2940
      %v2994 = vmul.f32 %v2919, %v2940
      %v2995 = vmul.f32 %v2921, %v2940
      %v2996 = vmul.f32 %v2923, %v2940
      %v2997 = vmul.f32 %v2925, %v2940
      %v2998 = vmul.f32 %v2927, %v2940
      %v2999 = vmul.f32 %v2929, %v2940
      %v3000 = vmul.f32 %v2931, %v2940
      %v3001 = vmul.f32 %v2933, %v2940
      %v3002 = vmul.f32 %v2935, %v2940
      %v3003 = vmul.f32 %v2937, %v2940
      %v3004 = vmul.f32 %v2939, %v2940
      %v3005 = vsub.f32 %v2494, %v2941
      %v3006 = vsub.f32 %v2499, %v2942
      %v3007 = vsub.f32 %v2504, %v2943
      %v3008 = vsub.f32 %v2509, %v2944
      %v3009 = vsub.f32 %v2514, %v2945
      %v3010 = vsub.f32 %v2519, %v2946
      %v3011 = vsub.f32 %v2524, %v2947
      %v3012 = vsub.f32 %v2529, %v2948
      %v3013 = vsub.f32 %v2534, %v2949
      %v3014 = vsub.f32 %v2539, %v2950
      %v3015 = vsub.f32 %v2544, %v2951
      %v3016 = vsub.f32 %v2549, %v2952
      %v3017 = vsub.f32 %v2554, %v2953
      %v3018 = vsub.f32 %v2559, %v2954
      %v3019 = vsub.f32 %v2564, %v2955
      %v3020 = vsub.f32 %v2569, %v2956
      %v3021 = vsub.f32 %v2574, %v2957
      %v3022 = vsub.f32 %v2579, %v2958
      %v3023 = vsub.f32 %v2584, %v2959
      %v3024 = vsub.f32 %v2589, %v2960
      %v3025 = vsub.f32 %v2594, %v2961
      %v3026 = vsub.f32 %v2599, %v2962
      %v3027 = vsub.f32 %v2604, %v2963
      %v3028 = vsub.f32 %v2609, %v2964
      %v3029 = vsub.f32 %v2614, %v2965
      %v3030 = vsub.f32 %v2619, %v2966
      %v3031 = vsub.f32 %v2624, %v2967
      %v3032 = vsub.f32 %v2629, %v2968
      %v3033 = vsub.f32 %v2634, %v2969
      %v3034 = vsub.f32 %v2639, %v2970
      %v3035 = vsub.f32 %v2644, %v2971
      %v3036 = vsub.f32 %v2649, %v2972
      %v3037 = vsub.f32 %v2654, %v2973
      %v3038 = vsub.f32 %v2659, %v2974
      %v3039 = vsub.f32 %v2664, %v2975
      %v3040 = vsub.f32 %v2669, %v2976
      %v3041 = vsub.f32 %v2674, %v2977
      %v3042 = vsub.f32 %v2679, %v2978
      %v3043 = vsub.f32 %v2684, %v2979
      %v3044 = vsub.f32 %v2689, %v2980
      %v3045 = vsub.f32 %v2694, %v2981
      %v3046 = vsub.f32 %v2699, %v2982
      %v3047 = vsub.f32 %v2704, %v2983
      %v3048 = vsub.f32 %v2709, %v2984
      %v3049 = vsub.f32 %v2714, %v2985
      %v3050 = vsub.f32 %v2719, %v2986
      %v3051 = vsub.f32 %v2724, %v2987
      %v3052 = vsub.f32 %v2729, %v2988
      %v3053 = vsub.f32 %v2734, %v2989
      %v3054 = vsub.f32 %v2739, %v2990
      %v3055 = vsub.f32 %v2744, %v2991
      %v3056 = vsub.f32 %v2749, %v2992
      %v3057 = vsub.f32 %v2754, %v2993
      %v3058 = vsub.f32 %v2759, %v2994
      %v3059 = vsub.f32 %v2764, %v2995
      %v3060 = vsub.f32 %v2769, %v2996
      %v3061 = vsub.f32 %v2774, %v2997
      %v3062 = vsub.f32 %v2779, %v2998
      %v3063 = vsub.f32 %v2784, %v2999
      %v3064 = vsub.f32 %v2789, %v3000
      %v3065 = vsub.f32 %v2794, %v3001
      %v3066 = vsub.f32 %v2799, %v3002
      %v3067 = vsub.f32 %v2804, %v3003
      %v3068 = vsub.f32 %v2809, %v3004
      %v3069 = vmul.f32 %v3005, %v3005
      %v3070 = vmul.f32 %v3006, %v3006
      %v3071 = vmul.f32 %v3007, %v3007
      %v3072 = vmul.f32 %v3008, %v3008
      %v3073 = vmul.f32 %v3009, %v3009
      %v3074 = vmul.f32 %v3010, %v3010
      %v3075 = vmul.f32 %v3011, %v3011
      %v3076 = vmul.f32 %v3012, %v3012
      %v3077 = vmul.f32 %v3013, %v3013
      %v3078 = vmul.f32 %v3014, %v3014
      %v3079 = vmul.f32 %v3015, %v3015
      %v3080 = vmul.f32 %v3016, %v3016
      %v3081 = vmul.f32 %v3017, %v3017
      %v3082 = vmul.f32 %v3018, %v3018
      %v3083 = vmul.f32 %v3019, %v3019
      %v3084 = vmul.f32 %v3020, %v3020
      %v3085 = vmul.f32 %v3021, %v3021
      %v3086 = vmul.f32 %v3022, %v3022
      %v3087 = vmul.f32 %v3023, %v3023
      %v3088 = vmul.f32 %v3024, %v3024
      %v3089 = vmul.f32 %v3025, %v3025
      %v3090 = vmul.f32 %v3026, %v3026
      %v3091 = vmul.f32 %v3027, %v3027
      %v3092 = vmul.f32 %v3028, %v3028
      %v3093 = vmul.f32 %v3029, %v3029
      %v3094 = vmul.f32 %v3030, %v3030
      %v3095 = vmul.f32 %v3031, %v3031
      %v3096 = vmul.f32 %v3032, %v3032
      %v3097 = vmul.f32 %v3033, %v3033
      %v3098 = vmul.f32 %v3034, %v3034
      %v3099 = vmul.f32 %v3035, %v3035
      %v3100 = vmul.f32 %v3036, %v3036
      %v3101 = vmul.f32 %v3037, %v3037
      %v3102 = vmul.f32 %v3038, %v3038
      %v3103 = vmul.f32 %v3039, %v3039
      %v3104 = vmul.f32 %v3040, %v3040
      %v3105 = vmul.f32 %v3041, %v3041
      %v3106 = vmul.f32 %v3042, %v3042
      %v3107 = vmul.f32 %v3043, %v3043
      %v3108 = vmul.f32 %v3044, %v3044
      %v3109 = vmul.f32 %v3045, %v3045
      %v3110 = vmul.f32 %v3046, %v3046
      %v3111 = vmul.f32 %v3047, %v3047
      %v3112 = vmul.f32 %v3048, %v3048
      %v3113 = vmul.f32 %v3049, %v3049
      %v3114 = vmul.f32 %v3050, %v3050
      %v3115 = vmul.f32 %v3051, %v3051
      %v3116 = vmul.f32 %v3052, %v3052
      %v3117 = vmul.f32 %v3053, %v3053
      %v3118 = vmul.f32 %v3054, %v3054
      %v3119 = vmul.f32 %v3055, %v3055
      %v3120 = vmul.f32 %v3056, %v3056
      %v3121 = vmul.f32 %v3057, %v3057
      %v3122 = vmul.f32 %v3058, %v3058
      %v3123 = vmul.f32 %v3059, %v3059
      %v3124 = vmul.f32 %v3060, %v3060
      %v3125 = vmul.f32 %v3061, %v3061
      %v3126 = vmul.f32 %v3062, %v3062
      %v3127 = vmul.f32 %v3063, %v3063
      %v3128 = vmul.f32 %v3064, %v3064
      %v3129 = vmul.f32 %v3065, %v3065
      %v3130 = vmul.f32 %v3066, %v3066
      %v3131 = vmul.f32 %v3067, %v3067
      %v3132 = vmul.f32 %v3068, %v3068
      %3133 = vadd.xlane.f32.xlu0 %v3069
      %v3134 = vpop.xlane.xlu0 %3133
      %3135 = vadd.xlane.f32.xlu0 %v3070
      %v3136 = vpop.xlane.xlu0 %3135
      %3137 = vadd.xlane.f32.xlu0 %v3071
      %v3138 = vpop.xlane.xlu0 %3137
      %3139 = vadd.xlane.f32.xlu0 %v3072
      %v3140 = vpop.xlane.xlu0 %3139
      %3141 = vadd.xlane.f32.xlu0 %v3073
      %v3142 = vpop.xlane.xlu0 %3141
      %3143 = vadd.xlane.f32.xlu0 %v3074
      %v3144 = vpop.xlane.xlu0 %3143
      %3145 = vadd.xlane.f32.xlu0 %v3075
      %v3146 = vpop.xlane.xlu0 %3145
      %3147 = vadd.xlane.f32.xlu0 %v3076
      %v3148 = vpop.xlane.xlu0 %3147
      %3149 = vadd.xlane.f32.xlu0 %v3077
      %v3150 = vpop.xlane.xlu0 %3149
      %3151 = vadd.xlane.f32.xlu0 %v3078
      %v3152 = vpop.xlane.xlu0 %3151
      %3153 = vadd.xlane.f32.xlu0 %v3079
      %v3154 = vpop.xlane.xlu0 %3153
      %3155 = vadd.xlane.f32.xlu0 %v3080
      %v3156 = vpop.xlane.xlu0 %3155
      %3157 = vadd.xlane.f32.xlu0 %v3081
      %v3158 = vpop.xlane.xlu0 %3157
      %3159 = vadd.xlane.f32.xlu0 %v3082
      %v3160 = vpop.xlane.xlu0 %3159
      %3161 = vadd.xlane.f32.xlu0 %v3083
      %v3162 = vpop.xlane.xlu0 %3161
      %3163 = vadd.xlane.f32.xlu0 %v3084
      %v3164 = vpop.xlane.xlu0 %3163
      %3165 = vadd.xlane.f32.xlu0 %v3085
      %v3166 = vpop.xlane.xlu0 %3165
      %3167 = vadd.xlane.f32.xlu0 %v3086
      %v3168 = vpop.xlane.xlu0 %3167
      %3169 = vadd.xlane.f32.xlu0 %v3087
      %v3170 = vpop.xlane.xlu0 %3169
      %3171 = vadd.xlane.f32.xlu0 %v3088
      %v3172 = vpop.xlane.xlu0 %3171
      %3173 = vadd.xlane.f32.xlu0 %v3089
      %v3174 = vpop.xlane.xlu0 %3173
      %3175 = vadd.xlane.f32.xlu0 %v3090
      %v3176 = vpop.xlane.xlu0 %3175
      %3177 = vadd.xlane.f32.xlu0 %v3091
      %v3178 = vpop.xlane.xlu0 %3177
      %3179 = vadd.xlane.f32.xlu0 %v3092
      %v3180 = vpop.xlane.xlu0 %3179
      %3181 = vadd.xlane.f32.xlu0 %v3093
      %v3182 = vpop.xlane.xlu0 %3181
      %3183 = vadd.xlane.f32.xlu0 %v3094
      %v3184 = vpop.xlane.xlu0 %3183
      %3185 = vadd.xlane.f32.xlu0 %v3095
      %v3186 = vpop.xlane.xlu0 %3185
      %3187 = vadd.xlane.f32.xlu0 %v3096
      %v3188 = vpop.xlane.xlu0 %3187
      %3189 = vadd.xlane.f32.xlu0 %v3097
      %v3190 = vpop.xlane.xlu0 %3189
      %3191 = vadd.xlane.f32.xlu0 %v3098
      %v3192 = vpop.xlane.xlu0 %3191
      %3193 = vadd.xlane.f32.xlu0 %v3099
      %v3194 = vpop.xlane.xlu0 %3193
      %3195 = vadd.xlane.f32.xlu0 %v3100
      %v3196 = vpop.xlane.xlu0 %3195
      %3197 = vadd.xlane.f32.xlu0 %v3101
      %v3198 = vpop.xlane.xlu0 %3197
      %3199 = vadd.xlane.f32.xlu0 %v3102
      %v3200 = vpop.xlane.xlu0 %3199
      %3201 = vadd.xlane.f32.xlu0 %v3103
      %v3202 = vpop.xlane.xlu0 %3201
      %3203 = vadd.xlane.f32.xlu0 %v3104
      %v3204 = vpop.xlane.xlu0 %3203
      %3205 = vadd.xlane.f32.xlu0 %v3105
      %v3206 = vpop.xlane.xlu0 %3205
      %3207 = vadd.xlane.f32.xlu0 %v3106
      %v3208 = vpop.xlane.xlu0 %3207
      %3209 = vadd.xlane.f32.xlu0 %v3107
      %v3210 = vpop.xlane.xlu0 %3209
      %3211 = vadd.xlane.f32.xlu0 %v3108
      %v3212 = vpop.xlane.xlu0 %3211
      %3213 = vadd.xlane.f32.xlu0 %v3109
      %v3214 = vpop.xlane.xlu0 %3213
      %3215 = vadd.xlane.f32.xlu0 %v3110
      %v3216 = vpop.xlane.xlu0 %3215
      %3217 = vadd.xlane.f32.xlu0 %v3111
      %v3218 = vpop.xlane.xlu0 %3217
      %3219 = vadd.xlane.f32.xlu0 %v3112
      %v3220 = vpop.xlane.xlu0 %3219
      %3221 = vadd.xlane.f32.xlu0 %v3113
      %v3222 = vpop.xlane.xlu0 %3221
      %3223 = vadd.xlane.f32.xlu0 %v3114
      %v3224 = vpop.xlane.xlu0 %3223
      %3225 = vadd.xlane.f32.xlu0 %v3115
      %v3226 = vpop.xlane.xlu0 %3225
      %3227 = vadd.xlane.f32.xlu0 %v3116
      %v3228 = vpop.xlane.xlu0 %3227
      %3229 = vadd.xlane.f32.xlu0 %v3117
      %v3230 = vpop.xlane.xlu0 %3229
      %3231 = vadd.xlane.f32.xlu0 %v3118
      %v3232 = vpop.xlane.xlu0 %3231
      %3233 = vadd.xlane.f32.xlu0 %v3119
      %v3234 = vpop.xlane.xlu0 %3233
      %3235 = vadd.xlane.f32.xlu0 %v3120
      %v3236 = vpop.xlane.xlu0 %3235
      %3237 = vadd.xlane.f32.xlu0 %v3121
      %v3238 = vpop.xlane.xlu0 %3237
      %3239 = vadd.xlane.f32.xlu0 %v3122
      %v3240 = vpop.xlane.xlu0 %3239
      %3241 = vadd.xlane.f32.xlu0 %v3123
      %v3242 = vpop.xlane.xlu0 %3241
      %3243 = vadd.xlane.f32.xlu0 %v3124
      %v3244 = vpop.xlane.xlu0 %3243
      %3245 = vadd.xlane.f32.xlu0 %v3125
      %v3246 = vpop.xlane.xlu0 %3245
      %3247 = vadd.xlane.f32.xlu0 %v3126
      %v3248 = vpop.xlane.xlu0 %3247
      %3249 = vadd.xlane.f32.xlu0 %v3127
      %v3250 = vpop.xlane.xlu0 %3249
      %3251 = vadd.xlane.f32.xlu0 %v3128
      %v3252 = vpop.xlane.xlu0 %3251
      %3253 = vadd.xlane.f32.xlu0 %v3129
      %v3254 = vpop.xlane.xlu0 %3253
      %3255 = vadd.xlane.f32.xlu0 %v3130
      %v3256 = vpop.xlane.xlu0 %3255
      %3257 = vadd.xlane.f32.xlu0 %v3131
      %v3258 = vpop.xlane.xlu0 %3257
      %3259 = vadd.xlane.f32.xlu0 %v3132
      %v3260 = vpop.xlane.xlu0 %3259
      %v3261 = vmul.f32 %v3134, %v2940
      %v3262 = vmul.f32 %v3136, %v2940
      %v3263 = vmul.f32 %v3138, %v2940
      %v3264 = vmul.f32 %v3140, %v2940
      %v3265 = vmul.f32 %v3142, %v2940
      %v3266 = vmul.f32 %v3144, %v2940
      %v3267 = vmul.f32 %v3146, %v2940
      %v3268 = vmul.f32 %v3148, %v2940
      %v3269 = vmul.f32 %v3150, %v2940
      %v3270 = vmul.f32 %v3152, %v2940
      %v3271 = vmul.f32 %v3154, %v2940
      %v3272 = vmul.f32 %v3156, %v2940
      %v3273 = vmul.f32 %v3158, %v2940
      %v3274 = vmul.f32 %v3160, %v2940
      %v3275 = vmul.f32 %v3162, %v2940
      %v3276 = vmul.f32 %v3164, %v2940
      %v3277 = vmul.f32 %v3166, %v2940
      %v3278 = vmul.f32 %v3168, %v2940
      %v3279 = vmul.f32 %v3170, %v2940
      %v3280 = vmul.f32 %v3172, %v2940
      %v3281 = vmul.f32 %v3174, %v2940
      %v3282 = vmul.f32 %v3176, %v2940
      %v3283 = vmul.f32 %v3178, %v2940
      %v3284 = vmul.f32 %v3180, %v2940
      %v3285 = vmul.f32 %v3182, %v2940
      %v3286 = vmul.f32 %v3184, %v2940
      %v3287 = vmul.f32 %v3186, %v2940
      %v3288 = vmul.f32 %v3188, %v2940
      %v3289 = vmul.f32 %v3190, %v2940
      %v3290 = vmul.f32 %v3192, %v2940
      %v3291 = vmul.f32 %v3194, %v2940
      %v3292 = vmul.f32 %v3196, %v2940
      %v3293 = vmul.f32 %v3198, %v2940
      %v3294 = vmul.f32 %v3200, %v2940
      %v3295 = vmul.f32 %v3202, %v2940
      %v3296 = vmul.f32 %v3204, %v2940
      %v3297 = vmul.f32 %v3206, %v2940
      %v3298 = vmul.f32 %v3208, %v2940
      %v3299 = vmul.f32 %v3210, %v2940
      %v3300 = vmul.f32 %v3212, %v2940
      %v3301 = vmul.f32 %v3214, %v2940
      %v3302 = vmul.f32 %v3216, %v2940
      %v3303 = vmul.f32 %v3218, %v2940
      %v3304 = vmul.f32 %v3220, %v2940
      %v3305 = vmul.f32 %v3222, %v2940
      %v3306 = vmul.f32 %v3224, %v2940
      %v3307 = vmul.f32 %v3226, %v2940
      %v3308 = vmul.f32 %v3228, %v2940
      %v3309 = vmul.f32 %v3230, %v2940
      %v3310 = vmul.f32 %v3232, %v2940
      %v3311 = vmul.f32 %v3234, %v2940
      %v3312 = vmul.f32 %v3236, %v2940
      %v3313 = vmul.f32 %v3238, %v2940
      %v3314 = vmul.f32 %v3240, %v2940
      %v3315 = vmul.f32 %v3242, %v2940
      %v3316 = vmul.f32 %v3244, %v2940
      %v3317 = vmul.f32 %v3246, %v2940
      %v3318 = vmul.f32 %v3248, %v2940
      %v3319 = vmul.f32 %v3250, %v2940
      %v3320 = vmul.f32 %v3252, %v2940
      %v3321 = vmul.f32 %v3254, %v2940
      %v3322 = vmul.f32 %v3256, %v2940
      %v3323 = vmul.f32 %v3258, %v2940
      %v3324 = vmul.f32 %v3260, %v2940
      %v3325 = vadd.f32 %v3261, 1e-05
      %v3326 = vadd.f32 %v3262, 1e-05
      %v3327 = vadd.f32 %v3263, 1e-05
      %v3328 = vadd.f32 %v3264, 1e-05
      %v3329 = vadd.f32 %v3265, 1e-05
      %v3330 = vadd.f32 %v3266, 1e-05
      %v3331 = vadd.f32 %v3267, 1e-05
      %v3332 = vadd.f32 %v3268, 1e-05
      %v3333 = vadd.f32 %v3269, 1e-05
      %v3334 = vadd.f32 %v3270, 1e-05
      %v3335 = vadd.f32 %v3271, 1e-05
      %v3336 = vadd.f32 %v3272, 1e-05
      %v3337 = vadd.f32 %v3273, 1e-05
      %v3338 = vadd.f32 %v3274, 1e-05
      %v3339 = vadd.f32 %v3275, 1e-05
      %v3340 = vadd.f32 %v3276, 1e-05
      %v3341 = vadd.f32 %v3277, 1e-05
      %v3342 = vadd.f32 %v3278, 1e-05
      %v3343 = vadd.f32 %v3279, 1e-05
      %v3344 = vadd.f32 %v3280, 1e-05
      %v3345 = vadd.f32 %v3281, 1e-05
      %v3346 = vadd.f32 %v3282, 1e-05
      %v3347 = vadd.f32 %v3283, 1e-05
      %v3348 = vadd.f32 %v3284, 1e-05
      %v3349 = vadd.f32 %v3285, 1e-05
      %v3350 = vadd.f32 %v3286, 1e-05
      %v3351 = vadd.f32 %v3287, 1e-05
      %v3352 = vadd.f32 %v3288, 1e-05
      %v3353 = vadd.f32 %v3289, 1e-05
      %v3354 = vadd.f32 %v3290, 1e-05
      %v3355 = vadd.f32 %v3291, 1e-05
      %v3356 = vadd.f32 %v3292, 1e-05
      %v3357 = vadd.f32 %v3293, 1e-05
      %v3358 = vadd.f32 %v3294, 1e-05
      %v3359 = vadd.f32 %v3295, 1e-05
      %v3360 = vadd.f32 %v3296, 1e-05
      %v3361 = vadd.f32 %v3297, 1e-05
      %v3362 = vadd.f32 %v3298, 1e-05
      %v3363 = vadd.f32 %v3299, 1e-05
      %v3364 = vadd.f32 %v3300, 1e-05
      %v3365 = vadd.f32 %v3301, 1e-05
      %v3366 = vadd.f32 %v3302, 1e-05
      %v3367 = vadd.f32 %v3303, 1e-05
      %v3368 = vadd.f32 %v3304, 1e-05
      %v3369 = vadd.f32 %v3305, 1e-05
      %v3370 = vadd.f32 %v3306, 1e-05
      %v3371 = vadd.f32 %v3307, 1e-05
      %v3372 = vadd.f32 %v3308, 1e-05
      %v3373 = vadd.f32 %v3309, 1e-05
      %v3374 = vadd.f32 %v3310, 1e-05
      %v3375 = vadd.f32 %v3311, 1e-05
      %v3376 = vadd.f32 %v3312, 1e-05
      %v3377 = vadd.f32 %v3313, 1e-05
      %v3378 = vadd.f32 %v3314, 1e-05
      %v3379 = vadd.f32 %v3315, 1e-05
      %v3380 = vadd.f32 %v3316, 1e-05
      %v3381 = vadd.f32 %v3317, 1e-05
      %v3382 = vadd.f32 %v3318, 1e-05
      %v3383 = vadd.f32 %v3319, 1e-05
      %v3384 = vadd.f32 %v3320, 1e-05
      %v3385 = vadd.f32 %v3321, 1e-05
      %v3386 = vadd.f32 %v3322, 1e-05
      %v3387 = vadd.f32 %v3323, 1e-05
      %v3388 = vadd.f32 %v3324, 1e-05
      %v3389 = vrsqrt.pop %v3325
      %v3390 = vrsqrt.pop %v3326
      %v3391 = vrsqrt.pop %v3327
      %v3392 = vrsqrt.pop %v3328
      %v3393 = vrsqrt.pop %v3329
      %v3394 = vrsqrt.pop %v3330
      %v3395 = vrsqrt.pop %v3331
      %v3396 = vrsqrt.pop %v3332
      %v3397 = vrsqrt.pop %v3333
      %v3398 = vrsqrt.pop %v3334
      %v3399 = vrsqrt.pop %v3335
      %v3400 = vrsqrt.pop %v3336
      %v3401 = vrsqrt.pop %v3337
      %v3402 = vrsqrt.pop %v3338
      %v3403 = vrsqrt.pop %v3339
      %v3404 = vrsqrt.pop %v3340
      %v3405 = vrsqrt.pop %v3341
      %v3406 = vrsqrt.pop %v3342
      %v3407 = vrsqrt.pop %v3343
      %v3408 = vrsqrt.pop %v3344
      %v3409 = vrsqrt.pop %v3345
      %v3410 = vrsqrt.pop %v3346
      %v3411 = vrsqrt.pop %v3347
      %v3412 = vrsqrt.pop %v3348
      %v3413 = vrsqrt.pop %v3349
      %v3414 = vrsqrt.pop %v3350
      %v3415 = vrsqrt.pop %v3351
      %v3416 = vrsqrt.pop %v3352
      %v3417 = vrsqrt.pop %v3353
      %v3418 = vrsqrt.pop %v3354
      %v3419 = vrsqrt.pop %v3355
      %v3420 = vrsqrt.pop %v3356
      %v3421 = vrsqrt.pop %v3357
      %v3422 = vrsqrt.pop %v3358
      %v3423 = vrsqrt.pop %v3359
      %v3424 = vrsqrt.pop %v3360
      %v3425 = vrsqrt.pop %v3361
      %v3426 = vrsqrt.pop %v3362
      %v3427 = vrsqrt.pop %v3363
      %v3428 = vrsqrt.pop %v3364
      %v3429 = vrsqrt.pop %v3365
      %v3430 = vrsqrt.pop %v3366
      %v3431 = vrsqrt.pop %v3367
      %v3432 = vrsqrt.pop %v3368
      %v3433 = vrsqrt.pop %v3369
      %v3434 = vrsqrt.pop %v3370
      %v3435 = vrsqrt.pop %v3371
      %v3436 = vrsqrt.pop %v3372
      %v3437 = vrsqrt.pop %v3373
      %v3438 = vrsqrt.pop %v3374
      %v3439 = vrsqrt.pop %v3375
      %v3440 = vrsqrt.pop %v3376
      %v3441 = vrsqrt.pop %v3377
      %v3442 = vrsqrt.pop %v3378
      %v3443 = vrsqrt.pop %v3379
      %v3444 = vrsqrt.pop %v3380
      %v3445 = vrsqrt.pop %v3381
      %v3446 = vrsqrt.pop %v3382
      %v3447 = vrsqrt.pop %v3383
      %v3448 = vrsqrt.pop %v3384
      %v3449 = vrsqrt.pop %v3385
      %v3450 = vrsqrt.pop %v3386
      %v3451 = vrsqrt.pop %v3387
      %v3452 = vrsqrt.pop %v3388
      %v3453 = vmul.f32 %v3005, %v3389
      %v3454 = vmul.f32 %v3006, %v3390
      %v3455 = vmul.f32 %v3007, %v3391
      %v3456 = vmul.f32 %v3008, %v3392
      %v3457 = vmul.f32 %v3009, %v3393
      %v3458 = vmul.f32 %v3010, %v3394
      %v3459 = vmul.f32 %v3011, %v3395
      %v3460 = vmul.f32 %v3012, %v3396
      %v3461 = vmul.f32 %v3013, %v3397
      %v3462 = vmul.f32 %v3014, %v3398
      %v3463 = vmul.f32 %v3015, %v3399
      %v3464 = vmul.f32 %v3016, %v3400
      %v3465 = vmul.f32 %v3017, %v3401
      %v3466 = vmul.f32 %v3018, %v3402
      %v3467 = vmul.f32 %v3019, %v3403
      %v3468 = vmul.f32 %v3020, %v3404
      %v3469 = vmul.f32 %v3021, %v3405
      %v3470 = vmul.f32 %v3022, %v3406
      %v3471 = vmul.f32 %v3023, %v3407
      %v3472 = vmul.f32 %v3024, %v3408
      %v3473 = vmul.f32 %v3025, %v3409
      %v3474 = vmul.f32 %v3026, %v3410
      %v3475 = vmul.f32 %v3027, %v3411
      %v3476 = vmul.f32 %v3028, %v3412
      %v3477 = vmul.f32 %v3029, %v3413
      %v3478 = vmul.f32 %v3030, %v3414
      %v3479 = vmul.f32 %v3031, %v3415
      %v3480 = vmul.f32 %v3032, %v3416
      %v3481 = vmul.f32 %v3033, %v3417
      %v3482 = vmul.f32 %v3034, %v3418
      %v3483 = vmul.f32 %v3035, %v3419
      %v3484 = vmul.f32 %v3036, %v3420
      %v3485 = vmul.f32 %v3037, %v3421
      %v3486 = vmul.f32 %v3038, %v3422
      %v3487 = vmul.f32 %v3039, %v3423
      %v3488 = vmul.f32 %v3040, %v3424
      %v3489 = vmul.f32 %v3041, %v3425
      %v3490 = vmul.f32 %v3042, %v3426
      %v3491 = vmul.f32 %v3043, %v3427
      %v3492 = vmul.f32 %v3044, %v3428
      %v3493 = vmul.f32 %v3045, %v3429
      %v3494 = vmul.f32 %v3046, %v3430
      %v3495 = vmul.f32 %v3047, %v3431
      %v3496 = vmul.f32 %v3048, %v3432
      %v3497 = vmul.f32 %v3049, %v3433
      %v3498 = vmul.f32 %v3050, %v3434
      %v3499 = vmul.f32 %v3051, %v3435
      %v3500 = vmul.f32 %v3052, %v3436
      %v3501 = vmul.f32 %v3053, %v3437
      %v3502 = vmul.f32 %v3054, %v3438
      %v3503 = vmul.f32 %v3055, %v3439
      %v3504 = vmul.f32 %v3056, %v3440
      %v3505 = vmul.f32 %v3057, %v3441
      %v3506 = vmul.f32 %v3058, %v3442
      %v3507 = vmul.f32 %v3059, %v3443
      %v3508 = vmul.f32 %v3060, %v3444
      %v3509 = vmul.f32 %v3061, %v3445
      %v3510 = vmul.f32 %v3062, %v3446
      %v3511 = vmul.f32 %v3063, %v3447
      %v3512 = vmul.f32 %v3064, %v3448
      %v3513 = vmul.f32 %v3065, %v3449
      %v3514 = vmul.f32 %v3066, %v3450
      %v3515 = vmul.f32 %v3067, %v3451
      %v3516 = vmul.f32 %v3068, %v3452
      %v3517 = vld [vmem:[%s7] sm:$0x1]
      %v3519 = vlaneseq
      %v3520 = vshrl.u32 %v3519, 7
      %v3521 = vsub.s32 0, %v3520
      %v3522 = vrot.slane %v3517, %v3521
      %v3524 = vmul.f32 %v3453, %v3522
      %v3525 = vmul.f32 %v3454, %v3522
      %v3526 = vmul.f32 %v3455, %v3522
      %v3527 = vmul.f32 %v3456, %v3522
      %v3528 = vmul.f32 %v3457, %v3522
      %v3529 = vmul.f32 %v3458, %v3522
      %v3530 = vmul.f32 %v3459, %v3522
      %v3531 = vmul.f32 %v3460, %v3522
      %v3532 = vmul.f32 %v3461, %v3522
      %v3533 = vmul.f32 %v3462, %v3522
      %v3534 = vmul.f32 %v3463, %v3522
      %v3535 = vmul.f32 %v3464, %v3522
      %v3536 = vmul.f32 %v3465, %v3522
      %v3537 = vmul.f32 %v3466, %v3522
      %v3538 = vmul.f32 %v3467, %v3522
      %v3539 = vmul.f32 %v3468, %v3522
      %v3540 = vmul.f32 %v3469, %v3522
      %v3541 = vmul.f32 %v3470, %v3522
      %v3542 = vmul.f32 %v3471, %v3522
      %v3543 = vmul.f32 %v3472, %v3522
      %v3544 = vmul.f32 %v3473, %v3522
      %v3545 = vmul.f32 %v3474, %v3522
      %v3546 = vmul.f32 %v3475, %v3522
      %v3547 = vmul.f32 %v3476, %v3522
      %v3548 = vmul.f32 %v3477, %v3522
      %v3549 = vmul.f32 %v3478, %v3522
      %v3550 = vmul.f32 %v3479, %v3522
      %v3551 = vmul.f32 %v3480, %v3522
      %v3552 = vmul.f32 %v3481, %v3522
      %v3553 = vmul.f32 %v3482, %v3522
      %v3554 = vmul.f32 %v3483, %v3522
      %v3555 = vmul.f32 %v3484, %v3522
      %v3556 = vmul.f32 %v3485, %v3522
      %v3557 = vmul.f32 %v3486, %v3522
      %v3558 = vmul.f32 %v3487, %v3522
      %v3559 = vmul.f32 %v3488, %v3522
      %v3560 = vmul.f32 %v3489, %v3522
      %v3561 = vmul.f32 %v3490, %v3522
      %v3562 = vmul.f32 %v3491, %v3522
      %v3563 = vmul.f32 %v3492, %v3522
      %v3564 = vmul.f32 %v3493, %v3522
      %v3565 = vmul.f32 %v3494, %v3522
      %v3566 = vmul.f32 %v3495, %v3522
      %v3567 = vmul.f32 %v3496, %v3522
      %v3568 = vmul.f32 %v3497, %v3522
      %v3569 = vmul.f32 %v3498, %v3522
      %v3570 = vmul.f32 %v3499, %v3522
      %v3571 = vmul.f32 %v3500, %v3522
      %v3572 = vmul.f32 %v3501, %v3522
      %v3573 = vmul.f32 %v3502, %v3522
      %v3574 = vmul.f32 %v3503, %v3522
      %v3575 = vmul.f32 %v3504, %v3522
      %v3576 = vmul.f32 %v3505, %v3522
      %v3577 = vmul.f32 %v3506, %v3522
      %v3578 = vmul.f32 %v3507, %v3522
      %v3579 = vmul.f32 %v3508, %v3522
      %v3580 = vmul.f32 %v3509, %v3522
      %v3581 = vmul.f32 %v3510, %v3522
      %v3582 = vmul.f32 %v3511, %v3522
      %v3583 = vmul.f32 %v3512, %v3522
      %v3584 = vmul.f32 %v3513, %v3522
      %v3585 = vmul.f32 %v3514, %v3522
      %v3586 = vmul.f32 %v3515, %v3522
      %v3587 = vmul.f32 %v3516, %v3522
      %v3588 = vld [vmem:[%s8] sm:$0x1]
      %v3590 = vlaneseq
      %v3591 = vshrl.u32 %v3590, 7
      %v3592 = vsub.s32 0, %v3591
      %v3593 = vrot.slane %v3588, %v3592
      %v3595 = vadd.f32 %v3524, %v3593
      %v3596 = vadd.f32 %v3525, %v3593
      %v3597 = vadd.f32 %v3526, %v3593
      %v3598 = vadd.f32 %v3527, %v3593
      %v3599 = vadd.f32 %v3528, %v3593
      %v3600 = vadd.f32 %v3529, %v3593
      %v3601 = vadd.f32 %v3530, %v3593
      %v3602 = vadd.f32 %v3531, %v3593
      %v3603 = vadd.f32 %v3532, %v3593
      %v3604 = vadd.f32 %v3533, %v3593
      %v3605 = vadd.f32 %v3534, %v3593
      %v3606 = vadd.f32 %v3535, %v3593
      %v3607 = vadd.f32 %v3536, %v3593
      %v3608 = vadd.f32 %v3537, %v3593
      %v3609 = vadd.f32 %v3538, %v3593
      %v3610 = vadd.f32 %v3539, %v3593
      %v3611 = vadd.f32 %v3540, %v3593
      %v3612 = vadd.f32 %v3541, %v3593
      %v3613 = vadd.f32 %v3542, %v3593
      %v3614 = vadd.f32 %v3543, %v3593
      %v3615 = vadd.f32 %v3544, %v3593
      %v3616 = vadd.f32 %v3545, %v3593
      %v3617 = vadd.f32 %v3546, %v3593
      %v3618 = vadd.f32 %v3547, %v3593
      %v3619 = vadd.f32 %v3548, %v3593
      %v3620 = vadd.f32 %v3549, %v3593
      %v3621 = vadd.f32 %v3550, %v3593
      %v3622 = vadd.f32 %v3551, %v3593
      %v3623 = vadd.f32 %v3552, %v3593
      %v3624 = vadd.f32 %v3553, %v3593
      %v3625 = vadd.f32 %v3554, %v3593
      %v3626 = vadd.f32 %v3555, %v3593
      %v3627 = vadd.f32 %v3556, %v3593
      %v3628 = vadd.f32 %v3557, %v3593
      %v3629 = vadd.f32 %v3558, %v3593
      %v3630 = vadd.f32 %v3559, %v3593
      %v3631 = vadd.f32 %v3560, %v3593
      %v3632 = vadd.f32 %v3561, %v3593
      %v3633 = vadd.f32 %v3562, %v3593
      %v3634 = vadd.f32 %v3563, %v3593
      %v3635 = vadd.f32 %v3564, %v3593
      %v3636 = vadd.f32 %v3565, %v3593
      %v3637 = vadd.f32 %v3566, %v3593
      %v3638 = vadd.f32 %v3567, %v3593
      %v3639 = vadd.f32 %v3568, %v3593
      %v3640 = vadd.f32 %v3569, %v3593
      %v3641 = vadd.f32 %v3570, %v3593
      %v3642 = vadd.f32 %v3571, %v3593
      %v3643 = vadd.f32 %v3572, %v3593
      %v3644 = vadd.f32 %v3573, %v3593
      %v3645 = vadd.f32 %v3574, %v3593
      %v3646 = vadd.f32 %v3575, %v3593
      %v3647 = vadd.f32 %v3576, %v3593
      %v3648 = vadd.f32 %v3577, %v3593
      %v3649 = vadd.f32 %v3578, %v3593
      %v3650 = vadd.f32 %v3579, %v3593
      %v3651 = vadd.f32 %v3580, %v3593
      %v3652 = vadd.f32 %v3581, %v3593
      %v3653 = vadd.f32 %v3582, %v3593
      %v3654 = vadd.f32 %v3583, %v3593
      %v3655 = vadd.f32 %v3584, %v3593
      %v3656 = vadd.f32 %v3585, %v3593
      %v3657 = vadd.f32 %v3586, %v3593
      %v3658 = vadd.f32 %v3587, %v3593
      %3659 = vst [vmem:[%s337] sm:$0xff] %v3595
      %3660 = vst [vmem:[%s337 + $0x8] sm:$0xff] %v3596
      %3661 = vst [vmem:[%s337 + $0x10] sm:$0xff] %v3597
      %3662 = vst [vmem:[%s337 + $0x18] sm:$0xff] %v3598
      %3663 = vst [vmem:[%s337 + $0x20] sm:$0xff] %v3599
      %3664 = vst [vmem:[%s337 + $0x28] sm:$0xff] %v3600
      %3665 = vst [vmem:[%s337 + $0x30] sm:$0xff] %v3601
      %3666 = vst [vmem:[%s337 + $0x38] sm:$0xff] %v3602
      %3667 = vst [vmem:[%s337 + $0x40] sm:$0xff] %v3603
      %3668 = vst [vmem:[%s337 + $0x48] sm:$0xff] %v3604
      %3669 = vst [vmem:[%s337 + $0x50] sm:$0xff] %v3605
      %3670 = vst [vmem:[%s337 + $0x58] sm:$0xff] %v3606
      %3671 = vst [vmem:[%s337 + $0x60] sm:$0xff] %v3607
      %3672 = vst [vmem:[%s337 + $0x68] sm:$0xff] %v3608
      %3673 = vst [vmem:[%s337 + $0x70] sm:$0xff] %v3609
      %3674 = vst [vmem:[%s337 + $0x78] sm:$0xff] %v3610
      %3675 = vst [vmem:[%s337 + $0x80] sm:$0xff] %v3611
      %3676 = vst [vmem:[%s337 + $0x88] sm:$0xff] %v3612
      %3677 = vst [vmem:[%s337 + $0x90] sm:$0xff] %v3613
      %3678 = vst [vmem:[%s337 + $0x98] sm:$0xff] %v3614
      %3679 = vst [vmem:[%s337 + $0xa0] sm:$0xff] %v3615
      %3680 = vst [vmem:[%s337 + $0xa8] sm:$0xff] %v3616
      %3681 = vst [vmem:[%s337 + $0xb0] sm:$0xff] %v3617
      %3682 = vst [vmem:[%s337 + $0xb8] sm:$0xff] %v3618
      %3683 = vst [vmem:[%s337 + $0xc0] sm:$0xff] %v3619
      %3684 = vst [vmem:[%s337 + $0xc8] sm:$0xff] %v3620
      %3685 = vst [vmem:[%s337 + $0xd0] sm:$0xff] %v3621
      %3686 = vst [vmem:[%s337 + $0xd8] sm:$0xff] %v3622
      %3687 = vst [vmem:[%s337 + $0xe0] sm:$0xff] %v3623
      %3688 = vst [vmem:[%s337 + $0xe8] sm:$0xff] %v3624
      %3689 = vst [vmem:[%s337 + $0xf0] sm:$0xff] %v3625
      %3690 = vst [vmem:[%s337 + $0xf8] sm:$0xff] %v3626
      %3691 = vst [vmem:[%s337 + $0x100] sm:$0xff] %v3627
      %3692 = vst [vmem:[%s337 + $0x108] sm:$0xff] %v3628
      %3693 = vst [vmem:[%s337 + $0x110] sm:$0xff] %v3629
      %3694 = vst [vmem:[%s337 + $0x118] sm:$0xff] %v3630
      %3695 = vst [vmem:[%s337 + $0x120] sm:$0xff] %v3631
      %3696 = vst [vmem:[%s337 + $0x128] sm:$0xff] %v3632
      %3697 = vst [vmem:[%s337 + $0x130] sm:$0xff] %v3633
      %3698 = vst [vmem:[%s337 + $0x138] sm:$0xff] %v3634
      %3699 = vst [vmem:[%s337 + $0x140] sm:$0xff] %v3635
      %3700 = vst [vmem:[%s337 + $0x148] sm:$0xff] %v3636
      %3701 = vst [vmem:[%s337 + $0x150] sm:$0xff] %v3637
      %3702 = vst [vmem:[%s337 + $0x158] sm:$0xff] %v3638
      %3703 = vst [vmem:[%s337 + $0x160] sm:$0xff] %v3639
      %3704 = vst [vmem:[%s337 + $0x168] sm:$0xff] %v3640
      %3705 = vst [vmem:[%s337 + $0x170] sm:$0xff] %v3641
      %3706 = vst [vmem:[%s337 + $0x178] sm:$0xff] %v3642
      %3707 = vst [vmem:[%s337 + $0x180] sm:$0xff] %v3643
      %3708 = vst [vmem:[%s337 + $0x188] sm:$0xff] %v3644
      %3709 = vst [vmem:[%s337 + $0x190] sm:$0xff] %v3645
      %3710 = vst [vmem:[%s337 + $0x198] sm:$0xff] %v3646
      %3711 = vst [vmem:[%s337 + $0x1a0] sm:$0xff] %v3647
      %3712 = vst [vmem:[%s337 + $0x1a8] sm:$0xff] %v3648
      %3713 = vst [vmem:[%s337 + $0x1b0] sm:$0xff] %v3649
      %3714 = vst [vmem:[%s337 + $0x1b8] sm:$0xff] %v3650
      %3715 = vst [vmem:[%s337 + $0x1c0] sm:$0xff] %v3651
      %3716 = vst [vmem:[%s337 + $0x1c8] sm:$0xff] %v3652
      %3717 = vst [vmem:[%s337 + $0x1d0] sm:$0xff] %v3653
      %3718 = vst [vmem:[%s337 + $0x1d8] sm:$0xff] %v3654
      %3719 = vst [vmem:[%s337 + $0x1e0] sm:$0xff] %v3655
      %3720 = vst [vmem:[%s337 + $0x1e8] sm:$0xff] %v3656
      %3721 = vst [vmem:[%s337 + $0x1f0] sm:$0xff] %v3657
      %3722 = vst [vmem:[%s337 + $0x1f8] sm:$0xff] %v3658
      %s3723 = smul.u32 64, %s20
      %p3724 = scmp.lt.s32.totalorder %s3723, 191
      %s3725 = scalar_select %p3724, %s3723, 191
      %s3726 = smul.addr %s3725, 8
      %s3727 = scalar_lea.vmem %s9, %s3726
      // Predicated region
      $region57: #{gn_block_forward.2} parent=55 // pred_check
        %p3728 = pneg %p232
      $region58: #{gn_block_forward.2} parent=55 // pred_check_branch
        %3730 = sbr.rel (%p3728) target = $region60
      $region59: #{gn_block_forward.2} parent=55 // pred_region
        %s3731 = smul.u32 64, %s20
      $region60: #{gn_block_forward.2} parent=55 // pred_fallthru
        _
    $region56: #{gn_block_forward.2} parent=5 // pred_fallthru
      _
    %p3732 = scmp.le.s32.totalorder 2, %s15
    // Predicated region
    $region61: #{gn_block_forward.2} parent=5 // pred_check
      %p3733 = pneg %p3732
    $region62: #{gn_block_forward.2} parent=5 // pred_check_branch
      %3735 = sbr.rel (%p3733) target = $region64
    $region63: #{gn_block_forward.2} parent=5 // pred_region
      %s3736 = ssub.s32 %s15, 2
      // Predicated region
      $region65: #{gn_block_forward.2} parent=63 // pred_check
        %p3737 = pneg %p238
      $region66: #{gn_block_forward.2} parent=63 // pred_check_branch
        %3739 = sbr.rel (%p3737) target = $region68
      $region67: #{gn_block_forward.2} parent=63 // pred_region
        %s3740 = smul.u32 64, %s21
        %p3741 = scmp.lt.s32.totalorder %s3740, 191
        %s3742 = scalar_select %p3741, %s3740, 191
        %s3743 = smul.addr %s3742, 8
        %s3744 = scalar_lea.vmem %s9, %s3743
      $region68: #{gn_block_forward.2} parent=63 // pred_fallthru
        _
    $region64: #{gn_block_forward.2} parent=5 // pred_fallthru
      _
  $region6: #{gn_block_forward.2} parent=0 // loop_footer
    %s19 = sadd.s32 1, %s15
  $region7: #{gn_block_forward.2} parent=0 // loop_footer_branch
    %14 = sbr.rel target = $region3
  $region8: #{gn_block_forward.2} parent=0 // loop_exit
    _

// kernel: gn_block_forward.3
$region0: #{gn_block_forward.3}
  #allocation0 [shape = 'u32[]', space=smem, size = 0x4, offset = 0x4, fixed_abs, tag = 'smem constant byte address 0x4 - core index']
  #allocation1 [shape = 'u32[144,128]{1,0:T(1,128)}', space=vmem, size = 0x12000, scoped, tag = 'internal scratch']
  %s0 = inlined_call_operand.vmem [shape: f32[1024,192], index: 0, kind: input, shape index: {}]
  %s1 = inlined_call_operand.vmem [shape: f32[192,128], index: 1, kind: input, shape index: {}]
  %s2 = inlined_call_operand.vmem [shape: f32[1,128], index: 2, kind: input, shape index: {}]
  %s3 = inlined_call_operand.vmem [shape: f32[128,128], index: 3, kind: input, shape index: {}]
  %s4 = inlined_call_operand.vmem [shape: f32[1,128], index: 4, kind: input, shape index: {}]
  %s5 = inlined_call_operand.vmem [shape: f32[128,128], index: 5, kind: input, shape index: {}]
  %s6 = inlined_call_operand.vmem [shape: f32[1,128], index: 6, kind: input, shape index: {}]
  %s7 = inlined_call_operand.vmem [shape: f32[1,128], index: 7, kind: input, shape index: {}]
  %s8 = inlined_call_operand.vmem [shape: f32[1,128], index: 8, kind: input, shape index: {}]
  %s9 = inlined_call_operand.vmem [shape: f32[1024,128], index: 9, kind: output, shape index: {}]
  %s10 = sld [smem:[#allocation0]]
  $region69: #{gn_block_forward.3} parent=0
    _
  %s12 = ssub.s32 1, %s10
  %s13 = scalar_select 0, %s12, %s10
  loop: start=0, step=1, limit=4
  $region2: #{gn_block_forward.3} parent=0 // loop_pre_header
    _
  $region3: #{gn_block_forward.3} parent=0 // loop_header
    %s15 = sphi 0, %s19
    %p16 = scmp.ge.s32.totalorder %s15, 4
    %s25 = sphi 0, %s27
    %s28 = sphi 0, %s25
    %s29 = sphi 0, %s28
    %s45 = sphi 0, %s29
    %s49 = sphi 0, %s49
    %s51 = sphi 0, %s49
    %s52 = sphi 0, %s51
    %s66 = sphi 0, %s52
    %s70 = sphi 0, %s70
    %s72 = sphi 0, %s70
    %s73 = sphi 0, %s72
    %s87 = sphi 0, %s73
    %s91 = sphi 0, %s91
    %s93 = sphi 0, %s91
    %s94 = sphi 0, %s93
    %s108 = sphi 0, %s94
    %s112 = sphi 0, %s112
    %s114 = sphi 0, %s112
    %s115 = sphi 0, %s114
    %s129 = sphi 0, %s115
    %s133 = sphi 0, %s133
    %s135 = sphi 0, %s133
    %s136 = sphi 0, %s135
    %s150 = sphi 0, %s136
    %s154 = sphi 0, %s154
    %s156 = sphi 0, %s154
    %s157 = sphi 0, %s156
    %s171 = sphi 0, %s157
    %s175 = sphi 0, %s175
    %s177 = sphi 0, %s175
    %s178 = sphi 0, %s177
    %s192 = sphi 0, %s178
    %s196 = sphi 0, %s196
    %s198 = sphi 0, %s196
    %s199 = sphi 0, %s198
    %s213 = sphi 0, %s199
    %s219 = sphi 0, %s221
    %s222 = sphi 0, %s219
    %s223 = sphi 0, %s222
    %s239 = sphi 0, %s223
  $region4: #{gn_block_forward.3} parent=0 // loop_header_branch
    %18 = sbr.rel (%p16) target = $region8
  $region5: #{gn_block_forward.3} parent=0 // loop_body
    %s20 = ssub.s32 %s15, 1
    %s21 = ssub.s32 %s15, 2
    %s22 = sadd.s32 %s15, 1
    %s23 = ssub.s32 %s15, %s22
    %p24 = scmp.eq.s32.totalorder %s23, 0
    %s26 = sadd.s32 %s25, 1
    %s27 = scalar_select %p24, %s25, %s26
    %p30 = pneg %p24
    %p31 = scmp.eq.s32.totalorder %s15, 1
    %p32 = por %p30, %p31
    %p33 = scmp.ne.s32.totalorder %s25, %s28
    %p34 = scmp.eq.s32.totalorder %s15, 0
    %p35 = por %p33, %p34
    %p36 = scmp.ne.s32.totalorder %s25, %s28
    %p37 = scmp.eq.s32.totalorder %s20, 1
    %p38 = por %p36, %p37
    %p39 = scmp.ne.s32.totalorder %s28, %s29
    %p40 = scmp.eq.s32.totalorder %s20, 0
    %p41 = por %p39, %p40
    %p42 = scmp.ne.s32.totalorder %s28, %s29
    %p43 = scmp.eq.s32.totalorder %s21, 1
    %p44 = por %p42, %p43
    %p46 = scmp.ne.s32.totalorder %s29, %s45
    %p47 = scmp.eq.s32.totalorder %s21, 0
    %p48 = por %p46, %p47
    %s50 = sadd.s32 %s49, 1
    %p53 = scmp.eq.s32.totalorder %s15, 1
    %p54 = scmp.ne.s32.totalorder %s49, %s51
    %p55 = scmp.eq.s32.totalorder %s15, 0
    %p56 = por %p54, %p55
    %p57 = scmp.ne.s32.totalorder %s49, %s51
    %p58 = scmp.eq.s32.totalorder %s20, 1
    %p59 = por %p57, %p58
    %p60 = scmp.ne.s32.totalorder %s51, %s52
    %p61 = scmp.eq.s32.totalorder %s20, 0
    %p62 = por %p60, %p61
    %p63 = scmp.ne.s32.totalorder %s51, %s52
    %p64 = scmp.eq.s32.totalorder %s21, 1
    %p65 = por %p63, %p64
    %p67 = scmp.ne.s32.totalorder %s52, %s66
    %p68 = scmp.eq.s32.totalorder %s21, 0
    %p69 = por %p67, %p68
    %s71 = sadd.s32 %s70, 1
    %p74 = scmp.eq.s32.totalorder %s15, 1
    %p75 = scmp.ne.s32.totalorder %s70, %s72
    %p76 = scmp.eq.s32.totalorder %s15, 0
    %p77 = por %p75, %p76
    %p78 = scmp.ne.s32.totalorder %s70, %s72
    %p79 = scmp.eq.s32.totalorder %s20, 1
    %p80 = por %p78, %p79
    %p81 = scmp.ne.s32.totalorder %s72, %s73
    %p82 = scmp.eq.s32.totalorder %s20, 0
    %p83 = por %p81, %p82
    %p84 = scmp.ne.s32.totalorder %s72, %s73
    %p85 = scmp.eq.s32.totalorder %s21, 1
    %p86 = por %p84, %p85
    %p88 = scmp.ne.s32.totalorder %s73, %s87
    %p89 = scmp.eq.s32.totalorder %s21, 0
    %p90 = por %p88, %p89
    %s92 = sadd.s32 %s91, 1
    %p95 = scmp.eq.s32.totalorder %s15, 1
    %p96 = scmp.ne.s32.totalorder %s91, %s93
    %p97 = scmp.eq.s32.totalorder %s15, 0
    %p98 = por %p96, %p97
    %p99 = scmp.ne.s32.totalorder %s91, %s93
    %p100 = scmp.eq.s32.totalorder %s20, 1
    %p101 = por %p99, %p100
    %p102 = scmp.ne.s32.totalorder %s93, %s94
    %p103 = scmp.eq.s32.totalorder %s20, 0
    %p104 = por %p102, %p103
    %p105 = scmp.ne.s32.totalorder %s93, %s94
    %p106 = scmp.eq.s32.totalorder %s21, 1
    %p107 = por %p105, %p106
    %p109 = scmp.ne.s32.totalorder %s94, %s108
    %p110 = scmp.eq.s32.totalorder %s21, 0
    %p111 = por %p109, %p110
    %s113 = sadd.s32 %s112, 1
    %p116 = scmp.eq.s32.totalorder %s15, 1
    %p117 = scmp.ne.s32.totalorder %s112, %s114
    %p118 = scmp.eq.s32.totalorder %s15, 0
    %p119 = por %p117, %p118
    %p120 = scmp.ne.s32.totalorder %s112, %s114
    %p121 = scmp.eq.s32.totalorder %s20, 1
    %p122 = por %p120, %p121
    %p123 = scmp.ne.s32.totalorder %s114, %s115
    %p124 = scmp.eq.s32.totalorder %s20, 0
    %p125 = por %p123, %p124
    %p126 = scmp.ne.s32.totalorder %s114, %s115
    %p127 = scmp.eq.s32.totalorder %s21, 1
    %p128 = por %p126, %p127
    %p130 = scmp.ne.s32.totalorder %s115, %s129
    %p131 = scmp.eq.s32.totalorder %s21, 0
    %p132 = por %p130, %p131
    %s134 = sadd.s32 %s133, 1
    %p137 = scmp.eq.s32.totalorder %s15, 1
    %p138 = scmp.ne.s32.totalorder %s133, %s135
    %p139 = scmp.eq.s32.totalorder %s15, 0
    %p140 = por %p138, %p139
    %p141 = scmp.ne.s32.totalorder %s133, %s135
    %p142 = scmp.eq.s32.totalorder %s20, 1
    %p143 = por %p141, %p142
    %p144 = scmp.ne.s32.totalorder %s135, %s136
    %p145 = scmp.eq.s32.totalorder %s20, 0
    %p146 = por %p144, %p145
    %p147 = scmp.ne.s32.totalorder %s135, %s136
    %p148 = scmp.eq.s32.totalorder %s21, 1
    %p149 = por %p147, %p148
    %p151 = scmp.ne.s32.totalorder %s136, %s150
    %p152 = scmp.eq.s32.totalorder %s21, 0
    %p153 = por %p151, %p152
    %s155 = sadd.s32 %s154, 1
    %p158 = scmp.eq.s32.totalorder %s15, 1
    %p159 = scmp.ne.s32.totalorder %s154, %s156
    %p160 = scmp.eq.s32.totalorder %s15, 0
    %p161 = por %p159, %p160
    %p162 = scmp.ne.s32.totalorder %s154, %s156
    %p163 = scmp.eq.s32.totalorder %s20, 1
    %p164 = por %p162, %p163
    %p165 = scmp.ne.s32.totalorder %s156, %s157
    %p166 = scmp.eq.s32.totalorder %s20, 0
    %p167 = por %p165, %p166
    %p168 = scmp.ne.s32.totalorder %s156, %s157
    %p169 = scmp.eq.s32.totalorder %s21, 1
    %p170 = por %p168, %p169
    %p172 = scmp.ne.s32.totalorder %s157, %s171
    %p173 = scmp.eq.s32.totalorder %s21, 0
    %p174 = por %p172, %p173
    %s176 = sadd.s32 %s175, 1
    %p179 = scmp.eq.s32.totalorder %s15, 1
    %p180 = scmp.ne.s32.totalorder %s175, %s177
    %p181 = scmp.eq.s32.totalorder %s15, 0
    %p182 = por %p180, %p181
    %p183 = scmp.ne.s32.totalorder %s175, %s177
    %p184 = scmp.eq.s32.totalorder %s20, 1
    %p185 = por %p183, %p184
    %p186 = scmp.ne.s32.totalorder %s177, %s178
    %p187 = scmp.eq.s32.totalorder %s20, 0
    %p188 = por %p186, %p187
    %p189 = scmp.ne.s32.totalorder %s177, %s178
    %p190 = scmp.eq.s32.totalorder %s21, 1
    %p191 = por %p189, %p190
    %p193 = scmp.ne.s32.totalorder %s178, %s192
    %p194 = scmp.eq.s32.totalorder %s21, 0
    %p195 = por %p193, %p194
    %s197 = sadd.s32 %s196, 1
    %p200 = scmp.eq.s32.totalorder %s15, 1
    %p201 = scmp.ne.s32.totalorder %s196, %s198
    %p202 = scmp.eq.s32.totalorder %s15, 0
    %p203 = por %p201, %p202
    %p204 = scmp.ne.s32.totalorder %s196, %s198
    %p205 = scmp.eq.s32.totalorder %s20, 1
    %p206 = por %p204, %p205
    %p207 = scmp.ne.s32.totalorder %s198, %s199
    %p208 = scmp.eq.s32.totalorder %s20, 0
    %p209 = por %p207, %p208
    %p210 = scmp.ne.s32.totalorder %s198, %s199
    %p211 = scmp.eq.s32.totalorder %s21, 1
    %p212 = por %p210, %p211
    %p214 = scmp.ne.s32.totalorder %s199, %s213
    %p215 = scmp.eq.s32.totalorder %s21, 0
    %p216 = por %p214, %p215
    %s217 = ssub.s32 %s15, %s22
    %p218 = scmp.eq.s32.totalorder %s217, 0
    %s220 = sadd.s32 %s219, 1
    %s221 = scalar_select %p218, %s219, %s220
    %p224 = pneg %p218
    %p225 = scmp.eq.s32.totalorder %s15, 1
    %p226 = por %p224, %p225
    %p227 = scmp.ne.s32.totalorder %s219, %s222
    %p228 = scmp.eq.s32.totalorder %s15, 0
    %p229 = por %p227, %p228
    %p230 = scmp.ne.s32.totalorder %s219, %s222
    %p231 = scmp.eq.s32.totalorder %s20, 1
    %p232 = por %p230, %p231
    %p233 = scmp.ne.s32.totalorder %s222, %s223
    %p234 = scmp.eq.s32.totalorder %s20, 0
    %p235 = por %p233, %p234
    %p236 = scmp.ne.s32.totalorder %s222, %s223
    %p237 = scmp.eq.s32.totalorder %s21, 1
    %p238 = por %p236, %p237
    %p240 = scmp.ne.s32.totalorder %s223, %s239
    %p241 = scmp.eq.s32.totalorder %s21, 0
    %p242 = por %p240, %p241
    %p243 = scmp.le.s32.totalorder 1, %s15
    %p244 = scmp.lt.s32.totalorder %s15, 3
    %p245 = pnand %p243, %p244
    %p246 = pneg %p245
    // Predicated region
    $region9: #{gn_block_forward.3} parent=5 // pred_check
      _
    $region10: #{gn_block_forward.3} parent=5 // pred_check_branch
      %248 = sbr.rel (%p245) target = $region12
    $region11: #{gn_block_forward.3} parent=5 // pred_region
      %s249 = ssub.s32 %s15, 1
      // Predicated region
      $region13: #{gn_block_forward.3} parent=11 // pred_check
        %p250 = pneg %p62
      $region14: #{gn_block_forward.3} parent=11 // pred_check_branch
        %252 = sbr.rel (%p250) target = $region16
      $region15: #{gn_block_forward.3} parent=11 // pred_region
        _
      $region16: #{gn_block_forward.3} parent=11 // pred_fallthru
        _
      // Predicated region
      $region17: #{gn_block_forward.3} parent=11 // pred_check
        %p253 = pneg %p83
      $region18: #{gn_block_forward.3} parent=11 // pred_check_branch
        %255 = sbr.rel (%p253) target = $region20
      $region19: #{gn_block_forward.3} parent=11 // pred_region
        _
      $region20: #{gn_block_forward.3} parent=11 // pred_fallthru
        _
      // Predicated region
      $region21: #{gn_block_forward.3} parent=11 // pred_check
        %p256 = pneg %p104
      $region22: #{gn_block_forward.3} parent=11 // pred_check_branch
        %258 = sbr.rel (%p256) target = $region24
      $region23: #{gn_block_forward.3} parent=11 // pred_region
        _
      $region24: #{gn_block_forward.3} parent=11 // pred_fallthru
        _
      // Predicated region
      $region25: #{gn_block_forward.3} parent=11 // pred_check
        %p259 = pneg %p125
      $region26: #{gn_block_forward.3} parent=11 // pred_check_branch
        %261 = sbr.rel (%p259) target = $region28
      $region27: #{gn_block_forward.3} parent=11 // pred_region
        _
      $region28: #{gn_block_forward.3} parent=11 // pred_fallthru
        _
      // Predicated region
      $region29: #{gn_block_forward.3} parent=11 // pred_check
        %p262 = pneg %p146
      $region30: #{gn_block_forward.3} parent=11 // pred_check_branch
        %264 = sbr.rel (%p262) target = $region32
      $region31: #{gn_block_forward.3} parent=11 // pred_region
        _
      $region32: #{gn_block_forward.3} parent=11 // pred_fallthru
        _
      // Predicated region
      $region33: #{gn_block_forward.3} parent=11 // pred_check
        %p265 = pneg %p167
      $region34: #{gn_block_forward.3} parent=11 // pred_check_branch
        %267 = sbr.rel (%p265) target = $region36
      $region35: #{gn_block_forward.3} parent=11 // pred_region
        _
      $region36: #{gn_block_forward.3} parent=11 // pred_fallthru
        _
      // Predicated region
      $region37: #{gn_block_forward.3} parent=11 // pred_check
        %p268 = pneg %p188
      $region38: #{gn_block_forward.3} parent=11 // pred_check_branch
        %270 = sbr.rel (%p268) target = $region40
      $region39: #{gn_block_forward.3} parent=11 // pred_region
        _
      $region40: #{gn_block_forward.3} parent=11 // pred_fallthru
        _
      // Predicated region
      $region41: #{gn_block_forward.3} parent=11 // pred_check
        %p271 = pneg %p209
      $region42: #{gn_block_forward.3} parent=11 // pred_check_branch
        %273 = sbr.rel (%p271) target = $region44
      $region43: #{gn_block_forward.3} parent=11 // pred_region
        _
      $region44: #{gn_block_forward.3} parent=11 // pred_fallthru
        _
    $region12: #{gn_block_forward.3} parent=5 // pred_fallthru
      _
    %p274 = scmp.lt.s32.totalorder %s15, 2
    // Predicated region
    $region45: #{gn_block_forward.3} parent=5 // pred_check
      %p275 = pneg %p274
    $region46: #{gn_block_forward.3} parent=5 // pred_check_branch
      %277 = sbr.rel (%p275) target = $region48
    $region47: #{gn_block_forward.3} parent=5 // pred_region
      // Predicated region
      $region49: #{gn_block_forward.3} parent=47 // pred_check
        %p278 = pneg %p35
      $region50: #{gn_block_forward.3} parent=47 // pred_check_branch
        %280 = sbr.rel (%p278) target = $region52
      $region51: #{gn_block_forward.3} parent=47 // pred_region
        %s281 = smul.u32 64, %s15
        %p282 = scmp.lt.s32.totalorder %s281, 127
        %s283 = scalar_select %p282, %s281, 127
        %s284 = smul.addr %s283, 2
        %s285 = smul.addr %s284, 8
        %s286 = scalar_lea.vmem %s0, %s285
        %s287 = smul.u32 64, %s15
      $region52: #{gn_block_forward.3} parent=47 // pred_fallthru
        _
    $region48: #{gn_block_forward.3} parent=5 // pred_fallthru
      _
    %p288 = scmp.le.s32.totalorder 1, %s15
    %p289 = scmp.lt.s32.totalorder %s15, 3
    %p290 = pnand %p288, %p289
    %p291 = pneg %p290
    // Predicated region
    $region53: #{gn_block_forward.3} parent=5 // pred_check
      _
    $region54: #{gn_block_forward.3} parent=5 // pred_check_branch
      %293 = sbr.rel (%p290) target = $region56
    $region55: #{gn_block_forward.3} parent=5 // pred_region
      %s294 = ssub.s32 %s15, 1
      %s295 = smul.u32 64, %s20
      %p296 = scmp.lt.s32.totalorder %s295, 127
      %s297 = scalar_select %p296, %s295, 127
      %s298 = smul.addr %s297, 2
      %s299 = smul.addr %s298, 8
      %s300 = scalar_lea.vmem %s0, %s299
      %p301 = pneg %p41
      %p302 = pneg %p38
      %p303 = pneg %p62
      %p304 = pneg %p59
      %p305 = pneg %p83
      %p306 = pneg %p80
      %p307 = pneg %p104
      %p308 = pneg %p101
      %p309 = pneg %p125
      %p310 = pneg %p122
      %p311 = pneg %p146
      %p312 = pneg %p143
      %p313 = pneg %p167
      %p314 = pneg %p164
      %p315 = pneg %p188
      %p316 = pneg %p185
      %p317 = pneg %p209
      %p318 = pneg %p206
      %p319 = pneg %p235
      %p320 = pneg %p232
      %s321 = smul.u32 64, %s20
      %p322 = scmp.lt.s32.totalorder %s321, 127
      %s323 = scalar_select %p322, %s321, 127
      %s324 = smul.addr %s323, 8
      %s325 = scalar_lea.vmem %s9, %s324
      %s326 = smul.u32 64, %s20
      %p327 = scmp.lt.s32.totalorder %s326, 127
      %s328 = scalar_select %p327, %s326, 127
      %s329 = smul.addr %s328, 2
      %s330 = smul.addr %s329, 8
      %s331 = scalar_lea.vmem %s0, %s330
      %s332 = smul.u32 64, %s20
      %s333 = smul.u32 64, %s20
      %p334 = scmp.lt.s32.totalorder %s333, 127
      %s335 = scalar_select %p334, %s333, 127
      %s336 = smul.addr %s335, 8
      %s337 = scalar_lea.vmem %s9, %s336
      %s338 = smul.u32 64, %s20
      %v339 = vld [vmem:[%s331] sm:$0xff]
      %v340 = vld [vmem:[%s331 + $0x8] sm:$0xff]
      %v341 = vld [vmem:[%s331 + $0x10] sm:$0xff]
      %v342 = vld [vmem:[%s331 + $0x18] sm:$0xff]
      %v343 = vld [vmem:[%s331 + $0x20] sm:$0xff]
      %v344 = vld [vmem:[%s331 + $0x28] sm:$0xff]
      %v345 = vld [vmem:[%s331 + $0x30] sm:$0xff]
      %v346 = vld [vmem:[%s331 + $0x38] sm:$0xff]
      %v347 = vld [vmem:[%s331 + $0x40] sm:$0xff]
      %v348 = vld [vmem:[%s331 + $0x48] sm:$0xff]
      %v349 = vld [vmem:[%s331 + $0x50] sm:$0xff]
      %v350 = vld [vmem:[%s331 + $0x58] sm:$0xff]
      %v351 = vld [vmem:[%s331 + $0x60] sm:$0xff]
      %v352 = vld [vmem:[%s331 + $0x68] sm:$0xff]
      %v353 = vld [vmem:[%s331 + $0x70] sm:$0xff]
      %v354 = vld [vmem:[%s331 + $0x78] sm:$0xff]
      %v355 = vld [vmem:[%s331 + $0x80] sm:$0xff]
      %v356 = vld [vmem:[%s331 + $0x88] sm:$0xff]
      %v357 = vld [vmem:[%s331 + $0x90] sm:$0xff]
      %v358 = vld [vmem:[%s331 + $0x98] sm:$0xff]
      %v359 = vld [vmem:[%s331 + $0xa0] sm:$0xff]
      %v360 = vld [vmem:[%s331 + $0xa8] sm:$0xff]
      %v361 = vld [vmem:[%s331 + $0xb0] sm:$0xff]
      %v362 = vld [vmem:[%s331 + $0xb8] sm:$0xff]
      %v363 = vld [vmem:[%s331 + $0xc0] sm:$0xff]
      %v364 = vld [vmem:[%s331 + $0xc8] sm:$0xff]
      %v365 = vld [vmem:[%s331 + $0xd0] sm:$0xff]
      %v366 = vld [vmem:[%s331 + $0xd8] sm:$0xff]
      %v367 = vld [vmem:[%s331 + $0xe0] sm:$0xff]
      %v368 = vld [vmem:[%s331 + $0xe8] sm:$0xff]
      %v369 = vld [vmem:[%s331 + $0xf0] sm:$0xff]
      %v370 = vld [vmem:[%s331 + $0xf8] sm:$0xff]
      %v371 = vld [vmem:[%s331 + $0x100] sm:$0xff]
      %v372 = vld [vmem:[%s331 + $0x108] sm:$0xff]
      %v373 = vld [vmem:[%s331 + $0x110] sm:$0xff]
      %v374 = vld [vmem:[%s331 + $0x118] sm:$0xff]
      %v375 = vld [vmem:[%s331 + $0x120] sm:$0xff]
      %v376 = vld [vmem:[%s331 + $0x128] sm:$0xff]
      %v377 = vld [vmem:[%s331 + $0x130] sm:$0xff]
      %v378 = vld [vmem:[%s331 + $0x138] sm:$0xff]
      %v379 = vld [vmem:[%s331 + $0x140] sm:$0xff]
      %v380 = vld [vmem:[%s331 + $0x148] sm:$0xff]
      %v381 = vld [vmem:[%s331 + $0x150] sm:$0xff]
      %v382 = vld [vmem:[%s331 + $0x158] sm:$0xff]
      %v383 = vld [vmem:[%s331 + $0x160] sm:$0xff]
      %v384 = vld [vmem:[%s331 + $0x168] sm:$0xff]
      %v385 = vld [vmem:[%s331 + $0x170] sm:$0xff]
      %v386 = vld [vmem:[%s331 + $0x178] sm:$0xff]
      %v387 = vld [vmem:[%s331 + $0x180] sm:$0xff]
      %v388 = vld [vmem:[%s331 + $0x188] sm:$0xff]
      %v389 = vld [vmem:[%s331 + $0x190] sm:$0xff]
      %v390 = vld [vmem:[%s331 + $0x198] sm:$0xff]
      %v391 = vld [vmem:[%s331 + $0x1a0] sm:$0xff]
      %v392 = vld [vmem:[%s331 + $0x1a8] sm:$0xff]
      %v393 = vld [vmem:[%s331 + $0x1b0] sm:$0xff]
      %v394 = vld [vmem:[%s331 + $0x1b8] sm:$0xff]
      %v395 = vld [vmem:[%s331 + $0x1c0] sm:$0xff]
      %v396 = vld [vmem:[%s331 + $0x1c8] sm:$0xff]
      %v397 = vld [vmem:[%s331 + $0x1d0] sm:$0xff]
      %v398 = vld [vmem:[%s331 + $0x1d8] sm:$0xff]
      %v399 = vld [vmem:[%s331 + $0x1e0] sm:$0xff]
      %v400 = vld [vmem:[%s331 + $0x1e8] sm:$0xff]
      %v401 = vld [vmem:[%s331 + $0x1f0] sm:$0xff]
      %v402 = vld [vmem:[%s331 + $0x1f8] sm:$0xff]
      %v403 = vld [vmem:[%s331 + $0x200] sm:$0xff]
      %v404 = vld [vmem:[%s331 + $0x208] sm:$0xff]
      %v405 = vld [vmem:[%s331 + $0x210] sm:$0xff]
      %v406 = vld [vmem:[%s331 + $0x218] sm:$0xff]
      %v407 = vld [vmem:[%s331 + $0x220] sm:$0xff]
      %v408 = vld [vmem:[%s331 + $0x228] sm:$0xff]
      %v409 = vld [vmem:[%s331 + $0x230] sm:$0xff]
      %v410 = vld [vmem:[%s331 + $0x238] sm:$0xff]
      %v411 = vld [vmem:[%s331 + $0x240] sm:$0xff]
      %v412 = vld [vmem:[%s331 + $0x248] sm:$0xff]
      %v413 = vld [vmem:[%s331 + $0x250] sm:$0xff]
      %v414 = vld [vmem:[%s331 + $0x258] sm:$0xff]
      %v415 = vld [vmem:[%s331 + $0x260] sm:$0xff]
      %v416 = vld [vmem:[%s331 + $0x268] sm:$0xff]
      %v417 = vld [vmem:[%s331 + $0x270] sm:$0xff]
      %v418 = vld [vmem:[%s331 + $0x278] sm:$0xff]
      %v419 = vld [vmem:[%s331 + $0x280] sm:$0xff]
      %v420 = vld [vmem:[%s331 + $0x288] sm:$0xff]
      %v421 = vld [vmem:[%s331 + $0x290] sm:$0xff]
      %v422 = vld [vmem:[%s331 + $0x298] sm:$0xff]
      %v423 = vld [vmem:[%s331 + $0x2a0] sm:$0xff]
      %v424 = vld [vmem:[%s331 + $0x2a8] sm:$0xff]
      %v425 = vld [vmem:[%s331 + $0x2b0] sm:$0xff]
      %v426 = vld [vmem:[%s331 + $0x2b8] sm:$0xff]
      %v427 = vld [vmem:[%s331 + $0x2c0] sm:$0xff]
      %v428 = vld [vmem:[%s331 + $0x2c8] sm:$0xff]
      %v429 = vld [vmem:[%s331 + $0x2d0] sm:$0xff]
      %v430 = vld [vmem:[%s331 + $0x2d8] sm:$0xff]
      %v431 = vld [vmem:[%s331 + $0x2e0] sm:$0xff]
      %v432 = vld [vmem:[%s331 + $0x2e8] sm:$0xff]
      %v433 = vld [vmem:[%s331 + $0x2f0] sm:$0xff]
      %v434 = vld [vmem:[%s331 + $0x2f8] sm:$0xff]
      %v435 = vld [vmem:[%s331 + $0x300] sm:$0xff]
      %v436 = vld [vmem:[%s331 + $0x308] sm:$0xff]
      %v437 = vld [vmem:[%s331 + $0x310] sm:$0xff]
      %v438 = vld [vmem:[%s331 + $0x318] sm:$0xff]
      %v439 = vld [vmem:[%s331 + $0x320] sm:$0xff]
      %v440 = vld [vmem:[%s331 + $0x328] sm:$0xff]
      %v441 = vld [vmem:[%s331 + $0x330] sm:$0xff]
      %v442 = vld [vmem:[%s331 + $0x338] sm:$0xff]
      %v443 = vld [vmem:[%s331 + $0x340] sm:$0xff]
      %v444 = vld [vmem:[%s331 + $0x348] sm:$0xff]
      %v445 = vld [vmem:[%s331 + $0x350] sm:$0xff]
      %v446 = vld [vmem:[%s331 + $0x358] sm:$0xff]
      %v447 = vld [vmem:[%s331 + $0x360] sm:$0xff]
      %v448 = vld [vmem:[%s331 + $0x368] sm:$0xff]
      %v449 = vld [vmem:[%s331 + $0x370] sm:$0xff]
      %v450 = vld [vmem:[%s331 + $0x378] sm:$0xff]
      %v451 = vld [vmem:[%s331 + $0x380] sm:$0xff]
      %v452 = vld [vmem:[%s331 + $0x388] sm:$0xff]
      %v453 = vld [vmem:[%s331 + $0x390] sm:$0xff]
      %v454 = vld [vmem:[%s331 + $0x398] sm:$0xff]
      %v455 = vld [vmem:[%s331 + $0x3a0] sm:$0xff]
      %v456 = vld [vmem:[%s331 + $0x3a8] sm:$0xff]
      %v457 = vld [vmem:[%s331 + $0x3b0] sm:$0xff]
      %v458 = vld [vmem:[%s331 + $0x3b8] sm:$0xff]
      %v459 = vld [vmem:[%s331 + $0x3c0] sm:$0xff]
      %v460 = vld [vmem:[%s331 + $0x3c8] sm:$0xff]
      %v461 = vld [vmem:[%s331 + $0x3d0] sm:$0xff]
      %v462 = vld [vmem:[%s331 + $0x3d8] sm:$0xff]
      %v463 = vld [vmem:[%s331 + $0x3e0] sm:$0xff]
      %v464 = vld [vmem:[%s331 + $0x3e8] sm:$0xff]
      %v465 = vld [vmem:[%s331 + $0x3f0] sm:$0xff]
      %v466 = vld [vmem:[%s331 + $0x3f8] sm:$0xff]
      %v467 = vld [vmem:[%s1] sm:$0xff]
      %v468 = vld [vmem:[%s1 + $0x8] sm:$0xff]
      %v469 = vld [vmem:[%s1 + $0x10] sm:$0xff]
      %v470 = vld [vmem:[%s1 + $0x18] sm:$0xff]
      %v471 = vld [vmem:[%s1 + $0x20] sm:$0xff]
      %v472 = vld [vmem:[%s1 + $0x28] sm:$0xff]
      %v473 = vld [vmem:[%s1 + $0x30] sm:$0xff]
      %v474 = vld [vmem:[%s1 + $0x38] sm:$0xff]
      %v475 = vld [vmem:[%s1 + $0x40] sm:$0xff]
      %v476 = vld [vmem:[%s1 + $0x48] sm:$0xff]
      %v477 = vld [vmem:[%s1 + $0x50] sm:$0xff]
      %v478 = vld [vmem:[%s1 + $0x58] sm:$0xff]
      %v479 = vld [vmem:[%s1 + $0x60] sm:$0xff]
      %v480 = vld [vmem:[%s1 + $0x68] sm:$0xff]
      %v481 = vld [vmem:[%s1 + $0x70] sm:$0xff]
      %v482 = vld [vmem:[%s1 + $0x78] sm:$0xff]
      %v483 = vld [vmem:[%s1 + $0x80] sm:$0xff]
      %v484 = vld [vmem:[%s1 + $0x88] sm:$0xff]
      %v485 = vld [vmem:[%s1 + $0x90] sm:$0xff]
      %v486 = vld [vmem:[%s1 + $0x98] sm:$0xff]
      %v487 = vld [vmem:[%s1 + $0xa0] sm:$0xff]
      %v488 = vld [vmem:[%s1 + $0xa8] sm:$0xff]
      %v489 = vld [vmem:[%s1 + $0xb0] sm:$0xff]
      %v490 = vld [vmem:[%s1 + $0xb8] sm:$0xff]
      %v491 = vld [vmem:[%s2] sm:$0x1]
      %v493 = vlaneseq
      %v494 = vshrl.u32 %v493, 7
      %v495 = vsub.s32 0, %v494
      %v496 = vrot.slane %v491, %v495
      %vm498 = vcmask 523264
      %v500 = vsel %vm498, %v340, 0
      %v503 = vsel %vm498, %v342, 0
      %v506 = vsel %vm498, %v344, 0
      %v509 = vsel %vm498, %v346, 0
      %v512 = vsel %vm498, %v348, 0
      %v515 = vsel %vm498, %v350, 0
      %v518 = vsel %vm498, %v352, 0
      %v521 = vsel %vm498, %v354, 0
      %v524 = vsel %vm498, %v356, 0
      %v527 = vsel %vm498, %v358, 0
      %v530 = vsel %vm498, %v360, 0
      %v533 = vsel %vm498, %v362, 0
      %v536 = vsel %vm498, %v364, 0
      %v539 = vsel %vm498, %v366, 0
      %v542 = vsel %vm498, %v368, 0
      %v545 = vsel %vm498, %v370, 0
      %v548 = vsel %vm498, %v372, 0
      %v551 = vsel %vm498, %v374, 0
      %v554 = vsel %vm498, %v376, 0
      %v557 = vsel %vm498, %v378, 0
      %v560 = vsel %vm498, %v380, 0
      %v563 = vsel %vm498, %v382, 0
      %v566 = vsel %vm498, %v384, 0
      %v569 = vsel %vm498, %v386, 0
      %v572 = vsel %vm498, %v388, 0
      %v575 = vsel %vm498, %v390, 0
      %v578 = vsel %vm498, %v392, 0
      %v581 = vsel %vm498, %v394, 0
      %v584 = vsel %vm498, %v396, 0
      %v587 = vsel %vm498, %v398, 0
      %v590 = vsel %vm498, %v400, 0
      %v593 = vsel %vm498, %v402, 0
      %v596 = vsel %vm498, %v404, 0
      %v599 = vsel %vm498, %v406, 0
      %v602 = vsel %vm498, %v408, 0
      %v605 = vsel %vm498, %v410, 0
      %v608 = vsel %vm498, %v412, 0
      %v611 = vsel %vm498, %v414, 0
      %v614 = vsel %vm498, %v416, 0
      %v617 = vsel %vm498, %v418, 0
      %v620 = vsel %vm498, %v420, 0
      %v623 = vsel %vm498, %v422, 0
      %v626 = vsel %vm498, %v424, 0
      %v629 = vsel %vm498, %v426, 0
      %v632 = vsel %vm498, %v428, 0
      %v635 = vsel %vm498, %v430, 0
      %v638 = vsel %vm498, %v432, 0
      %v641 = vsel %vm498, %v434, 0
      %v644 = vsel %vm498, %v436, 0
      %v647 = vsel %vm498, %v438, 0
      %v650 = vsel %vm498, %v440, 0
      %v653 = vsel %vm498, %v442, 0
      %v656 = vsel %vm498, %v444, 0
      %v659 = vsel %vm498, %v446, 0
      %v662 = vsel %vm498, %v448, 0
      %v665 = vsel %vm498, %v450, 0
      %v668 = vsel %vm498, %v452, 0
      %v671 = vsel %vm498, %v454, 0
      %v674 = vsel %vm498, %v456, 0
      %v677 = vsel %vm498, %v458, 0
      %v680 = vsel %vm498, %v460, 0
      %v683 = vsel %vm498, %v462, 0
      %v686 = vsel %vm498, %v464, 0
      %v689 = vsel %vm498, %v466, 0
      %691 = vmatprep.subr.mxu0 0.0
      %692 = vmatpush1.msra.mxu0 %v467
      %693 = vmatprep.subr.mxu0 0.0
      %694 = vmatpush1.msra.mxu0 %v468
      %695 = vmatprep.subr.mxu0 0.0
      %696 = vmatpush1.msra.mxu0 %v469
      %697 = vmatprep.subr.mxu0 0.0
      %698 = vmatpush1.msra.mxu0 %v470
      %699 = vmatprep.subr.mxu0 0.0
      %700 = vmatpush1.msra.mxu0 %v471
      %701 = vmatprep.subr.mxu0 0.0
      %702 = vmatpush1.msra.mxu0 %v472
      %703 = vmatprep.subr.mxu0 0.0
      %704 = vmatpush1.msra.mxu0 %v473
      %705 = vmatprep.subr.mxu0 0.0
      %706 = vmatpush1.msra.mxu0 %v474
      %707 = vmatprep.subr.mxu0 0.0
      %708 = vmatpush1.msra.mxu0 %v475
      %709 = vmatprep.subr.mxu0 0.0
      %710 = vmatpush1.msra.mxu0 %v476
      %711 = vmatprep.subr.mxu0 0.0
      %712 = vmatpush1.msra.mxu0 %v477
      %713 = vmatprep.subr.mxu0 0.0
      %714 = vmatpush1.msra.mxu0 %v478
      %715 = vmatprep.subr.mxu0 0.0
      %716 = vmatpush1.msra.mxu0 %v479
      %717 = vmatprep.subr.mxu0 0.0
      %718 = vmatpush1.msra.mxu0 %v480
      %719 = vmatprep.subr.mxu0 0.0
      %720 = vmatpush1.msra.mxu0 %v481
      %721 = vmatprep.subr.mxu0 0.0
      %722 = vmatpush1.msra.mxu0 %v482
      %723 = vmatprep.subr.mxu0 0.0
      %724 = vmatpush1.msra.mxu0 %v483
      %725 = vmatprep.subr.mxu0 0.0
      %726 = vmatpush1.msra.mxu0 %v484
      %727 = vmatprep.subr.mxu0 0.0
      %728 = vmatpush1.msra.mxu0 %v485
      %729 = vmatprep.subr.mxu0 0.0
      %730 = vmatpush1.msra.mxu0 %v486
      %731 = vmatprep.subr.mxu0 0.0
      %732 = vmatpush1.msra.mxu0 %v487
      %733 = vmatprep.subr.mxu0 0.0
      %734 = vmatpush1.msra.mxu0 %v488
      %735 = vmatprep.subr.mxu0 0.0
      %736 = vmatpush1.msra.mxu0 %v489
      %737 = vmatprep.subr.mxu0 0.0
      %738 = vmatpush1.msra.mxu0 %v490
      %739 = vmatprep.subr.mxu0 0.0
      %740 = vmatpush1.msra.mxu0 0.0
      %741 = vmatprep.subr.mxu0 0.0
      %742 = vmatpush1.msra.mxu0 0.0
      %743 = vmatprep.subr.mxu0 0.0
      %744 = vmatpush1.msra.mxu0 0.0
      %745 = vmatprep.subr.mxu0 0.0
      %746 = vmatpush1.msra.mxu0 0.0
      %747 = vmatprep.subr.mxu0 0.0
      %748 = vmatpush1.msra.mxu0 0.0
      %749 = vmatprep.subr.mxu0 0.0
      %750 = vmatpush1.msra.mxu0 0.0
      %751 = vmatprep.subr.mxu0 0.0
      %752 = vmatpush1.msra.mxu0 0.0
      %753 = vmatprep.subr.mxu0 0.0
      %754 = vmatpush1.msra.mxu0 0.0
      %755 = vmatprep.mubr.f32.mxu0 %v500
      %756 = vmatmul.mubr.f32.gmra.mrb[0].mxu0 %v339
      %v757 = vpop.f32.mrb[0].mxu0
      %v758 = vadd.f32 %v496, %v757
      %v759 = vpop.f32.mrb[0].mxu0
      %760 = vmatprep.mubr.f32.mxu0 %v503
      %761 = vmatmul.mubr.f32.gmra.mrb[0].mxu0 %v341
      %v762 = vpop.f32.mrb[0].mxu0
      %v763 = vadd.f32 %v496, %v762
      %v764 = vpop.f32.mrb[0].mxu0
      %765 = vmatprep.mubr.f32.mxu0 %v506
      %766 = vmatmul.mubr.f32.gmra.mrb[0].mxu0 %v343
      %v767 = vpop.f32.mrb[0].mxu0
      %v768 = vadd.f32 %v496, %v767
      %v769 = vpop.f32.mrb[0].mxu0
      %770 = vmatprep.mubr.f32.mxu0 %v509
      %771 = vmatmul.mubr.f32.gmra.mrb[0].mxu0 %v345
      %v772 = vpop.f32.mrb[0].mxu0
      %v773 = vadd.f32 %v496, %v772
      %v774 = vpop.f32.mrb[0].mxu0
      %775 = vmatprep.mubr.f32.mxu0 %v512
      %776 = vmatmul.mubr.f32.gmra.mrb[0].mxu0 %v347
      %v777 = vpop.f32.mrb[0].mxu0
      %v778 = vadd.f32 %v496, %v777
      %v779 = vpop.f32.mrb[0].mxu0
      %780 = vmatprep.mubr.f32.mxu0 %v515
      %781 = vmatmul.mubr.f32.gmra.mrb[0].mxu0 %v349
      %v782 = vpop.f32.mrb[0].mxu0
      %v783 = vadd.f32 %v496, %v782
      %v784 = vpop.f32.mrb[0].mxu0
      %785 = vmatprep.mubr.f32.mxu0 %v518
      %786 = vmatmul.mubr.f32.gmra.mrb[0].mxu0 %v351
      %v787 = vpop.f32.mrb[0].mxu0
      %v788 = vadd.f32 %v496, %v787
      %v789 = vpop.f32.mrb[0].mxu0
      %790 = vmatprep.mubr.f32.mxu0 %v521
      %791 = vmatmul.mubr.f32.gmra.mrb[0].mxu0 %v353
      %v792 = vpop.f32.mrb[0].mxu0
      %v793 = vadd.f32 %v496, %v792
      %v794 = vpop.f32.mrb[0].mxu0
      %795 = vmatprep.mubr.f32.mxu0 %v524
      %796 = vmatmul.mubr.f32.gmra.mrb[0].mxu0 %v355
      %v797 = vpop.f32.mrb[0].mxu0
      %v798 = vadd.f32 %v496, %v797
      %v799 = vpop.f32.mrb[0].mxu0
      %800 = vmatprep.mubr.f32.mxu0 %v527
      %801 = vmatmul.mubr.f32.gmra.mrb[0].mxu0 %v357
      %v802 = vpop.f32.mrb[0].mxu0
      %v803 = vadd.f32 %v496, %v802
      %v804 = vpop.f32.mrb[0].mxu0
      %805 = vmatprep.mubr.f32.mxu0 %v530
      %806 = vmatmul.mubr.f32.gmra.mrb[0].mxu0 %v359
      %v807 = vpop.f32.mrb[0].mxu0
      %v808 = vadd.f32 %v496, %v807
      %v809 = vpop.f32.mrb[0].mxu0
      %810 = vmatprep.mubr.f32.mxu0 %v533
      %811 = vmatmul.mubr.f32.gmra.mrb[0].mxu0 %v361
      %v812 = vpop.f32.mrb[0].mxu0
      %v813 = vadd.f32 %v496, %v812
      %v814 = vpop.f32.mrb[0].mxu0
      %815 = vmatprep.mubr.f32.mxu0 %v536
      %816 = vmatmul.mubr.f32.gmra.mrb[0].mxu0 %v363
      %v817 = vpop.f32.mrb[0].mxu0
      %v818 = vadd.f32 %v496, %v817
      %v819 = vpop.f32.mrb[0].mxu0
      %820 = vmatprep.mubr.f32.mxu0 %v539
      %821 = vmatmul.mubr.f32.gmra.mrb[0].mxu0 %v365
      %v822 = vpop.f32.mrb[0].mxu0
      %v823 = vadd.f32 %v496, %v822
      %v824 = vpop.f32.mrb[0].mxu0
      %825 = vmatprep.mubr.f32.mxu0 %v542
      %826 = vmatmul.mubr.f32.gmra.mrb[0].mxu0 %v367
      %v827 = vpop.f32.mrb[0].mxu0
      %v828 = vadd.f32 %v496, %v827
      %v829 = vpop.f32.mrb[0].mxu0
      %830 = vmatprep.mubr.f32.mxu0 %v545
      %831 = vmatmul.mubr.f32.gmra.mrb[0].mxu0 %v369
      %v832 = vpop.f32.mrb[0].mxu0
      %v833 = vadd.f32 %v496, %v832
      %v834 = vpop.f32.mrb[0].mxu0
      %835 = vmatprep.mubr.f32.mxu0 %v548
      %836 = vmatmul.mubr.f32.gmra.mrb[0].mxu0 %v371
      %v837 = vpop.f32.mrb[0].mxu0
      %v838 = vadd.f32 %v496, %v837
      %v839 = vpop.f32.mrb[0].mxu0
      %840 = vmatprep.mubr.f32.mxu0 %v551
      %841 = vmatmul.mubr.f32.gmra.mrb[0].mxu0 %v373
      %v842 = vpop.f32.mrb[0].mxu0
      %v843 = vadd.f32 %v496, %v842
      %v844 = vpop.f32.mrb[0].mxu0
      %845 = vmatprep.mubr.f32.mxu0 %v554
      %846 = vmatmul.mubr.f32.gmra.mrb[0].mxu0 %v375
      %v847 = vpop.f32.mrb[0].mxu0
      %v848 = vadd.f32 %v496, %v847
      %v849 = vpop.f32.mrb[0].mxu0
      %850 = vmatprep.mubr.f32.mxu0 %v557
      %851 = vmatmul.mubr.f32.gmra.mrb[0].mxu0 %v377
      %v852 = vpop.f32.mrb[0].mxu0
      %v853 = vadd.f32 %v496, %v852
      %v854 = vpop.f32.mrb[0].mxu0
      %855 = vmatprep.mubr.f32.mxu0 %v560
      %856 = vmatmul.mubr.f32.gmra.mrb[0].mxu0 %v379
      %v857 = vpop.f32.mrb[0].mxu0
      %v858 = vadd.f32 %v496, %v857
      %v859 = vpop.f32.mrb[0].mxu0
      %860 = vmatprep.mubr.f32.mxu0 %v563
      %861 = vmatmul.mubr.f32.gmra.mrb[0].mxu0 %v381
      %v862 = vpop.f32.mrb[0].mxu0
      %v863 = vadd.f32 %v496, %v862
      %v864 = vpop.f32.mrb[0].mxu0
      %865 = vmatprep.mubr.f32.mxu0 %v566
      %866 = vmatmul.mubr.f32.gmra.mrb[0].mxu0 %v383
      %v867 = vpop.f32.mrb[0].mxu0
      %v868 = vadd.f32 %v496, %v867
      %v869 = vpop.f32.mrb[0].mxu0
      %870 = vmatprep.mubr.f32.mxu0 %v569
      %871 = vmatmul.mubr.f32.gmra.mrb[0].mxu0 %v385
      %v872 = vpop.f32.mrb[0].mxu0
      %v873 = vadd.f32 %v496, %v872
      %v874 = vpop.f32.mrb[0].mxu0
      %875 = vmatprep.mubr.f32.mxu0 %v572
      %876 = vmatmul.mubr.f32.gmra.mrb[0].mxu0 %v387
      %v877 = vpop.f32.mrb[0].mxu0
      %v878 = vadd.f32 %v496, %v877
      %v879 = vpop.f32.mrb[0].mxu0
      %880 = vmatprep.mubr.f32.mxu0 %v575
      %881 = vmatmul.mubr.f32.gmra.mrb[0].mxu0 %v389
      %v882 = vpop.f32.mrb[0].mxu0
      %v883 = vadd.f32 %v496, %v882
      %v884 = vpop.f32.mrb[0].mxu0
      %885 = vmatprep.mubr.f32.mxu0 %v578
      %886 = vmatmul.mubr.f32.gmra.mrb[0].mxu0 %v391
      %v887 = vpop.f32.mrb[0].mxu0
      %v888 = vadd.f32 %v496, %v887
      %v889 = vpop.f32.mrb[0].mxu0
      %890 = vmatprep.mubr.f32.mxu0 %v581
      %891 = vmatmul.mubr.f32.gmra.mrb[0].mxu0 %v393
      %v892 = vpop.f32.mrb[0].mxu0
      %v893 = vadd.f32 %v496, %v892
      %v894 = vpop.f32.mrb[0].mxu0
      %895 = vmatprep.mubr.f32.mxu0 %v584
      %896 = vmatmul.mubr.f32.gmra.mrb[0].mxu0 %v395
      %v897 = vpop.f32.mrb[0].mxu0
      %v898 = vadd.f32 %v496, %v897
      %v899 = vpop.f32.mrb[0].mxu0
      %900 = vmatprep.mubr.f32.mxu0 %v587
      %901 = vmatmul.mubr.f32.gmra.mrb[0].mxu0 %v397
      %v902 = vpop.f32.mrb[0].mxu0
      %v903 = vadd.f32 %v496, %v902
      %v904 = vpop.f32.mrb[0].mxu0
      %905 = vmatprep.mubr.f32.mxu0 %v590
      %906 = vmatmul.mubr.f32.gmra.mrb[0].mxu0 %v399
      %v907 = vpop.f32.mrb[0].mxu0
      %v908 = vadd.f32 %v496, %v907
      %v909 = vpop.f32.mrb[0].mxu0
      %910 = vmatprep.mubr.f32.mxu0 %v593
      %911 = vmatmul.mubr.f32.gmra.mrb[0].mxu0 %v401
      %v912 = vpop.f32.mrb[0].mxu0
      %v913 = vadd.f32 %v496, %v912
      %v914 = vpop.f32.mrb[0].mxu0
      %915 = vmatprep.mubr.f32.mxu0 %v596
      %916 = vmatmul.mubr.f32.gmra.mrb[0].mxu0 %v403
      %v917 = vpop.f32.mrb[0].mxu0
      %v918 = vadd.f32 %v496, %v917
      %v919 = vpop.f32.mrb[0].mxu0
      %920 = vmatprep.mubr.f32.mxu0 %v599
      %921 = vmatmul.mubr.f32.gmra.mrb[0].mxu0 %v405
      %v922 = vpop.f32.mrb[0].mxu0
      %v923 = vadd.f32 %v496, %v922
      %v924 = vpop.f32.mrb[0].mxu0
      %925 = vmatprep.mubr.f32.mxu0 %v602
      %926 = vmatmul.mubr.f32.gmra.mrb[0].mxu0 %v407
      %v927 = vpop.f32.mrb[0].mxu0
      %v928 = vadd.f32 %v496, %v927
      %v929 = vpop.f32.mrb[0].mxu0
      %930 = vmatprep.mubr.f32.mxu0 %v605
      %931 = vmatmul.mubr.f32.gmra.mrb[0].mxu0 %v409
      %v932 = vpop.f32.mrb[0].mxu0
      %v933 = vadd.f32 %v496, %v932
      %v934 = vpop.f32.mrb[0].mxu0
      %935 = vmatprep.mubr.f32.mxu0 %v608
      %936 = vmatmul.mubr.f32.gmra.mrb[0].mxu0 %v411
      %v937 = vpop.f32.mrb[0].mxu0
      %v938 = vadd.f32 %v496, %v937
      %v939 = vpop.f32.mrb[0].mxu0
      %940 = vmatprep.mubr.f32.mxu0 %v611
      %941 = vmatmul.mubr.f32.gmra.mrb[0].mxu0 %v413
      %v942 = vpop.f32.mrb[0].mxu0
      %v943 = vadd.f32 %v496, %v942
      %v944 = vpop.f32.mrb[0].mxu0
      %945 = vmatprep.mubr.f32.mxu0 %v614
      %946 = vmatmul.mubr.f32.gmra.mrb[0].mxu0 %v415
      %v947 = vpop.f32.mrb[0].mxu0
      %v948 = vadd.f32 %v496, %v947
      %v949 = vpop.f32.mrb[0].mxu0
      %950 = vmatprep.mubr.f32.mxu0 %v617
      %951 = vmatmul.mubr.f32.gmra.mrb[0].mxu0 %v417
      %v952 = vpop.f32.mrb[0].mxu0
      %v953 = vadd.f32 %v496, %v952
      %v954 = vpop.f32.mrb[0].mxu0
      %955 = vmatprep.mubr.f32.mxu0 %v620
      %956 = vmatmul.mubr.f32.gmra.mrb[0].mxu0 %v419
      %v957 = vpop.f32.mrb[0].mxu0
      %v958 = vadd.f32 %v496, %v957
      %v959 = vpop.f32.mrb[0].mxu0
      %960 = vmatprep.mubr.f32.mxu0 %v623
      %961 = vmatmul.mubr.f32.gmra.mrb[0].mxu0 %v421
      %v962 = vpop.f32.mrb[0].mxu0
      %v963 = vadd.f32 %v496, %v962
      %v964 = vpop.f32.mrb[0].mxu0
      %965 = vmatprep.mubr.f32.mxu0 %v626
      %966 = vmatmul.mubr.f32.gmra.mrb[0].mxu0 %v423
      %v967 = vpop.f32.mrb[0].mxu0
      %v968 = vadd.f32 %v496, %v967
      %v969 = vpop.f32.mrb[0].mxu0
      %970 = vmatprep.mubr.f32.mxu0 %v629
      %971 = vmatmul.mubr.f32.gmra.mrb[0].mxu0 %v425
      %v972 = vpop.f32.mrb[0].mxu0
      %v973 = vadd.f32 %v496, %v972
      %v974 = vpop.f32.mrb[0].mxu0
      %975 = vmatprep.mubr.f32.mxu0 %v632
      %976 = vmatmul.mubr.f32.gmra.mrb[0].mxu0 %v427
      %v977 = vpop.f32.mrb[0].mxu0
      %v978 = vadd.f32 %v496, %v977
      %v979 = vpop.f32.mrb[0].mxu0
      %980 = vmatprep.mubr.f32.mxu0 %v635
      %981 = vmatmul.mubr.f32.gmra.mrb[0].mxu0 %v429
      %v982 = vpop.f32.mrb[0].mxu0
      %v983 = vadd.f32 %v496, %v982
      %v984 = vpop.f32.mrb[0].mxu0
      %985 = vmatprep.mubr.f32.mxu0 %v638
      %986 = vmatmul.mubr.f32.gmra.mrb[0].mxu0 %v431
      %v987 = vpop.f32.mrb[0].mxu0
      %v988 = vadd.f32 %v496, %v987
      %v989 = vpop.f32.mrb[0].mxu0
      %990 = vmatprep.mubr.f32.mxu0 %v641
      %991 = vmatmul.mubr.f32.gmra.mrb[0].mxu0 %v433
      %v992 = vpop.f32.mrb[0].mxu0
      %v993 = vadd.f32 %v496, %v992
      %v994 = vpop.f32.mrb[0].mxu0
      %995 = vmatprep.mubr.f32.mxu0 %v644
      %996 = vmatmul.mubr.f32.gmra.mrb[0].mxu0 %v435
      %v997 = vpop.f32.mrb[0].mxu0
      %v998 = vadd.f32 %v496, %v997
      %v999 = vpop.f32.mrb[0].mxu0
      %1000 = vmatprep.mubr.f32.mxu0 %v647
      %1001 = vmatmul.mubr.f32.gmra.mrb[0].mxu0 %v437
      %v1002 = vpop.f32.mrb[0].mxu0
      %v1003 = vadd.f32 %v496, %v1002
      %v1004 = vpop.f32.mrb[0].mxu0
      %1005 = vmatprep.mubr.f32.mxu0 %v650
      %1006 = vmatmul.mubr.f32.gmra.mrb[0].mxu0 %v439
      %v1007 = vpop.f32.mrb[0].mxu0
      %v1008 = vadd.f32 %v496, %v1007
      %v1009 = vpop.f32.mrb[0].mxu0
      %1010 = vmatprep.mubr.f32.mxu0 %v653
      %1011 = vmatmul.mubr.f32.gmra.mrb[0].mxu0 %v441
      %v1012 = vpop.f32.mrb[0].mxu0
      %v1013 = vadd.f32 %v496, %v1012
      %v1014 = vpop.f32.mrb[0].mxu0
      %1015 = vmatprep.mubr.f32.mxu0 %v656
      %1016 = vmatmul.mubr.f32.gmra.mrb[0].mxu0 %v443
      %v1017 = vpop.f32.mrb[0].mxu0
      %v1018 = vadd.f32 %v496, %v1017
      %v1019 = vpop.f32.mrb[0].mxu0
      %1020 = vmatprep.mubr.f32.mxu0 %v659
      %1021 = vmatmul.mubr.f32.gmra.mrb[0].mxu0 %v445
      %v1022 = vpop.f32.mrb[0].mxu0
      %v1023 = vadd.f32 %v496, %v1022
      %v1024 = vpop.f32.mrb[0].mxu0
      %1025 = vmatprep.mubr.f32.mxu0 %v662
      %1026 = vmatmul.mubr.f32.gmra.mrb[0].mxu0 %v447
      %v1027 = vpop.f32.mrb[0].mxu0
      %v1028 = vadd.f32 %v496, %v1027
      %v1029 = vpop.f32.mrb[0].mxu0
      %1030 = vmatprep.mubr.f32.mxu0 %v665
      %1031 = vmatmul.mubr.f32.gmra.mrb[0].mxu0 %v449
      %v1032 = vpop.f32.mrb[0].mxu0
      %v1033 = vadd.f32 %v496, %v1032
      %v1034 = vpop.f32.mrb[0].mxu0
      %1035 = vmatprep.mubr.f32.mxu0 %v668
      %1036 = vmatmul.mubr.f32.gmra.mrb[0].mxu0 %v451
      %v1037 = vpop.f32.mrb[0].mxu0
      %v1038 = vadd.f32 %v496, %v1037
      %v1039 = vpop.f32.mrb[0].mxu0
      %1040 = vmatprep.mubr.f32.mxu0 %v671
      %1041 = vmatmul.mubr.f32.gmra.mrb[0].mxu0 %v453
      %v1042 = vpop.f32.mrb[0].mxu0
      %v1043 = vadd.f32 %v496, %v1042
      %v1044 = vpop.f32.mrb[0].mxu0
      %1045 = vmatprep.mubr.f32.mxu0 %v674
      %1046 = vmatmul.mubr.f32.gmra.mrb[0].mxu0 %v455
      %v1047 = vpop.f32.mrb[0].mxu0
      %v1048 = vadd.f32 %v496, %v1047
      %v1049 = vpop.f32.mrb[0].mxu0
      %1050 = vmatprep.mubr.f32.mxu0 %v677
      %1051 = vmatmul.mubr.f32.gmra.mrb[0].mxu0 %v457
      %v1052 = vpop.f32.mrb[0].mxu0
      %v1053 = vadd.f32 %v496, %v1052
      %v1054 = vpop.f32.mrb[0].mxu0
      %1055 = vmatprep.mubr.f32.mxu0 %v680
      %1056 = vmatmul.mubr.f32.gmra.mrb[0].mxu0 %v459
      %v1057 = vpop.f32.mrb[0].mxu0
      %v1058 = vadd.f32 %v496, %v1057
      %v1059 = vpop.f32.mrb[0].mxu0
      %1060 = vmatprep.mubr.f32.mxu0 %v683
      %1061 = vmatmul.mubr.f32.gmra.mrb[0].mxu0 %v461
      %v1062 = vpop.f32.mrb[0].mxu0
      %v1063 = vadd.f32 %v496, %v1062
      %v1064 = vpop.f32.mrb[0].mxu0
      %1065 = vmatprep.mubr.f32.mxu0 %v686
      %1066 = vmatmul.mubr.f32.gmra.mrb[0].mxu0 %v463
      %v1067 = vpop.f32.mrb[0].mxu0
      %v1068 = vadd.f32 %v496, %v1067
      %v1069 = vpop.f32.mrb[0].mxu0
      %1070 = vmatprep.mubr.f32.mxu0 %v689
      %1071 = vmatmul.mubr.f32.gmra.mrb[0].mxu0 %v465
      %v1072 = vpop.f32.mrb[0].mxu0
      %v1073 = vadd.f32 %v496, %v1072
      %v1074 = vpop.f32.mrb[0].mxu0
      %1075 = vdwg.mxu0
      %v1076 = vmul.f32 %v758, 0.5
      %v1077 = vmul.f32 %v763, 0.5
      %v1078 = vmul.f32 %v768, 0.5
      %v1079 = vmul.f32 %v773, 0.5
      %v1080 = vmul.f32 %v778, 0.5
      %v1081 = vmul.f32 %v783, 0.5
      %v1082 = vmul.f32 %v788, 0.5
      %v1083 = vmul.f32 %v793, 0.5
      %v1084 = vmul.f32 %v798, 0.5
      %v1085 = vmul.f32 %v803, 0.5
      %v1086 = vmul.f32 %v808, 0.5
      %v1087 = vmul.f32 %v813, 0.5
      %v1088 = vmul.f32 %v818, 0.5
      %v1089 = vmul.f32 %v823, 0.5
      %v1090 = vmul.f32 %v828, 0.5
      %v1091 = vmul.f32 %v833, 0.5
      %v1092 = vmul.f32 %v838, 0.5
      %v1093 = vmul.f32 %v843, 0.5
      %v1094 = vmul.f32 %v848, 0.5
      %v1095 = vmul.f32 %v853, 0.5
      %v1096 = vmul.f32 %v858, 0.5
      %v1097 = vmul.f32 %v863, 0.5
      %v1098 = vmul.f32 %v868, 0.5
      %v1099 = vmul.f32 %v873, 0.5
      %v1100 = vmul.f32 %v878, 0.5
      %v1101 = vmul.f32 %v883, 0.5
      %v1102 = vmul.f32 %v888, 0.5
      %v1103 = vmul.f32 %v893, 0.5
      %v1104 = vmul.f32 %v898, 0.5
      %v1105 = vmul.f32 %v903, 0.5
      %v1106 = vmul.f32 %v908, 0.5
      %v1107 = vmul.f32 %v913, 0.5
      %v1108 = vmul.f32 %v918, 0.5
      %v1109 = vmul.f32 %v923, 0.5
      %v1110 = vmul.f32 %v928, 0.5
      %v1111 = vmul.f32 %v933, 0.5
      %v1112 = vmul.f32 %v938, 0.5
      %v1113 = vmul.f32 %v943, 0.5
      %v1114 = vmul.f32 %v948, 0.5
      %v1115 = vmul.f32 %v953, 0.5
      %v1116 = vmul.f32 %v958, 0.5
      %v1117 = vmul.f32 %v963, 0.5
      %v1118 = vmul.f32 %v968, 0.5
      %v1119 = vmul.f32 %v973, 0.5
      %v1120 = vmul.f32 %v978, 0.5
      %v1121 = vmul.f32 %v983, 0.5
      %v1122 = vmul.f32 %v988, 0.5
      %v1123 = vmul.f32 %v993, 0.5
      %v1124 = vmul.f32 %v998, 0.5
      %v1125 = vmul.f32 %v1003, 0.5
      %v1126 = vmul.f32 %v1008, 0.5
      %v1127 = vmul.f32 %v1013, 0.5
      %v1128 = vmul.f32 %v1018, 0.5
      %v1129 = vmul.f32 %v1023, 0.5
      %v1130 = vmul.f32 %v1028, 0.5
      %v1131 = vmul.f32 %v1033, 0.5
      %v1132 = vmul.f32 %v1038, 0.5
      %v1133 = vmul.f32 %v1043, 0.5
      %v1134 = vmul.f32 %v1048, 0.5
      %v1135 = vmul.f32 %v1053, 0.5
      %v1136 = vmul.f32 %v1058, 0.5
      %v1137 = vmul.f32 %v1063, 0.5
      %v1138 = vmul.f32 %v1068, 0.5
      %v1139 = vmul.f32 %v1073, 0.5
      %v1140 = vmul.f32 %v758, 0.70710677
      %v1141 = vmul.f32 %v763, 0.70710677
      %v1142 = vmul.f32 %v768, 0.70710677
      %v1143 = vmul.f32 %v773, 0.70710677
      %v1144 = vmul.f32 %v778, 0.70710677
      %v1145 = vmul.f32 %v783, 0.70710677
      %v1146 = vmul.f32 %v788, 0.70710677
      %v1147 = vmul.f32 %v793, 0.70710677
      %v1148 = vmul.f32 %v798, 0.70710677
      %v1149 = vmul.f32 %v803, 0.70710677
      %v1150 = vmul.f32 %v808, 0.70710677
      %v1151 = vmul.f32 %v813, 0.70710677
      %v1152 = vmul.f32 %v818, 0.70710677
      %v1153 = vmul.f32 %v823, 0.70710677
      %v1154 = vmul.f32 %v828, 0.70710677
      %v1155 = vmul.f32 %v833, 0.70710677
      %v1156 = vmul.f32 %v838, 0.70710677
      %v1157 = vmul.f32 %v843, 0.70710677
      %v1158 = vmul.f32 %v848, 0.70710677
      %v1159 = vmul.f32 %v853, 0.70710677
      %v1160 = vmul.f32 %v858, 0.70710677
      %v1161 = vmul.f32 %v863, 0.70710677
      %v1162 = vmul.f32 %v868, 0.70710677
      %v1163 = vmul.f32 %v873, 0.70710677
      %v1164 = vmul.f32 %v878, 0.70710677
      %v1165 = vmul.f32 %v883, 0.70710677
      %v1166 = vmul.f32 %v888, 0.70710677
      %v1167 = vmul.f32 %v893, 0.70710677
      %v1168 = vmul.f32 %v898, 0.70710677
      %v1169 = vmul.f32 %v903, 0.70710677
      %v1170 = vmul.f32 %v908, 0.70710677
      %v1171 = vmul.f32 %v913, 0.70710677
      %v1172 = vmul.f32 %v918, 0.70710677
      %v1173 = vmul.f32 %v923, 0.70710677
      %v1174 = vmul.f32 %v928, 0.70710677
      %v1175 = vmul.f32 %v933, 0.70710677
      %v1176 = vmul.f32 %v938, 0.70710677
      %v1177 = vmul.f32 %v943, 0.70710677
      %v1178 = vmul.f32 %v948, 0.70710677
      %v1179 = vmul.f32 %v953, 0.70710677
      %v1180 = vmul.f32 %v958, 0.70710677
      %v1181 = vmul.f32 %v963, 0.70710677
      %v1182 = vmul.f32 %v968, 0.70710677
      %v1183 = vmul.f32 %v973, 0.70710677
      %v1184 = vmul.f32 %v978, 0.70710677
      %v1185 = vmul.f32 %v983, 0.70710677
      %v1186 = vmul.f32 %v988, 0.70710677
      %v1187 = vmul.f32 %v993, 0.70710677
      %v1188 = vmul.f32 %v998, 0.70710677
      %v1189 = vmul.f32 %v1003, 0.70710677
      %v1190 = vmul.f32 %v1008, 0.70710677
      %v1191 = vmul.f32 %v1013, 0.70710677
      %v1192 = vmul.f32 %v1018, 0.70710677
      %v1193 = vmul.f32 %v1023, 0.70710677
      %v1194 = vmul.f32 %v1028, 0.70710677
      %v1195 = vmul.f32 %v1033, 0.70710677
      %v1196 = vmul.f32 %v1038, 0.70710677
      %v1197 = vmul.f32 %v1043, 0.70710677
      %v1198 = vmul.f32 %v1048, 0.70710677
      %v1199 = vmul.f32 %v1053, 0.70710677
      %v1200 = vmul.f32 %v1058, 0.70710677
      %v1201 = vmul.f32 %v1063, 0.70710677
      %v1202 = vmul.f32 %v1068, 0.70710677
      %v1203 = vmul.f32 %v1073, 0.70710677
      %v1204 = verf.f32.pop %v1140
      %v1205 = verf.f32.pop %v1141
      %v1206 = verf.f32.pop %v1142
      %v1207 = verf.f32.pop %v1143
      %v1208 = verf.f32.pop %v1144
      %v1209 = verf.f32.pop %v1145
      %v1210 = verf.f32.pop %v1146
      %v1211 = verf.f32.pop %v1147
      %v1212 = verf.f32.pop %v1148
      %v1213 = verf.f32.pop %v1149
      %v1214 = verf.f32.pop %v1150
      %v1215 = verf.f32.pop %v1151
      %v1216 = verf.f32.pop %v1152
      %v1217 = verf.f32.pop %v1153
      %v1218 = verf.f32.pop %v1154
      %v1219 = verf.f32.pop %v1155
      %v1220 = verf.f32.pop %v1156
      %v1221 = verf.f32.pop %v1157
      %v1222 = verf.f32.pop %v1158
      %v1223 = verf.f32.pop %v1159
      %v1224 = verf.f32.pop %v1160
      %v1225 = verf.f32.pop %v1161
      %v1226 = verf.f32.pop %v1162
      %v1227 = verf.f32.pop %v1163
      %v1228 = verf.f32.pop %v1164
      %v1229 = verf.f32.pop %v1165
      %v1230 = verf.f32.pop %v1166
      %v1231 = verf.f32.pop %v1167
      %v1232 = verf.f32.pop %v1168
      %v1233 = verf.f32.pop %v1169
      %v1234 = verf.f32.pop %v1170
      %v1235 = verf.f32.pop %v1171
      %v1236 = verf.f32.pop %v1172
      %v1237 = verf.f32.pop %v1173
      %v1238 = verf.f32.pop %v1174
      %v1239 = verf.f32.pop %v1175
      %v1240 = verf.f32.pop %v1176
      %v1241 = verf.f32.pop %v1177
      %v1242 = verf.f32.pop %v1178
      %v1243 = verf.f32.pop %v1179
      %v1244 = verf.f32.pop %v1180
      %v1245 = verf.f32.pop %v1181
      %v1246 = verf.f32.pop %v1182
      %v1247 = verf.f32.pop %v1183
      %v1248 = verf.f32.pop %v1184
      %v1249 = verf.f32.pop %v1185
      %v1250 = verf.f32.pop %v1186
      %v1251 = verf.f32.pop %v1187
      %v1252 = verf.f32.pop %v1188
      %v1253 = verf.f32.pop %v1189
      %v1254 = verf.f32.pop %v1190
      %v1255 = verf.f32.pop %v1191
      %v1256 = verf.f32.pop %v1192
      %v1257 = verf.f32.pop %v1193
      %v1258 = verf.f32.pop %v1194
      %v1259 = verf.f32.pop %v1195
      %v1260 = verf.f32.pop %v1196
      %v1261 = verf.f32.pop %v1197
      %v1262 = verf.f32.pop %v1198
      %v1263 = verf.f32.pop %v1199
      %v1264 = verf.f32.pop %v1200
      %v1265 = verf.f32.pop %v1201
      %v1266 = verf.f32.pop %v1202
      %v1267 = verf.f32.pop %v1203
      %v1268 = vadd.f32 %v1204, 1.0
      %v1269 = vadd.f32 %v1205, 1.0
      %v1270 = vadd.f32 %v1206, 1.0
      %v1271 = vadd.f32 %v1207, 1.0
      %v1272 = vadd.f32 %v1208, 1.0
      %v1273 = vadd.f32 %v1209, 1.0
      %v1274 = vadd.f32 %v1210, 1.0
      %v1275 = vadd.f32 %v1211, 1.0
      %v1276 = vadd.f32 %v1212, 1.0
      %v1277 = vadd.f32 %v1213, 1.0
      %v1278 = vadd.f32 %v1214, 1.0
      %v1279 = vadd.f32 %v1215, 1.0
      %v1280 = vadd.f32 %v1216, 1.0
      %v1281 = vadd.f32 %v1217, 1.0
      %v1282 = vadd.f32 %v1218, 1.0
      %v1283 = vadd.f32 %v1219, 1.0
      %v1284 = vadd.f32 %v1220, 1.0
      %v1285 = vadd.f32 %v1221, 1.0
      %v1286 = vadd.f32 %v1222, 1.0
      %v1287 = vadd.f32 %v1223, 1.0
      %v1288 = vadd.f32 %v1224, 1.0
      %v1289 = vadd.f32 %v1225, 1.0
      %v1290 = vadd.f32 %v1226, 1.0
      %v1291 = vadd.f32 %v1227, 1.0
      %v1292 = vadd.f32 %v1228, 1.0
      %v1293 = vadd.f32 %v1229, 1.0
      %v1294 = vadd.f32 %v1230, 1.0
      %v1295 = vadd.f32 %v1231, 1.0
      %v1296 = vadd.f32 %v1232, 1.0
      %v1297 = vadd.f32 %v1233, 1.0
      %v1298 = vadd.f32 %v1234, 1.0
      %v1299 = vadd.f32 %v1235, 1.0
      %v1300 = vadd.f32 %v1236, 1.0
      %v1301 = vadd.f32 %v1237, 1.0
      %v1302 = vadd.f32 %v1238, 1.0
      %v1303 = vadd.f32 %v1239, 1.0
      %v1304 = vadd.f32 %v1240, 1.0
      %v1305 = vadd.f32 %v1241, 1.0
      %v1306 = vadd.f32 %v1242, 1.0
      %v1307 = vadd.f32 %v1243, 1.0
      %v1308 = vadd.f32 %v1244, 1.0
      %v1309 = vadd.f32 %v1245, 1.0
      %v1310 = vadd.f32 %v1246, 1.0
      %v1311 = vadd.f32 %v1247, 1.0
      %v1312 = vadd.f32 %v1248, 1.0
      %v1313 = vadd.f32 %v1249, 1.0
      %v1314 = vadd.f32 %v1250, 1.0
      %v1315 = vadd.f32 %v1251, 1.0
      %v1316 = vadd.f32 %v1252, 1.0
      %v1317 = vadd.f32 %v1253, 1.0
      %v1318 = vadd.f32 %v1254, 1.0
      %v1319 = vadd.f32 %v1255, 1.0
      %v1320 = vadd.f32 %v1256, 1.0
      %v1321 = vadd.f32 %v1257, 1.0
      %v1322 = vadd.f32 %v1258, 1.0
      %v1323 = vadd.f32 %v1259, 1.0
      %v1324 = vadd.f32 %v1260, 1.0
      %v1325 = vadd.f32 %v1261, 1.0
      %v1326 = vadd.f32 %v1262, 1.0
      %v1327 = vadd.f32 %v1263, 1.0
      %v1328 = vadd.f32 %v1264, 1.0
      %v1329 = vadd.f32 %v1265, 1.0
      %v1330 = vadd.f32 %v1266, 1.0
      %v1331 = vadd.f32 %v1267, 1.0
      %v1332 = vmul.f32 %v1076, %v1268
      %v1333 = vmul.f32 %v1077, %v1269
      %v1334 = vmul.f32 %v1078, %v1270
      %v1335 = vmul.f32 %v1079, %v1271
      %v1336 = vmul.f32 %v1080, %v1272
      %v1337 = vmul.f32 %v1081, %v1273
      %v1338 = vmul.f32 %v1082, %v1274
      %v1339 = vmul.f32 %v1083, %v1275
      %v1340 = vmul.f32 %v1084, %v1276
      %v1341 = vmul.f32 %v1085, %v1277
      %v1342 = vmul.f32 %v1086, %v1278
      %v1343 = vmul.f32 %v1087, %v1279
      %v1344 = vmul.f32 %v1088, %v1280
      %v1345 = vmul.f32 %v1089, %v1281
      %v1346 = vmul.f32 %v1090, %v1282
      %v1347 = vmul.f32 %v1091, %v1283
      %v1348 = vmul.f32 %v1092, %v1284
      %v1349 = vmul.f32 %v1093, %v1285
      %v1350 = vmul.f32 %v1094, %v1286
      %v1351 = vmul.f32 %v1095, %v1287
      %v1352 = vmul.f32 %v1096, %v1288
      %v1353 = vmul.f32 %v1097, %v1289
      %v1354 = vmul.f32 %v1098, %v1290
      %v1355 = vmul.f32 %v1099, %v1291
      %v1356 = vmul.f32 %v1100, %v1292
      %v1357 = vmul.f32 %v1101, %v1293
      %v1358 = vmul.f32 %v1102, %v1294
      %v1359 = vmul.f32 %v1103, %v1295
      %v1360 = vmul.f32 %v1104, %v1296
      %v1361 = vmul.f32 %v1105, %v1297
      %v1362 = vmul.f32 %v1106, %v1298
      %v1363 = vmul.f32 %v1107, %v1299
      %v1364 = vmul.f32 %v1108, %v1300
      %v1365 = vmul.f32 %v1109, %v1301
      %v1366 = vmul.f32 %v1110, %v1302
      %v1367 = vmul.f32 %v1111, %v1303
      %v1368 = vmul.f32 %v1112, %v1304
      %v1369 = vmul.f32 %v1113, %v1305
      %v1370 = vmul.f32 %v1114, %v1306
      %v1371 = vmul.f32 %v1115, %v1307
      %v1372 = vmul.f32 %v1116, %v1308
      %v1373 = vmul.f32 %v1117, %v1309
      %v1374 = vmul.f32 %v1118, %v1310
      %v1375 = vmul.f32 %v1119, %v1311
      %v1376 = vmul.f32 %v1120, %v1312
      %v1377 = vmul.f32 %v1121, %v1313
      %v1378 = vmul.f32 %v1122, %v1314
      %v1379 = vmul.f32 %v1123, %v1315
      %v1380 = vmul.f32 %v1124, %v1316
      %v1381 = vmul.f32 %v1125, %v1317
      %v1382 = vmul.f32 %v1126, %v1318
      %v1383 = vmul.f32 %v1127, %v1319
      %v1384 = vmul.f32 %v1128, %v1320
      %v1385 = vmul.f32 %v1129, %v1321
      %v1386 = vmul.f32 %v1130, %v1322
      %v1387 = vmul.f32 %v1131, %v1323
      %v1388 = vmul.f32 %v1132, %v1324
      %v1389 = vmul.f32 %v1133, %v1325
      %v1390 = vmul.f32 %v1134, %v1326
      %v1391 = vmul.f32 %v1135, %v1327
      %v1392 = vmul.f32 %v1136, %v1328
      %v1393 = vmul.f32 %v1137, %v1329
      %v1394 = vmul.f32 %v1138, %v1330
      %v1395 = vmul.f32 %v1139, %v1331
      %v1396 = vld [vmem:[%s3] sm:$0xff]
      %v1397 = vld [vmem:[%s3 + $0x8] sm:$0xff]
      %v1398 = vld [vmem:[%s3 + $0x10] sm:$0xff]
      %v1399 = vld [vmem:[%s3 + $0x18] sm:$0xff]
      %v1400 = vld [vmem:[%s3 + $0x20] sm:$0xff]
      %v1401 = vld [vmem:[%s3 + $0x28] sm:$0xff]
      %v1402 = vld [vmem:[%s3 + $0x30] sm:$0xff]
      %v1403 = vld [vmem:[%s3 + $0x38] sm:$0xff]
      %v1404 = vld [vmem:[%s3 + $0x40] sm:$0xff]
      %v1405 = vld [vmem:[%s3 + $0x48] sm:$0xff]
      %v1406 = vld [vmem:[%s3 + $0x50] sm:$0xff]
      %v1407 = vld [vmem:[%s3 + $0x58] sm:$0xff]
      %v1408 = vld [vmem:[%s3 + $0x60] sm:$0xff]
      %v1409 = vld [vmem:[%s3 + $0x68] sm:$0xff]
      %v1410 = vld [vmem:[%s3 + $0x70] sm:$0xff]
      %v1411 = vld [vmem:[%s3 + $0x78] sm:$0xff]
      %v1412 = vld [vmem:[%s4] sm:$0x1]
      %v1414 = vlaneseq
      %v1415 = vshrl.u32 %v1414, 7
      %v1416 = vsub.s32 0, %v1415
      %v1417 = vrot.slane %v1412, %v1416
      %1419 = vmatprep.subr.mxu0 0.0
      %1420 = vmatpush1.msra.mxu0 %v1396
      %1421 = vmatprep.subr.mxu0 0.0
      %1422 = vmatpush1.msra.mxu0 %v1397
      %1423 = vmatprep.subr.mxu0 0.0
      %1424 = vmatpush1.msra.mxu0 %v1398
      %1425 = vmatprep.subr.mxu0 0.0
      %1426 = vmatpush1.msra.mxu0 %v1399
      %1427 = vmatprep.subr.mxu0 0.0
      %1428 = vmatpush1.msra.mxu0 %v1400
      %1429 = vmatprep.subr.mxu0 0.0
      %1430 = vmatpush1.msra.mxu0 %v1401
      %1431 = vmatprep.subr.mxu0 0.0
      %1432 = vmatpush1.msra.mxu0 %v1402
      %1433 = vmatprep.subr.mxu0 0.0
      %1434 = vmatpush1.msra.mxu0 %v1403
      %1435 = vmatprep.subr.mxu0 0.0
      %1436 = vmatpush1.msra.mxu0 %v1404
      %1437 = vmatprep.subr.mxu0 0.0
      %1438 = vmatpush1.msra.mxu0 %v1405
      %1439 = vmatprep.subr.mxu0 0.0
      %1440 = vmatpush1.msra.mxu0 %v1406
      %1441 = vmatprep.subr.mxu0 0.0
      %1442 = vmatpush1.msra.mxu0 %v1407
      %1443 = vmatprep.subr.mxu0 0.0
      %1444 = vmatpush1.msra.mxu0 %v1408
      %1445 = vmatprep.subr.mxu0 0.0
      %1446 = vmatpush1.msra.mxu0 %v1409
      %1447 = vmatprep.subr.mxu0 0.0
      %1448 = vmatpush1.msra.mxu0 %v1410
      %1449 = vmatprep.subr.mxu0 0.0
      %1450 = vmatpush1.msra.mxu0 %v1411
      %1451 = vmatprep.subr.mxu0 0.0
      %1452 = vmatpush1.msra.mxu0 0.0
      %1453 = vmatprep.subr.mxu0 0.0
      %1454 = vmatpush1.msra.mxu0 0.0
      %1455 = vmatprep.subr.mxu0 0.0
      %1456 = vmatpush1.msra.mxu0 0.0
      %1457 = vmatprep.subr.mxu0 0.0
      %1458 = vmatpush1.msra.mxu0 0.0
      %1459 = vmatprep.subr.mxu0 0.0
      %1460 = vmatpush1.msra.mxu0 0.0
      %1461 = vmatprep.subr.mxu0 0.0
      %1462 = vmatpush1.msra.mxu0 0.0
      %1463 = vmatprep.subr.mxu0 0.0
      %1464 = vmatpush1.msra.mxu0 0.0
      %1465 = vmatprep.subr.mxu0 0.0
      %1466 = vmatpush1.msra.mxu0 0.0
      %1467 = vmatprep.subr.mxu0 0.0
      %1468 = vmatpush1.msra.mxu0 0.0
      %1469 = vmatprep.subr.mxu0 0.0
      %1470 = vmatpush1.msra.mxu0 0.0
      %1471 = vmatprep.subr.mxu0 0.0
      %1472 = vmatpush1.msra.mxu0 0.0
      %1473 = vmatprep.subr.mxu0 0.0
      %1474 = vmatpush1.msra.mxu0 0.0
      %1475 = vmatprep.subr.mxu0 0.0
      %1476 = vmatpush1.msra.mxu0 0.0
      %1477 = vmatprep.subr.mxu0 0.0
      %1478 = vmatpush1.msra.mxu0 0.0
      %1479 = vmatprep.subr.mxu0 0.0
      %1480 = vmatpush1.msra.mxu0 0.0
      %1481 = vmatprep.subr.mxu0 0.0
      %1482 = vmatpush1.msra.mxu0 0.0
      %1483 = vmatprep.mubr.f32.mxu0 0.0
      %1484 = vmatmul.mubr.f32.gmra.mrb[0].mxu0 %v1332
      %v1485 = vpop.f32.mrb[0].mxu0
      %v1486 = vadd.f32 %v1417, %v1485
      %v1487 = vpop.f32.mrb[0].mxu0
      %1488 = vmatprep.mubr.f32.mxu0 0.0
      %1489 = vmatmul.mubr.f32.gmra.mrb[0].mxu0 %v1333
      %v1490 = vpop.f32.mrb[0].mxu0
      %v1491 = vadd.f32 %v1417, %v1490
      %v1492 = vpop.f32.mrb[0].mxu0
      %1493 = vmatprep.mubr.f32.mxu0 0.0
      %1494 = vmatmul.mubr.f32.gmra.mrb[0].mxu0 %v1334
      %v1495 = vpop.f32.mrb[0].mxu0
      %v1496 = vadd.f32 %v1417, %v1495
      %v1497 = vpop.f32.mrb[0].mxu0
      %1498 = vmatprep.mubr.f32.mxu0 0.0
      %1499 = vmatmul.mubr.f32.gmra.mrb[0].mxu0 %v1335
      %v1500 = vpop.f32.mrb[0].mxu0
      %v1501 = vadd.f32 %v1417, %v1500
      %v1502 = vpop.f32.mrb[0].mxu0
      %1503 = vmatprep.mubr.f32.mxu0 0.0
      %1504 = vmatmul.mubr.f32.gmra.mrb[0].mxu0 %v1336
      %v1505 = vpop.f32.mrb[0].mxu0
      %v1506 = vadd.f32 %v1417, %v1505
      %v1507 = vpop.f32.mrb[0].mxu0
      %1508 = vmatprep.mubr.f32.mxu0 0.0
      %1509 = vmatmul.mubr.f32.gmra.mrb[0].mxu0 %v1337
      %v1510 = vpop.f32.mrb[0].mxu0
      %v1511 = vadd.f32 %v1417, %v1510
      %v1512 = vpop.f32.mrb[0].mxu0
      %1513 = vmatprep.mubr.f32.mxu0 0.0
      %1514 = vmatmul.mubr.f32.gmra.mrb[0].mxu0 %v1338
      %v1515 = vpop.f32.mrb[0].mxu0
      %v1516 = vadd.f32 %v1417, %v1515
      %v1517 = vpop.f32.mrb[0].mxu0
      %1518 = vmatprep.mubr.f32.mxu0 0.0
      %1519 = vmatmul.mubr.f32.gmra.mrb[0].mxu0 %v1339
      %v1520 = vpop.f32.mrb[0].mxu0
      %v1521 = vadd.f32 %v1417, %v1520
      %v1522 = vpop.f32.mrb[0].mxu0
      %1523 = vmatprep.mubr.f32.mxu0 0.0
      %1524 = vmatmul.mubr.f32.gmra.mrb[0].mxu0 %v1340
      %v1525 = vpop.f32.mrb[0].mxu0
      %v1526 = vadd.f32 %v1417, %v1525
      %v1527 = vpop.f32.mrb[0].mxu0
      %1528 = vmatprep.mubr.f32.mxu0 0.0
      %1529 = vmatmul.mubr.f32.gmra.mrb[0].mxu0 %v1341
      %v1530 = vpop.f32.mrb[0].mxu0
      %v1531 = vadd.f32 %v1417, %v1530
      %v1532 = vpop.f32.mrb[0].mxu0
      %1533 = vmatprep.mubr.f32.mxu0 0.0
      %1534 = vmatmul.mubr.f32.gmra.mrb[0].mxu0 %v1342
      %v1535 = vpop.f32.mrb[0].mxu0
      %v1536 = vadd.f32 %v1417, %v1535
      %v1537 = vpop.f32.mrb[0].mxu0
      %1538 = vmatprep.mubr.f32.mxu0 0.0
      %1539 = vmatmul.mubr.f32.gmra.mrb[0].mxu0 %v1343
      %v1540 = vpop.f32.mrb[0].mxu0
      %v1541 = vadd.f32 %v1417, %v1540
      %v1542 = vpop.f32.mrb[0].mxu0
      %1543 = vmatprep.mubr.f32.mxu0 0.0
      %1544 = vmatmul.mubr.f32.gmra.mrb[0].mxu0 %v1344
      %v1545 = vpop.f32.mrb[0].mxu0
      %v1546 = vadd.f32 %v1417, %v1545
      %v1547 = vpop.f32.mrb[0].mxu0
      %1548 = vmatprep.mubr.f32.mxu0 0.0
      %1549 = vmatmul.mubr.f32.gmra.mrb[0].mxu0 %v1345
      %v1550 = vpop.f32.mrb[0].mxu0
      %v1551 = vadd.f32 %v1417, %v1550
      %v1552 = vpop.f32.mrb[0].mxu0
      %1553 = vmatprep.mubr.f32.mxu0 0.0
      %1554 = vmatmul.mubr.f32.gmra.mrb[0].mxu0 %v1346
      %v1555 = vpop.f32.mrb[0].mxu0
      %v1556 = vadd.f32 %v1417, %v1555
      %v1557 = vpop.f32.mrb[0].mxu0
      %1558 = vmatprep.mubr.f32.mxu0 0.0
      %1559 = vmatmul.mubr.f32.gmra.mrb[0].mxu0 %v1347
      %v1560 = vpop.f32.mrb[0].mxu0
      %v1561 = vadd.f32 %v1417, %v1560
      %v1562 = vpop.f32.mrb[0].mxu0
      %1563 = vmatprep.mubr.f32.mxu0 0.0
      %1564 = vmatmul.mubr.f32.gmra.mrb[0].mxu0 %v1348
      %v1565 = vpop.f32.mrb[0].mxu0
      %v1566 = vadd.f32 %v1417, %v1565
      %v1567 = vpop.f32.mrb[0].mxu0
      %1568 = vmatprep.mubr.f32.mxu0 0.0
      %1569 = vmatmul.mubr.f32.gmra.mrb[0].mxu0 %v1349
      %v1570 = vpop.f32.mrb[0].mxu0
      %v1571 = vadd.f32 %v1417, %v1570
      %v1572 = vpop.f32.mrb[0].mxu0
      %1573 = vmatprep.mubr.f32.mxu0 0.0
      %1574 = vmatmul.mubr.f32.gmra.mrb[0].mxu0 %v1350
      %v1575 = vpop.f32.mrb[0].mxu0
      %v1576 = vadd.f32 %v1417, %v1575
      %v1577 = vpop.f32.mrb[0].mxu0
      %1578 = vmatprep.mubr.f32.mxu0 0.0
      %1579 = vmatmul.mubr.f32.gmra.mrb[0].mxu0 %v1351
      %v1580 = vpop.f32.mrb[0].mxu0
      %v1581 = vadd.f32 %v1417, %v1580
      %v1582 = vpop.f32.mrb[0].mxu0
      %1583 = vmatprep.mubr.f32.mxu0 0.0
      %1584 = vmatmul.mubr.f32.gmra.mrb[0].mxu0 %v1352
      %v1585 = vpop.f32.mrb[0].mxu0
      %v1586 = vadd.f32 %v1417, %v1585
      %v1587 = vpop.f32.mrb[0].mxu0
      %1588 = vmatprep.mubr.f32.mxu0 0.0
      %1589 = vmatmul.mubr.f32.gmra.mrb[0].mxu0 %v1353
      %v1590 = vpop.f32.mrb[0].mxu0
      %v1591 = vadd.f32 %v1417, %v1590
      %v1592 = vpop.f32.mrb[0].mxu0
      %1593 = vmatprep.mubr.f32.mxu0 0.0
      %1594 = vmatmul.mubr.f32.gmra.mrb[0].mxu0 %v1354
      %v1595 = vpop.f32.mrb[0].mxu0
      %v1596 = vadd.f32 %v1417, %v1595
      %v1597 = vpop.f32.mrb[0].mxu0
      %1598 = vmatprep.mubr.f32.mxu0 0.0
      %1599 = vmatmul.mubr.f32.gmra.mrb[0].mxu0 %v1355
      %v1600 = vpop.f32.mrb[0].mxu0
      %v1601 = vadd.f32 %v1417, %v1600
      %v1602 = vpop.f32.mrb[0].mxu0
      %1603 = vmatprep.mubr.f32.mxu0 0.0
      %1604 = vmatmul.mubr.f32.gmra.mrb[0].mxu0 %v1356
      %v1605 = vpop.f32.mrb[0].mxu0
      %v1606 = vadd.f32 %v1417, %v1605
      %v1607 = vpop.f32.mrb[0].mxu0
      %1608 = vmatprep.mubr.f32.mxu0 0.0
      %1609 = vmatmul.mubr.f32.gmra.mrb[0].mxu0 %v1357
      %v1610 = vpop.f32.mrb[0].mxu0
      %v1611 = vadd.f32 %v1417, %v1610
      %v1612 = vpop.f32.mrb[0].mxu0
      %1613 = vmatprep.mubr.f32.mxu0 0.0
      %1614 = vmatmul.mubr.f32.gmra.mrb[0].mxu0 %v1358
      %v1615 = vpop.f32.mrb[0].mxu0
      %v1616 = vadd.f32 %v1417, %v1615
      %v1617 = vpop.f32.mrb[0].mxu0
      %1618 = vmatprep.mubr.f32.mxu0 0.0
      %1619 = vmatmul.mubr.f32.gmra.mrb[0].mxu0 %v1359
      %v1620 = vpop.f32.mrb[0].mxu0
      %v1621 = vadd.f32 %v1417, %v1620
      %v1622 = vpop.f32.mrb[0].mxu0
      %1623 = vmatprep.mubr.f32.mxu0 0.0
      %1624 = vmatmul.mubr.f32.gmra.mrb[0].mxu0 %v1360
      %v1625 = vpop.f32.mrb[0].mxu0
      %v1626 = vadd.f32 %v1417, %v1625
      %v1627 = vpop.f32.mrb[0].mxu0
      %1628 = vmatprep.mubr.f32.mxu0 0.0
      %1629 = vmatmul.mubr.f32.gmra.mrb[0].mxu0 %v1361
      %v1630 = vpop.f32.mrb[0].mxu0
      %v1631 = vadd.f32 %v1417, %v1630
      %v1632 = vpop.f32.mrb[0].mxu0
      %1633 = vmatprep.mubr.f32.mxu0 0.0
      %1634 = vmatmul.mubr.f32.gmra.mrb[0].mxu0 %v1362
      %v1635 = vpop.f32.mrb[0].mxu0
      %v1636 = vadd.f32 %v1417, %v1635
      %v1637 = vpop.f32.mrb[0].mxu0
      %1638 = vmatprep.mubr.f32.mxu0 0.0
      %1639 = vmatmul.mubr.f32.gmra.mrb[0].mxu0 %v1363
      %v1640 = vpop.f32.mrb[0].mxu0
      %v1641 = vadd.f32 %v1417, %v1640
      %v1642 = vpop.f32.mrb[0].mxu0
      %1643 = vmatprep.mubr.f32.mxu0 0.0
      %1644 = vmatmul.mubr.f32.gmra.mrb[0].mxu0 %v1364
      %v1645 = vpop.f32.mrb[0].mxu0
      %v1646 = vadd.f32 %v1417, %v1645
      %v1647 = vpop.f32.mrb[0].mxu0
      %1648 = vmatprep.mubr.f32.mxu0 0.0
      %1649 = vmatmul.mubr.f32.gmra.mrb[0].mxu0 %v1365
      %v1650 = vpop.f32.mrb[0].mxu0
      %v1651 = vadd.f32 %v1417, %v1650
      %v1652 = vpop.f32.mrb[0].mxu0
      %1653 = vmatprep.mubr.f32.mxu0 0.0
      %1654 = vmatmul.mubr.f32.gmra.mrb[0].mxu0 %v1366
      %v1655 = vpop.f32.mrb[0].mxu0
      %v1656 = vadd.f32 %v1417, %v1655
      %v1657 = vpop.f32.mrb[0].mxu0
      %1658 = vmatprep.mubr.f32.mxu0 0.0
      %1659 = vmatmul.mubr.f32.gmra.mrb[0].mxu0 %v1367
      %v1660 = vpop.f32.mrb[0].mxu0
      %v1661 = vadd.f32 %v1417, %v1660
      %v1662 = vpop.f32.mrb[0].mxu0
      %1663 = vmatprep.mubr.f32.mxu0 0.0
      %1664 = vmatmul.mubr.f32.gmra.mrb[0].mxu0 %v1368
      %v1665 = vpop.f32.mrb[0].mxu0
      %v1666 = vadd.f32 %v1417, %v1665
      %v1667 = vpop.f32.mrb[0].mxu0
      %1668 = vmatprep.mubr.f32.mxu0 0.0
      %1669 = vmatmul.mubr.f32.gmra.mrb[0].mxu0 %v1369
      %v1670 = vpop.f32.mrb[0].mxu0
      %v1671 = vadd.f32 %v1417, %v1670
      %v1672 = vpop.f32.mrb[0].mxu0
      %1673 = vmatprep.mubr.f32.mxu0 0.0
      %1674 = vmatmul.mubr.f32.gmra.mrb[0].mxu0 %v1370
      %v1675 = vpop.f32.mrb[0].mxu0
      %v1676 = vadd.f32 %v1417, %v1675
      %v1677 = vpop.f32.mrb[0].mxu0
      %1678 = vmatprep.mubr.f32.mxu0 0.0
      %1679 = vmatmul.mubr.f32.gmra.mrb[0].mxu0 %v1371
      %v1680 = vpop.f32.mrb[0].mxu0
      %v1681 = vadd.f32 %v1417, %v1680
      %v1682 = vpop.f32.mrb[0].mxu0
      %1683 = vmatprep.mubr.f32.mxu0 0.0
      %1684 = vmatmul.mubr.f32.gmra.mrb[0].mxu0 %v1372
      %v1685 = vpop.f32.mrb[0].mxu0
      %v1686 = vadd.f32 %v1417, %v1685
      %v1687 = vpop.f32.mrb[0].mxu0
      %1688 = vmatprep.mubr.f32.mxu0 0.0
      %1689 = vmatmul.mubr.f32.gmra.mrb[0].mxu0 %v1373
      %v1690 = vpop.f32.mrb[0].mxu0
      %v1691 = vadd.f32 %v1417, %v1690
      %v1692 = vpop.f32.mrb[0].mxu0
      %1693 = vmatprep.mubr.f32.mxu0 0.0
      %1694 = vmatmul.mubr.f32.gmra.mrb[0].mxu0 %v1374
      %v1695 = vpop.f32.mrb[0].mxu0
      %v1696 = vadd.f32 %v1417, %v1695
      %v1697 = vpop.f32.mrb[0].mxu0
      %1698 = vmatprep.mubr.f32.mxu0 0.0
      %1699 = vmatmul.mubr.f32.gmra.mrb[0].mxu0 %v1375
      %v1700 = vpop.f32.mrb[0].mxu0
      %v1701 = vadd.f32 %v1417, %v1700
      %v1702 = vpop.f32.mrb[0].mxu0
      %1703 = vmatprep.mubr.f32.mxu0 0.0
      %1704 = vmatmul.mubr.f32.gmra.mrb[0].mxu0 %v1376
      %v1705 = vpop.f32.mrb[0].mxu0
      %v1706 = vadd.f32 %v1417, %v1705
      %v1707 = vpop.f32.mrb[0].mxu0
      %1708 = vmatprep.mubr.f32.mxu0 0.0
      %1709 = vmatmul.mubr.f32.gmra.mrb[0].mxu0 %v1377
      %v1710 = vpop.f32.mrb[0].mxu0
      %v1711 = vadd.f32 %v1417, %v1710
      %v1712 = vpop.f32.mrb[0].mxu0
      %1713 = vmatprep.mubr.f32.mxu0 0.0
      %1714 = vmatmul.mubr.f32.gmra.mrb[0].mxu0 %v1378
      %v1715 = vpop.f32.mrb[0].mxu0
      %v1716 = vadd.f32 %v1417, %v1715
      %v1717 = vpop.f32.mrb[0].mxu0
      %1718 = vmatprep.mubr.f32.mxu0 0.0
      %1719 = vmatmul.mubr.f32.gmra.mrb[0].mxu0 %v1379
      %v1720 = vpop.f32.mrb[0].mxu0
      %v1721 = vadd.f32 %v1417, %v1720
      %v1722 = vpop.f32.mrb[0].mxu0
      %1723 = vmatprep.mubr.f32.mxu0 0.0
      %1724 = vmatmul.mubr.f32.gmra.mrb[0].mxu0 %v1380
      %v1725 = vpop.f32.mrb[0].mxu0
      %v1726 = vadd.f32 %v1417, %v1725
      %v1727 = vpop.f32.mrb[0].mxu0
      %1728 = vmatprep.mubr.f32.mxu0 0.0
      %1729 = vmatmul.mubr.f32.gmra.mrb[0].mxu0 %v1381
      %v1730 = vpop.f32.mrb[0].mxu0
      %v1731 = vadd.f32 %v1417, %v1730
      %v1732 = vpop.f32.mrb[0].mxu0
      %1733 = vmatprep.mubr.f32.mxu0 0.0
      %1734 = vmatmul.mubr.f32.gmra.mrb[0].mxu0 %v1382
      %v1735 = vpop.f32.mrb[0].mxu0
      %v1736 = vadd.f32 %v1417, %v1735
      %v1737 = vpop.f32.mrb[0].mxu0
      %1738 = vmatprep.mubr.f32.mxu0 0.0
      %1739 = vmatmul.mubr.f32.gmra.mrb[0].mxu0 %v1383
      %v1740 = vpop.f32.mrb[0].mxu0
      %v1741 = vadd.f32 %v1417, %v1740
      %v1742 = vpop.f32.mrb[0].mxu0
      %1743 = vmatprep.mubr.f32.mxu0 0.0
      %1744 = vmatmul.mubr.f32.gmra.mrb[0].mxu0 %v1384
      %v1745 = vpop.f32.mrb[0].mxu0
      %v1746 = vadd.f32 %v1417, %v1745
      %v1747 = vpop.f32.mrb[0].mxu0
      %1748 = vmatprep.mubr.f32.mxu0 0.0
      %1749 = vmatmul.mubr.f32.gmra.mrb[0].mxu0 %v1385
      %v1750 = vpop.f32.mrb[0].mxu0
      %v1751 = vadd.f32 %v1417, %v1750
      %v1752 = vpop.f32.mrb[0].mxu0
      %1753 = vmatprep.mubr.f32.mxu0 0.0
      %1754 = vmatmul.mubr.f32.gmra.mrb[0].mxu0 %v1386
      %v1755 = vpop.f32.mrb[0].mxu0
      %v1756 = vadd.f32 %v1417, %v1755
      %v1757 = vpop.f32.mrb[0].mxu0
      %1758 = vmatprep.mubr.f32.mxu0 0.0
      %1759 = vmatmul.mubr.f32.gmra.mrb[0].mxu0 %v1387
      %v1760 = vpop.f32.mrb[0].mxu0
      %v1761 = vadd.f32 %v1417, %v1760
      %v1762 = vpop.f32.mrb[0].mxu0
      %1763 = vmatprep.mubr.f32.mxu0 0.0
      %1764 = vmatmul.mubr.f32.gmra.mrb[0].mxu0 %v1388
      %v1765 = vpop.f32.mrb[0].mxu0
      %v1766 = vadd.f32 %v1417, %v1765
      %v1767 = vpop.f32.mrb[0].mxu0
      %1768 = vmatprep.mubr.f32.mxu0 0.0
      %1769 = vmatmul.mubr.f32.gmra.mrb[0].mxu0 %v1389
      %v1770 = vpop.f32.mrb[0].mxu0
      %v1771 = vadd.f32 %v1417, %v1770
      %v1772 = vpop.f32.mrb[0].mxu0
      %1773 = vmatprep.mubr.f32.mxu0 0.0
      %1774 = vmatmul.mubr.f32.gmra.mrb[0].mxu0 %v1390
      %v1775 = vpop.f32.mrb[0].mxu0
      %v1776 = vadd.f32 %v1417, %v1775
      %v1777 = vpop.f32.mrb[0].mxu0
      %1778 = vmatprep.mubr.f32.mxu0 0.0
      %1779 = vmatmul.mubr.f32.gmra.mrb[0].mxu0 %v1391
      %v1780 = vpop.f32.mrb[0].mxu0
      %v1781 = vadd.f32 %v1417, %v1780
      %v1782 = vpop.f32.mrb[0].mxu0
      %1783 = vmatprep.mubr.f32.mxu0 0.0
      %1784 = vmatmul.mubr.f32.gmra.mrb[0].mxu0 %v1392
      %v1785 = vpop.f32.mrb[0].mxu0
      %v1786 = vadd.f32 %v1417, %v1785
      %v1787 = vpop.f32.mrb[0].mxu0
      %1788 = vmatprep.mubr.f32.mxu0 0.0
      %1789 = vmatmul.mubr.f32.gmra.mrb[0].mxu0 %v1393
      %v1790 = vpop.f32.mrb[0].mxu0
      %v1791 = vadd.f32 %v1417, %v1790
      %v1792 = vpop.f32.mrb[0].mxu0
      %1793 = vmatprep.mubr.f32.mxu0 0.0
      %1794 = vmatmul.mubr.f32.gmra.mrb[0].mxu0 %v1394
      %v1795 = vpop.f32.mrb[0].mxu0
      %v1796 = vadd.f32 %v1417, %v1795
      %v1797 = vpop.f32.mrb[0].mxu0
      %1798 = vmatprep.mubr.f32.mxu0 0.0
      %1799 = vmatmul.mubr.f32.gmra.mrb[0].mxu0 %v1395
      %v1800 = vpop.f32.mrb[0].mxu0
      %v1801 = vadd.f32 %v1417, %v1800
      %v1802 = vpop.f32.mrb[0].mxu0
      %1803 = vdwg.mxu0
      %v1804 = vmul.f32 %v1486, 0.5
      %v1805 = vmul.f32 %v1491, 0.5
      %v1806 = vmul.f32 %v1496, 0.5
      %v1807 = vmul.f32 %v1501, 0.5
      %v1808 = vmul.f32 %v1506, 0.5
      %v1809 = vmul.f32 %v1511, 0.5
      %v1810 = vmul.f32 %v1516, 0.5
      %v1811 = vmul.f32 %v1521, 0.5
      %v1812 = vmul.f32 %v1526, 0.5
      %v1813 = vmul.f32 %v1531, 0.5
      %v1814 = vmul.f32 %v1536, 0.5
      %v1815 = vmul.f32 %v1541, 0.5
      %v1816 = vmul.f32 %v1546, 0.5
      %v1817 = vmul.f32 %v1551, 0.5
      %v1818 = vmul.f32 %v1556, 0.5
      %v1819 = vmul.f32 %v1561, 0.5
      %v1820 = vmul.f32 %v1566, 0.5
      %v1821 = vmul.f32 %v1571, 0.5
      %v1822 = vmul.f32 %v1576, 0.5
      %v1823 = vmul.f32 %v1581, 0.5
      %v1824 = vmul.f32 %v1586, 0.5
      %v1825 = vmul.f32 %v1591, 0.5
      %v1826 = vmul.f32 %v1596, 0.5
      %v1827 = vmul.f32 %v1601, 0.5
      %v1828 = vmul.f32 %v1606, 0.5
      %v1829 = vmul.f32 %v1611, 0.5
      %v1830 = vmul.f32 %v1616, 0.5
      %v1831 = vmul.f32 %v1621, 0.5
      %v1832 = vmul.f32 %v1626, 0.5
      %v1833 = vmul.f32 %v1631, 0.5
      %v1834 = vmul.f32 %v1636, 0.5
      %v1835 = vmul.f32 %v1641, 0.5
      %v1836 = vmul.f32 %v1646, 0.5
      %v1837 = vmul.f32 %v1651, 0.5
      %v1838 = vmul.f32 %v1656, 0.5
      %v1839 = vmul.f32 %v1661, 0.5
      %v1840 = vmul.f32 %v1666, 0.5
      %v1841 = vmul.f32 %v1671, 0.5
      %v1842 = vmul.f32 %v1676, 0.5
      %v1843 = vmul.f32 %v1681, 0.5
      %v1844 = vmul.f32 %v1686, 0.5
      %v1845 = vmul.f32 %v1691, 0.5
      %v1846 = vmul.f32 %v1696, 0.5
      %v1847 = vmul.f32 %v1701, 0.5
      %v1848 = vmul.f32 %v1706, 0.5
      %v1849 = vmul.f32 %v1711, 0.5
      %v1850 = vmul.f32 %v1716, 0.5
      %v1851 = vmul.f32 %v1721, 0.5
      %v1852 = vmul.f32 %v1726, 0.5
      %v1853 = vmul.f32 %v1731, 0.5
      %v1854 = vmul.f32 %v1736, 0.5
      %v1855 = vmul.f32 %v1741, 0.5
      %v1856 = vmul.f32 %v1746, 0.5
      %v1857 = vmul.f32 %v1751, 0.5
      %v1858 = vmul.f32 %v1756, 0.5
      %v1859 = vmul.f32 %v1761, 0.5
      %v1860 = vmul.f32 %v1766, 0.5
      %v1861 = vmul.f32 %v1771, 0.5
      %v1862 = vmul.f32 %v1776, 0.5
      %v1863 = vmul.f32 %v1781, 0.5
      %v1864 = vmul.f32 %v1786, 0.5
      %v1865 = vmul.f32 %v1791, 0.5
      %v1866 = vmul.f32 %v1796, 0.5
      %v1867 = vmul.f32 %v1801, 0.5
      %v1868 = vmul.f32 %v1486, 0.70710677
      %v1869 = vmul.f32 %v1491, 0.70710677
      %v1870 = vmul.f32 %v1496, 0.70710677
      %v1871 = vmul.f32 %v1501, 0.70710677
      %v1872 = vmul.f32 %v1506, 0.70710677
      %v1873 = vmul.f32 %v1511, 0.70710677
      %v1874 = vmul.f32 %v1516, 0.70710677
      %v1875 = vmul.f32 %v1521, 0.70710677
      %v1876 = vmul.f32 %v1526, 0.70710677
      %v1877 = vmul.f32 %v1531, 0.70710677
      %v1878 = vmul.f32 %v1536, 0.70710677
      %v1879 = vmul.f32 %v1541, 0.70710677
      %v1880 = vmul.f32 %v1546, 0.70710677
      %v1881 = vmul.f32 %v1551, 0.70710677
      %v1882 = vmul.f32 %v1556, 0.70710677
      %v1883 = vmul.f32 %v1561, 0.70710677
      %v1884 = vmul.f32 %v1566, 0.70710677
      %v1885 = vmul.f32 %v1571, 0.70710677
      %v1886 = vmul.f32 %v1576, 0.70710677
      %v1887 = vmul.f32 %v1581, 0.70710677
      %v1888 = vmul.f32 %v1586, 0.70710677
      %v1889 = vmul.f32 %v1591, 0.70710677
      %v1890 = vmul.f32 %v1596, 0.70710677
      %v1891 = vmul.f32 %v1601, 0.70710677
      %v1892 = vmul.f32 %v1606, 0.70710677
      %v1893 = vmul.f32 %v1611, 0.70710677
      %v1894 = vmul.f32 %v1616, 0.70710677
      %v1895 = vmul.f32 %v1621, 0.70710677
      %v1896 = vmul.f32 %v1626, 0.70710677
      %v1897 = vmul.f32 %v1631, 0.70710677
      %v1898 = vmul.f32 %v1636, 0.70710677
      %v1899 = vmul.f32 %v1641, 0.70710677
      %v1900 = vmul.f32 %v1646, 0.70710677
      %v1901 = vmul.f32 %v1651, 0.70710677
      %v1902 = vmul.f32 %v1656, 0.70710677
      %v1903 = vmul.f32 %v1661, 0.70710677
      %v1904 = vmul.f32 %v1666, 0.70710677
      %v1905 = vmul.f32 %v1671, 0.70710677
      %v1906 = vmul.f32 %v1676, 0.70710677
      %v1907 = vmul.f32 %v1681, 0.70710677
      %v1908 = vmul.f32 %v1686, 0.70710677
      %v1909 = vmul.f32 %v1691, 0.70710677
      %v1910 = vmul.f32 %v1696, 0.70710677
      %v1911 = vmul.f32 %v1701, 0.70710677
      %v1912 = vmul.f32 %v1706, 0.70710677
      %v1913 = vmul.f32 %v1711, 0.70710677
      %v1914 = vmul.f32 %v1716, 0.70710677
      %v1915 = vmul.f32 %v1721, 0.70710677
      %v1916 = vmul.f32 %v1726, 0.70710677
      %v1917 = vmul.f32 %v1731, 0.70710677
      %v1918 = vmul.f32 %v1736, 0.70710677
      %v1919 = vmul.f32 %v1741, 0.70710677
      %v1920 = vmul.f32 %v1746, 0.70710677
      %v1921 = vmul.f32 %v1751, 0.70710677
      %v1922 = vmul.f32 %v1756, 0.70710677
      %v1923 = vmul.f32 %v1761, 0.70710677
      %v1924 = vmul.f32 %v1766, 0.70710677
      %v1925 = vmul.f32 %v1771, 0.70710677
      %v1926 = vmul.f32 %v1776, 0.70710677
      %v1927 = vmul.f32 %v1781, 0.70710677
      %v1928 = vmul.f32 %v1786, 0.70710677
      %v1929 = vmul.f32 %v1791, 0.70710677
      %v1930 = vmul.f32 %v1796, 0.70710677
      %v1931 = vmul.f32 %v1801, 0.70710677
      %v1932 = verf.f32.pop %v1868
      %v1933 = verf.f32.pop %v1869
      %v1934 = verf.f32.pop %v1870
      %v1935 = verf.f32.pop %v1871
      %v1936 = verf.f32.pop %v1872
      %v1937 = verf.f32.pop %v1873
      %v1938 = verf.f32.pop %v1874
      %v1939 = verf.f32.pop %v1875
      %v1940 = verf.f32.pop %v1876
      %v1941 = verf.f32.pop %v1877
      %v1942 = verf.f32.pop %v1878
      %v1943 = verf.f32.pop %v1879
      %v1944 = verf.f32.pop %v1880
      %v1945 = verf.f32.pop %v1881
      %v1946 = verf.f32.pop %v1882
      %v1947 = verf.f32.pop %v1883
      %v1948 = verf.f32.pop %v1884
      %v1949 = verf.f32.pop %v1885
      %v1950 = verf.f32.pop %v1886
      %v1951 = verf.f32.pop %v1887
      %v1952 = verf.f32.pop %v1888
      %v1953 = verf.f32.pop %v1889
      %v1954 = verf.f32.pop %v1890
      %v1955 = verf.f32.pop %v1891
      %v1956 = verf.f32.pop %v1892
      %v1957 = verf.f32.pop %v1893
      %v1958 = verf.f32.pop %v1894
      %v1959 = verf.f32.pop %v1895
      %v1960 = verf.f32.pop %v1896
      %v1961 = verf.f32.pop %v1897
      %v1962 = verf.f32.pop %v1898
      %v1963 = verf.f32.pop %v1899
      %v1964 = verf.f32.pop %v1900
      %v1965 = verf.f32.pop %v1901
      %v1966 = verf.f32.pop %v1902
      %v1967 = verf.f32.pop %v1903
      %v1968 = verf.f32.pop %v1904
      %v1969 = verf.f32.pop %v1905
      %v1970 = verf.f32.pop %v1906
      %v1971 = verf.f32.pop %v1907
      %v1972 = verf.f32.pop %v1908
      %v1973 = verf.f32.pop %v1909
      %v1974 = verf.f32.pop %v1910
      %v1975 = verf.f32.pop %v1911
      %v1976 = verf.f32.pop %v1912
      %v1977 = verf.f32.pop %v1913
      %v1978 = verf.f32.pop %v1914
      %v1979 = verf.f32.pop %v1915
      %v1980 = verf.f32.pop %v1916
      %v1981 = verf.f32.pop %v1917
      %v1982 = verf.f32.pop %v1918
      %v1983 = verf.f32.pop %v1919
      %v1984 = verf.f32.pop %v1920
      %v1985 = verf.f32.pop %v1921
      %v1986 = verf.f32.pop %v1922
      %v1987 = verf.f32.pop %v1923
      %v1988 = verf.f32.pop %v1924
      %v1989 = verf.f32.pop %v1925
      %v1990 = verf.f32.pop %v1926
      %v1991 = verf.f32.pop %v1927
      %v1992 = verf.f32.pop %v1928
      %v1993 = verf.f32.pop %v1929
      %v1994 = verf.f32.pop %v1930
      %v1995 = verf.f32.pop %v1931
      %v1996 = vadd.f32 %v1932, 1.0
      %v1997 = vadd.f32 %v1933, 1.0
      %v1998 = vadd.f32 %v1934, 1.0
      %v1999 = vadd.f32 %v1935, 1.0
      %v2000 = vadd.f32 %v1936, 1.0
      %v2001 = vadd.f32 %v1937, 1.0
      %v2002 = vadd.f32 %v1938, 1.0
      %v2003 = vadd.f32 %v1939, 1.0
      %v2004 = vadd.f32 %v1940, 1.0
      %v2005 = vadd.f32 %v1941, 1.0
      %v2006 = vadd.f32 %v1942, 1.0
      %v2007 = vadd.f32 %v1943, 1.0
      %v2008 = vadd.f32 %v1944, 1.0
      %v2009 = vadd.f32 %v1945, 1.0
      %v2010 = vadd.f32 %v1946, 1.0
      %v2011 = vadd.f32 %v1947, 1.0
      %v2012 = vadd.f32 %v1948, 1.0
      %v2013 = vadd.f32 %v1949, 1.0
      %v2014 = vadd.f32 %v1950, 1.0
      %v2015 = vadd.f32 %v1951, 1.0
      %v2016 = vadd.f32 %v1952, 1.0
      %v2017 = vadd.f32 %v1953, 1.0
      %v2018 = vadd.f32 %v1954, 1.0
      %v2019 = vadd.f32 %v1955, 1.0
      %v2020 = vadd.f32 %v1956, 1.0
      %v2021 = vadd.f32 %v1957, 1.0
      %v2022 = vadd.f32 %v1958, 1.0
      %v2023 = vadd.f32 %v1959, 1.0
      %v2024 = vadd.f32 %v1960, 1.0
      %v2025 = vadd.f32 %v1961, 1.0
      %v2026 = vadd.f32 %v1962, 1.0
      %v2027 = vadd.f32 %v1963, 1.0
      %v2028 = vadd.f32 %v1964, 1.0
      %v2029 = vadd.f32 %v1965, 1.0
      %v2030 = vadd.f32 %v1966, 1.0
      %v2031 = vadd.f32 %v1967, 1.0
      %v2032 = vadd.f32 %v1968, 1.0
      %v2033 = vadd.f32 %v1969, 1.0
      %v2034 = vadd.f32 %v1970, 1.0
      %v2035 = vadd.f32 %v1971, 1.0
      %v2036 = vadd.f32 %v1972, 1.0
      %v2037 = vadd.f32 %v1973, 1.0
      %v2038 = vadd.f32 %v1974, 1.0
      %v2039 = vadd.f32 %v1975, 1.0
      %v2040 = vadd.f32 %v1976, 1.0
      %v2041 = vadd.f32 %v1977, 1.0
      %v2042 = vadd.f32 %v1978, 1.0
      %v2043 = vadd.f32 %v1979, 1.0
      %v2044 = vadd.f32 %v1980, 1.0
      %v2045 = vadd.f32 %v1981, 1.0
      %v2046 = vadd.f32 %v1982, 1.0
      %v2047 = vadd.f32 %v1983, 1.0
      %v2048 = vadd.f32 %v1984, 1.0
      %v2049 = vadd.f32 %v1985, 1.0
      %v2050 = vadd.f32 %v1986, 1.0
      %v2051 = vadd.f32 %v1987, 1.0
      %v2052 = vadd.f32 %v1988, 1.0
      %v2053 = vadd.f32 %v1989, 1.0
      %v2054 = vadd.f32 %v1990, 1.0
      %v2055 = vadd.f32 %v1991, 1.0
      %v2056 = vadd.f32 %v1992, 1.0
      %v2057 = vadd.f32 %v1993, 1.0
      %v2058 = vadd.f32 %v1994, 1.0
      %v2059 = vadd.f32 %v1995, 1.0
      %v2060 = vmul.f32 %v1804, %v1996
      %v2061 = vmul.f32 %v1805, %v1997
      %v2062 = vmul.f32 %v1806, %v1998
      %v2063 = vmul.f32 %v1807, %v1999
      %v2064 = vmul.f32 %v1808, %v2000
      %v2065 = vmul.f32 %v1809, %v2001
      %v2066 = vmul.f32 %v1810, %v2002
      %v2067 = vmul.f32 %v1811, %v2003
      %v2068 = vmul.f32 %v1812, %v2004
      %v2069 = vmul.f32 %v1813, %v2005
      %v2070 = vmul.f32 %v1814, %v2006
      %v2071 = vmul.f32 %v1815, %v2007
      %v2072 = vmul.f32 %v1816, %v2008
      %v2073 = vmul.f32 %v1817, %v2009
      %v2074 = vmul.f32 %v1818, %v2010
      %v2075 = vmul.f32 %v1819, %v2011
      %v2076 = vmul.f32 %v1820, %v2012
      %v2077 = vmul.f32 %v1821, %v2013
      %v2078 = vmul.f32 %v1822, %v2014
      %v2079 = vmul.f32 %v1823, %v2015
      %v2080 = vmul.f32 %v1824, %v2016
      %v2081 = vmul.f32 %v1825, %v2017
      %v2082 = vmul.f32 %v1826, %v2018
      %v2083 = vmul.f32 %v1827, %v2019
      %v2084 = vmul.f32 %v1828, %v2020
      %v2085 = vmul.f32 %v1829, %v2021
      %v2086 = vmul.f32 %v1830, %v2022
      %v2087 = vmul.f32 %v1831, %v2023
      %v2088 = vmul.f32 %v1832, %v2024
      %v2089 = vmul.f32 %v1833, %v2025
      %v2090 = vmul.f32 %v1834, %v2026
      %v2091 = vmul.f32 %v1835, %v2027
      %v2092 = vmul.f32 %v1836, %v2028
      %v2093 = vmul.f32 %v1837, %v2029
      %v2094 = vmul.f32 %v1838, %v2030
      %v2095 = vmul.f32 %v1839, %v2031
      %v2096 = vmul.f32 %v1840, %v2032
      %v2097 = vmul.f32 %v1841, %v2033
      %v2098 = vmul.f32 %v1842, %v2034
      %v2099 = vmul.f32 %v1843, %v2035
      %v2100 = vmul.f32 %v1844, %v2036
      %v2101 = vmul.f32 %v1845, %v2037
      %v2102 = vmul.f32 %v1846, %v2038
      %v2103 = vmul.f32 %v1847, %v2039
      %v2104 = vmul.f32 %v1848, %v2040
      %v2105 = vmul.f32 %v1849, %v2041
      %v2106 = vmul.f32 %v1850, %v2042
      %v2107 = vmul.f32 %v1851, %v2043
      %v2108 = vmul.f32 %v1852, %v2044
      %v2109 = vmul.f32 %v1853, %v2045
      %v2110 = vmul.f32 %v1854, %v2046
      %v2111 = vmul.f32 %v1855, %v2047
      %v2112 = vmul.f32 %v1856, %v2048
      %v2113 = vmul.f32 %v1857, %v2049
      %v2114 = vmul.f32 %v1858, %v2050
      %v2115 = vmul.f32 %v1859, %v2051
      %v2116 = vmul.f32 %v1860, %v2052
      %v2117 = vmul.f32 %v1861, %v2053
      %v2118 = vmul.f32 %v1862, %v2054
      %v2119 = vmul.f32 %v1863, %v2055
      %v2120 = vmul.f32 %v1864, %v2056
      %v2121 = vmul.f32 %v1865, %v2057
      %v2122 = vmul.f32 %v1866, %v2058
      %v2123 = vmul.f32 %v1867, %v2059
      %v2124 = vld [vmem:[%s5] sm:$0xff]
      %v2125 = vld [vmem:[%s5 + $0x8] sm:$0xff]
      %v2126 = vld [vmem:[%s5 + $0x10] sm:$0xff]
      %v2127 = vld [vmem:[%s5 + $0x18] sm:$0xff]
      %v2128 = vld [vmem:[%s5 + $0x20] sm:$0xff]
      %v2129 = vld [vmem:[%s5 + $0x28] sm:$0xff]
      %v2130 = vld [vmem:[%s5 + $0x30] sm:$0xff]
      %v2131 = vld [vmem:[%s5 + $0x38] sm:$0xff]
      %v2132 = vld [vmem:[%s5 + $0x40] sm:$0xff]
      %v2133 = vld [vmem:[%s5 + $0x48] sm:$0xff]
      %v2134 = vld [vmem:[%s5 + $0x50] sm:$0xff]
      %v2135 = vld [vmem:[%s5 + $0x58] sm:$0xff]
      %v2136 = vld [vmem:[%s5 + $0x60] sm:$0xff]
      %v2137 = vld [vmem:[%s5 + $0x68] sm:$0xff]
      %v2138 = vld [vmem:[%s5 + $0x70] sm:$0xff]
      %v2139 = vld [vmem:[%s5 + $0x78] sm:$0xff]
      %v2140 = vld [vmem:[%s6] sm:$0x1]
      %v2142 = vlaneseq
      %v2143 = vshrl.u32 %v2142, 7
      %v2144 = vsub.s32 0, %v2143
      %v2145 = vrot.slane %v2140, %v2144
      %2147 = vmatprep.subr.mxu0 0.0
      %2148 = vmatpush1.msra.mxu0 %v2124
      %2149 = vmatprep.subr.mxu0 0.0
      %2150 = vmatpush1.msra.mxu0 %v2125
      %2151 = vmatprep.subr.mxu0 0.0
      %2152 = vmatpush1.msra.mxu0 %v2126
      %2153 = vmatprep.subr.mxu0 0.0
      %2154 = vmatpush1.msra.mxu0 %v2127
      %2155 = vmatprep.subr.mxu0 0.0
      %2156 = vmatpush1.msra.mxu0 %v2128
      %2157 = vmatprep.subr.mxu0 0.0
      %2158 = vmatpush1.msra.mxu0 %v2129
      %2159 = vmatprep.subr.mxu0 0.0
      %2160 = vmatpush1.msra.mxu0 %v2130
      %2161 = vmatprep.subr.mxu0 0.0
      %2162 = vmatpush1.msra.mxu0 %v2131
      %2163 = vmatprep.subr.mxu0 0.0
      %2164 = vmatpush1.msra.mxu0 %v2132
      %2165 = vmatprep.subr.mxu0 0.0
      %2166 = vmatpush1.msra.mxu0 %v2133
      %2167 = vmatprep.subr.mxu0 0.0
      %2168 = vmatpush1.msra.mxu0 %v2134
      %2169 = vmatprep.subr.mxu0 0.0
      %2170 = vmatpush1.msra.mxu0 %v2135
      %2171 = vmatprep.subr.mxu0 0.0
      %2172 = vmatpush1.msra.mxu0 %v2136
      %2173 = vmatprep.subr.mxu0 0.0
      %2174 = vmatpush1.msra.mxu0 %v2137
      %2175 = vmatprep.subr.mxu0 0.0
      %2176 = vmatpush1.msra.mxu0 %v2138
      %2177 = vmatprep.subr.mxu0 0.0
      %2178 = vmatpush1.msra.mxu0 %v2139
      %2179 = vmatprep.subr.mxu0 0.0
      %2180 = vmatpush1.msra.mxu0 0.0
      %2181 = vmatprep.subr.mxu0 0.0
      %2182 = vmatpush1.msra.mxu0 0.0
      %2183 = vmatprep.subr.mxu0 0.0
      %2184 = vmatpush1.msra.mxu0 0.0
      %2185 = vmatprep.subr.mxu0 0.0
      %2186 = vmatpush1.msra.mxu0 0.0
      %2187 = vmatprep.subr.mxu0 0.0
      %2188 = vmatpush1.msra.mxu0 0.0
      %2189 = vmatprep.subr.mxu0 0.0
      %2190 = vmatpush1.msra.mxu0 0.0
      %2191 = vmatprep.subr.mxu0 0.0
      %2192 = vmatpush1.msra.mxu0 0.0
      %2193 = vmatprep.subr.mxu0 0.0
      %2194 = vmatpush1.msra.mxu0 0.0
      %2195 = vmatprep.subr.mxu0 0.0
      %2196 = vmatpush1.msra.mxu0 0.0
      %2197 = vmatprep.subr.mxu0 0.0
      %2198 = vmatpush1.msra.mxu0 0.0
      %2199 = vmatprep.subr.mxu0 0.0
      %2200 = vmatpush1.msra.mxu0 0.0
      %2201 = vmatprep.subr.mxu0 0.0
      %2202 = vmatpush1.msra.mxu0 0.0
      %2203 = vmatprep.subr.mxu0 0.0
      %2204 = vmatpush1.msra.mxu0 0.0
      %2205 = vmatprep.subr.mxu0 0.0
      %2206 = vmatpush1.msra.mxu0 0.0
      %2207 = vmatprep.subr.mxu0 0.0
      %2208 = vmatpush1.msra.mxu0 0.0
      %2209 = vmatprep.subr.mxu0 0.0
      %2210 = vmatpush1.msra.mxu0 0.0
      %2211 = vmatprep.mubr.f32.mxu0 0.0
      %2212 = vmatmul.mubr.f32.gmra.mrb[0].mxu0 %v2060
      %v2213 = vpop.f32.mrb[0].mxu0
      %v2214 = vadd.f32 %v2145, %v2213
      %v2215 = vpop.f32.mrb[0].mxu0
      %2216 = vmatprep.mubr.f32.mxu0 0.0
      %2217 = vmatmul.mubr.f32.gmra.mrb[0].mxu0 %v2061
      %v2218 = vpop.f32.mrb[0].mxu0
      %v2219 = vadd.f32 %v2145, %v2218
      %v2220 = vpop.f32.mrb[0].mxu0
      %2221 = vmatprep.mubr.f32.mxu0 0.0
      %2222 = vmatmul.mubr.f32.gmra.mrb[0].mxu0 %v2062
      %v2223 = vpop.f32.mrb[0].mxu0
      %v2224 = vadd.f32 %v2145, %v2223
      %v2225 = vpop.f32.mrb[0].mxu0
      %2226 = vmatprep.mubr.f32.mxu0 0.0
      %2227 = vmatmul.mubr.f32.gmra.mrb[0].mxu0 %v2063
      %v2228 = vpop.f32.mrb[0].mxu0
      %v2229 = vadd.f32 %v2145, %v2228
      %v2230 = vpop.f32.mrb[0].mxu0
      %2231 = vmatprep.mubr.f32.mxu0 0.0
      %2232 = vmatmul.mubr.f32.gmra.mrb[0].mxu0 %v2064
      %v2233 = vpop.f32.mrb[0].mxu0
      %v2234 = vadd.f32 %v2145, %v2233
      %v2235 = vpop.f32.mrb[0].mxu0
      %2236 = vmatprep.mubr.f32.mxu0 0.0
      %2237 = vmatmul.mubr.f32.gmra.mrb[0].mxu0 %v2065
      %v2238 = vpop.f32.mrb[0].mxu0
      %v2239 = vadd.f32 %v2145, %v2238
      %v2240 = vpop.f32.mrb[0].mxu0
      %2241 = vmatprep.mubr.f32.mxu0 0.0
      %2242 = vmatmul.mubr.f32.gmra.mrb[0].mxu0 %v2066
      %v2243 = vpop.f32.mrb[0].mxu0
      %v2244 = vadd.f32 %v2145, %v2243
      %v2245 = vpop.f32.mrb[0].mxu0
      %2246 = vmatprep.mubr.f32.mxu0 0.0
      %2247 = vmatmul.mubr.f32.gmra.mrb[0].mxu0 %v2067
      %v2248 = vpop.f32.mrb[0].mxu0
      %v2249 = vadd.f32 %v2145, %v2248
      %v2250 = vpop.f32.mrb[0].mxu0
      %2251 = vmatprep.mubr.f32.mxu0 0.0
      %2252 = vmatmul.mubr.f32.gmra.mrb[0].mxu0 %v2068
      %v2253 = vpop.f32.mrb[0].mxu0
      %v2254 = vadd.f32 %v2145, %v2253
      %v2255 = vpop.f32.mrb[0].mxu0
      %2256 = vmatprep.mubr.f32.mxu0 0.0
      %2257 = vmatmul.mubr.f32.gmra.mrb[0].mxu0 %v2069
      %v2258 = vpop.f32.mrb[0].mxu0
      %v2259 = vadd.f32 %v2145, %v2258
      %v2260 = vpop.f32.mrb[0].mxu0
      %2261 = vmatprep.mubr.f32.mxu0 0.0
      %2262 = vmatmul.mubr.f32.gmra.mrb[0].mxu0 %v2070
      %v2263 = vpop.f32.mrb[0].mxu0
      %v2264 = vadd.f32 %v2145, %v2263
      %v2265 = vpop.f32.mrb[0].mxu0
      %2266 = vmatprep.mubr.f32.mxu0 0.0
      %2267 = vmatmul.mubr.f32.gmra.mrb[0].mxu0 %v2071
      %v2268 = vpop.f32.mrb[0].mxu0
      %v2269 = vadd.f32 %v2145, %v2268
      %v2270 = vpop.f32.mrb[0].mxu0
      %2271 = vmatprep.mubr.f32.mxu0 0.0
      %2272 = vmatmul.mubr.f32.gmra.mrb[0].mxu0 %v2072
      %v2273 = vpop.f32.mrb[0].mxu0
      %v2274 = vadd.f32 %v2145, %v2273
      %v2275 = vpop.f32.mrb[0].mxu0
      %2276 = vmatprep.mubr.f32.mxu0 0.0
      %2277 = vmatmul.mubr.f32.gmra.mrb[0].mxu0 %v2073
      %v2278 = vpop.f32.mrb[0].mxu0
      %v2279 = vadd.f32 %v2145, %v2278
      %v2280 = vpop.f32.mrb[0].mxu0
      %2281 = vmatprep.mubr.f32.mxu0 0.0
      %2282 = vmatmul.mubr.f32.gmra.mrb[0].mxu0 %v2074
      %v2283 = vpop.f32.mrb[0].mxu0
      %v2284 = vadd.f32 %v2145, %v2283
      %v2285 = vpop.f32.mrb[0].mxu0
      %2286 = vmatprep.mubr.f32.mxu0 0.0
      %2287 = vmatmul.mubr.f32.gmra.mrb[0].mxu0 %v2075
      %v2288 = vpop.f32.mrb[0].mxu0
      %v2289 = vadd.f32 %v2145, %v2288
      %v2290 = vpop.f32.mrb[0].mxu0
      %2291 = vmatprep.mubr.f32.mxu0 0.0
      %2292 = vmatmul.mubr.f32.gmra.mrb[0].mxu0 %v2076
      %v2293 = vpop.f32.mrb[0].mxu0
      %v2294 = vadd.f32 %v2145, %v2293
      %v2295 = vpop.f32.mrb[0].mxu0
      %2296 = vmatprep.mubr.f32.mxu0 0.0
      %2297 = vmatmul.mubr.f32.gmra.mrb[0].mxu0 %v2077
      %v2298 = vpop.f32.mrb[0].mxu0
      %v2299 = vadd.f32 %v2145, %v2298
      %v2300 = vpop.f32.mrb[0].mxu0
      %2301 = vmatprep.mubr.f32.mxu0 0.0
      %2302 = vmatmul.mubr.f32.gmra.mrb[0].mxu0 %v2078
      %v2303 = vpop.f32.mrb[0].mxu0
      %v2304 = vadd.f32 %v2145, %v2303
      %v2305 = vpop.f32.mrb[0].mxu0
      %2306 = vmatprep.mubr.f32.mxu0 0.0
      %2307 = vmatmul.mubr.f32.gmra.mrb[0].mxu0 %v2079
      %v2308 = vpop.f32.mrb[0].mxu0
      %v2309 = vadd.f32 %v2145, %v2308
      %v2310 = vpop.f32.mrb[0].mxu0
      %2311 = vmatprep.mubr.f32.mxu0 0.0
      %2312 = vmatmul.mubr.f32.gmra.mrb[0].mxu0 %v2080
      %v2313 = vpop.f32.mrb[0].mxu0
      %v2314 = vadd.f32 %v2145, %v2313
      %v2315 = vpop.f32.mrb[0].mxu0
      %2316 = vmatprep.mubr.f32.mxu0 0.0
      %2317 = vmatmul.mubr.f32.gmra.mrb[0].mxu0 %v2081
      %v2318 = vpop.f32.mrb[0].mxu0
      %v2319 = vadd.f32 %v2145, %v2318
      %v2320 = vpop.f32.mrb[0].mxu0
      %2321 = vmatprep.mubr.f32.mxu0 0.0
      %2322 = vmatmul.mubr.f32.gmra.mrb[0].mxu0 %v2082
      %v2323 = vpop.f32.mrb[0].mxu0
      %v2324 = vadd.f32 %v2145, %v2323
      %v2325 = vpop.f32.mrb[0].mxu0
      %2326 = vmatprep.mubr.f32.mxu0 0.0
      %2327 = vmatmul.mubr.f32.gmra.mrb[0].mxu0 %v2083
      %v2328 = vpop.f32.mrb[0].mxu0
      %v2329 = vadd.f32 %v2145, %v2328
      %v2330 = vpop.f32.mrb[0].mxu0
      %2331 = vmatprep.mubr.f32.mxu0 0.0
      %2332 = vmatmul.mubr.f32.gmra.mrb[0].mxu0 %v2084
      %v2333 = vpop.f32.mrb[0].mxu0
      %v2334 = vadd.f32 %v2145, %v2333
      %v2335 = vpop.f32.mrb[0].mxu0
      %2336 = vmatprep.mubr.f32.mxu0 0.0
      %2337 = vmatmul.mubr.f32.gmra.mrb[0].mxu0 %v2085
      %v2338 = vpop.f32.mrb[0].mxu0
      %v2339 = vadd.f32 %v2145, %v2338
      %v2340 = vpop.f32.mrb[0].mxu0
      %2341 = vmatprep.mubr.f32.mxu0 0.0
      %2342 = vmatmul.mubr.f32.gmra.mrb[0].mxu0 %v2086
      %v2343 = vpop.f32.mrb[0].mxu0
      %v2344 = vadd.f32 %v2145, %v2343
      %v2345 = vpop.f32.mrb[0].mxu0
      %2346 = vmatprep.mubr.f32.mxu0 0.0
      %2347 = vmatmul.mubr.f32.gmra.mrb[0].mxu0 %v2087
      %v2348 = vpop.f32.mrb[0].mxu0
      %v2349 = vadd.f32 %v2145, %v2348
      %v2350 = vpop.f32.mrb[0].mxu0
      %2351 = vmatprep.mubr.f32.mxu0 0.0
      %2352 = vmatmul.mubr.f32.gmra.mrb[0].mxu0 %v2088
      %v2353 = vpop.f32.mrb[0].mxu0
      %v2354 = vadd.f32 %v2145, %v2353
      %v2355 = vpop.f32.mrb[0].mxu0
      %2356 = vmatprep.mubr.f32.mxu0 0.0
      %2357 = vmatmul.mubr.f32.gmra.mrb[0].mxu0 %v2089
      %v2358 = vpop.f32.mrb[0].mxu0
      %v2359 = vadd.f32 %v2145, %v2358
      %v2360 = vpop.f32.mrb[0].mxu0
      %2361 = vmatprep.mubr.f32.mxu0 0.0
      %2362 = vmatmul.mubr.f32.gmra.mrb[0].mxu0 %v2090
      %v2363 = vpop.f32.mrb[0].mxu0
      %v2364 = vadd.f32 %v2145, %v2363
      %v2365 = vpop.f32.mrb[0].mxu0
      %2366 = vmatprep.mubr.f32.mxu0 0.0
      %2367 = vmatmul.mubr.f32.gmra.mrb[0].mxu0 %v2091
      %v2368 = vpop.f32.mrb[0].mxu0
      %v2369 = vadd.f32 %v2145, %v2368
      %v2370 = vpop.f32.mrb[0].mxu0
      %2371 = vmatprep.mubr.f32.mxu0 0.0
      %2372 = vmatmul.mubr.f32.gmra.mrb[0].mxu0 %v2092
      %v2373 = vpop.f32.mrb[0].mxu0
      %v2374 = vadd.f32 %v2145, %v2373
      %v2375 = vpop.f32.mrb[0].mxu0
      %2376 = vmatprep.mubr.f32.mxu0 0.0
      %2377 = vmatmul.mubr.f32.gmra.mrb[0].mxu0 %v2093
      %v2378 = vpop.f32.mrb[0].mxu0
      %v2379 = vadd.f32 %v2145, %v2378
      %v2380 = vpop.f32.mrb[0].mxu0
      %2381 = vmatprep.mubr.f32.mxu0 0.0
      %2382 = vmatmul.mubr.f32.gmra.mrb[0].mxu0 %v2094
      %v2383 = vpop.f32.mrb[0].mxu0
      %v2384 = vadd.f32 %v2145, %v2383
      %v2385 = vpop.f32.mrb[0].mxu0
      %2386 = vmatprep.mubr.f32.mxu0 0.0
      %2387 = vmatmul.mubr.f32.gmra.mrb[0].mxu0 %v2095
      %v2388 = vpop.f32.mrb[0].mxu0
      %v2389 = vadd.f32 %v2145, %v2388
      %v2390 = vpop.f32.mrb[0].mxu0
      %2391 = vmatprep.mubr.f32.mxu0 0.0
      %2392 = vmatmul.mubr.f32.gmra.mrb[0].mxu0 %v2096
      %v2393 = vpop.f32.mrb[0].mxu0
      %v2394 = vadd.f32 %v2145, %v2393
      %v2395 = vpop.f32.mrb[0].mxu0
      %2396 = vmatprep.mubr.f32.mxu0 0.0
      %2397 = vmatmul.mubr.f32.gmra.mrb[0].mxu0 %v2097
      %v2398 = vpop.f32.mrb[0].mxu0
      %v2399 = vadd.f32 %v2145, %v2398
      %v2400 = vpop.f32.mrb[0].mxu0
      %2401 = vmatprep.mubr.f32.mxu0 0.0
      %2402 = vmatmul.mubr.f32.gmra.mrb[0].mxu0 %v2098
      %v2403 = vpop.f32.mrb[0].mxu0
      %v2404 = vadd.f32 %v2145, %v2403
      %v2405 = vpop.f32.mrb[0].mxu0
      %2406 = vmatprep.mubr.f32.mxu0 0.0
      %2407 = vmatmul.mubr.f32.gmra.mrb[0].mxu0 %v2099
      %v2408 = vpop.f32.mrb[0].mxu0
      %v2409 = vadd.f32 %v2145, %v2408
      %v2410 = vpop.f32.mrb[0].mxu0
      %2411 = vmatprep.mubr.f32.mxu0 0.0
      %2412 = vmatmul.mubr.f32.gmra.mrb[0].mxu0 %v2100
      %v2413 = vpop.f32.mrb[0].mxu0
      %v2414 = vadd.f32 %v2145, %v2413
      %v2415 = vpop.f32.mrb[0].mxu0
      %2416 = vmatprep.mubr.f32.mxu0 0.0
      %2417 = vmatmul.mubr.f32.gmra.mrb[0].mxu0 %v2101
      %v2418 = vpop.f32.mrb[0].mxu0
      %v2419 = vadd.f32 %v2145, %v2418
      %v2420 = vpop.f32.mrb[0].mxu0
      %2421 = vmatprep.mubr.f32.mxu0 0.0
      %2422 = vmatmul.mubr.f32.gmra.mrb[0].mxu0 %v2102
      %v2423 = vpop.f32.mrb[0].mxu0
      %v2424 = vadd.f32 %v2145, %v2423
      %v2425 = vpop.f32.mrb[0].mxu0
      %2426 = vmatprep.mubr.f32.mxu0 0.0
      %2427 = vmatmul.mubr.f32.gmra.mrb[0].mxu0 %v2103
      %v2428 = vpop.f32.mrb[0].mxu0
      %v2429 = vadd.f32 %v2145, %v2428
      %v2430 = vpop.f32.mrb[0].mxu0
      %2431 = vmatprep.mubr.f32.mxu0 0.0
      %2432 = vmatmul.mubr.f32.gmra.mrb[0].mxu0 %v2104
      %v2433 = vpop.f32.mrb[0].mxu0
      %v2434 = vadd.f32 %v2145, %v2433
      %v2435 = vpop.f32.mrb[0].mxu0
      %2436 = vmatprep.mubr.f32.mxu0 0.0
      %2437 = vmatmul.mubr.f32.gmra.mrb[0].mxu0 %v2105
      %v2438 = vpop.f32.mrb[0].mxu0
      %v2439 = vadd.f32 %v2145, %v2438
      %v2440 = vpop.f32.mrb[0].mxu0
      %2441 = vmatprep.mubr.f32.mxu0 0.0
      %2442 = vmatmul.mubr.f32.gmra.mrb[0].mxu0 %v2106
      %v2443 = vpop.f32.mrb[0].mxu0
      %v2444 = vadd.f32 %v2145, %v2443
      %v2445 = vpop.f32.mrb[0].mxu0
      %2446 = vmatprep.mubr.f32.mxu0 0.0
      %2447 = vmatmul.mubr.f32.gmra.mrb[0].mxu0 %v2107
      %v2448 = vpop.f32.mrb[0].mxu0
      %v2449 = vadd.f32 %v2145, %v2448
      %v2450 = vpop.f32.mrb[0].mxu0
      %2451 = vmatprep.mubr.f32.mxu0 0.0
      %2452 = vmatmul.mubr.f32.gmra.mrb[0].mxu0 %v2108
      %v2453 = vpop.f32.mrb[0].mxu0
      %v2454 = vadd.f32 %v2145, %v2453
      %v2455 = vpop.f32.mrb[0].mxu0
      %2456 = vmatprep.mubr.f32.mxu0 0.0
      %2457 = vmatmul.mubr.f32.gmra.mrb[0].mxu0 %v2109
      %v2458 = vpop.f32.mrb[0].mxu0
      %v2459 = vadd.f32 %v2145, %v2458
      %v2460 = vpop.f32.mrb[0].mxu0
      %2461 = vmatprep.mubr.f32.mxu0 0.0
      %2462 = vmatmul.mubr.f32.gmra.mrb[0].mxu0 %v2110
      %v2463 = vpop.f32.mrb[0].mxu0
      %v2464 = vadd.f32 %v2145, %v2463
      %v2465 = vpop.f32.mrb[0].mxu0
      %2466 = vmatprep.mubr.f32.mxu0 0.0
      %2467 = vmatmul.mubr.f32.gmra.mrb[0].mxu0 %v2111
      %v2468 = vpop.f32.mrb[0].mxu0
      %v2469 = vadd.f32 %v2145, %v2468
      %v2470 = vpop.f32.mrb[0].mxu0
      %2471 = vmatprep.mubr.f32.mxu0 0.0
      %2472 = vmatmul.mubr.f32.gmra.mrb[0].mxu0 %v2112
      %v2473 = vpop.f32.mrb[0].mxu0
      %v2474 = vadd.f32 %v2145, %v2473
      %v2475 = vpop.f32.mrb[0].mxu0
      %2476 = vmatprep.mubr.f32.mxu0 0.0
      %2477 = vmatmul.mubr.f32.gmra.mrb[0].mxu0 %v2113
      %v2478 = vpop.f32.mrb[0].mxu0
      %v2479 = vadd.f32 %v2145, %v2478
      %v2480 = vpop.f32.mrb[0].mxu0
      %2481 = vmatprep.mubr.f32.mxu0 0.0
      %2482 = vmatmul.mubr.f32.gmra.mrb[0].mxu0 %v2114
      %v2483 = vpop.f32.mrb[0].mxu0
      %v2484 = vadd.f32 %v2145, %v2483
      %v2485 = vpop.f32.mrb[0].mxu0
      %2486 = vmatprep.mubr.f32.mxu0 0.0
      %2487 = vmatmul.mubr.f32.gmra.mrb[0].mxu0 %v2115
      %v2488 = vpop.f32.mrb[0].mxu0
      %v2489 = vadd.f32 %v2145, %v2488
      %v2490 = vpop.f32.mrb[0].mxu0
      %2491 = vmatprep.mubr.f32.mxu0 0.0
      %2492 = vmatmul.mubr.f32.gmra.mrb[0].mxu0 %v2116
      %v2493 = vpop.f32.mrb[0].mxu0
      %v2494 = vadd.f32 %v2145, %v2493
      %v2495 = vpop.f32.mrb[0].mxu0
      %2496 = vmatprep.mubr.f32.mxu0 0.0
      %2497 = vmatmul.mubr.f32.gmra.mrb[0].mxu0 %v2117
      %v2498 = vpop.f32.mrb[0].mxu0
      %v2499 = vadd.f32 %v2145, %v2498
      %v2500 = vpop.f32.mrb[0].mxu0
      %2501 = vmatprep.mubr.f32.mxu0 0.0
      %2502 = vmatmul.mubr.f32.gmra.mrb[0].mxu0 %v2118
      %v2503 = vpop.f32.mrb[0].mxu0
      %v2504 = vadd.f32 %v2145, %v2503
      %v2505 = vpop.f32.mrb[0].mxu0
      %2506 = vmatprep.mubr.f32.mxu0 0.0
      %2507 = vmatmul.mubr.f32.gmra.mrb[0].mxu0 %v2119
      %v2508 = vpop.f32.mrb[0].mxu0
      %v2509 = vadd.f32 %v2145, %v2508
      %v2510 = vpop.f32.mrb[0].mxu0
      %2511 = vmatprep.mubr.f32.mxu0 0.0
      %2512 = vmatmul.mubr.f32.gmra.mrb[0].mxu0 %v2120
      %v2513 = vpop.f32.mrb[0].mxu0
      %v2514 = vadd.f32 %v2145, %v2513
      %v2515 = vpop.f32.mrb[0].mxu0
      %2516 = vmatprep.mubr.f32.mxu0 0.0
      %2517 = vmatmul.mubr.f32.gmra.mrb[0].mxu0 %v2121
      %v2518 = vpop.f32.mrb[0].mxu0
      %v2519 = vadd.f32 %v2145, %v2518
      %v2520 = vpop.f32.mrb[0].mxu0
      %2521 = vmatprep.mubr.f32.mxu0 0.0
      %2522 = vmatmul.mubr.f32.gmra.mrb[0].mxu0 %v2122
      %v2523 = vpop.f32.mrb[0].mxu0
      %v2524 = vadd.f32 %v2145, %v2523
      %v2525 = vpop.f32.mrb[0].mxu0
      %2526 = vmatprep.mubr.f32.mxu0 0.0
      %2527 = vmatmul.mubr.f32.gmra.mrb[0].mxu0 %v2123
      %v2528 = vpop.f32.mrb[0].mxu0
      %v2529 = vadd.f32 %v2145, %v2528
      %v2530 = vpop.f32.mrb[0].mxu0
      %2531 = vdwg.mxu0
      %2532 = vadd.xlane.f32.xlu0 %v2214
      %v2533 = vpop.xlane.xlu0 %2532
      %2534 = vadd.xlane.f32.xlu0 %v2219
      %v2535 = vpop.xlane.xlu0 %2534
      %2536 = vadd.xlane.f32.xlu0 %v2224
      %v2537 = vpop.xlane.xlu0 %2536
      %2538 = vadd.xlane.f32.xlu0 %v2229
      %v2539 = vpop.xlane.xlu0 %2538
      %2540 = vadd.xlane.f32.xlu0 %v2234
      %v2541 = vpop.xlane.xlu0 %2540
      %2542 = vadd.xlane.f32.xlu0 %v2239
      %v2543 = vpop.xlane.xlu0 %2542
      %2544 = vadd.xlane.f32.xlu0 %v2244
      %v2545 = vpop.xlane.xlu0 %2544
      %2546 = vadd.xlane.f32.xlu0 %v2249
      %v2547 = vpop.xlane.xlu0 %2546
      %2548 = vadd.xlane.f32.xlu0 %v2254
      %v2549 = vpop.xlane.xlu0 %2548
      %2550 = vadd.xlane.f32.xlu0 %v2259
      %v2551 = vpop.xlane.xlu0 %2550
      %2552 = vadd.xlane.f32.xlu0 %v2264
      %v2553 = vpop.xlane.xlu0 %2552
      %2554 = vadd.xlane.f32.xlu0 %v2269
      %v2555 = vpop.xlane.xlu0 %2554
      %2556 = vadd.xlane.f32.xlu0 %v2274
      %v2557 = vpop.xlane.xlu0 %2556
      %2558 = vadd.xlane.f32.xlu0 %v2279
      %v2559 = vpop.xlane.xlu0 %2558
      %2560 = vadd.xlane.f32.xlu0 %v2284
      %v2561 = vpop.xlane.xlu0 %2560
      %2562 = vadd.xlane.f32.xlu0 %v2289
      %v2563 = vpop.xlane.xlu0 %2562
      %2564 = vadd.xlane.f32.xlu0 %v2294
      %v2565 = vpop.xlane.xlu0 %2564
      %2566 = vadd.xlane.f32.xlu0 %v2299
      %v2567 = vpop.xlane.xlu0 %2566
      %2568 = vadd.xlane.f32.xlu0 %v2304
      %v2569 = vpop.xlane.xlu0 %2568
      %2570 = vadd.xlane.f32.xlu0 %v2309
      %v2571 = vpop.xlane.xlu0 %2570
      %2572 = vadd.xlane.f32.xlu0 %v2314
      %v2573 = vpop.xlane.xlu0 %2572
      %2574 = vadd.xlane.f32.xlu0 %v2319
      %v2575 = vpop.xlane.xlu0 %2574
      %2576 = vadd.xlane.f32.xlu0 %v2324
      %v2577 = vpop.xlane.xlu0 %2576
      %2578 = vadd.xlane.f32.xlu0 %v2329
      %v2579 = vpop.xlane.xlu0 %2578
      %2580 = vadd.xlane.f32.xlu0 %v2334
      %v2581 = vpop.xlane.xlu0 %2580
      %2582 = vadd.xlane.f32.xlu0 %v2339
      %v2583 = vpop.xlane.xlu0 %2582
      %2584 = vadd.xlane.f32.xlu0 %v2344
      %v2585 = vpop.xlane.xlu0 %2584
      %2586 = vadd.xlane.f32.xlu0 %v2349
      %v2587 = vpop.xlane.xlu0 %2586
      %2588 = vadd.xlane.f32.xlu0 %v2354
      %v2589 = vpop.xlane.xlu0 %2588
      %2590 = vadd.xlane.f32.xlu0 %v2359
      %v2591 = vpop.xlane.xlu0 %2590
      %2592 = vadd.xlane.f32.xlu0 %v2364
      %v2593 = vpop.xlane.xlu0 %2592
      %2594 = vadd.xlane.f32.xlu0 %v2369
      %v2595 = vpop.xlane.xlu0 %2594
      %2596 = vadd.xlane.f32.xlu0 %v2374
      %v2597 = vpop.xlane.xlu0 %2596
      %2598 = vadd.xlane.f32.xlu0 %v2379
      %v2599 = vpop.xlane.xlu0 %2598
      %2600 = vadd.xlane.f32.xlu0 %v2384
      %v2601 = vpop.xlane.xlu0 %2600
      %2602 = vadd.xlane.f32.xlu0 %v2389
      %v2603 = vpop.xlane.xlu0 %2602
      %2604 = vadd.xlane.f32.xlu0 %v2394
      %v2605 = vpop.xlane.xlu0 %2604
      %2606 = vadd.xlane.f32.xlu0 %v2399
      %v2607 = vpop.xlane.xlu0 %2606
      %2608 = vadd.xlane.f32.xlu0 %v2404
      %v2609 = vpop.xlane.xlu0 %2608
      %2610 = vadd.xlane.f32.xlu0 %v2409
      %v2611 = vpop.xlane.xlu0 %2610
      %2612 = vadd.xlane.f32.xlu0 %v2414
      %v2613 = vpop.xlane.xlu0 %2612
      %2614 = vadd.xlane.f32.xlu0 %v2419
      %v2615 = vpop.xlane.xlu0 %2614
      %2616 = vadd.xlane.f32.xlu0 %v2424
      %v2617 = vpop.xlane.xlu0 %2616
      %2618 = vadd.xlane.f32.xlu0 %v2429
      %v2619 = vpop.xlane.xlu0 %2618
      %2620 = vadd.xlane.f32.xlu0 %v2434
      %v2621 = vpop.xlane.xlu0 %2620
      %2622 = vadd.xlane.f32.xlu0 %v2439
      %v2623 = vpop.xlane.xlu0 %2622
      %2624 = vadd.xlane.f32.xlu0 %v2444
      %v2625 = vpop.xlane.xlu0 %2624
      %2626 = vadd.xlane.f32.xlu0 %v2449
      %v2627 = vpop.xlane.xlu0 %2626
      %2628 = vadd.xlane.f32.xlu0 %v2454
      %v2629 = vpop.xlane.xlu0 %2628
      %2630 = vadd.xlane.f32.xlu0 %v2459
      %v2631 = vpop.xlane.xlu0 %2630
      %2632 = vadd.xlane.f32.xlu0 %v2464
      %v2633 = vpop.xlane.xlu0 %2632
      %2634 = vadd.xlane.f32.xlu0 %v2469
      %v2635 = vpop.xlane.xlu0 %2634
      %2636 = vadd.xlane.f32.xlu0 %v2474
      %v2637 = vpop.xlane.xlu0 %2636
      %2638 = vadd.xlane.f32.xlu0 %v2479
      %v2639 = vpop.xlane.xlu0 %2638
      %2640 = vadd.xlane.f32.xlu0 %v2484
      %v2641 = vpop.xlane.xlu0 %2640
      %2642 = vadd.xlane.f32.xlu0 %v2489
      %v2643 = vpop.xlane.xlu0 %2642
      %2644 = vadd.xlane.f32.xlu0 %v2494
      %v2645 = vpop.xlane.xlu0 %2644
      %2646 = vadd.xlane.f32.xlu0 %v2499
      %v2647 = vpop.xlane.xlu0 %2646
      %2648 = vadd.xlane.f32.xlu0 %v2504
      %v2649 = vpop.xlane.xlu0 %2648
      %2650 = vadd.xlane.f32.xlu0 %v2509
      %v2651 = vpop.xlane.xlu0 %2650
      %2652 = vadd.xlane.f32.xlu0 %v2514
      %v2653 = vpop.xlane.xlu0 %2652
      %2654 = vadd.xlane.f32.xlu0 %v2519
      %v2655 = vpop.xlane.xlu0 %2654
      %2656 = vadd.xlane.f32.xlu0 %v2524
      %v2657 = vpop.xlane.xlu0 %2656
      %2658 = vadd.xlane.f32.xlu0 %v2529
      %v2659 = vpop.xlane.xlu0 %2658
      %v2660 = vrcp.pop 128.0
      %v2661 = vmul.f32 %v2533, %v2660
      %v2662 = vmul.f32 %v2535, %v2660
      %v2663 = vmul.f32 %v2537, %v2660
      %v2664 = vmul.f32 %v2539, %v2660
      %v2665 = vmul.f32 %v2541, %v2660
      %v2666 = vmul.f32 %v2543, %v2660
      %v2667 = vmul.f32 %v2545, %v2660
      %v2668 = vmul.f32 %v2547, %v2660
      %v2669 = vmul.f32 %v2549, %v2660
      %v2670 = vmul.f32 %v2551, %v2660
      %v2671 = vmul.f32 %v2553, %v2660
      %v2672 = vmul.f32 %v2555, %v2660
      %v2673 = vmul.f32 %v2557, %v2660
      %v2674 = vmul.f32 %v2559, %v2660
      %v2675 = vmul.f32 %v2561, %v2660
      %v2676 = vmul.f32 %v2563, %v2660
      %v2677 = vmul.f32 %v2565, %v2660
      %v2678 = vmul.f32 %v2567, %v2660
      %v2679 = vmul.f32 %v2569, %v2660
      %v2680 = vmul.f32 %v2571, %v2660
      %v2681 = vmul.f32 %v2573, %v2660
      %v2682 = vmul.f32 %v2575, %v2660
      %v2683 = vmul.f32 %v2577, %v2660
      %v2684 = vmul.f32 %v2579, %v2660
      %v2685 = vmul.f32 %v2581, %v2660
      %v2686 = vmul.f32 %v2583, %v2660
      %v2687 = vmul.f32 %v2585, %v2660
      %v2688 = vmul.f32 %v2587, %v2660
      %v2689 = vmul.f32 %v2589, %v2660
      %v2690 = vmul.f32 %v2591, %v2660
      %v2691 = vmul.f32 %v2593, %v2660
      %v2692 = vmul.f32 %v2595, %v2660
      %v2693 = vmul.f32 %v2597, %v2660
      %v2694 = vmul.f32 %v2599, %v2660
      %v2695 = vmul.f32 %v2601, %v2660
      %v2696 = vmul.f32 %v2603, %v2660
      %v2697 = vmul.f32 %v2605, %v2660
      %v2698 = vmul.f32 %v2607, %v2660
      %v2699 = vmul.f32 %v2609, %v2660
      %v2700 = vmul.f32 %v2611, %v2660
      %v2701 = vmul.f32 %v2613, %v2660
      %v2702 = vmul.f32 %v2615, %v2660
      %v2703 = vmul.f32 %v2617, %v2660
      %v2704 = vmul.f32 %v2619, %v2660
      %v2705 = vmul.f32 %v2621, %v2660
      %v2706 = vmul.f32 %v2623, %v2660
      %v2707 = vmul.f32 %v2625, %v2660
      %v2708 = vmul.f32 %v2627, %v2660
      %v2709 = vmul.f32 %v2629, %v2660
      %v2710 = vmul.f32 %v2631, %v2660
      %v2711 = vmul.f32 %v2633, %v2660
      %v2712 = vmul.f32 %v2635, %v2660
      %v2713 = vmul.f32 %v2637, %v2660
      %v2714 = vmul.f32 %v2639, %v2660
      %v2715 = vmul.f32 %v2641, %v2660
      %v2716 = vmul.f32 %v2643, %v2660
      %v2717 = vmul.f32 %v2645, %v2660
      %v2718 = vmul.f32 %v2647, %v2660
      %v2719 = vmul.f32 %v2649, %v2660
      %v2720 = vmul.f32 %v2651, %v2660
      %v2721 = vmul.f32 %v2653, %v2660
      %v2722 = vmul.f32 %v2655, %v2660
      %v2723 = vmul.f32 %v2657, %v2660
      %v2724 = vmul.f32 %v2659, %v2660
      %v2725 = vsub.f32 %v2214, %v2661
      %v2726 = vsub.f32 %v2219, %v2662
      %v2727 = vsub.f32 %v2224, %v2663
      %v2728 = vsub.f32 %v2229, %v2664
      %v2729 = vsub.f32 %v2234, %v2665
      %v2730 = vsub.f32 %v2239, %v2666
      %v2731 = vsub.f32 %v2244, %v2667
      %v2732 = vsub.f32 %v2249, %v2668
      %v2733 = vsub.f32 %v2254, %v2669
      %v2734 = vsub.f32 %v2259, %v2670
      %v2735 = vsub.f32 %v2264, %v2671
      %v2736 = vsub.f32 %v2269, %v2672
      %v2737 = vsub.f32 %v2274, %v2673
      %v2738 = vsub.f32 %v2279, %v2674
      %v2739 = vsub.f32 %v2284, %v2675
      %v2740 = vsub.f32 %v2289, %v2676
      %v2741 = vsub.f32 %v2294, %v2677
      %v2742 = vsub.f32 %v2299, %v2678
      %v2743 = vsub.f32 %v2304, %v2679
      %v2744 = vsub.f32 %v2309, %v2680
      %v2745 = vsub.f32 %v2314, %v2681
      %v2746 = vsub.f32 %v2319, %v2682
      %v2747 = vsub.f32 %v2324, %v2683
      %v2748 = vsub.f32 %v2329, %v2684
      %v2749 = vsub.f32 %v2334, %v2685
      %v2750 = vsub.f32 %v2339, %v2686
      %v2751 = vsub.f32 %v2344, %v2687
      %v2752 = vsub.f32 %v2349, %v2688
      %v2753 = vsub.f32 %v2354, %v2689
      %v2754 = vsub.f32 %v2359, %v2690
      %v2755 = vsub.f32 %v2364, %v2691
      %v2756 = vsub.f32 %v2369, %v2692
      %v2757 = vsub.f32 %v2374, %v2693
      %v2758 = vsub.f32 %v2379, %v2694
      %v2759 = vsub.f32 %v2384, %v2695
      %v2760 = vsub.f32 %v2389, %v2696
      %v2761 = vsub.f32 %v2394, %v2697
      %v2762 = vsub.f32 %v2399, %v2698
      %v2763 = vsub.f32 %v2404, %v2699
      %v2764 = vsub.f32 %v2409, %v2700
      %v2765 = vsub.f32 %v2414, %v2701
      %v2766 = vsub.f32 %v2419, %v2702
      %v2767 = vsub.f32 %v2424, %v2703
      %v2768 = vsub.f32 %v2429, %v2704
      %v2769 = vsub.f32 %v2434, %v2705
      %v2770 = vsub.f32 %v2439, %v2706
      %v2771 = vsub.f32 %v2444, %v2707
      %v2772 = vsub.f32 %v2449, %v2708
      %v2773 = vsub.f32 %v2454, %v2709
      %v2774 = vsub.f32 %v2459, %v2710
      %v2775 = vsub.f32 %v2464, %v2711
      %v2776 = vsub.f32 %v2469, %v2712
      %v2777 = vsub.f32 %v2474, %v2713
      %v2778 = vsub.f32 %v2479, %v2714
      %v2779 = vsub.f32 %v2484, %v2715
      %v2780 = vsub.f32 %v2489, %v2716
      %v2781 = vsub.f32 %v2494, %v2717
      %v2782 = vsub.f32 %v2499, %v2718
      %v2783 = vsub.f32 %v2504, %v2719
      %v2784 = vsub.f32 %v2509, %v2720
      %v2785 = vsub.f32 %v2514, %v2721
      %v2786 = vsub.f32 %v2519, %v2722
      %v2787 = vsub.f32 %v2524, %v2723
      %v2788 = vsub.f32 %v2529, %v2724
      %v2789 = vmul.f32 %v2725, %v2725
      %v2790 = vmul.f32 %v2726, %v2726
      %v2791 = vmul.f32 %v2727, %v2727
      %v2792 = vmul.f32 %v2728, %v2728
      %v2793 = vmul.f32 %v2729, %v2729
      %v2794 = vmul.f32 %v2730, %v2730
      %v2795 = vmul.f32 %v2731, %v2731
      %v2796 = vmul.f32 %v2732, %v2732
      %v2797 = vmul.f32 %v2733, %v2733
      %v2798 = vmul.f32 %v2734, %v2734
      %v2799 = vmul.f32 %v2735, %v2735
      %v2800 = vmul.f32 %v2736, %v2736
      %v2801 = vmul.f32 %v2737, %v2737
      %v2802 = vmul.f32 %v2738, %v2738
      %v2803 = vmul.f32 %v2739, %v2739
      %v2804 = vmul.f32 %v2740, %v2740
      %v2805 = vmul.f32 %v2741, %v2741
      %v2806 = vmul.f32 %v2742, %v2742
      %v2807 = vmul.f32 %v2743, %v2743
      %v2808 = vmul.f32 %v2744, %v2744
      %v2809 = vmul.f32 %v2745, %v2745
      %v2810 = vmul.f32 %v2746, %v2746
      %v2811 = vmul.f32 %v2747, %v2747
      %v2812 = vmul.f32 %v2748, %v2748
      %v2813 = vmul.f32 %v2749, %v2749
      %v2814 = vmul.f32 %v2750, %v2750
      %v2815 = vmul.f32 %v2751, %v2751
      %v2816 = vmul.f32 %v2752, %v2752
      %v2817 = vmul.f32 %v2753, %v2753
      %v2818 = vmul.f32 %v2754, %v2754
      %v2819 = vmul.f32 %v2755, %v2755
      %v2820 = vmul.f32 %v2756, %v2756
      %v2821 = vmul.f32 %v2757, %v2757
      %v2822 = vmul.f32 %v2758, %v2758
      %v2823 = vmul.f32 %v2759, %v2759
      %v2824 = vmul.f32 %v2760, %v2760
      %v2825 = vmul.f32 %v2761, %v2761
      %v2826 = vmul.f32 %v2762, %v2762
      %v2827 = vmul.f32 %v2763, %v2763
      %v2828 = vmul.f32 %v2764, %v2764
      %v2829 = vmul.f32 %v2765, %v2765
      %v2830 = vmul.f32 %v2766, %v2766
      %v2831 = vmul.f32 %v2767, %v2767
      %v2832 = vmul.f32 %v2768, %v2768
      %v2833 = vmul.f32 %v2769, %v2769
      %v2834 = vmul.f32 %v2770, %v2770
      %v2835 = vmul.f32 %v2771, %v2771
      %v2836 = vmul.f32 %v2772, %v2772
      %v2837 = vmul.f32 %v2773, %v2773
      %v2838 = vmul.f32 %v2774, %v2774
      %v2839 = vmul.f32 %v2775, %v2775
      %v2840 = vmul.f32 %v2776, %v2776
      %v2841 = vmul.f32 %v2777, %v2777
      %v2842 = vmul.f32 %v2778, %v2778
      %v2843 = vmul.f32 %v2779, %v2779
      %v2844 = vmul.f32 %v2780, %v2780
      %v2845 = vmul.f32 %v2781, %v2781
      %v2846 = vmul.f32 %v2782, %v2782
      %v2847 = vmul.f32 %v2783, %v2783
      %v2848 = vmul.f32 %v2784, %v2784
      %v2849 = vmul.f32 %v2785, %v2785
      %v2850 = vmul.f32 %v2786, %v2786
      %v2851 = vmul.f32 %v2787, %v2787
      %v2852 = vmul.f32 %v2788, %v2788
      %2853 = vadd.xlane.f32.xlu0 %v2789
      %v2854 = vpop.xlane.xlu0 %2853
      %2855 = vadd.xlane.f32.xlu0 %v2790
      %v2856 = vpop.xlane.xlu0 %2855
      %2857 = vadd.xlane.f32.xlu0 %v2791
      %v2858 = vpop.xlane.xlu0 %2857
      %2859 = vadd.xlane.f32.xlu0 %v2792
      %v2860 = vpop.xlane.xlu0 %2859
      %2861 = vadd.xlane.f32.xlu0 %v2793
      %v2862 = vpop.xlane.xlu0 %2861
      %2863 = vadd.xlane.f32.xlu0 %v2794
      %v2864 = vpop.xlane.xlu0 %2863
      %2865 = vadd.xlane.f32.xlu0 %v2795
      %v2866 = vpop.xlane.xlu0 %2865
      %2867 = vadd.xlane.f32.xlu0 %v2796
      %v2868 = vpop.xlane.xlu0 %2867
      %2869 = vadd.xlane.f32.xlu0 %v2797
      %v2870 = vpop.xlane.xlu0 %2869
      %2871 = vadd.xlane.f32.xlu0 %v2798
      %v2872 = vpop.xlane.xlu0 %2871
      %2873 = vadd.xlane.f32.xlu0 %v2799
      %v2874 = vpop.xlane.xlu0 %2873
      %2875 = vadd.xlane.f32.xlu0 %v2800
      %v2876 = vpop.xlane.xlu0 %2875
      %2877 = vadd.xlane.f32.xlu0 %v2801
      %v2878 = vpop.xlane.xlu0 %2877
      %2879 = vadd.xlane.f32.xlu0 %v2802
      %v2880 = vpop.xlane.xlu0 %2879
      %2881 = vadd.xlane.f32.xlu0 %v2803
      %v2882 = vpop.xlane.xlu0 %2881
      %2883 = vadd.xlane.f32.xlu0 %v2804
      %v2884 = vpop.xlane.xlu0 %2883
      %2885 = vadd.xlane.f32.xlu0 %v2805
      %v2886 = vpop.xlane.xlu0 %2885
      %2887 = vadd.xlane.f32.xlu0 %v2806
      %v2888 = vpop.xlane.xlu0 %2887
      %2889 = vadd.xlane.f32.xlu0 %v2807
      %v2890 = vpop.xlane.xlu0 %2889
      %2891 = vadd.xlane.f32.xlu0 %v2808
      %v2892 = vpop.xlane.xlu0 %2891
      %2893 = vadd.xlane.f32.xlu0 %v2809
      %v2894 = vpop.xlane.xlu0 %2893
      %2895 = vadd.xlane.f32.xlu0 %v2810
      %v2896 = vpop.xlane.xlu0 %2895
      %2897 = vadd.xlane.f32.xlu0 %v2811
      %v2898 = vpop.xlane.xlu0 %2897
      %2899 = vadd.xlane.f32.xlu0 %v2812
      %v2900 = vpop.xlane.xlu0 %2899
      %2901 = vadd.xlane.f32.xlu0 %v2813
      %v2902 = vpop.xlane.xlu0 %2901
      %2903 = vadd.xlane.f32.xlu0 %v2814
      %v2904 = vpop.xlane.xlu0 %2903
      %2905 = vadd.xlane.f32.xlu0 %v2815
      %v2906 = vpop.xlane.xlu0 %2905
      %2907 = vadd.xlane.f32.xlu0 %v2816
      %v2908 = vpop.xlane.xlu0 %2907
      %2909 = vadd.xlane.f32.xlu0 %v2817
      %v2910 = vpop.xlane.xlu0 %2909
      %2911 = vadd.xlane.f32.xlu0 %v2818
      %v2912 = vpop.xlane.xlu0 %2911
      %2913 = vadd.xlane.f32.xlu0 %v2819
      %v2914 = vpop.xlane.xlu0 %2913
      %2915 = vadd.xlane.f32.xlu0 %v2820
      %v2916 = vpop.xlane.xlu0 %2915
      %2917 = vadd.xlane.f32.xlu0 %v2821
      %v2918 = vpop.xlane.xlu0 %2917
      %2919 = vadd.xlane.f32.xlu0 %v2822
      %v2920 = vpop.xlane.xlu0 %2919
      %2921 = vadd.xlane.f32.xlu0 %v2823
      %v2922 = vpop.xlane.xlu0 %2921
      %2923 = vadd.xlane.f32.xlu0 %v2824
      %v2924 = vpop.xlane.xlu0 %2923
      %2925 = vadd.xlane.f32.xlu0 %v2825
      %v2926 = vpop.xlane.xlu0 %2925
      %2927 = vadd.xlane.f32.xlu0 %v2826
      %v2928 = vpop.xlane.xlu0 %2927
      %2929 = vadd.xlane.f32.xlu0 %v2827
      %v2930 = vpop.xlane.xlu0 %2929
      %2931 = vadd.xlane.f32.xlu0 %v2828
      %v2932 = vpop.xlane.xlu0 %2931
      %2933 = vadd.xlane.f32.xlu0 %v2829
      %v2934 = vpop.xlane.xlu0 %2933
      %2935 = vadd.xlane.f32.xlu0 %v2830
      %v2936 = vpop.xlane.xlu0 %2935
      %2937 = vadd.xlane.f32.xlu0 %v2831
      %v2938 = vpop.xlane.xlu0 %2937
      %2939 = vadd.xlane.f32.xlu0 %v2832
      %v2940 = vpop.xlane.xlu0 %2939
      %2941 = vadd.xlane.f32.xlu0 %v2833
      %v2942 = vpop.xlane.xlu0 %2941
      %2943 = vadd.xlane.f32.xlu0 %v2834
      %v2944 = vpop.xlane.xlu0 %2943
      %2945 = vadd.xlane.f32.xlu0 %v2835
      %v2946 = vpop.xlane.xlu0 %2945
      %2947 = vadd.xlane.f32.xlu0 %v2836
      %v2948 = vpop.xlane.xlu0 %2947
      %2949 = vadd.xlane.f32.xlu0 %v2837
      %v2950 = vpop.xlane.xlu0 %2949
      %2951 = vadd.xlane.f32.xlu0 %v2838
      %v2952 = vpop.xlane.xlu0 %2951
      %2953 = vadd.xlane.f32.xlu0 %v2839
      %v2954 = vpop.xlane.xlu0 %2953
      %2955 = vadd.xlane.f32.xlu0 %v2840
      %v2956 = vpop.xlane.xlu0 %2955
      %2957 = vadd.xlane.f32.xlu0 %v2841
      %v2958 = vpop.xlane.xlu0 %2957
      %2959 = vadd.xlane.f32.xlu0 %v2842
      %v2960 = vpop.xlane.xlu0 %2959
      %2961 = vadd.xlane.f32.xlu0 %v2843
      %v2962 = vpop.xlane.xlu0 %2961
      %2963 = vadd.xlane.f32.xlu0 %v2844
      %v2964 = vpop.xlane.xlu0 %2963
      %2965 = vadd.xlane.f32.xlu0 %v2845
      %v2966 = vpop.xlane.xlu0 %2965
      %2967 = vadd.xlane.f32.xlu0 %v2846
      %v2968 = vpop.xlane.xlu0 %2967
      %2969 = vadd.xlane.f32.xlu0 %v2847
      %v2970 = vpop.xlane.xlu0 %2969
      %2971 = vadd.xlane.f32.xlu0 %v2848
      %v2972 = vpop.xlane.xlu0 %2971
      %2973 = vadd.xlane.f32.xlu0 %v2849
      %v2974 = vpop.xlane.xlu0 %2973
      %2975 = vadd.xlane.f32.xlu0 %v2850
      %v2976 = vpop.xlane.xlu0 %2975
      %2977 = vadd.xlane.f32.xlu0 %v2851
      %v2978 = vpop.xlane.xlu0 %2977
      %2979 = vadd.xlane.f32.xlu0 %v2852
      %v2980 = vpop.xlane.xlu0 %2979
      %v2981 = vmul.f32 %v2854, %v2660
      %v2982 = vmul.f32 %v2856, %v2660
      %v2983 = vmul.f32 %v2858, %v2660
      %v2984 = vmul.f32 %v2860, %v2660
      %v2985 = vmul.f32 %v2862, %v2660
      %v2986 = vmul.f32 %v2864, %v2660
      %v2987 = vmul.f32 %v2866, %v2660
      %v2988 = vmul.f32 %v2868, %v2660
      %v2989 = vmul.f32 %v2870, %v2660
      %v2990 = vmul.f32 %v2872, %v2660
      %v2991 = vmul.f32 %v2874, %v2660
      %v2992 = vmul.f32 %v2876, %v2660
      %v2993 = vmul.f32 %v2878, %v2660
      %v2994 = vmul.f32 %v2880, %v2660
      %v2995 = vmul.f32 %v2882, %v2660
      %v2996 = vmul.f32 %v2884, %v2660
      %v2997 = vmul.f32 %v2886, %v2660
      %v2998 = vmul.f32 %v2888, %v2660
      %v2999 = vmul.f32 %v2890, %v2660
      %v3000 = vmul.f32 %v2892, %v2660
      %v3001 = vmul.f32 %v2894, %v2660
      %v3002 = vmul.f32 %v2896, %v2660
      %v3003 = vmul.f32 %v2898, %v2660
      %v3004 = vmul.f32 %v2900, %v2660
      %v3005 = vmul.f32 %v2902, %v2660
      %v3006 = vmul.f32 %v2904, %v2660
      %v3007 = vmul.f32 %v2906, %v2660
      %v3008 = vmul.f32 %v2908, %v2660
      %v3009 = vmul.f32 %v2910, %v2660
      %v3010 = vmul.f32 %v2912, %v2660
      %v3011 = vmul.f32 %v2914, %v2660
      %v3012 = vmul.f32 %v2916, %v2660
      %v3013 = vmul.f32 %v2918, %v2660
      %v3014 = vmul.f32 %v2920, %v2660
      %v3015 = vmul.f32 %v2922, %v2660
      %v3016 = vmul.f32 %v2924, %v2660
      %v3017 = vmul.f32 %v2926, %v2660
      %v3018 = vmul.f32 %v2928, %v2660
      %v3019 = vmul.f32 %v2930, %v2660
      %v3020 = vmul.f32 %v2932, %v2660
      %v3021 = vmul.f32 %v2934, %v2660
      %v3022 = vmul.f32 %v2936, %v2660
      %v3023 = vmul.f32 %v2938, %v2660
      %v3024 = vmul.f32 %v2940, %v2660
      %v3025 = vmul.f32 %v2942, %v2660
      %v3026 = vmul.f32 %v2944, %v2660
      %v3027 = vmul.f32 %v2946, %v2660
      %v3028 = vmul.f32 %v2948, %v2660
      %v3029 = vmul.f32 %v2950, %v2660
      %v3030 = vmul.f32 %v2952, %v2660
      %v3031 = vmul.f32 %v2954, %v2660
      %v3032 = vmul.f32 %v2956, %v2660
      %v3033 = vmul.f32 %v2958, %v2660
      %v3034 = vmul.f32 %v2960, %v2660
      %v3035 = vmul.f32 %v2962, %v2660
      %v3036 = vmul.f32 %v2964, %v2660
      %v3037 = vmul.f32 %v2966, %v2660
      %v3038 = vmul.f32 %v2968, %v2660
      %v3039 = vmul.f32 %v2970, %v2660
      %v3040 = vmul.f32 %v2972, %v2660
      %v3041 = vmul.f32 %v2974, %v2660
      %v3042 = vmul.f32 %v2976, %v2660
      %v3043 = vmul.f32 %v2978, %v2660
      %v3044 = vmul.f32 %v2980, %v2660
      %v3045 = vadd.f32 %v2981, 1e-05
      %v3046 = vadd.f32 %v2982, 1e-05
      %v3047 = vadd.f32 %v2983, 1e-05
      %v3048 = vadd.f32 %v2984, 1e-05
      %v3049 = vadd.f32 %v2985, 1e-05
      %v3050 = vadd.f32 %v2986, 1e-05
      %v3051 = vadd.f32 %v2987, 1e-05
      %v3052 = vadd.f32 %v2988, 1e-05
      %v3053 = vadd.f32 %v2989, 1e-05
      %v3054 = vadd.f32 %v2990, 1e-05
      %v3055 = vadd.f32 %v2991, 1e-05
      %v3056 = vadd.f32 %v2992, 1e-05
      %v3057 = vadd.f32 %v2993, 1e-05
      %v3058 = vadd.f32 %v2994, 1e-05
      %v3059 = vadd.f32 %v2995, 1e-05
      %v3060 = vadd.f32 %v2996, 1e-05
      %v3061 = vadd.f32 %v2997, 1e-05
      %v3062 = vadd.f32 %v2998, 1e-05
      %v3063 = vadd.f32 %v2999, 1e-05
      %v3064 = vadd.f32 %v3000, 1e-05
      %v3065 = vadd.f32 %v3001, 1e-05
      %v3066 = vadd.f32 %v3002, 1e-05
      %v3067 = vadd.f32 %v3003, 1e-05
      %v3068 = vadd.f32 %v3004, 1e-05
      %v3069 = vadd.f32 %v3005, 1e-05
      %v3070 = vadd.f32 %v3006, 1e-05
      %v3071 = vadd.f32 %v3007, 1e-05
      %v3072 = vadd.f32 %v3008, 1e-05
      %v3073 = vadd.f32 %v3009, 1e-05
      %v3074 = vadd.f32 %v3010, 1e-05
      %v3075 = vadd.f32 %v3011, 1e-05
      %v3076 = vadd.f32 %v3012, 1e-05
      %v3077 = vadd.f32 %v3013, 1e-05
      %v3078 = vadd.f32 %v3014, 1e-05
      %v3079 = vadd.f32 %v3015, 1e-05
      %v3080 = vadd.f32 %v3016, 1e-05
      %v3081 = vadd.f32 %v3017, 1e-05
      %v3082 = vadd.f32 %v3018, 1e-05
      %v3083 = vadd.f32 %v3019, 1e-05
      %v3084 = vadd.f32 %v3020, 1e-05
      %v3085 = vadd.f32 %v3021, 1e-05
      %v3086 = vadd.f32 %v3022, 1e-05
      %v3087 = vadd.f32 %v3023, 1e-05
      %v3088 = vadd.f32 %v3024, 1e-05
      %v3089 = vadd.f32 %v3025, 1e-05
      %v3090 = vadd.f32 %v3026, 1e-05
      %v3091 = vadd.f32 %v3027, 1e-05
      %v3092 = vadd.f32 %v3028, 1e-05
      %v3093 = vadd.f32 %v3029, 1e-05
      %v3094 = vadd.f32 %v3030, 1e-05
      %v3095 = vadd.f32 %v3031, 1e-05
      %v3096 = vadd.f32 %v3032, 1e-05
      %v3097 = vadd.f32 %v3033, 1e-05
      %v3098 = vadd.f32 %v3034, 1e-05
      %v3099 = vadd.f32 %v3035, 1e-05
      %v3100 = vadd.f32 %v3036, 1e-05
      %v3101 = vadd.f32 %v3037, 1e-05
      %v3102 = vadd.f32 %v3038, 1e-05
      %v3103 = vadd.f32 %v3039, 1e-05
      %v3104 = vadd.f32 %v3040, 1e-05
      %v3105 = vadd.f32 %v3041, 1e-05
      %v3106 = vadd.f32 %v3042, 1e-05
      %v3107 = vadd.f32 %v3043, 1e-05
      %v3108 = vadd.f32 %v3044, 1e-05
      %v3109 = vrsqrt.pop %v3045
      %v3110 = vrsqrt.pop %v3046
      %v3111 = vrsqrt.pop %v3047
      %v3112 = vrsqrt.pop %v3048
      %v3113 = vrsqrt.pop %v3049
      %v3114 = vrsqrt.pop %v3050
      %v3115 = vrsqrt.pop %v3051
      %v3116 = vrsqrt.pop %v3052
      %v3117 = vrsqrt.pop %v3053
      %v3118 = vrsqrt.pop %v3054
      %v3119 = vrsqrt.pop %v3055
      %v3120 = vrsqrt.pop %v3056
      %v3121 = vrsqrt.pop %v3057
      %v3122 = vrsqrt.pop %v3058
      %v3123 = vrsqrt.pop %v3059
      %v3124 = vrsqrt.pop %v3060
      %v3125 = vrsqrt.pop %v3061
      %v3126 = vrsqrt.pop %v3062
      %v3127 = vrsqrt.pop %v3063
      %v3128 = vrsqrt.pop %v3064
      %v3129 = vrsqrt.pop %v3065
      %v3130 = vrsqrt.pop %v3066
      %v3131 = vrsqrt.pop %v3067
      %v3132 = vrsqrt.pop %v3068
      %v3133 = vrsqrt.pop %v3069
      %v3134 = vrsqrt.pop %v3070
      %v3135 = vrsqrt.pop %v3071
      %v3136 = vrsqrt.pop %v3072
      %v3137 = vrsqrt.pop %v3073
      %v3138 = vrsqrt.pop %v3074
      %v3139 = vrsqrt.pop %v3075
      %v3140 = vrsqrt.pop %v3076
      %v3141 = vrsqrt.pop %v3077
      %v3142 = vrsqrt.pop %v3078
      %v3143 = vrsqrt.pop %v3079
      %v3144 = vrsqrt.pop %v3080
      %v3145 = vrsqrt.pop %v3081
      %v3146 = vrsqrt.pop %v3082
      %v3147 = vrsqrt.pop %v3083
      %v3148 = vrsqrt.pop %v3084
      %v3149 = vrsqrt.pop %v3085
      %v3150 = vrsqrt.pop %v3086
      %v3151 = vrsqrt.pop %v3087
      %v3152 = vrsqrt.pop %v3088
      %v3153 = vrsqrt.pop %v3089
      %v3154 = vrsqrt.pop %v3090
      %v3155 = vrsqrt.pop %v3091
      %v3156 = vrsqrt.pop %v3092
      %v3157 = vrsqrt.pop %v3093
      %v3158 = vrsqrt.pop %v3094
      %v3159 = vrsqrt.pop %v3095
      %v3160 = vrsqrt.pop %v3096
      %v3161 = vrsqrt.pop %v3097
      %v3162 = vrsqrt.pop %v3098
      %v3163 = vrsqrt.pop %v3099
      %v3164 = vrsqrt.pop %v3100
      %v3165 = vrsqrt.pop %v3101
      %v3166 = vrsqrt.pop %v3102
      %v3167 = vrsqrt.pop %v3103
      %v3168 = vrsqrt.pop %v3104
      %v3169 = vrsqrt.pop %v3105
      %v3170 = vrsqrt.pop %v3106
      %v3171 = vrsqrt.pop %v3107
      %v3172 = vrsqrt.pop %v3108
      %v3173 = vmul.f32 %v2725, %v3109
      %v3174 = vmul.f32 %v2726, %v3110
      %v3175 = vmul.f32 %v2727, %v3111
      %v3176 = vmul.f32 %v2728, %v3112
      %v3177 = vmul.f32 %v2729, %v3113
      %v3178 = vmul.f32 %v2730, %v3114
      %v3179 = vmul.f32 %v2731, %v3115
      %v3180 = vmul.f32 %v2732, %v3116
      %v3181 = vmul.f32 %v2733, %v3117
      %v3182 = vmul.f32 %v2734, %v3118
      %v3183 = vmul.f32 %v2735, %v3119
      %v3184 = vmul.f32 %v2736, %v3120
      %v3185 = vmul.f32 %v2737, %v3121
      %v3186 = vmul.f32 %v2738, %v3122
      %v3187 = vmul.f32 %v2739, %v3123
      %v3188 = vmul.f32 %v2740, %v3124
      %v3189 = vmul.f32 %v2741, %v3125
      %v3190 = vmul.f32 %v2742, %v3126
      %v3191 = vmul.f32 %v2743, %v3127
      %v3192 = vmul.f32 %v2744, %v3128
      %v3193 = vmul.f32 %v2745, %v3129
      %v3194 = vmul.f32 %v2746, %v3130
      %v3195 = vmul.f32 %v2747, %v3131
      %v3196 = vmul.f32 %v2748, %v3132
      %v3197 = vmul.f32 %v2749, %v3133
      %v3198 = vmul.f32 %v2750, %v3134
      %v3199 = vmul.f32 %v2751, %v3135
      %v3200 = vmul.f32 %v2752, %v3136
      %v3201 = vmul.f32 %v2753, %v3137
      %v3202 = vmul.f32 %v2754, %v3138
      %v3203 = vmul.f32 %v2755, %v3139
      %v3204 = vmul.f32 %v2756, %v3140
      %v3205 = vmul.f32 %v2757, %v3141
      %v3206 = vmul.f32 %v2758, %v3142
      %v3207 = vmul.f32 %v2759, %v3143
      %v3208 = vmul.f32 %v2760, %v3144
      %v3209 = vmul.f32 %v2761, %v3145
      %v3210 = vmul.f32 %v2762, %v3146
      %v3211 = vmul.f32 %v2763, %v3147
      %v3212 = vmul.f32 %v2764, %v3148
      %v3213 = vmul.f32 %v2765, %v3149
      %v3214 = vmul.f32 %v2766, %v3150
      %v3215 = vmul.f32 %v2767, %v3151
      %v3216 = vmul.f32 %v2768, %v3152
      %v3217 = vmul.f32 %v2769, %v3153
      %v3218 = vmul.f32 %v2770, %v3154
      %v3219 = vmul.f32 %v2771, %v3155
      %v3220 = vmul.f32 %v2772, %v3156
      %v3221 = vmul.f32 %v2773, %v3157
      %v3222 = vmul.f32 %v2774, %v3158
      %v3223 = vmul.f32 %v2775, %v3159
      %v3224 = vmul.f32 %v2776, %v3160
      %v3225 = vmul.f32 %v2777, %v3161
      %v3226 = vmul.f32 %v2778, %v3162
      %v3227 = vmul.f32 %v2779, %v3163
      %v3228 = vmul.f32 %v2780, %v3164
      %v3229 = vmul.f32 %v2781, %v3165
      %v3230 = vmul.f32 %v2782, %v3166
      %v3231 = vmul.f32 %v2783, %v3167
      %v3232 = vmul.f32 %v2784, %v3168
      %v3233 = vmul.f32 %v2785, %v3169
      %v3234 = vmul.f32 %v2786, %v3170
      %v3235 = vmul.f32 %v2787, %v3171
      %v3236 = vmul.f32 %v2788, %v3172
      %v3237 = vld [vmem:[%s7] sm:$0x1]
      %v3239 = vlaneseq
      %v3240 = vshrl.u32 %v3239, 7
      %v3241 = vsub.s32 0, %v3240
      %v3242 = vrot.slane %v3237, %v3241
      %v3244 = vmul.f32 %v3173, %v3242
      %v3245 = vmul.f32 %v3174, %v3242
      %v3246 = vmul.f32 %v3175, %v3242
      %v3247 = vmul.f32 %v3176, %v3242
      %v3248 = vmul.f32 %v3177, %v3242
      %v3249 = vmul.f32 %v3178, %v3242
      %v3250 = vmul.f32 %v3179, %v3242
      %v3251 = vmul.f32 %v3180, %v3242
      %v3252 = vmul.f32 %v3181, %v3242
      %v3253 = vmul.f32 %v3182, %v3242
      %v3254 = vmul.f32 %v3183, %v3242
      %v3255 = vmul.f32 %v3184, %v3242
      %v3256 = vmul.f32 %v3185, %v3242
      %v3257 = vmul.f32 %v3186, %v3242
      %v3258 = vmul.f32 %v3187, %v3242
      %v3259 = vmul.f32 %v3188, %v3242
      %v3260 = vmul.f32 %v3189, %v3242
      %v3261 = vmul.f32 %v3190, %v3242
      %v3262 = vmul.f32 %v3191, %v3242
      %v3263 = vmul.f32 %v3192, %v3242
      %v3264 = vmul.f32 %v3193, %v3242
      %v3265 = vmul.f32 %v3194, %v3242
      %v3266 = vmul.f32 %v3195, %v3242
      %v3267 = vmul.f32 %v3196, %v3242
      %v3268 = vmul.f32 %v3197, %v3242
      %v3269 = vmul.f32 %v3198, %v3242
      %v3270 = vmul.f32 %v3199, %v3242
      %v3271 = vmul.f32 %v3200, %v3242
      %v3272 = vmul.f32 %v3201, %v3242
      %v3273 = vmul.f32 %v3202, %v3242
      %v3274 = vmul.f32 %v3203, %v3242
      %v3275 = vmul.f32 %v3204, %v3242
      %v3276 = vmul.f32 %v3205, %v3242
      %v3277 = vmul.f32 %v3206, %v3242
      %v3278 = vmul.f32 %v3207, %v3242
      %v3279 = vmul.f32 %v3208, %v3242
      %v3280 = vmul.f32 %v3209, %v3242
      %v3281 = vmul.f32 %v3210, %v3242
      %v3282 = vmul.f32 %v3211, %v3242
      %v3283 = vmul.f32 %v3212, %v3242
      %v3284 = vmul.f32 %v3213, %v3242
      %v3285 = vmul.f32 %v3214, %v3242
      %v3286 = vmul.f32 %v3215, %v3242
      %v3287 = vmul.f32 %v3216, %v3242
      %v3288 = vmul.f32 %v3217, %v3242
      %v3289 = vmul.f32 %v3218, %v3242
      %v3290 = vmul.f32 %v3219, %v3242
      %v3291 = vmul.f32 %v3220, %v3242
      %v3292 = vmul.f32 %v3221, %v3242
      %v3293 = vmul.f32 %v3222, %v3242
      %v3294 = vmul.f32 %v3223, %v3242
      %v3295 = vmul.f32 %v3224, %v3242
      %v3296 = vmul.f32 %v3225, %v3242
      %v3297 = vmul.f32 %v3226, %v3242
      %v3298 = vmul.f32 %v3227, %v3242
      %v3299 = vmul.f32 %v3228, %v3242
      %v3300 = vmul.f32 %v3229, %v3242
      %v3301 = vmul.f32 %v3230, %v3242
      %v3302 = vmul.f32 %v3231, %v3242
      %v3303 = vmul.f32 %v3232, %v3242
      %v3304 = vmul.f32 %v3233, %v3242
      %v3305 = vmul.f32 %v3234, %v3242
      %v3306 = vmul.f32 %v3235, %v3242
      %v3307 = vmul.f32 %v3236, %v3242
      %v3308 = vld [vmem:[%s8] sm:$0x1]
      %v3310 = vlaneseq
      %v3311 = vshrl.u32 %v3310, 7
      %v3312 = vsub.s32 0, %v3311
      %v3313 = vrot.slane %v3308, %v3312
      %v3315 = vadd.f32 %v3244, %v3313
      %v3316 = vadd.f32 %v3245, %v3313
      %v3317 = vadd.f32 %v3246, %v3313
      %v3318 = vadd.f32 %v3247, %v3313
      %v3319 = vadd.f32 %v3248, %v3313
      %v3320 = vadd.f32 %v3249, %v3313
      %v3321 = vadd.f32 %v3250, %v3313
      %v3322 = vadd.f32 %v3251, %v3313
      %v3323 = vadd.f32 %v3252, %v3313
      %v3324 = vadd.f32 %v3253, %v3313
      %v3325 = vadd.f32 %v3254, %v3313
      %v3326 = vadd.f32 %v3255, %v3313
      %v3327 = vadd.f32 %v3256, %v3313
      %v3328 = vadd.f32 %v3257, %v3313
      %v3329 = vadd.f32 %v3258, %v3313
      %v3330 = vadd.f32 %v3259, %v3313
      %v3331 = vadd.f32 %v3260, %v3313
      %v3332 = vadd.f32 %v3261, %v3313
      %v3333 = vadd.f32 %v3262, %v3313
      %v3334 = vadd.f32 %v3263, %v3313
      %v3335 = vadd.f32 %v3264, %v3313
      %v3336 = vadd.f32 %v3265, %v3313
      %v3337 = vadd.f32 %v3266, %v3313
      %v3338 = vadd.f32 %v3267, %v3313
      %v3339 = vadd.f32 %v3268, %v3313
      %v3340 = vadd.f32 %v3269, %v3313
      %v3341 = vadd.f32 %v3270, %v3313
      %v3342 = vadd.f32 %v3271, %v3313
      %v3343 = vadd.f32 %v3272, %v3313
      %v3344 = vadd.f32 %v3273, %v3313
      %v3345 = vadd.f32 %v3274, %v3313
      %v3346 = vadd.f32 %v3275, %v3313
      %v3347 = vadd.f32 %v3276, %v3313
      %v3348 = vadd.f32 %v3277, %v3313
      %v3349 = vadd.f32 %v3278, %v3313
      %v3350 = vadd.f32 %v3279, %v3313
      %v3351 = vadd.f32 %v3280, %v3313
      %v3352 = vadd.f32 %v3281, %v3313
      %v3353 = vadd.f32 %v3282, %v3313
      %v3354 = vadd.f32 %v3283, %v3313
      %v3355 = vadd.f32 %v3284, %v3313
      %v3356 = vadd.f32 %v3285, %v3313
      %v3357 = vadd.f32 %v3286, %v3313
      %v3358 = vadd.f32 %v3287, %v3313
      %v3359 = vadd.f32 %v3288, %v3313
      %v3360 = vadd.f32 %v3289, %v3313
      %v3361 = vadd.f32 %v3290, %v3313
      %v3362 = vadd.f32 %v3291, %v3313
      %v3363 = vadd.f32 %v3292, %v3313
      %v3364 = vadd.f32 %v3293, %v3313
      %v3365 = vadd.f32 %v3294, %v3313
      %v3366 = vadd.f32 %v3295, %v3313
      %v3367 = vadd.f32 %v3296, %v3313
      %v3368 = vadd.f32 %v3297, %v3313
      %v3369 = vadd.f32 %v3298, %v3313
      %v3370 = vadd.f32 %v3299, %v3313
      %v3371 = vadd.f32 %v3300, %v3313
      %v3372 = vadd.f32 %v3301, %v3313
      %v3373 = vadd.f32 %v3302, %v3313
      %v3374 = vadd.f32 %v3303, %v3313
      %v3375 = vadd.f32 %v3304, %v3313
      %v3376 = vadd.f32 %v3305, %v3313
      %v3377 = vadd.f32 %v3306, %v3313
      %v3378 = vadd.f32 %v3307, %v3313
      %3379 = vst [vmem:[%s337] sm:$0xff] %v3315
      %3380 = vst [vmem:[%s337 + $0x8] sm:$0xff] %v3316
      %3381 = vst [vmem:[%s337 + $0x10] sm:$0xff] %v3317
      %3382 = vst [vmem:[%s337 + $0x18] sm:$0xff] %v3318
      %3383 = vst [vmem:[%s337 + $0x20] sm:$0xff] %v3319
      %3384 = vst [vmem:[%s337 + $0x28] sm:$0xff] %v3320
      %3385 = vst [vmem:[%s337 + $0x30] sm:$0xff] %v3321
      %3386 = vst [vmem:[%s337 + $0x38] sm:$0xff] %v3322
      %3387 = vst [vmem:[%s337 + $0x40] sm:$0xff] %v3323
      %3388 = vst [vmem:[%s337 + $0x48] sm:$0xff] %v3324
      %3389 = vst [vmem:[%s337 + $0x50] sm:$0xff] %v3325
      %3390 = vst [vmem:[%s337 + $0x58] sm:$0xff] %v3326
      %3391 = vst [vmem:[%s337 + $0x60] sm:$0xff] %v3327
      %3392 = vst [vmem:[%s337 + $0x68] sm:$0xff] %v3328
      %3393 = vst [vmem:[%s337 + $0x70] sm:$0xff] %v3329
      %3394 = vst [vmem:[%s337 + $0x78] sm:$0xff] %v3330
      %3395 = vst [vmem:[%s337 + $0x80] sm:$0xff] %v3331
      %3396 = vst [vmem:[%s337 + $0x88] sm:$0xff] %v3332
      %3397 = vst [vmem:[%s337 + $0x90] sm:$0xff] %v3333
      %3398 = vst [vmem:[%s337 + $0x98] sm:$0xff] %v3334
      %3399 = vst [vmem:[%s337 + $0xa0] sm:$0xff] %v3335
      %3400 = vst [vmem:[%s337 + $0xa8] sm:$0xff] %v3336
      %3401 = vst [vmem:[%s337 + $0xb0] sm:$0xff] %v3337
      %3402 = vst [vmem:[%s337 + $0xb8] sm:$0xff] %v3338
      %3403 = vst [vmem:[%s337 + $0xc0] sm:$0xff] %v3339
      %3404 = vst [vmem:[%s337 + $0xc8] sm:$0xff] %v3340
      %3405 = vst [vmem:[%s337 + $0xd0] sm:$0xff] %v3341
      %3406 = vst [vmem:[%s337 + $0xd8] sm:$0xff] %v3342
      %3407 = vst [vmem:[%s337 + $0xe0] sm:$0xff] %v3343
      %3408 = vst [vmem:[%s337 + $0xe8] sm:$0xff] %v3344
      %3409 = vst [vmem:[%s337 + $0xf0] sm:$0xff] %v3345
      %3410 = vst [vmem:[%s337 + $0xf8] sm:$0xff] %v3346
      %3411 = vst [vmem:[%s337 + $0x100] sm:$0xff] %v3347
      %3412 = vst [vmem:[%s337 + $0x108] sm:$0xff] %v3348
      %3413 = vst [vmem:[%s337 + $0x110] sm:$0xff] %v3349
      %3414 = vst [vmem:[%s337 + $0x118] sm:$0xff] %v3350
      %3415 = vst [vmem:[%s337 + $0x120] sm:$0xff] %v3351
      %3416 = vst [vmem:[%s337 + $0x128] sm:$0xff] %v3352
      %3417 = vst [vmem:[%s337 + $0x130] sm:$0xff] %v3353
      %3418 = vst [vmem:[%s337 + $0x138] sm:$0xff] %v3354
      %3419 = vst [vmem:[%s337 + $0x140] sm:$0xff] %v3355
      %3420 = vst [vmem:[%s337 + $0x148] sm:$0xff] %v3356
      %3421 = vst [vmem:[%s337 + $0x150] sm:$0xff] %v3357
      %3422 = vst [vmem:[%s337 + $0x158] sm:$0xff] %v3358
      %3423 = vst [vmem:[%s337 + $0x160] sm:$0xff] %v3359
      %3424 = vst [vmem:[%s337 + $0x168] sm:$0xff] %v3360
      %3425 = vst [vmem:[%s337 + $0x170] sm:$0xff] %v3361
      %3426 = vst [vmem:[%s337 + $0x178] sm:$0xff] %v3362
      %3427 = vst [vmem:[%s337 + $0x180] sm:$0xff] %v3363
      %3428 = vst [vmem:[%s337 + $0x188] sm:$0xff] %v3364
      %3429 = vst [vmem:[%s337 + $0x190] sm:$0xff] %v3365
      %3430 = vst [vmem:[%s337 + $0x198] sm:$0xff] %v3366
      %3431 = vst [vmem:[%s337 + $0x1a0] sm:$0xff] %v3367
      %3432 = vst [vmem:[%s337 + $0x1a8] sm:$0xff] %v3368
      %3433 = vst [vmem:[%s337 + $0x1b0] sm:$0xff] %v3369
      %3434 = vst [vmem:[%s337 + $0x1b8] sm:$0xff] %v3370
      %3435 = vst [vmem:[%s337 + $0x1c0] sm:$0xff] %v3371
      %3436 = vst [vmem:[%s337 + $0x1c8] sm:$0xff] %v3372
      %3437 = vst [vmem:[%s337 + $0x1d0] sm:$0xff] %v3373
      %3438 = vst [vmem:[%s337 + $0x1d8] sm:$0xff] %v3374
      %3439 = vst [vmem:[%s337 + $0x1e0] sm:$0xff] %v3375
      %3440 = vst [vmem:[%s337 + $0x1e8] sm:$0xff] %v3376
      %3441 = vst [vmem:[%s337 + $0x1f0] sm:$0xff] %v3377
      %3442 = vst [vmem:[%s337 + $0x1f8] sm:$0xff] %v3378
      %s3443 = smul.u32 64, %s20
      %p3444 = scmp.lt.s32.totalorder %s3443, 127
      %s3445 = scalar_select %p3444, %s3443, 127
      %s3446 = smul.addr %s3445, 8
      %s3447 = scalar_lea.vmem %s9, %s3446
      // Predicated region
      $region57: #{gn_block_forward.3} parent=55 // pred_check
        %p3448 = pneg %p232
      $region58: #{gn_block_forward.3} parent=55 // pred_check_branch
        %3450 = sbr.rel (%p3448) target = $region60
      $region59: #{gn_block_forward.3} parent=55 // pred_region
        %s3451 = smul.u32 64, %s20
      $region60: #{gn_block_forward.3} parent=55 // pred_fallthru
        _
    $region56: #{gn_block_forward.3} parent=5 // pred_fallthru
      _
    %p3452 = scmp.le.s32.totalorder 2, %s15
    // Predicated region
    $region61: #{gn_block_forward.3} parent=5 // pred_check
      %p3453 = pneg %p3452
    $region62: #{gn_block_forward.3} parent=5 // pred_check_branch
      %3455 = sbr.rel (%p3453) target = $region64
    $region63: #{gn_block_forward.3} parent=5 // pred_region
      %s3456 = ssub.s32 %s15, 2
      // Predicated region
      $region65: #{gn_block_forward.3} parent=63 // pred_check
        %p3457 = pneg %p238
      $region66: #{gn_block_forward.3} parent=63 // pred_check_branch
        %3459 = sbr.rel (%p3457) target = $region68
      $region67: #{gn_block_forward.3} parent=63 // pred_region
        %s3460 = smul.u32 64, %s21
        %p3461 = scmp.lt.s32.totalorder %s3460, 127
        %s3462 = scalar_select %p3461, %s3460, 127
        %s3463 = smul.addr %s3462, 8
        %s3464 = scalar_lea.vmem %s9, %s3463
      $region68: #{gn_block_forward.3} parent=63 // pred_fallthru
        _
    $region64: #{gn_block_forward.3} parent=5 // pred_fallthru
      _
  $region6: #{gn_block_forward.3} parent=0 // loop_footer
    %s19 = sadd.s32 1, %s15
  $region7: #{gn_block_forward.3} parent=0 // loop_footer_branch
    %14 = sbr.rel target = $region3
  $region8: #{gn_block_forward.3} parent=0 // loop_exit
    _

</llo_original>
